<compile_context>
chip_gen: v7x
topology: tpu7x:2x2x1
jax: 0.10.0
libtpu: 0.0.40
codegen_flags: <defaults>
</compile_context>

<pallas_src>
import math

import jax
import jax.numpy as jnp
from jax import lax
from jax.experimental import pallas as pl
from jax.experimental.pallas import tpu as pltpu


def _sigmoid(x):
    return 1.0 / (1.0 + jnp.exp(-x))


def _layer_norm(x, g, b, eps=1e-5):
    mu = jnp.mean(x, axis=-1, keepdims=True)
    var = jnp.mean((x - mu) * (x - mu), axis=-1, keepdims=True)
    return (x - mu) * lax.rsqrt(var + eps) * g + b


# Packed bias / LayerNorm vector layout (all lane offsets 128-aligned).
_OFF_BCONV = 0
_OFF_BGATE = 128
_OFF_BQ = 640
_OFF_BKV = 768
_OFF_BO = 1024
_OFF_LN1W = 1152
_OFF_LN1B = 1280
_OFF_B1 = 1408
_OFF_B2 = 3456
_OFF_LN2W = 3584
_OFF_LN2B = 3712
_OFF_NFW = 3840
_OFF_NFB = 3968
_OFF_BFC = 4096
_VEC_LEN = 4224


def fused_forward_kernel(
    xcol_ref, wcol_ref, wih_ref, whh_ref, wattn_ref, vec_ref,   # VMEM inputs
    w1_hbm, w2_hbm,                                             # HBM (pl.ANY)
    out_ref,                                                    # output
    gxa_ref, gxs_ref, xseq_ref, kv_ref, w1_ref, w2_ref, dma_sem,  # scratch
):
    Bp = out_ref.shape[0]               # padded batch (power of two, >= 8)
    D = whh_ref.shape[0]                # 128
    G = whh_ref.shape[1]                # 512 = 4 gates x 2 directions
    H = D // 2                          # 64
    L = xcol_ref.shape[0] // Bp         # 16
    nH = 4
    Dh = D // nH                        # 32

    # ---- Kick off the late-needed FFN-weight DMAs immediately; they stream
    #      in behind the conv + LSTM recurrence and are awaited before the FFN.
    w1_cp = pltpu.make_async_copy(w1_hbm, w1_ref, dma_sem.at[0])
    w2_cp = pltpu.make_async_copy(w2_hbm, w2_ref, dma_sem.at[1])
    w1_cp.start()
    w2_cp.start()

    # ---- Conv1d(k=3, pad=1) + ReLU: one im2col matmul over all (t, b) rows.
    h0 = jnp.maximum(
        jnp.dot(xcol_ref[...], wcol_ref[...], preferred_element_type=jnp.float32)
        + vec_ref[:, _OFF_BCONV:_OFF_BCONV + 32], 0.0)            # (L*Bp, 32)
    # TODO(synk): nn.Dropout(0.3) + encoder dropouts are identity (eval mode).

    # ---- LSTM input projection for BOTH directions, hoisted out of the
    #      recurrence: one (L*Bp, 32) @ (32, 512) matmul -> VMEM scratch.
    gxa_ref[...] = (
        jnp.dot(h0, wih_ref[...], preferred_element_type=jnp.float32)
        + vec_ref[:, _OFF_BGATE:_OFF_BGATE + G])                  # (L*Bp, 512)

    # ---- Direction select (fwd lanes keep time order, bwd lanes are
    #      time-flipped) hoisted OFF the serial recurrence path.
    lane = lax.broadcasted_iota(jnp.int32, (Bp, G), 1)
    fwd_mask = (lane & H) == 0          # gate lanes [dir_f(64) | dir_b(64)]
    for t in range(L):
        rt = L - 1 - t
        gxs_ref[t * Bp:(t + 1) * Bp, :] = jnp.where(
            fwd_mask,
            gxa_ref[t * Bp:(t + 1) * Bp, :],
            gxa_ref[rt * Bp:(rt + 1) * Bp, :])

    # ---- Fused forward/backward recurrence, fully unrolled (L = 16).
    #      State is [h_fwd | h_bwd] on the lane axis; block-diagonal W_hh
    #      produces both directions' gates with a single MXU push per step.
    w_hh = whh_ref[...]                                           # (128, 512)
    h_cat = jnp.zeros((Bp, D), jnp.float32)
    c_cat = jnp.zeros((Bp, D), jnp.float32)
    for t in range(L):
        rt = L - 1 - t
        gates = gxs_ref[t * Bp:(t + 1) * Bp, :] + jnp.dot(
            h_cat, w_hh, preferred_element_type=jnp.float32)
        i = _sigmoid(gates[:, 0 * D:1 * D])       # [i_f | i_b] (128-aligned)
        f = _sigmoid(gates[:, 1 * D:2 * D])
        g = jnp.tanh(gates[:, 2 * D:3 * D])
        o = _sigmoid(gates[:, 3 * D:4 * D])
        c_cat = f * c_cat + i * g
        h_cat = o * jnp.tanh(c_cat)
        # Per-position LSTM output -> VMEM (stores are off the critical path).
        xseq_ref[t * Bp:(t + 1) * Bp, 0:H] = h_cat[:, 0:H]
        xseq_ref[rt * Bp:(rt + 1) * Bp, H:D] = h_cat[:, H:D]

    # ---- Transformer encoder layer: K/V for ALL positions in one matmul;
    #      Q / attention / residual / FFN only for the last token (exact,
    #      since there is a single layer and only x[:, -1, :] is consumed).
    w_q = wattn_ref[:, 0:D]
    w_kv = wattn_ref[:, D:3 * D]
    w_o = wattn_ref[:, 3 * D:4 * D]
    w_fc = wattn_ref[:, 4 * D:4 * D + 1]

    kv_ref[...] = (
        jnp.dot(xseq_ref[...], w_kv, preferred_element_type=jnp.float32)
        + vec_ref[:, _OFF_BKV:_OFF_BKV + 2 * D])                  # (L*Bp, 256)

    x_last = xseq_ref[(L - 1) * Bp:L * Bp, :]                     # (Bp, 128)
    q = (jnp.dot(x_last, w_q, preferred_element_type=jnp.float32)
         + vec_ref[:, _OFF_BQ:_OFF_BQ + D])
    scale = 1.0 / math.sqrt(Dh)

    # Full-vreg attention: per head the scores form a single (Bp, L*Bp) tile
    # (row b attends to columns t*Bp + b); cross-batch pairs are masked out.
    row_b = lax.broadcasted_iota(jnp.int32, (Bp, L * Bp), 0)
    col_b = lax.broadcasted_iota(jnp.int32, (Bp, L * Bp), 1) & (Bp - 1)
    same_b = row_b == col_b
    head_outs = []
    for h in range(nH):
        lo = h * Dh
        k_h = kv_ref[:, lo:lo + Dh]                               # (L*Bp, Dh)
        v_h = kv_ref[:, D + lo:D + lo + Dh]                       # (L*Bp, Dh)
        s = lax.dot_general(q[:, lo:lo + Dh], k_h,
                            (((1,), (1,)), ((), ())),
                            preferred_element_type=jnp.float32) * scale
        s = jnp.where(same_b, s, -1e30)
        m = jnp.max(s, axis=-1, keepdims=True)
        p = jnp.exp(s - m)
        p = jnp.where(same_b, p, 0.0)
        denom = jnp.sum(p, axis=-1, keepdims=True)
        p = p * pl.reciprocal(denom, approx=True)
        head_outs.append(jnp.dot(p, v_h, preferred_element_type=jnp.float32))
    attn = jnp.concatenate(head_outs, axis=-1)                    # (Bp, 128)

    attn = (jnp.dot(attn, w_o, preferred_element_type=jnp.float32)
            + vec_ref[:, _OFF_BO:_OFF_BO + D])
    x1 = _layer_norm(x_last + attn,
                     vec_ref[:, _OFF_LN1W:_OFF_LN1W + D],
                     vec_ref[:, _OFF_LN1B:_OFF_LN1B + D])

    # ---- FFN 128 -> 2048 -> 128 with bf16 weights; DMAs awaited only here.
    w1_cp.wait()
    w2_cp.wait()
    ffh = jnp.maximum(
        jnp.dot(x1.astype(jnp.bfloat16), w1_ref[...],
                preferred_element_type=jnp.float32)
        + vec_ref[:, _OFF_B1:_OFF_B1 + 2048], 0.0)                # (Bp, 2048)
    ff = (jnp.dot(ffh.astype(jnp.bfloat16), w2_ref[...],
                  preferred_element_type=jnp.float32)
          + vec_ref[:, _OFF_B2:_OFF_B2 + D])
    x2 = _layer_norm(x1 + ff,
                     vec_ref[:, _OFF_LN2W:_OFF_LN2W + D],
                     vec_ref[:, _OFF_LN2B:_OFF_LN2B + D])

    # ---- Final LayerNorm + fc head.
    xn = _layer_norm(x2,
                     vec_ref[:, _OFF_NFW:_OFF_NFW + D],
                     vec_ref[:, _OFF_NFB:_OFF_NFB + D])
    y = (jnp.dot(xn, w_fc, preferred_element_type=jnp.float32)
         + vec_ref[:, _OFF_BFC:_OFF_BFC + 1])
    out_ref[...] = y.astype(out_ref.dtype)


# ---------------------------------------------------------------------------
# Wrapper: one-time weight packing + im2col (tiny XLA ops), then a single
# fused pallas_call.
# ---------------------------------------------------------------------------
def _interleave_dirs(a_f, a_b, H):
    """Interleave per-gate column blocks of the two LSTM directions so the
    512 gate lanes are laid out [i_f, i_b, f_f, f_b, g_f, g_b, o_f, o_b]."""
    K = a_f.shape[0]
    a_f = a_f.reshape(K, 4, H)
    a_b = a_b.reshape(K, 4, H)
    return jnp.stack([a_f, a_b], axis=2).reshape(K, 8 * H)


def _seg(v, width):
    v = jnp.asarray(v, jnp.float32).reshape(-1)
    return jnp.pad(v, (0, width - v.shape[0]))


def forward(x, p):
    """x: (B, C_in, L) float32 (PyTorch Conv1d NCL layout)."""
    B, C, L = x.shape
    OC, H, D = 32, 64, 128
    # Pad batch to a full sublane tile; power of two so the kernel can use a
    # bitwise-and for the per-column batch index.
    Bp = max(8, 1 << (B - 1).bit_length())

    xb = jnp.pad(x.astype(jnp.float32), ((0, Bp - B), (0, 0), (0, 0)))

    # im2col for Conv1d(k=3, pad=1); rows are time-major (row = t*Bp + b).
    x_lc = jnp.transpose(xb, (0, 2, 1))                       # (Bp, L, C)
    x_pad = jnp.pad(x_lc, ((0, 0), (1, 1), (0, 0)))           # (Bp, L+2, C)
    x_col = jnp.concatenate([x_pad[:, k:k + L, :] for k in range(3)],
                            axis=-1)                          # (Bp, L, 3C)
    x_col = jnp.transpose(x_col, (1, 0, 2)).reshape(L * Bp, 3 * C)
    w_col = jnp.transpose(p['conv_w'], (2, 1, 0)).reshape(3 * C, OC)

    # LSTM: hoisted input projection + fused directions (block-diag W_hh).
    w_ih_all = _interleave_dirs(p['w_ih_f'].T, p['w_ih_b'].T, H)     # (32, 512)
    zeros_h = jnp.zeros((H, 4 * H), jnp.float32)
    whh_f_blk = jnp.concatenate([p['w_hh_f'].T, zeros_h], axis=0)    # (128, 256)
    whh_b_blk = jnp.concatenate([zeros_h, p['w_hh_b'].T], axis=0)
    w_hh_all = _interleave_dirs(whh_f_blk, whh_b_blk, H)             # (128, 512)
    b_f = (p['b_ih_f'] + p['b_hh_f']).reshape(1, 4 * H)
    b_b = (p['b_ih_b'] + p['b_hh_b']).reshape(1, 4 * H)
    b_gates = _interleave_dirs(b_f, b_b, H).reshape(-1)              # (512,)

    # Attention / head weights packed into one (128, 513) array:
    #   [ W_q (128) | W_kv (256) | W_o (128) | W_fc (1) ].
    w_attn = jnp.concatenate(
        [p['in_proj_w'][0:D, :].T,
         p['in_proj_w'][D:3 * D, :].T,
         p['out_proj_w'].T,
         p['fc_w'].T], axis=1)

    # All small bias / LayerNorm vectors packed into one lane-aligned array.
    vec = jnp.concatenate([
        _seg(p['conv_b'], 128),
        _seg(b_gates, 512),
        _seg(p['in_proj_b'][0:D], 128),
        _seg(p['in_proj_b'][D:3 * D], 256),
        _seg(p['out_proj_b'], 128),
        _seg(p['ln1_w'], 128), _seg(p['ln1_b'], 128),
        _seg(p['lin1_b'], 2048),
        _seg(p['lin2_b'], 128),
        _seg(p['ln2_w'], 128), _seg(p['ln2_b'], 128),
        _seg(p['norm_w'], 128), _seg(p['norm_b'], 128),
        _seg(p['fc_b'], 128),
    ]).reshape(1, _VEC_LEN)

    # Large FFN weights in bf16 (halved HBM traffic, single-pass MXU); they
    # stay in HBM (pl.ANY) and are DMA'd manually inside the kernel,
    # overlapped with the recurrence.
    w1 = p['lin1_w'].T.astype(jnp.bfloat16)                    # (128, 2048)
    w2 = p['lin2_w'].T.astype(jnp.bfloat16)                    # (2048, 128)

    vmem = pl.BlockSpec(memory_space=pltpu.MemorySpace.VMEM)
    hbm = pl.BlockSpec(memory_space=pl.ANY)
    out = pl.pallas_call(
        fused_forward_kernel,
        out_shape=jax.ShapeDtypeStruct((Bp, 1), jnp.float32),
        in_specs=[vmem, vmem, vmem, vmem, vmem, vmem, hbm, hbm],
        out_specs=vmem,
        scratch_shapes=[
            pltpu.VMEM((L * Bp, 8 * H), jnp.float32),   # raw x-gates
            pltpu.VMEM((L * Bp, 8 * H), jnp.float32),   # dir-selected x-gates
            pltpu.VMEM((L * Bp, D), jnp.float32),       # LSTM outputs x_seq
            pltpu.VMEM((L * Bp, 2 * D), jnp.float32),   # K/V for all positions
            pltpu.VMEM((D, 2048), jnp.bfloat16),        # FFN W1 (manual DMA)
            pltpu.VMEM((2048, D), jnp.bfloat16),        # FFN W2 (manual DMA)
            pltpu.SemaphoreType.DMA((2,)),
        ],
        compiler_params=pltpu.CompilerParams(
            vmem_limit_bytes=32 * 1024 * 1024),
    )(x_col, w_col, w_ih_all, w_hh_all, w_attn, vec, w1, w2)
    return out[:B, 0]                                   # (B,) like .squeeze(1)


# ---------------------------------------------------------------------------
# Deterministic parameter init (same shapes as the PyTorch module).
# ---------------------------------------------------------------------------
def init_params(key, in_channels, n_classes=1):
    keys = jax.random.split(key, 24)
    it = iter(keys)

    def nrm(shape, fan_in):
        return jax.random.normal(next(it), shape, jnp.float32) / math.sqrt(fan_in)

    p = {}
    p['conv_w'] = nrm((32, in_channels, 3), in_channels * 3)
    p['conv_b'] = nrm((32,), 32)
    for d in ('f', 'b'):
        p[f'w_ih_{d}'] = nrm((256, 32), 32)
        p[f'w_hh_{d}'] = nrm((256, 64), 64)
        p[f'b_ih_{d}'] = nrm((256,), 64)
        p[f'b_hh_{d}'] = nrm((256,), 64)
    p['in_proj_w'] = nrm((384, 128), 128)
    p['in_proj_b'] = nrm((384,), 128)
    p['out_proj_w'] = nrm((128, 128), 128)
    p['out_proj_b'] = nrm((128,), 128)
    p['ln1_w'] = jnp.ones((128,), jnp.float32)
    p['ln1_b'] = jnp.zeros((128,), jnp.float32)
    p['lin1_w'] = nrm((2048, 128), 128)
    p['lin1_b'] = nrm((2048,), 128)
    p['lin2_w'] = nrm((128, 2048), 2048)
    p['lin2_b'] = nrm((128,), 2048)
    p['ln2_w'] = jnp.ones((128,), jnp.float32)
    p['ln2_b'] = jnp.zeros((128,), jnp.float32)
    p['norm_w'] = jnp.ones((128,), jnp.float32)
    p['norm_b'] = jnp.zeros((128,), jnp.float32)
    p['fc_w'] = nrm((n_classes, 128), 128)
    p['fc_b'] = nrm((n_classes,), 128)
    return p


if __name__ == "__main__":
    B, C_IN, L = 2, 4, 16
    key = jax.random.PRNGKey(0)
    pkey, xkey = jax.random.split(key)
    params = init_params(pkey, C_IN, n_classes=1)
    x = jax.random.normal(xkey, (B, C_IN, L), jnp.float32)

    fwd = jax.jit(forward)
    y = jax.block_until_ready(fwd(x, params))

    assert y.shape == (B,), f"unexpected output shape {y.shape}"
    assert bool(jnp.all(jnp.isfinite(y))), "non-finite output"
    print("KERNEL_OK")
</pallas_src>

<mosaic_0001>
module attributes {stable_mosaic.version = 11 : i64} {
  func.func @fused_forward_kernel(%arg0: memref<128x12xf32, #tpu.memory_space<vmem>>, %arg1: memref<12x32xf32, #tpu.memory_space<vmem>>, %arg2: memref<32x512xf32, #tpu.memory_space<vmem>>, %arg3: memref<128x512xf32, #tpu.memory_space<vmem>>, %arg4: memref<128x513xf32, #tpu.memory_space<vmem>>, %arg5: memref<1x4224xf32, #tpu.memory_space<vmem>>, %arg6: memref<128x2048xbf16, #tpu.memory_space<any>>, %arg7: memref<2048x128xbf16, #tpu.memory_space<any>>, %arg8: memref<8x1xf32, #tpu.memory_space<vmem>>, %arg9: memref<128x512xf32, #tpu.memory_space<vmem>>, %arg10: memref<128x512xf32, #tpu.memory_space<vmem>>, %arg11: memref<128x128xf32, #tpu.memory_space<vmem>>, %arg12: memref<128x256xf32, #tpu.memory_space<vmem>>, %arg13: memref<128x2048xbf16, #tpu.memory_space<vmem>>, %arg14: memref<2048x128xbf16, #tpu.memory_space<vmem>>, %arg15: memref<2x!tpu.dma_semaphore, #tpu.memory_space<semaphore_mem>>) attributes {dimension_semantics = [], scalar_prefetch = 0 : i64, scratch_operands = 7 : i64, tpu.core_type = #tpu.core_type<tc>} {
    %c0_i32 = arith.constant 0 : i32
    %0 = tpu.memref_slice %arg15[%c0_i32] : memref<2x!tpu.dma_semaphore, #tpu.memory_space<semaphore_mem>> -> memref<1x!tpu.dma_semaphore, #tpu.memory_space<semaphore_mem>>
    %1 = tpu.memref_squeeze %0 : memref<1x!tpu.dma_semaphore, #tpu.memory_space<semaphore_mem>> -> memref<!tpu.dma_semaphore, #tpu.memory_space<semaphore_mem>>
    tpu.enqueue_dma source(%arg6 : memref<128x2048xbf16, #tpu.memory_space<any>>) target(%arg13 : memref<128x2048xbf16, #tpu.memory_space<vmem>>) target_semaphore(%1 : memref<!tpu.dma_semaphore, #tpu.memory_space<semaphore_mem>>)
    %c1_i32 = arith.constant 1 : i32
    %2 = tpu.memref_slice %arg15[%c1_i32] : memref<2x!tpu.dma_semaphore, #tpu.memory_space<semaphore_mem>> -> memref<1x!tpu.dma_semaphore, #tpu.memory_space<semaphore_mem>>
    %3 = tpu.memref_squeeze %2 : memref<1x!tpu.dma_semaphore, #tpu.memory_space<semaphore_mem>> -> memref<!tpu.dma_semaphore, #tpu.memory_space<semaphore_mem>>
    tpu.enqueue_dma source(%arg7 : memref<2048x128xbf16, #tpu.memory_space<any>>) target(%arg14 : memref<2048x128xbf16, #tpu.memory_space<vmem>>) target_semaphore(%3 : memref<!tpu.dma_semaphore, #tpu.memory_space<semaphore_mem>>)
    %c0 = arith.constant 0 : index
    %c0_0 = arith.constant 0 : index
    %4 = vector.load %arg0[%c0, %c0_0] : memref<128x12xf32, #tpu.memory_space<vmem>>, vector<128x12xf32>
    %c0_1 = arith.constant 0 : index
    %c0_2 = arith.constant 0 : index
    %5 = vector.load %arg1[%c0_1, %c0_2] : memref<12x32xf32, #tpu.memory_space<vmem>>, vector<12x32xf32>
    %cst = arith.constant dense<0.000000e+00> : vector<128x32xf32>
    %6 = tpu.matmul %4, %5, %cst {dimension_numbers = #tpu.dot_dimension_numbers<[1], [0], [0], [1], [0, 0, 1, 1], [], []>} : vector<128x12xf32>, vector<12x32xf32>, vector<128x32xf32> -> vector<128x32xf32>
    %c0_3 = arith.constant 0 : index
    %c0_4 = arith.constant 0 : index
    %7 = vector.load %arg5[%c0_3, %c0_4] : memref<1x4224xf32, #tpu.memory_space<vmem>>, vector<1x32xf32>
    %8 = vector.broadcast %7 : vector<1x32xf32> to vector<128x32xf32>
    %9 = arith.addf %6, %8 : vector<128x32xf32>
    %cst_5 = arith.constant 0.000000e+00 : f32
    %10 = vector.broadcast %cst_5 : f32 to vector<128x32xf32>
    %11 = arith.maximumf %9, %10 : vector<128x32xf32>
    %c0_6 = arith.constant 0 : index
    %c0_7 = arith.constant 0 : index
    %12 = vector.load %arg2[%c0_6, %c0_7] : memref<32x512xf32, #tpu.memory_space<vmem>>, vector<32x512xf32>
    %cst_8 = arith.constant dense<0.000000e+00> : vector<128x512xf32>
    %13 = tpu.matmul %11, %12, %cst_8 {dimension_numbers = #tpu.dot_dimension_numbers<[1], [0], [0], [1], [0, 0, 1, 1], [], []>} : vector<128x32xf32>, vector<32x512xf32>, vector<128x512xf32> -> vector<128x512xf32>
    %c0_9 = arith.constant 0 : index
    %c128 = arith.constant 128 : index
    %14 = vector.load %arg5[%c0_9, %c128] : memref<1x4224xf32, #tpu.memory_space<vmem>>, vector<1x512xf32>
    %15 = vector.broadcast %14 : vector<1x512xf32> to vector<128x512xf32>
    %16 = arith.addf %13, %15 : vector<128x512xf32>
    %c0_10 = arith.constant 0 : index
    %c0_11 = arith.constant 0 : index
    %17 = vector.load %arg9[%c0_10, %c0_11] : memref<128x512xf32, #tpu.memory_space<vmem>>, vector<128x512xf32>
    tpu.vector_store %arg9[%c0_10, %c0_11], %16 {strides = array<i32>} : memref<128x512xf32, #tpu.memory_space<vmem>>, vector<128x512xf32>,
    %18 = tpu.iota {dimensions = array<i32: 1>} : vector<8x512xi32>
    %c64_i32 = arith.constant 64 : i32
    %19 = vector.broadcast %c64_i32 : i32 to vector<8x512xi32>
    %20 = arith.andi %18, %19 : vector<8x512xi32>
    %c0_i32_12 = arith.constant 0 : i32
    %21 = vector.broadcast %c0_i32_12 : i32 to vector<8x512xi32>
    %22 = arith.cmpi eq, %20, %21 : vector<8x512xi32>
    %c0_13 = arith.constant 0 : index
    %c0_14 = arith.constant 0 : index
    %23 = vector.load %arg9[%c0_13, %c0_14] : memref<128x512xf32, #tpu.memory_space<vmem>>, vector<8x512xf32>
    %c120 = arith.constant 120 : index
    %c0_15 = arith.constant 0 : index
    %24 = vector.load %arg9[%c120, %c0_15] : memref<128x512xf32, #tpu.memory_space<vmem>>, vector<8x512xf32>
    %25 = arith.select %22, %23, %24 : vector<8x512xi1>, vector<8x512xf32>
    %c0_16 = arith.constant 0 : index
    %c0_17 = arith.constant 0 : index
    %26 = vector.load %arg10[%c0_16, %c0_17] : memref<128x512xf32, #tpu.memory_space<vmem>>, vector<8x512xf32>
    tpu.vector_store %arg10[%c0_16, %c0_17], %25 {strides = array<i32>} : memref<128x512xf32, #tpu.memory_space<vmem>>, vector<8x512xf32>,
    %c8 = arith.constant 8 : index
    %c0_18 = arith.constant 0 : index
    %27 = vector.load %arg9[%c8, %c0_18] : memref<128x512xf32, #tpu.memory_space<vmem>>, vector<8x512xf32>
    %c112 = arith.constant 112 : index
    %c0_19 = arith.constant 0 : index
    %28 = vector.load %arg9[%c112, %c0_19] : memref<128x512xf32, #tpu.memory_space<vmem>>, vector<8x512xf32>
    %29 = arith.select %22, %27, %28 : vector<8x512xi1>, vector<8x512xf32>
    %c8_20 = arith.constant 8 : index
    %c0_21 = arith.constant 0 : index
    %30 = vector.load %arg10[%c8_20, %c0_21] : memref<128x512xf32, #tpu.memory_space<vmem>>, vector<8x512xf32>
    tpu.vector_store %arg10[%c8_20, %c0_21], %29 {strides = array<i32>} : memref<128x512xf32, #tpu.memory_space<vmem>>, vector<8x512xf32>,
    %c16 = arith.constant 16 : index
    %c0_22 = arith.constant 0 : index
    %31 = vector.load %arg9[%c16, %c0_22] : memref<128x512xf32, #tpu.memory_space<vmem>>, vector<8x512xf32>
    %c104 = arith.constant 104 : index
    %c0_23 = arith.constant 0 : index
    %32 = vector.load %arg9[%c104, %c0_23] : memref<128x512xf32, #tpu.memory_space<vmem>>, vector<8x512xf32>
    %33 = arith.select %22, %31, %32 : vector<8x512xi1>, vector<8x512xf32>
    %c16_24 = arith.constant 16 : index
    %c0_25 = arith.constant 0 : index
    %34 = vector.load %arg10[%c16_24, %c0_25] : memref<128x512xf32, #tpu.memory_space<vmem>>, vector<8x512xf32>
    tpu.vector_store %arg10[%c16_24, %c0_25], %33 {strides = array<i32>} : memref<128x512xf32, #tpu.memory_space<vmem>>, vector<8x512xf32>,
    %c24 = arith.constant 24 : index
    %c0_26 = arith.constant 0 : index
    %35 = vector.load %arg9[%c24, %c0_26] : memref<128x512xf32, #tpu.memory_space<vmem>>, vector<8x512xf32>
    %c96 = arith.constant 96 : index
    %c0_27 = arith.constant 0 : index
    %36 = vector.load %arg9[%c96, %c0_27] : memref<128x512xf32, #tpu.memory_space<vmem>>, vector<8x512xf32>
    %37 = arith.select %22, %35, %36 : vector<8x512xi1>, vector<8x512xf32>
    %c24_28 = arith.constant 24 : index
    %c0_29 = arith.constant 0 : index
    %38 = vector.load %arg10[%c24_28, %c0_29] : memref<128x512xf32, #tpu.memory_space<vmem>>, vector<8x512xf32>
    tpu.vector_store %arg10[%c24_28, %c0_29], %37 {strides = array<i32>} : memref<128x512xf32, #tpu.memory_space<vmem>>, vector<8x512xf32>,
    %c32 = arith.constant 32 : index
    %c0_30 = arith.constant 0 : index
    %39 = vector.load %arg9[%c32, %c0_30] : memref<128x512xf32, #tpu.memory_space<vmem>>, vector<8x512xf32>
    %c88 = arith.constant 88 : index
    %c0_31 = arith.constant 0 : index
    %40 = vector.load %arg9[%c88, %c0_31] : memref<128x512xf32, #tpu.memory_space<vmem>>, vector<8x512xf32>
    %41 = arith.select %22, %39, %40 : vector<8x512xi1>, vector<8x512xf32>
    %c32_32 = arith.constant 32 : index
    %c0_33 = arith.constant 0 : index
    %42 = vector.load %arg10[%c32_32, %c0_33] : memref<128x512xf32, #tpu.memory_space<vmem>>, vector<8x512xf32>
    tpu.vector_store %arg10[%c32_32, %c0_33], %41 {strides = array<i32>} : memref<128x512xf32, #tpu.memory_space<vmem>>, vector<8x512xf32>,
    %c40 = arith.constant 40 : index
    %c0_34 = arith.constant 0 : index
    %43 = vector.load %arg9[%c40, %c0_34] : memref<128x512xf32, #tpu.memory_space<vmem>>, vector<8x512xf32>
    %c80 = arith.constant 80 : index
    %c0_35 = arith.constant 0 : index
    %44 = vector.load %arg9[%c80, %c0_35] : memref<128x512xf32, #tpu.memory_space<vmem>>, vector<8x512xf32>
    %45 = arith.select %22, %43, %44 : vector<8x512xi1>, vector<8x512xf32>
    %c40_36 = arith.constant 40 : index
    %c0_37 = arith.constant 0 : index
    %46 = vector.load %arg10[%c40_36, %c0_37] : memref<128x512xf32, #tpu.memory_space<vmem>>, vector<8x512xf32>
    tpu.vector_store %arg10[%c40_36, %c0_37], %45 {strides = array<i32>} : memref<128x512xf32, #tpu.memory_space<vmem>>, vector<8x512xf32>,
    %c48 = arith.constant 48 : index
    %c0_38 = arith.constant 0 : index
    %47 = vector.load %arg9[%c48, %c0_38] : memref<128x512xf32, #tpu.memory_space<vmem>>, vector<8x512xf32>
    %c72 = arith.constant 72 : index
    %c0_39 = arith.constant 0 : index
    %48 = vector.load %arg9[%c72, %c0_39] : memref<128x512xf32, #tpu.memory_space<vmem>>, vector<8x512xf32>
    %49 = arith.select %22, %47, %48 : vector<8x512xi1>, vector<8x512xf32>
    %c48_40 = arith.constant 48 : index
    %c0_41 = arith.constant 0 : index
    %50 = vector.load %arg10[%c48_40, %c0_41] : memref<128x512xf32, #tpu.memory_space<vmem>>, vector<8x512xf32>
    tpu.vector_store %arg10[%c48_40, %c0_41], %49 {strides = array<i32>} : memref<128x512xf32, #tpu.memory_space<vmem>>, vector<8x512xf32>,
    %c56 = arith.constant 56 : index
    %c0_42 = arith.constant 0 : index
    %51 = vector.load %arg9[%c56, %c0_42] : memref<128x512xf32, #tpu.memory_space<vmem>>, vector<8x512xf32>
    %c64 = arith.constant 64 : index
    %c0_43 = arith.constant 0 : index
    %52 = vector.load %arg9[%c64, %c0_43] : memref<128x512xf32, #tpu.memory_space<vmem>>, vector<8x512xf32>
    %53 = arith.select %22, %51, %52 : vector<8x512xi1>, vector<8x512xf32>
    %c56_44 = arith.constant 56 : index
    %c0_45 = arith.constant 0 : index
    %54 = vector.load %arg10[%c56_44, %c0_45] : memref<128x512xf32, #tpu.memory_space<vmem>>, vector<8x512xf32>
    tpu.vector_store %arg10[%c56_44, %c0_45], %53 {strides = array<i32>} : memref<128x512xf32, #tpu.memory_space<vmem>>, vector<8x512xf32>,
    %c64_46 = arith.constant 64 : index
    %c0_47 = arith.constant 0 : index
    %55 = vector.load %arg9[%c64_46, %c0_47] : memref<128x512xf32, #tpu.memory_space<vmem>>, vector<8x512xf32>
    %c56_48 = arith.constant 56 : index
    %c0_49 = arith.constant 0 : index
    %56 = vector.load %arg9[%c56_48, %c0_49] : memref<128x512xf32, #tpu.memory_space<vmem>>, vector<8x512xf32>
    %57 = arith.select %22, %55, %56 : vector<8x512xi1>, vector<8x512xf32>
    %c64_50 = arith.constant 64 : index
    %c0_51 = arith.constant 0 : index
    %58 = vector.load %arg10[%c64_50, %c0_51] : memref<128x512xf32, #tpu.memory_space<vmem>>, vector<8x512xf32>
    tpu.vector_store %arg10[%c64_50, %c0_51], %57 {strides = array<i32>} : memref<128x512xf32, #tpu.memory_space<vmem>>, vector<8x512xf32>,
    %c72_52 = arith.constant 72 : index
    %c0_53 = arith.constant 0 : index
    %59 = vector.load %arg9[%c72_52, %c0_53] : memref<128x512xf32, #tpu.memory_space<vmem>>, vector<8x512xf32>
    %c48_54 = arith.constant 48 : index
    %c0_55 = arith.constant 0 : index
    %60 = vector.load %arg9[%c48_54, %c0_55] : memref<128x512xf32, #tpu.memory_space<vmem>>, vector<8x512xf32>
    %61 = arith.select %22, %59, %60 : vector<8x512xi1>, vector<8x512xf32>
    %c72_56 = arith.constant 72 : index
    %c0_57 = arith.constant 0 : index
    %62 = vector.load %arg10[%c72_56, %c0_57] : memref<128x512xf32, #tpu.memory_space<vmem>>, vector<8x512xf32>
    tpu.vector_store %arg10[%c72_56, %c0_57], %61 {strides = array<i32>} : memref<128x512xf32, #tpu.memory_space<vmem>>, vector<8x512xf32>,
    %c80_58 = arith.constant 80 : index
    %c0_59 = arith.constant 0 : index
    %63 = vector.load %arg9[%c80_58, %c0_59] : memref<128x512xf32, #tpu.memory_space<vmem>>, vector<8x512xf32>
    %c40_60 = arith.constant 40 : index
    %c0_61 = arith.constant 0 : index
    %64 = vector.load %arg9[%c40_60, %c0_61] : memref<128x512xf32, #tpu.memory_space<vmem>>, vector<8x512xf32>
    %65 = arith.select %22, %63, %64 : vector<8x512xi1>, vector<8x512xf32>
    %c80_62 = arith.constant 80 : index
    %c0_63 = arith.constant 0 : index
    %66 = vector.load %arg10[%c80_62, %c0_63] : memref<128x512xf32, #tpu.memory_space<vmem>>, vector<8x512xf32>
    tpu.vector_store %arg10[%c80_62, %c0_63], %65 {strides = array<i32>} : memref<128x512xf32, #tpu.memory_space<vmem>>, vector<8x512xf32>,
    %c88_64 = arith.constant 88 : index
    %c0_65 = arith.constant 0 : index
    %67 = vector.load %arg9[%c88_64, %c0_65] : memref<128x512xf32, #tpu.memory_space<vmem>>, vector<8x512xf32>
    %c32_66 = arith.constant 32 : index
    %c0_67 = arith.constant 0 : index
    %68 = vector.load %arg9[%c32_66, %c0_67] : memref<128x512xf32, #tpu.memory_space<vmem>>, vector<8x512xf32>
    %69 = arith.select %22, %67, %68 : vector<8x512xi1>, vector<8x512xf32>
    %c88_68 = arith.constant 88 : index
    %c0_69 = arith.constant 0 : index
    %70 = vector.load %arg10[%c88_68, %c0_69] : memref<128x512xf32, #tpu.memory_space<vmem>>, vector<8x512xf32>
    tpu.vector_store %arg10[%c88_68, %c0_69], %69 {strides = array<i32>} : memref<128x512xf32, #tpu.memory_space<vmem>>, vector<8x512xf32>,
    %c96_70 = arith.constant 96 : index
    %c0_71 = arith.constant 0 : index
    %71 = vector.load %arg9[%c96_70, %c0_71] : memref<128x512xf32, #tpu.memory_space<vmem>>, vector<8x512xf32>
    %c24_72 = arith.constant 24 : index
    %c0_73 = arith.constant 0 : index
    %72 = vector.load %arg9[%c24_72, %c0_73] : memref<128x512xf32, #tpu.memory_space<vmem>>, vector<8x512xf32>
    %73 = arith.select %22, %71, %72 : vector<8x512xi1>, vector<8x512xf32>
    %c96_74 = arith.constant 96 : index
    %c0_75 = arith.constant 0 : index
    %74 = vector.load %arg10[%c96_74, %c0_75] : memref<128x512xf32, #tpu.memory_space<vmem>>, vector<8x512xf32>
    tpu.vector_store %arg10[%c96_74, %c0_75], %73 {strides = array<i32>} : memref<128x512xf32, #tpu.memory_space<vmem>>, vector<8x512xf32>,
    %c104_76 = arith.constant 104 : index
    %c0_77 = arith.constant 0 : index
    %75 = vector.load %arg9[%c104_76, %c0_77] : memref<128x512xf32, #tpu.memory_space<vmem>>, vector<8x512xf32>
    %c16_78 = arith.constant 16 : index
    %c0_79 = arith.constant 0 : index
    %76 = vector.load %arg9[%c16_78, %c0_79] : memref<128x512xf32, #tpu.memory_space<vmem>>, vector<8x512xf32>
    %77 = arith.select %22, %75, %76 : vector<8x512xi1>, vector<8x512xf32>
    %c104_80 = arith.constant 104 : index
    %c0_81 = arith.constant 0 : index
    %78 = vector.load %arg10[%c104_80, %c0_81] : memref<128x512xf32, #tpu.memory_space<vmem>>, vector<8x512xf32>
    tpu.vector_store %arg10[%c104_80, %c0_81], %77 {strides = array<i32>} : memref<128x512xf32, #tpu.memory_space<vmem>>, vector<8x512xf32>,
    %c112_82 = arith.constant 112 : index
    %c0_83 = arith.constant 0 : index
    %79 = vector.load %arg9[%c112_82, %c0_83] : memref<128x512xf32, #tpu.memory_space<vmem>>, vector<8x512xf32>
    %c8_84 = arith.constant 8 : index
    %c0_85 = arith.constant 0 : index
    %80 = vector.load %arg9[%c8_84, %c0_85] : memref<128x512xf32, #tpu.memory_space<vmem>>, vector<8x512xf32>
    %81 = arith.select %22, %79, %80 : vector<8x512xi1>, vector<8x512xf32>
    %c112_86 = arith.constant 112 : index
    %c0_87 = arith.constant 0 : index
    %82 = vector.load %arg10[%c112_86, %c0_87] : memref<128x512xf32, #tpu.memory_space<vmem>>, vector<8x512xf32>
    tpu.vector_store %arg10[%c112_86, %c0_87], %81 {strides = array<i32>} : memref<128x512xf32, #tpu.memory_space<vmem>>, vector<8x512xf32>,
    %c120_88 = arith.constant 120 : index
    %c0_89 = arith.constant 0 : index
    %83 = vector.load %arg9[%c120_88, %c0_89] : memref<128x512xf32, #tpu.memory_space<vmem>>, vector<8x512xf32>
    %c0_90 = arith.constant 0 : index
    %c0_91 = arith.constant 0 : index
    %84 = vector.load %arg9[%c0_90, %c0_91] : memref<128x512xf32, #tpu.memory_space<vmem>>, vector<8x512xf32>
    %85 = arith.select %22, %83, %84 : vector<8x512xi1>, vector<8x512xf32>
    %c120_92 = arith.constant 120 : index
    %c0_93 = arith.constant 0 : index
    %86 = vector.load %arg10[%c120_92, %c0_93] : memref<128x512xf32, #tpu.memory_space<vmem>>, vector<8x512xf32>
    tpu.vector_store %arg10[%c120_92, %c0_93], %85 {strides = array<i32>} : memref<128x512xf32, #tpu.memory_space<vmem>>, vector<8x512xf32>,
    %c0_94 = arith.constant 0 : index
    %c0_95 = arith.constant 0 : index
    %87 = vector.load %arg3[%c0_94, %c0_95] : memref<128x512xf32, #tpu.memory_space<vmem>>, vector<128x512xf32>
    %cst_96 = arith.constant 0.000000e+00 : f32
    %88 = vector.broadcast %cst_96 : f32 to vector<8x128xf32>
    %cst_97 = arith.constant 0.000000e+00 : f32
    %89 = vector.broadcast %cst_97 : f32 to vector<8x128xf32>
    %c0_98 = arith.constant 0 : index
    %c0_99 = arith.constant 0 : index
    %90 = vector.load %arg10[%c0_98, %c0_99] : memref<128x512xf32, #tpu.memory_space<vmem>>, vector<8x512xf32>
    %cst_100 = arith.constant dense<0.000000e+00> : vector<8x512xf32>
    %91 = tpu.matmul %88, %87, %cst_100 {dimension_numbers = #tpu.dot_dimension_numbers<[1], [0], [0], [1], [0, 0, 1, 1], [], []>} : vector<8x128xf32>, vector<128x512xf32>, vector<8x512xf32> -> vector<8x512xf32>
    %92 = arith.addf %90, %91 : vector<8x512xf32>
    %93 = vector.extract_strided_slice %92 {offsets = [0, 0], sizes = [8, 128], strides = [1, 1]} : vector<8x512xf32> to vector<8x128xf32>
    %cst_101 = arith.constant 0.000000e+00 : f32
    %94 = vector.broadcast %cst_101 : f32 to vector<8x128xf32>
    %95 = arith.subf %94, %93 : vector<8x128xf32>
    %96 = math.exp %95 : vector<8x128xf32>
    %cst_102 = arith.constant 1.000000e+00 : f32
    %97 = vector.broadcast %cst_102 : f32 to vector<8x128xf32>
    %98 = arith.addf %97, %96 : vector<8x128xf32>
    %cst_103 = arith.constant 1.000000e+00 : f32
    %99 = vector.broadcast %cst_103 : f32 to vector<8x128xf32>
    %100 = arith.divf %99, %98 : vector<8x128xf32>
    %101 = vector.extract_strided_slice %92 {offsets = [0, 128], sizes = [8, 128], strides = [1, 1]} : vector<8x512xf32> to vector<8x128xf32>
    %cst_104 = arith.constant 0.000000e+00 : f32
    %102 = vector.broadcast %cst_104 : f32 to vector<8x128xf32>
    %103 = arith.subf %102, %101 : vector<8x128xf32>
    %104 = math.exp %103 : vector<8x128xf32>
    %cst_105 = arith.constant 1.000000e+00 : f32
    %105 = vector.broadcast %cst_105 : f32 to vector<8x128xf32>
    %106 = arith.addf %105, %104 : vector<8x128xf32>
    %cst_106 = arith.constant 1.000000e+00 : f32
    %107 = vector.broadcast %cst_106 : f32 to vector<8x128xf32>
    %108 = arith.divf %107, %106 : vector<8x128xf32>
    %109 = vector.extract_strided_slice %92 {offsets = [0, 256], sizes = [8, 128], strides = [1, 1]} : vector<8x512xf32> to vector<8x128xf32>
    %110 = math.tanh %109 : vector<8x128xf32>
    %111 = vector.extract_strided_slice %92 {offsets = [0, 384], sizes = [8, 128], strides = [1, 1]} : vector<8x512xf32> to vector<8x128xf32>
    %cst_107 = arith.constant 0.000000e+00 : f32
    %112 = vector.broadcast %cst_107 : f32 to vector<8x128xf32>
    %113 = arith.subf %112, %111 : vector<8x128xf32>
    %114 = math.exp %113 : vector<8x128xf32>
    %cst_108 = arith.constant 1.000000e+00 : f32
    %115 = vector.broadcast %cst_108 : f32 to vector<8x128xf32>
    %116 = arith.addf %115, %114 : vector<8x128xf32>
    %cst_109 = arith.constant 1.000000e+00 : f32
    %117 = vector.broadcast %cst_109 : f32 to vector<8x128xf32>
    %118 = arith.divf %117, %116 : vector<8x128xf32>
    %119 = arith.mulf %108, %89 : vector<8x128xf32>
    %120 = arith.mulf %100, %110 : vector<8x128xf32>
    %121 = arith.addf %119, %120 : vector<8x128xf32>
    %122 = math.tanh %121 : vector<8x128xf32>
    %123 = arith.mulf %118, %122 : vector<8x128xf32>
    %124 = vector.extract_strided_slice %123 {offsets = [0, 0], sizes = [8, 64], strides = [1, 1]} : vector<8x128xf32> to vector<8x64xf32>
    %c0_110 = arith.constant 0 : index
    %c0_111 = arith.constant 0 : index
    %125 = vector.load %arg11[%c0_110, %c0_111] : memref<128x128xf32, #tpu.memory_space<vmem>>, vector<8x64xf32>
    tpu.vector_store %arg11[%c0_110, %c0_111], %124 {strides = array<i32>} : memref<128x128xf32, #tpu.memory_space<vmem>>, vector<8x64xf32>,
    %126 = vector.extract_strided_slice %123 {offsets = [0, 64], sizes = [8, 64], strides = [1, 1]} : vector<8x128xf32> to vector<8x64xf32>
    %c120_112 = arith.constant 120 : index
    %c64_113 = arith.constant 64 : index
    %127 = vector.load %arg11[%c120_112, %c64_113] : memref<128x128xf32, #tpu.memory_space<vmem>>, vector<8x64xf32>
    tpu.vector_store %arg11[%c120_112, %c64_113], %126 {strides = array<i32>} : memref<128x128xf32, #tpu.memory_space<vmem>>, vector<8x64xf32>,
    %c8_114 = arith.constant 8 : index
    %c0_115 = arith.constant 0 : index
    %128 = vector.load %arg10[%c8_114, %c0_115] : memref<128x512xf32, #tpu.memory_space<vmem>>, vector<8x512xf32>
    %cst_116 = arith.constant dense<0.000000e+00> : vector<8x512xf32>
    %129 = tpu.matmul %123, %87, %cst_116 {dimension_numbers = #tpu.dot_dimension_numbers<[1], [0], [0], [1], [0, 0, 1, 1], [], []>} : vector<8x128xf32>, vector<128x512xf32>, vector<8x512xf32> -> vector<8x512xf32>
    %130 = arith.addf %128, %129 : vector<8x512xf32>
    %131 = vector.extract_strided_slice %130 {offsets = [0, 0], sizes = [8, 128], strides = [1, 1]} : vector<8x512xf32> to vector<8x128xf32>
    %cst_117 = arith.constant 0.000000e+00 : f32
    %132 = vector.broadcast %cst_117 : f32 to vector<8x128xf32>
    %133 = arith.subf %132, %131 : vector<8x128xf32>
    %134 = math.exp %133 : vector<8x128xf32>
    %cst_118 = arith.constant 1.000000e+00 : f32
    %135 = vector.broadcast %cst_118 : f32 to vector<8x128xf32>
    %136 = arith.addf %135, %134 : vector<8x128xf32>
    %cst_119 = arith.constant 1.000000e+00 : f32
    %137 = vector.broadcast %cst_119 : f32 to vector<8x128xf32>
    %138 = arith.divf %137, %136 : vector<8x128xf32>
    %139 = vector.extract_strided_slice %130 {offsets = [0, 128], sizes = [8, 128], strides = [1, 1]} : vector<8x512xf32> to vector<8x128xf32>
    %cst_120 = arith.constant 0.000000e+00 : f32
    %140 = vector.broadcast %cst_120 : f32 to vector<8x128xf32>
    %141 = arith.subf %140, %139 : vector<8x128xf32>
    %142 = math.exp %141 : vector<8x128xf32>
    %cst_121 = arith.constant 1.000000e+00 : f32
    %143 = vector.broadcast %cst_121 : f32 to vector<8x128xf32>
    %144 = arith.addf %143, %142 : vector<8x128xf32>
    %cst_122 = arith.constant 1.000000e+00 : f32
    %145 = vector.broadcast %cst_122 : f32 to vector<8x128xf32>
    %146 = arith.divf %145, %144 : vector<8x128xf32>
    %147 = vector.extract_strided_slice %130 {offsets = [0, 256], sizes = [8, 128], strides = [1, 1]} : vector<8x512xf32> to vector<8x128xf32>
    %148 = math.tanh %147 : vector<8x128xf32>
    %149 = vector.extract_strided_slice %130 {offsets = [0, 384], sizes = [8, 128], strides = [1, 1]} : vector<8x512xf32> to vector<8x128xf32>
    %cst_123 = arith.constant 0.000000e+00 : f32
    %150 = vector.broadcast %cst_123 : f32 to vector<8x128xf32>
    %151 = arith.subf %150, %149 : vector<8x128xf32>
    %152 = math.exp %151 : vector<8x128xf32>
    %cst_124 = arith.constant 1.000000e+00 : f32
    %153 = vector.broadcast %cst_124 : f32 to vector<8x128xf32>
    %154 = arith.addf %153, %152 : vector<8x128xf32>
    %cst_125 = arith.constant 1.000000e+00 : f32
    %155 = vector.broadcast %cst_125 : f32 to vector<8x128xf32>
    %156 = arith.divf %155, %154 : vector<8x128xf32>
    %157 = arith.mulf %146, %121 : vector<8x128xf32>
    %158 = arith.mulf %138, %148 : vector<8x128xf32>
    %159 = arith.addf %157, %158 : vector<8x128xf32>
    %160 = math.tanh %159 : vector<8x128xf32>
    %161 = arith.mulf %156, %160 : vector<8x128xf32>
    %162 = vector.extract_strided_slice %161 {offsets = [0, 0], sizes = [8, 64], strides = [1, 1]} : vector<8x128xf32> to vector<8x64xf32>
    %c8_126 = arith.constant 8 : index
    %c0_127 = arith.constant 0 : index
    %163 = vector.load %arg11[%c8_126, %c0_127] : memref<128x128xf32, #tpu.memory_space<vmem>>, vector<8x64xf32>
    tpu.vector_store %arg11[%c8_126, %c0_127], %162 {strides = array<i32>} : memref<128x128xf32, #tpu.memory_space<vmem>>, vector<8x64xf32>,
    %164 = vector.extract_strided_slice %161 {offsets = [0, 64], sizes = [8, 64], strides = [1, 1]} : vector<8x128xf32> to vector<8x64xf32>
    %c112_128 = arith.constant 112 : index
    %c64_129 = arith.constant 64 : index
    %165 = vector.load %arg11[%c112_128, %c64_129] : memref<128x128xf32, #tpu.memory_space<vmem>>, vector<8x64xf32>
    tpu.vector_store %arg11[%c112_128, %c64_129], %164 {strides = array<i32>} : memref<128x128xf32, #tpu.memory_space<vmem>>, vector<8x64xf32>,
    %c16_130 = arith.constant 16 : index
    %c0_131 = arith.constant 0 : index
    %166 = vector.load %arg10[%c16_130, %c0_131] : memref<128x512xf32, #tpu.memory_space<vmem>>, vector<8x512xf32>
    %cst_132 = arith.constant dense<0.000000e+00> : vector<8x512xf32>
    %167 = tpu.matmul %161, %87, %cst_132 {dimension_numbers = #tpu.dot_dimension_numbers<[1], [0], [0], [1], [0, 0, 1, 1], [], []>} : vector<8x128xf32>, vector<128x512xf32>, vector<8x512xf32> -> vector<8x512xf32>
    %168 = arith.addf %166, %167 : vector<8x512xf32>
    %169 = vector.extract_strided_slice %168 {offsets = [0, 0], sizes = [8, 128], strides = [1, 1]} : vector<8x512xf32> to vector<8x128xf32>
    %cst_133 = arith.constant 0.000000e+00 : f32
    %170 = vector.broadcast %cst_133 : f32 to vector<8x128xf32>
    %171 = arith.subf %170, %169 : vector<8x128xf32>
    %172 = math.exp %171 : vector<8x128xf32>
    %cst_134 = arith.constant 1.000000e+00 : f32
    %173 = vector.broadcast %cst_134 : f32 to vector<8x128xf32>
    %174 = arith.addf %173, %172 : vector<8x128xf32>
    %cst_135 = arith.constant 1.000000e+00 : f32
    %175 = vector.broadcast %cst_135 : f32 to vector<8x128xf32>
    %176 = arith.divf %175, %174 : vector<8x128xf32>
    %177 = vector.extract_strided_slice %168 {offsets = [0, 128], sizes = [8, 128], strides = [1, 1]} : vector<8x512xf32> to vector<8x128xf32>
    %cst_136 = arith.constant 0.000000e+00 : f32
    %178 = vector.broadcast %cst_136 : f32 to vector<8x128xf32>
    %179 = arith.subf %178, %177 : vector<8x128xf32>
    %180 = math.exp %179 : vector<8x128xf32>
    %cst_137 = arith.constant 1.000000e+00 : f32
    %181 = vector.broadcast %cst_137 : f32 to vector<8x128xf32>
    %182 = arith.addf %181, %180 : vector<8x128xf32>
    %cst_138 = arith.constant 1.000000e+00 : f32
    %183 = vector.broadcast %cst_138 : f32 to vector<8x128xf32>
    %184 = arith.divf %183, %182 : vector<8x128xf32>
    %185 = vector.extract_strided_slice %168 {offsets = [0, 256], sizes = [8, 128], strides = [1, 1]} : vector<8x512xf32> to vector<8x128xf32>
    %186 = math.tanh %185 : vector<8x128xf32>
    %187 = vector.extract_strided_slice %168 {offsets = [0, 384], sizes = [8, 128], strides = [1, 1]} : vector<8x512xf32> to vector<8x128xf32>
    %cst_139 = arith.constant 0.000000e+00 : f32
    %188 = vector.broadcast %cst_139 : f32 to vector<8x128xf32>
    %189 = arith.subf %188, %187 : vector<8x128xf32>
    %190 = math.exp %189 : vector<8x128xf32>
    %cst_140 = arith.constant 1.000000e+00 : f32
    %191 = vector.broadcast %cst_140 : f32 to vector<8x128xf32>
    %192 = arith.addf %191, %190 : vector<8x128xf32>
    %cst_141 = arith.constant 1.000000e+00 : f32
    %193 = vector.broadcast %cst_141 : f32 to vector<8x128xf32>
    %194 = arith.divf %193, %192 : vector<8x128xf32>
    %195 = arith.mulf %184, %159 : vector<8x128xf32>
    %196 = arith.mulf %176, %186 : vector<8x128xf32>
    %197 = arith.addf %195, %196 : vector<8x128xf32>
    %198 = math.tanh %197 : vector<8x128xf32>
    %199 = arith.mulf %194, %198 : vector<8x128xf32>
    %200 = vector.extract_strided_slice %199 {offsets = [0, 0], sizes = [8, 64], strides = [1, 1]} : vector<8x128xf32> to vector<8x64xf32>
    %c16_142 = arith.constant 16 : index
    %c0_143 = arith.constant 0 : index
    %201 = vector.load %arg11[%c16_142, %c0_143] : memref<128x128xf32, #tpu.memory_space<vmem>>, vector<8x64xf32>
    tpu.vector_store %arg11[%c16_142, %c0_143], %200 {strides = array<i32>} : memref<128x128xf32, #tpu.memory_space<vmem>>, vector<8x64xf32>,
    %202 = vector.extract_strided_slice %199 {offsets = [0, 64], sizes = [8, 64], strides = [1, 1]} : vector<8x128xf32> to vector<8x64xf32>
    %c104_144 = arith.constant 104 : index
    %c64_145 = arith.constant 64 : index
    %203 = vector.load %arg11[%c104_144, %c64_145] : memref<128x128xf32, #tpu.memory_space<vmem>>, vector<8x64xf32>
    tpu.vector_store %arg11[%c104_144, %c64_145], %202 {strides = array<i32>} : memref<128x128xf32, #tpu.memory_space<vmem>>, vector<8x64xf32>,
    %c24_146 = arith.constant 24 : index
    %c0_147 = arith.constant 0 : index
    %204 = vector.load %arg10[%c24_146, %c0_147] : memref<128x512xf32, #tpu.memory_space<vmem>>, vector<8x512xf32>
    %cst_148 = arith.constant dense<0.000000e+00> : vector<8x512xf32>
    %205 = tpu.matmul %199, %87, %cst_148 {dimension_numbers = #tpu.dot_dimension_numbers<[1], [0], [0], [1], [0, 0, 1, 1], [], []>} : vector<8x128xf32>, vector<128x512xf32>, vector<8x512xf32> -> vector<8x512xf32>
    %206 = arith.addf %204, %205 : vector<8x512xf32>
    %207 = vector.extract_strided_slice %206 {offsets = [0, 0], sizes = [8, 128], strides = [1, 1]} : vector<8x512xf32> to vector<8x128xf32>
    %cst_149 = arith.constant 0.000000e+00 : f32
    %208 = vector.broadcast %cst_149 : f32 to vector<8x128xf32>
    %209 = arith.subf %208, %207 : vector<8x128xf32>
    %210 = math.exp %209 : vector<8x128xf32>
    %cst_150 = arith.constant 1.000000e+00 : f32
    %211 = vector.broadcast %cst_150 : f32 to vector<8x128xf32>
    %212 = arith.addf %211, %210 : vector<8x128xf32>
    %cst_151 = arith.constant 1.000000e+00 : f32
    %213 = vector.broadcast %cst_151 : f32 to vector<8x128xf32>
    %214 = arith.divf %213, %212 : vector<8x128xf32>
    %215 = vector.extract_strided_slice %206 {offsets = [0, 128], sizes = [8, 128], strides = [1, 1]} : vector<8x512xf32> to vector<8x128xf32>
    %cst_152 = arith.constant 0.000000e+00 : f32
    %216 = vector.broadcast %cst_152 : f32 to vector<8x128xf32>
    %217 = arith.subf %216, %215 : vector<8x128xf32>
    %218 = math.exp %217 : vector<8x128xf32>
    %cst_153 = arith.constant 1.000000e+00 : f32
    %219 = vector.broadcast %cst_153 : f32 to vector<8x128xf32>
    %220 = arith.addf %219, %218 : vector<8x128xf32>
    %cst_154 = arith.constant 1.000000e+00 : f32
    %221 = vector.broadcast %cst_154 : f32 to vector<8x128xf32>
    %222 = arith.divf %221, %220 : vector<8x128xf32>
    %223 = vector.extract_strided_slice %206 {offsets = [0, 256], sizes = [8, 128], strides = [1, 1]} : vector<8x512xf32> to vector<8x128xf32>
    %224 = math.tanh %223 : vector<8x128xf32>
    %225 = vector.extract_strided_slice %206 {offsets = [0, 384], sizes = [8, 128], strides = [1, 1]} : vector<8x512xf32> to vector<8x128xf32>
    %cst_155 = arith.constant 0.000000e+00 : f32
    %226 = vector.broadcast %cst_155 : f32 to vector<8x128xf32>
    %227 = arith.subf %226, %225 : vector<8x128xf32>
    %228 = math.exp %227 : vector<8x128xf32>
    %cst_156 = arith.constant 1.000000e+00 : f32
    %229 = vector.broadcast %cst_156 : f32 to vector<8x128xf32>
    %230 = arith.addf %229, %228 : vector<8x128xf32>
    %cst_157 = arith.constant 1.000000e+00 : f32
    %231 = vector.broadcast %cst_157 : f32 to vector<8x128xf32>
    %232 = arith.divf %231, %230 : vector<8x128xf32>
    %233 = arith.mulf %222, %197 : vector<8x128xf32>
    %234 = arith.mulf %214, %224 : vector<8x128xf32>
    %235 = arith.addf %233, %234 : vector<8x128xf32>
    %236 = math.tanh %235 : vector<8x128xf32>
    %237 = arith.mulf %232, %236 : vector<8x128xf32>
    %238 = vector.extract_strided_slice %237 {offsets = [0, 0], sizes = [8, 64], strides = [1, 1]} : vector<8x128xf32> to vector<8x64xf32>
    %c24_158 = arith.constant 24 : index
    %c0_159 = arith.constant 0 : index
    %239 = vector.load %arg11[%c24_158, %c0_159] : memref<128x128xf32, #tpu.memory_space<vmem>>, vector<8x64xf32>
    tpu.vector_store %arg11[%c24_158, %c0_159], %238 {strides = array<i32>} : memref<128x128xf32, #tpu.memory_space<vmem>>, vector<8x64xf32>,
    %240 = vector.extract_strided_slice %237 {offsets = [0, 64], sizes = [8, 64], strides = [1, 1]} : vector<8x128xf32> to vector<8x64xf32>
    %c96_160 = arith.constant 96 : index
    %c64_161 = arith.constant 64 : index
    %241 = vector.load %arg11[%c96_160, %c64_161] : memref<128x128xf32, #tpu.memory_space<vmem>>, vector<8x64xf32>
    tpu.vector_store %arg11[%c96_160, %c64_161], %240 {strides = array<i32>} : memref<128x128xf32, #tpu.memory_space<vmem>>, vector<8x64xf32>,
    %c32_162 = arith.constant 32 : index
    %c0_163 = arith.constant 0 : index
    %242 = vector.load %arg10[%c32_162, %c0_163] : memref<128x512xf32, #tpu.memory_space<vmem>>, vector<8x512xf32>
    %cst_164 = arith.constant dense<0.000000e+00> : vector<8x512xf32>
    %243 = tpu.matmul %237, %87, %cst_164 {dimension_numbers = #tpu.dot_dimension_numbers<[1], [0], [0], [1], [0, 0, 1, 1], [], []>} : vector<8x128xf32>, vector<128x512xf32>, vector<8x512xf32> -> vector<8x512xf32>
    %244 = arith.addf %242, %243 : vector<8x512xf32>
    %245 = vector.extract_strided_slice %244 {offsets = [0, 0], sizes = [8, 128], strides = [1, 1]} : vector<8x512xf32> to vector<8x128xf32>
    %cst_165 = arith.constant 0.000000e+00 : f32
    %246 = vector.broadcast %cst_165 : f32 to vector<8x128xf32>
    %247 = arith.subf %246, %245 : vector<8x128xf32>
    %248 = math.exp %247 : vector<8x128xf32>
    %cst_166 = arith.constant 1.000000e+00 : f32
    %249 = vector.broadcast %cst_166 : f32 to vector<8x128xf32>
    %250 = arith.addf %249, %248 : vector<8x128xf32>
    %cst_167 = arith.constant 1.000000e+00 : f32
    %251 = vector.broadcast %cst_167 : f32 to vector<8x128xf32>
    %252 = arith.divf %251, %250 : vector<8x128xf32>
    %253 = vector.extract_strided_slice %244 {offsets = [0, 128], sizes = [8, 128], strides = [1, 1]} : vector<8x512xf32> to vector<8x128xf32>
    %cst_168 = arith.constant 0.000000e+00 : f32
    %254 = vector.broadcast %cst_168 : f32 to vector<8x128xf32>
    %255 = arith.subf %254, %253 : vector<8x128xf32>
    %256 = math.exp %255 : vector<8x128xf32>
    %cst_169 = arith.constant 1.000000e+00 : f32
    %257 = vector.broadcast %cst_169 : f32 to vector<8x128xf32>
    %258 = arith.addf %257, %256 : vector<8x128xf32>
    %cst_170 = arith.constant 1.000000e+00 : f32
    %259 = vector.broadcast %cst_170 : f32 to vector<8x128xf32>
    %260 = arith.divf %259, %258 : vector<8x128xf32>
    %261 = vector.extract_strided_slice %244 {offsets = [0, 256], sizes = [8, 128], strides = [1, 1]} : vector<8x512xf32> to vector<8x128xf32>
    %262 = math.tanh %261 : vector<8x128xf32>
    %263 = vector.extract_strided_slice %244 {offsets = [0, 384], sizes = [8, 128], strides = [1, 1]} : vector<8x512xf32> to vector<8x128xf32>
    %cst_171 = arith.constant 0.000000e+00 : f32
    %264 = vector.broadcast %cst_171 : f32 to vector<8x128xf32>
    %265 = arith.subf %264, %263 : vector<8x128xf32>
    %266 = math.exp %265 : vector<8x128xf32>
    %cst_172 = arith.constant 1.000000e+00 : f32
    %267 = vector.broadcast %cst_172 : f32 to vector<8x128xf32>
    %268 = arith.addf %267, %266 : vector<8x128xf32>
    %cst_173 = arith.constant 1.000000e+00 : f32
    %269 = vector.broadcast %cst_173 : f32 to vector<8x128xf32>
    %270 = arith.divf %269, %268 : vector<8x128xf32>
    %271 = arith.mulf %260, %235 : vector<8x128xf32>
    %272 = arith.mulf %252, %262 : vector<8x128xf32>
    %273 = arith.addf %271, %272 : vector<8x128xf32>
    %274 = math.tanh %273 : vector<8x128xf32>
    %275 = arith.mulf %270, %274 : vector<8x128xf32>
    %276 = vector.extract_strided_slice %275 {offsets = [0, 0], sizes = [8, 64], strides = [1, 1]} : vector<8x128xf32> to vector<8x64xf32>
    %c32_174 = arith.constant 32 : index
    %c0_175 = arith.constant 0 : index
    %277 = vector.load %arg11[%c32_174, %c0_175] : memref<128x128xf32, #tpu.memory_space<vmem>>, vector<8x64xf32>
    tpu.vector_store %arg11[%c32_174, %c0_175], %276 {strides = array<i32>} : memref<128x128xf32, #tpu.memory_space<vmem>>, vector<8x64xf32>,
    %278 = vector.extract_strided_slice %275 {offsets = [0, 64], sizes = [8, 64], strides = [1, 1]} : vector<8x128xf32> to vector<8x64xf32>
    %c88_176 = arith.constant 88 : index
    %c64_177 = arith.constant 64 : index
    %279 = vector.load %arg11[%c88_176, %c64_177] : memref<128x128xf32, #tpu.memory_space<vmem>>, vector<8x64xf32>
    tpu.vector_store %arg11[%c88_176, %c64_177], %278 {strides = array<i32>} : memref<128x128xf32, #tpu.memory_space<vmem>>, vector<8x64xf32>,
    %c40_178 = arith.constant 40 : index
    %c0_179 = arith.constant 0 : index
    %280 = vector.load %arg10[%c40_178, %c0_179] : memref<128x512xf32, #tpu.memory_space<vmem>>, vector<8x512xf32>
    %cst_180 = arith.constant dense<0.000000e+00> : vector<8x512xf32>
    %281 = tpu.matmul %275, %87, %cst_180 {dimension_numbers = #tpu.dot_dimension_numbers<[1], [0], [0], [1], [0, 0, 1, 1], [], []>} : vector<8x128xf32>, vector<128x512xf32>, vector<8x512xf32> -> vector<8x512xf32>
    %282 = arith.addf %280, %281 : vector<8x512xf32>
    %283 = vector.extract_strided_slice %282 {offsets = [0, 0], sizes = [8, 128], strides = [1, 1]} : vector<8x512xf32> to vector<8x128xf32>
    %cst_181 = arith.constant 0.000000e+00 : f32
    %284 = vector.broadcast %cst_181 : f32 to vector<8x128xf32>
    %285 = arith.subf %284, %283 : vector<8x128xf32>
    %286 = math.exp %285 : vector<8x128xf32>
    %cst_182 = arith.constant 1.000000e+00 : f32
    %287 = vector.broadcast %cst_182 : f32 to vector<8x128xf32>
    %288 = arith.addf %287, %286 : vector<8x128xf32>
    %cst_183 = arith.constant 1.000000e+00 : f32
    %289 = vector.broadcast %cst_183 : f32 to vector<8x128xf32>
    %290 = arith.divf %289, %288 : vector<8x128xf32>
    %291 = vector.extract_strided_slice %282 {offsets = [0, 128], sizes = [8, 128], strides = [1, 1]} : vector<8x512xf32> to vector<8x128xf32>
    %cst_184 = arith.constant 0.000000e+00 : f32
    %292 = vector.broadcast %cst_184 : f32 to vector<8x128xf32>
    %293 = arith.subf %292, %291 : vector<8x128xf32>
    %294 = math.exp %293 : vector<8x128xf32>
    %cst_185 = arith.constant 1.000000e+00 : f32
    %295 = vector.broadcast %cst_185 : f32 to vector<8x128xf32>
    %296 = arith.addf %295, %294 : vector<8x128xf32>
    %cst_186 = arith.constant 1.000000e+00 : f32
    %297 = vector.broadcast %cst_186 : f32 to vector<8x128xf32>
    %298 = arith.divf %297, %296 : vector<8x128xf32>
    %299 = vector.extract_strided_slice %282 {offsets = [0, 256], sizes = [8, 128], strides = [1, 1]} : vector<8x512xf32> to vector<8x128xf32>
    %300 = math.tanh %299 : vector<8x128xf32>
    %301 = vector.extract_strided_slice %282 {offsets = [0, 384], sizes = [8, 128], strides = [1, 1]} : vector<8x512xf32> to vector<8x128xf32>
    %cst_187 = arith.constant 0.000000e+00 : f32
    %302 = vector.broadcast %cst_187 : f32 to vector<8x128xf32>
    %303 = arith.subf %302, %301 : vector<8x128xf32>
    %304 = math.exp %303 : vector<8x128xf32>
    %cst_188 = arith.constant 1.000000e+00 : f32
    %305 = vector.broadcast %cst_188 : f32 to vector<8x128xf32>
    %306 = arith.addf %305, %304 : vector<8x128xf32>
    %cst_189 = arith.constant 1.000000e+00 : f32
    %307 = vector.broadcast %cst_189 : f32 to vector<8x128xf32>
    %308 = arith.divf %307, %306 : vector<8x128xf32>
    %309 = arith.mulf %298, %273 : vector<8x128xf32>
    %310 = arith.mulf %290, %300 : vector<8x128xf32>
    %311 = arith.addf %309, %310 : vector<8x128xf32>
    %312 = math.tanh %311 : vector<8x128xf32>
    %313 = arith.mulf %308, %312 : vector<8x128xf32>
    %314 = vector.extract_strided_slice %313 {offsets = [0, 0], sizes = [8, 64], strides = [1, 1]} : vector<8x128xf32> to vector<8x64xf32>
    %c40_190 = arith.constant 40 : index
    %c0_191 = arith.constant 0 : index
    %315 = vector.load %arg11[%c40_190, %c0_191] : memref<128x128xf32, #tpu.memory_space<vmem>>, vector<8x64xf32>
    tpu.vector_store %arg11[%c40_190, %c0_191], %314 {strides = array<i32>} : memref<128x128xf32, #tpu.memory_space<vmem>>, vector<8x64xf32>,
    %316 = vector.extract_strided_slice %313 {offsets = [0, 64], sizes = [8, 64], strides = [1, 1]} : vector<8x128xf32> to vector<8x64xf32>
    %c80_192 = arith.constant 80 : index
    %c64_193 = arith.constant 64 : index
    %317 = vector.load %arg11[%c80_192, %c64_193] : memref<128x128xf32, #tpu.memory_space<vmem>>, vector<8x64xf32>
    tpu.vector_store %arg11[%c80_192, %c64_193], %316 {strides = array<i32>} : memref<128x128xf32, #tpu.memory_space<vmem>>, vector<8x64xf32>,
    %c48_194 = arith.constant 48 : index
    %c0_195 = arith.constant 0 : index
    %318 = vector.load %arg10[%c48_194, %c0_195] : memref<128x512xf32, #tpu.memory_space<vmem>>, vector<8x512xf32>
    %cst_196 = arith.constant dense<0.000000e+00> : vector<8x512xf32>
    %319 = tpu.matmul %313, %87, %cst_196 {dimension_numbers = #tpu.dot_dimension_numbers<[1], [0], [0], [1], [0, 0, 1, 1], [], []>} : vector<8x128xf32>, vector<128x512xf32>, vector<8x512xf32> -> vector<8x512xf32>
    %320 = arith.addf %318, %319 : vector<8x512xf32>
    %321 = vector.extract_strided_slice %320 {offsets = [0, 0], sizes = [8, 128], strides = [1, 1]} : vector<8x512xf32> to vector<8x128xf32>
    %cst_197 = arith.constant 0.000000e+00 : f32
    %322 = vector.broadcast %cst_197 : f32 to vector<8x128xf32>
    %323 = arith.subf %322, %321 : vector<8x128xf32>
    %324 = math.exp %323 : vector<8x128xf32>
    %cst_198 = arith.constant 1.000000e+00 : f32
    %325 = vector.broadcast %cst_198 : f32 to vector<8x128xf32>
    %326 = arith.addf %325, %324 : vector<8x128xf32>
    %cst_199 = arith.constant 1.000000e+00 : f32
    %327 = vector.broadcast %cst_199 : f32 to vector<8x128xf32>
    %328 = arith.divf %327, %326 : vector<8x128xf32>
    %329 = vector.extract_strided_slice %320 {offsets = [0, 128], sizes = [8, 128], strides = [1, 1]} : vector<8x512xf32> to vector<8x128xf32>
    %cst_200 = arith.constant 0.000000e+00 : f32
    %330 = vector.broadcast %cst_200 : f32 to vector<8x128xf32>
    %331 = arith.subf %330, %329 : vector<8x128xf32>
    %332 = math.exp %331 : vector<8x128xf32>
    %cst_201 = arith.constant 1.000000e+00 : f32
    %333 = vector.broadcast %cst_201 : f32 to vector<8x128xf32>
    %334 = arith.addf %333, %332 : vector<8x128xf32>
    %cst_202 = arith.constant 1.000000e+00 : f32
    %335 = vector.broadcast %cst_202 : f32 to vector<8x128xf32>
    %336 = arith.divf %335, %334 : vector<8x128xf32>
    %337 = vector.extract_strided_slice %320 {offsets = [0, 256], sizes = [8, 128], strides = [1, 1]} : vector<8x512xf32> to vector<8x128xf32>
    %338 = math.tanh %337 : vector<8x128xf32>
    %339 = vector.extract_strided_slice %320 {offsets = [0, 384], sizes = [8, 128], strides = [1, 1]} : vector<8x512xf32> to vector<8x128xf32>
    %cst_203 = arith.constant 0.000000e+00 : f32
    %340 = vector.broadcast %cst_203 : f32 to vector<8x128xf32>
    %341 = arith.subf %340, %339 : vector<8x128xf32>
    %342 = math.exp %341 : vector<8x128xf32>
    %cst_204 = arith.constant 1.000000e+00 : f32
    %343 = vector.broadcast %cst_204 : f32 to vector<8x128xf32>
    %344 = arith.addf %343, %342 : vector<8x128xf32>
    %cst_205 = arith.constant 1.000000e+00 : f32
    %345 = vector.broadcast %cst_205 : f32 to vector<8x128xf32>
    %346 = arith.divf %345, %344 : vector<8x128xf32>
    %347 = arith.mulf %336, %311 : vector<8x128xf32>
    %348 = arith.mulf %328, %338 : vector<8x128xf32>
    %349 = arith.addf %347, %348 : vector<8x128xf32>
    %350 = math.tanh %349 : vector<8x128xf32>
    %351 = arith.mulf %346, %350 : vector<8x128xf32>
    %352 = vector.extract_strided_slice %351 {offsets = [0, 0], sizes = [8, 64], strides = [1, 1]} : vector<8x128xf32> to vector<8x64xf32>
    %c48_206 = arith.constant 48 : index
    %c0_207 = arith.constant 0 : index
    %353 = vector.load %arg11[%c48_206, %c0_207] : memref<128x128xf32, #tpu.memory_space<vmem>>, vector<8x64xf32>
    tpu.vector_store %arg11[%c48_206, %c0_207], %352 {strides = array<i32>} : memref<128x128xf32, #tpu.memory_space<vmem>>, vector<8x64xf32>,
    %354 = vector.extract_strided_slice %351 {offsets = [0, 64], sizes = [8, 64], strides = [1, 1]} : vector<8x128xf32> to vector<8x64xf32>
    %c72_208 = arith.constant 72 : index
    %c64_209 = arith.constant 64 : index
    %355 = vector.load %arg11[%c72_208, %c64_209] : memref<128x128xf32, #tpu.memory_space<vmem>>, vector<8x64xf32>
    tpu.vector_store %arg11[%c72_208, %c64_209], %354 {strides = array<i32>} : memref<128x128xf32, #tpu.memory_space<vmem>>, vector<8x64xf32>,
    %c56_210 = arith.constant 56 : index
    %c0_211 = arith.constant 0 : index
    %356 = vector.load %arg10[%c56_210, %c0_211] : memref<128x512xf32, #tpu.memory_space<vmem>>, vector<8x512xf32>
    %cst_212 = arith.constant dense<0.000000e+00> : vector<8x512xf32>
    %357 = tpu.matmul %351, %87, %cst_212 {dimension_numbers = #tpu.dot_dimension_numbers<[1], [0], [0], [1], [0, 0, 1, 1], [], []>} : vector<8x128xf32>, vector<128x512xf32>, vector<8x512xf32> -> vector<8x512xf32>
    %358 = arith.addf %356, %357 : vector<8x512xf32>
    %359 = vector.extract_strided_slice %358 {offsets = [0, 0], sizes = [8, 128], strides = [1, 1]} : vector<8x512xf32> to vector<8x128xf32>
    %cst_213 = arith.constant 0.000000e+00 : f32
    %360 = vector.broadcast %cst_213 : f32 to vector<8x128xf32>
    %361 = arith.subf %360, %359 : vector<8x128xf32>
    %362 = math.exp %361 : vector<8x128xf32>
    %cst_214 = arith.constant 1.000000e+00 : f32
    %363 = vector.broadcast %cst_214 : f32 to vector<8x128xf32>
    %364 = arith.addf %363, %362 : vector<8x128xf32>
    %cst_215 = arith.constant 1.000000e+00 : f32
    %365 = vector.broadcast %cst_215 : f32 to vector<8x128xf32>
    %366 = arith.divf %365, %364 : vector<8x128xf32>
    %367 = vector.extract_strided_slice %358 {offsets = [0, 128], sizes = [8, 128], strides = [1, 1]} : vector<8x512xf32> to vector<8x128xf32>
    %cst_216 = arith.constant 0.000000e+00 : f32
    %368 = vector.broadcast %cst_216 : f32 to vector<8x128xf32>
    %369 = arith.subf %368, %367 : vector<8x128xf32>
    %370 = math.exp %369 : vector<8x128xf32>
    %cst_217 = arith.constant 1.000000e+00 : f32
    %371 = vector.broadcast %cst_217 : f32 to vector<8x128xf32>
    %372 = arith.addf %371, %370 : vector<8x128xf32>
    %cst_218 = arith.constant 1.000000e+00 : f32
    %373 = vector.broadcast %cst_218 : f32 to vector<8x128xf32>
    %374 = arith.divf %373, %372 : vector<8x128xf32>
    %375 = vector.extract_strided_slice %358 {offsets = [0, 256], sizes = [8, 128], strides = [1, 1]} : vector<8x512xf32> to vector<8x128xf32>
    %376 = math.tanh %375 : vector<8x128xf32>
    %377 = vector.extract_strided_slice %358 {offsets = [0, 384], sizes = [8, 128], strides = [1, 1]} : vector<8x512xf32> to vector<8x128xf32>
    %cst_219 = arith.constant 0.000000e+00 : f32
    %378 = vector.broadcast %cst_219 : f32 to vector<8x128xf32>
    %379 = arith.subf %378, %377 : vector<8x128xf32>
    %380 = math.exp %379 : vector<8x128xf32>
    %cst_220 = arith.constant 1.000000e+00 : f32
    %381 = vector.broadcast %cst_220 : f32 to vector<8x128xf32>
    %382 = arith.addf %381, %380 : vector<8x128xf32>
    %cst_221 = arith.constant 1.000000e+00 : f32
    %383 = vector.broadcast %cst_221 : f32 to vector<8x128xf32>
    %384 = arith.divf %383, %382 : vector<8x128xf32>
    %385 = arith.mulf %374, %349 : vector<8x128xf32>
    %386 = arith.mulf %366, %376 : vector<8x128xf32>
    %387 = arith.addf %385, %386 : vector<8x128xf32>
    %388 = math.tanh %387 : vector<8x128xf32>
    %389 = arith.mulf %384, %388 : vector<8x128xf32>
    %390 = vector.extract_strided_slice %389 {offsets = [0, 0], sizes = [8, 64], strides = [1, 1]} : vector<8x128xf32> to vector<8x64xf32>
    %c56_222 = arith.constant 56 : index
    %c0_223 = arith.constant 0 : index
    %391 = vector.load %arg11[%c56_222, %c0_223] : memref<128x128xf32, #tpu.memory_space<vmem>>, vector<8x64xf32>
    tpu.vector_store %arg11[%c56_222, %c0_223], %390 {strides = array<i32>} : memref<128x128xf32, #tpu.memory_space<vmem>>, vector<8x64xf32>,
    %392 = vector.extract_strided_slice %389 {offsets = [0, 64], sizes = [8, 64], strides = [1, 1]} : vector<8x128xf32> to vector<8x64xf32>
    %c64_224 = arith.constant 64 : index
    %c64_225 = arith.constant 64 : index
    %393 = vector.load %arg11[%c64_224, %c64_225] : memref<128x128xf32, #tpu.memory_space<vmem>>, vector<8x64xf32>
    tpu.vector_store %arg11[%c64_224, %c64_225], %392 {strides = array<i32>} : memref<128x128xf32, #tpu.memory_space<vmem>>, vector<8x64xf32>,
    %c64_226 = arith.constant 64 : index
    %c0_227 = arith.constant 0 : index
    %394 = vector.load %arg10[%c64_226, %c0_227] : memref<128x512xf32, #tpu.memory_space<vmem>>, vector<8x512xf32>
    %cst_228 = arith.constant dense<0.000000e+00> : vector<8x512xf32>
    %395 = tpu.matmul %389, %87, %cst_228 {dimension_numbers = #tpu.dot_dimension_numbers<[1], [0], [0], [1], [0, 0, 1, 1], [], []>} : vector<8x128xf32>, vector<128x512xf32>, vector<8x512xf32> -> vector<8x512xf32>
    %396 = arith.addf %394, %395 : vector<8x512xf32>
    %397 = vector.extract_strided_slice %396 {offsets = [0, 0], sizes = [8, 128], strides = [1, 1]} : vector<8x512xf32> to vector<8x128xf32>
    %cst_229 = arith.constant 0.000000e+00 : f32
    %398 = vector.broadcast %cst_229 : f32 to vector<8x128xf32>
    %399 = arith.subf %398, %397 : vector<8x128xf32>
    %400 = math.exp %399 : vector<8x128xf32>
    %cst_230 = arith.constant 1.000000e+00 : f32
    %401 = vector.broadcast %cst_230 : f32 to vector<8x128xf32>
    %402 = arith.addf %401, %400 : vector<8x128xf32>
    %cst_231 = arith.constant 1.000000e+00 : f32
    %403 = vector.broadcast %cst_231 : f32 to vector<8x128xf32>
    %404 = arith.divf %403, %402 : vector<8x128xf32>
    %405 = vector.extract_strided_slice %396 {offsets = [0, 128], sizes = [8, 128], strides = [1, 1]} : vector<8x512xf32> to vector<8x128xf32>
    %cst_232 = arith.constant 0.000000e+00 : f32
    %406 = vector.broadcast %cst_232 : f32 to vector<8x128xf32>
    %407 = arith.subf %406, %405 : vector<8x128xf32>
    %408 = math.exp %407 : vector<8x128xf32>
    %cst_233 = arith.constant 1.000000e+00 : f32
    %409 = vector.broadcast %cst_233 : f32 to vector<8x128xf32>
    %410 = arith.addf %409, %408 : vector<8x128xf32>
    %cst_234 = arith.constant 1.000000e+00 : f32
    %411 = vector.broadcast %cst_234 : f32 to vector<8x128xf32>
    %412 = arith.divf %411, %410 : vector<8x128xf32>
    %413 = vector.extract_strided_slice %396 {offsets = [0, 256], sizes = [8, 128], strides = [1, 1]} : vector<8x512xf32> to vector<8x128xf32>
    %414 = math.tanh %413 : vector<8x128xf32>
    %415 = vector.extract_strided_slice %396 {offsets = [0, 384], sizes = [8, 128], strides = [1, 1]} : vector<8x512xf32> to vector<8x128xf32>
    %cst_235 = arith.constant 0.000000e+00 : f32
    %416 = vector.broadcast %cst_235 : f32 to vector<8x128xf32>
    %417 = arith.subf %416, %415 : vector<8x128xf32>
    %418 = math.exp %417 : vector<8x128xf32>
    %cst_236 = arith.constant 1.000000e+00 : f32
    %419 = vector.broadcast %cst_236 : f32 to vector<8x128xf32>
    %420 = arith.addf %419, %418 : vector<8x128xf32>
    %cst_237 = arith.constant 1.000000e+00 : f32
    %421 = vector.broadcast %cst_237 : f32 to vector<8x128xf32>
    %422 = arith.divf %421, %420 : vector<8x128xf32>
    %423 = arith.mulf %412, %387 : vector<8x128xf32>
    %424 = arith.mulf %404, %414 : vector<8x128xf32>
    %425 = arith.addf %423, %424 : vector<8x128xf32>
    %426 = math.tanh %425 : vector<8x128xf32>
    %427 = arith.mulf %422, %426 : vector<8x128xf32>
    %428 = vector.extract_strided_slice %427 {offsets = [0, 0], sizes = [8, 64], strides = [1, 1]} : vector<8x128xf32> to vector<8x64xf32>
    %c64_238 = arith.constant 64 : index
    %c0_239 = arith.constant 0 : index
    %429 = vector.load %arg11[%c64_238, %c0_239] : memref<128x128xf32, #tpu.memory_space<vmem>>, vector<8x64xf32>
    tpu.vector_store %arg11[%c64_238, %c0_239], %428 {strides = array<i32>} : memref<128x128xf32, #tpu.memory_space<vmem>>, vector<8x64xf32>,
    %430 = vector.extract_strided_slice %427 {offsets = [0, 64], sizes = [8, 64], strides = [1, 1]} : vector<8x128xf32> to vector<8x64xf32>
    %c56_240 = arith.constant 56 : index
    %c64_241 = arith.constant 64 : index
    %431 = vector.load %arg11[%c56_240, %c64_241] : memref<128x128xf32, #tpu.memory_space<vmem>>, vector<8x64xf32>
    tpu.vector_store %arg11[%c56_240, %c64_241], %430 {strides = array<i32>} : memref<128x128xf32, #tpu.memory_space<vmem>>, vector<8x64xf32>,
    %c72_242 = arith.constant 72 : index
    %c0_243 = arith.constant 0 : index
    %432 = vector.load %arg10[%c72_242, %c0_243] : memref<128x512xf32, #tpu.memory_space<vmem>>, vector<8x512xf32>
    %cst_244 = arith.constant dense<0.000000e+00> : vector<8x512xf32>
    %433 = tpu.matmul %427, %87, %cst_244 {dimension_numbers = #tpu.dot_dimension_numbers<[1], [0], [0], [1], [0, 0, 1, 1], [], []>} : vector<8x128xf32>, vector<128x512xf32>, vector<8x512xf32> -> vector<8x512xf32>
    %434 = arith.addf %432, %433 : vector<8x512xf32>
    %435 = vector.extract_strided_slice %434 {offsets = [0, 0], sizes = [8, 128], strides = [1, 1]} : vector<8x512xf32> to vector<8x128xf32>
    %cst_245 = arith.constant 0.000000e+00 : f32
    %436 = vector.broadcast %cst_245 : f32 to vector<8x128xf32>
    %437 = arith.subf %436, %435 : vector<8x128xf32>
    %438 = math.exp %437 : vector<8x128xf32>
    %cst_246 = arith.constant 1.000000e+00 : f32
    %439 = vector.broadcast %cst_246 : f32 to vector<8x128xf32>
    %440 = arith.addf %439, %438 : vector<8x128xf32>
    %cst_247 = arith.constant 1.000000e+00 : f32
    %441 = vector.broadcast %cst_247 : f32 to vector<8x128xf32>
    %442 = arith.divf %441, %440 : vector<8x128xf32>
    %443 = vector.extract_strided_slice %434 {offsets = [0, 128], sizes = [8, 128], strides = [1, 1]} : vector<8x512xf32> to vector<8x128xf32>
    %cst_248 = arith.constant 0.000000e+00 : f32
    %444 = vector.broadcast %cst_248 : f32 to vector<8x128xf32>
    %445 = arith.subf %444, %443 : vector<8x128xf32>
    %446 = math.exp %445 : vector<8x128xf32>
    %cst_249 = arith.constant 1.000000e+00 : f32
    %447 = vector.broadcast %cst_249 : f32 to vector<8x128xf32>
    %448 = arith.addf %447, %446 : vector<8x128xf32>
    %cst_250 = arith.constant 1.000000e+00 : f32
    %449 = vector.broadcast %cst_250 : f32 to vector<8x128xf32>
    %450 = arith.divf %449, %448 : vector<8x128xf32>
    %451 = vector.extract_strided_slice %434 {offsets = [0, 256], sizes = [8, 128], strides = [1, 1]} : vector<8x512xf32> to vector<8x128xf32>
    %452 = math.tanh %451 : vector<8x128xf32>
    %453 = vector.extract_strided_slice %434 {offsets = [0, 384], sizes = [8, 128], strides = [1, 1]} : vector<8x512xf32> to vector<8x128xf32>
    %cst_251 = arith.constant 0.000000e+00 : f32
    %454 = vector.broadcast %cst_251 : f32 to vector<8x128xf32>
    %455 = arith.subf %454, %453 : vector<8x128xf32>
    %456 = math.exp %455 : vector<8x128xf32>
    %cst_252 = arith.constant 1.000000e+00 : f32
    %457 = vector.broadcast %cst_252 : f32 to vector<8x128xf32>
    %458 = arith.addf %457, %456 : vector<8x128xf32>
    %cst_253 = arith.constant 1.000000e+00 : f32
    %459 = vector.broadcast %cst_253 : f32 to vector<8x128xf32>
    %460 = arith.divf %459, %458 : vector<8x128xf32>
    %461 = arith.mulf %450, %425 : vector<8x128xf32>
    %462 = arith.mulf %442, %452 : vector<8x128xf32>
    %463 = arith.addf %461, %462 : vector<8x128xf32>
    %464 = math.tanh %463 : vector<8x128xf32>
    %465 = arith.mulf %460, %464 : vector<8x128xf32>
    %466 = vector.extract_strided_slice %465 {offsets = [0, 0], sizes = [8, 64], strides = [1, 1]} : vector<8x128xf32> to vector<8x64xf32>
    %c72_254 = arith.constant 72 : index
    %c0_255 = arith.constant 0 : index
    %467 = vector.load %arg11[%c72_254, %c0_255] : memref<128x128xf32, #tpu.memory_space<vmem>>, vector<8x64xf32>
    tpu.vector_store %arg11[%c72_254, %c0_255], %466 {strides = array<i32>} : memref<128x128xf32, #tpu.memory_space<vmem>>, vector<8x64xf32>,
    %468 = vector.extract_strided_slice %465 {offsets = [0, 64], sizes = [8, 64], strides = [1, 1]} : vector<8x128xf32> to vector<8x64xf32>
    %c48_256 = arith.constant 48 : index
    %c64_257 = arith.constant 64 : index
    %469 = vector.load %arg11[%c48_256, %c64_257] : memref<128x128xf32, #tpu.memory_space<vmem>>, vector<8x64xf32>
    tpu.vector_store %arg11[%c48_256, %c64_257], %468 {strides = array<i32>} : memref<128x128xf32, #tpu.memory_space<vmem>>, vector<8x64xf32>,
    %c80_258 = arith.constant 80 : index
    %c0_259 = arith.constant 0 : index
    %470 = vector.load %arg10[%c80_258, %c0_259] : memref<128x512xf32, #tpu.memory_space<vmem>>, vector<8x512xf32>
    %cst_260 = arith.constant dense<0.000000e+00> : vector<8x512xf32>
    %471 = tpu.matmul %465, %87, %cst_260 {dimension_numbers = #tpu.dot_dimension_numbers<[1], [0], [0], [1], [0, 0, 1, 1], [], []>} : vector<8x128xf32>, vector<128x512xf32>, vector<8x512xf32> -> vector<8x512xf32>
    %472 = arith.addf %470, %471 : vector<8x512xf32>
    %473 = vector.extract_strided_slice %472 {offsets = [0, 0], sizes = [8, 128], strides = [1, 1]} : vector<8x512xf32> to vector<8x128xf32>
    %cst_261 = arith.constant 0.000000e+00 : f32
    %474 = vector.broadcast %cst_261 : f32 to vector<8x128xf32>
    %475 = arith.subf %474, %473 : vector<8x128xf32>
    %476 = math.exp %475 : vector<8x128xf32>
    %cst_262 = arith.constant 1.000000e+00 : f32
    %477 = vector.broadcast %cst_262 : f32 to vector<8x128xf32>
    %478 = arith.addf %477, %476 : vector<8x128xf32>
    %cst_263 = arith.constant 1.000000e+00 : f32
    %479 = vector.broadcast %cst_263 : f32 to vector<8x128xf32>
    %480 = arith.divf %479, %478 : vector<8x128xf32>
    %481 = vector.extract_strided_slice %472 {offsets = [0, 128], sizes = [8, 128], strides = [1, 1]} : vector<8x512xf32> to vector<8x128xf32>
    %cst_264 = arith.constant 0.000000e+00 : f32
    %482 = vector.broadcast %cst_264 : f32 to vector<8x128xf32>
    %483 = arith.subf %482, %481 : vector<8x128xf32>
    %484 = math.exp %483 : vector<8x128xf32>
    %cst_265 = arith.constant 1.000000e+00 : f32
    %485 = vector.broadcast %cst_265 : f32 to vector<8x128xf32>
    %486 = arith.addf %485, %484 : vector<8x128xf32>
    %cst_266 = arith.constant 1.000000e+00 : f32
    %487 = vector.broadcast %cst_266 : f32 to vector<8x128xf32>
    %488 = arith.divf %487, %486 : vector<8x128xf32>
    %489 = vector.extract_strided_slice %472 {offsets = [0, 256], sizes = [8, 128], strides = [1, 1]} : vector<8x512xf32> to vector<8x128xf32>
    %490 = math.tanh %489 : vector<8x128xf32>
    %491 = vector.extract_strided_slice %472 {offsets = [0, 384], sizes = [8, 128], strides = [1, 1]} : vector<8x512xf32> to vector<8x128xf32>
    %cst_267 = arith.constant 0.000000e+00 : f32
    %492 = vector.broadcast %cst_267 : f32 to vector<8x128xf32>
    %493 = arith.subf %492, %491 : vector<8x128xf32>
    %494 = math.exp %493 : vector<8x128xf32>
    %cst_268 = arith.constant 1.000000e+00 : f32
    %495 = vector.broadcast %cst_268 : f32 to vector<8x128xf32>
    %496 = arith.addf %495, %494 : vector<8x128xf32>
    %cst_269 = arith.constant 1.000000e+00 : f32
    %497 = vector.broadcast %cst_269 : f32 to vector<8x128xf32>
    %498 = arith.divf %497, %496 : vector<8x128xf32>
    %499 = arith.mulf %488, %463 : vector<8x128xf32>
    %500 = arith.mulf %480, %490 : vector<8x128xf32>
    %501 = arith.addf %499, %500 : vector<8x128xf32>
    %502 = math.tanh %501 : vector<8x128xf32>
    %503 = arith.mulf %498, %502 : vector<8x128xf32>
    %504 = vector.extract_strided_slice %503 {offsets = [0, 0], sizes = [8, 64], strides = [1, 1]} : vector<8x128xf32> to vector<8x64xf32>
    %c80_270 = arith.constant 80 : index
    %c0_271 = arith.constant 0 : index
    %505 = vector.load %arg11[%c80_270, %c0_271] : memref<128x128xf32, #tpu.memory_space<vmem>>, vector<8x64xf32>
    tpu.vector_store %arg11[%c80_270, %c0_271], %504 {strides = array<i32>} : memref<128x128xf32, #tpu.memory_space<vmem>>, vector<8x64xf32>,
    %506 = vector.extract_strided_slice %503 {offsets = [0, 64], sizes = [8, 64], strides = [1, 1]} : vector<8x128xf32> to vector<8x64xf32>
    %c40_272 = arith.constant 40 : index
    %c64_273 = arith.constant 64 : index
    %507 = vector.load %arg11[%c40_272, %c64_273] : memref<128x128xf32, #tpu.memory_space<vmem>>, vector<8x64xf32>
    tpu.vector_store %arg11[%c40_272, %c64_273], %506 {strides = array<i32>} : memref<128x128xf32, #tpu.memory_space<vmem>>, vector<8x64xf32>,
    %c88_274 = arith.constant 88 : index
    %c0_275 = arith.constant 0 : index
    %508 = vector.load %arg10[%c88_274, %c0_275] : memref<128x512xf32, #tpu.memory_space<vmem>>, vector<8x512xf32>
    %cst_276 = arith.constant dense<0.000000e+00> : vector<8x512xf32>
    %509 = tpu.matmul %503, %87, %cst_276 {dimension_numbers = #tpu.dot_dimension_numbers<[1], [0], [0], [1], [0, 0, 1, 1], [], []>} : vector<8x128xf32>, vector<128x512xf32>, vector<8x512xf32> -> vector<8x512xf32>
    %510 = arith.addf %508, %509 : vector<8x512xf32>
    %511 = vector.extract_strided_slice %510 {offsets = [0, 0], sizes = [8, 128], strides = [1, 1]} : vector<8x512xf32> to vector<8x128xf32>
    %cst_277 = arith.constant 0.000000e+00 : f32
    %512 = vector.broadcast %cst_277 : f32 to vector<8x128xf32>
    %513 = arith.subf %512, %511 : vector<8x128xf32>
    %514 = math.exp %513 : vector<8x128xf32>
    %cst_278 = arith.constant 1.000000e+00 : f32
    %515 = vector.broadcast %cst_278 : f32 to vector<8x128xf32>
    %516 = arith.addf %515, %514 : vector<8x128xf32>
    %cst_279 = arith.constant 1.000000e+00 : f32
    %517 = vector.broadcast %cst_279 : f32 to vector<8x128xf32>
    %518 = arith.divf %517, %516 : vector<8x128xf32>
    %519 = vector.extract_strided_slice %510 {offsets = [0, 128], sizes = [8, 128], strides = [1, 1]} : vector<8x512xf32> to vector<8x128xf32>
    %cst_280 = arith.constant 0.000000e+00 : f32
    %520 = vector.broadcast %cst_280 : f32 to vector<8x128xf32>
    %521 = arith.subf %520, %519 : vector<8x128xf32>
    %522 = math.exp %521 : vector<8x128xf32>
    %cst_281 = arith.constant 1.000000e+00 : f32
    %523 = vector.broadcast %cst_281 : f32 to vector<8x128xf32>
    %524 = arith.addf %523, %522 : vector<8x128xf32>
    %cst_282 = arith.constant 1.000000e+00 : f32
    %525 = vector.broadcast %cst_282 : f32 to vector<8x128xf32>
    %526 = arith.divf %525, %524 : vector<8x128xf32>
    %527 = vector.extract_strided_slice %510 {offsets = [0, 256], sizes = [8, 128], strides = [1, 1]} : vector<8x512xf32> to vector<8x128xf32>
    %528 = math.tanh %527 : vector<8x128xf32>
    %529 = vector.extract_strided_slice %510 {offsets = [0, 384], sizes = [8, 128], strides = [1, 1]} : vector<8x512xf32> to vector<8x128xf32>
    %cst_283 = arith.constant 0.000000e+00 : f32
    %530 = vector.broadcast %cst_283 : f32 to vector<8x128xf32>
    %531 = arith.subf %530, %529 : vector<8x128xf32>
    %532 = math.exp %531 : vector<8x128xf32>
    %cst_284 = arith.constant 1.000000e+00 : f32
    %533 = vector.broadcast %cst_284 : f32 to vector<8x128xf32>
    %534 = arith.addf %533, %532 : vector<8x128xf32>
    %cst_285 = arith.constant 1.000000e+00 : f32
    %535 = vector.broadcast %cst_285 : f32 to vector<8x128xf32>
    %536 = arith.divf %535, %534 : vector<8x128xf32>
    %537 = arith.mulf %526, %501 : vector<8x128xf32>
    %538 = arith.mulf %518, %528 : vector<8x128xf32>
    %539 = arith.addf %537, %538 : vector<8x128xf32>
    %540 = math.tanh %539 : vector<8x128xf32>
    %541 = arith.mulf %536, %540 : vector<8x128xf32>
    %542 = vector.extract_strided_slice %541 {offsets = [0, 0], sizes = [8, 64], strides = [1, 1]} : vector<8x128xf32> to vector<8x64xf32>
    %c88_286 = arith.constant 88 : index
    %c0_287 = arith.constant 0 : index
    %543 = vector.load %arg11[%c88_286, %c0_287] : memref<128x128xf32, #tpu.memory_space<vmem>>, vector<8x64xf32>
    tpu.vector_store %arg11[%c88_286, %c0_287], %542 {strides = array<i32>} : memref<128x128xf32, #tpu.memory_space<vmem>>, vector<8x64xf32>,
    %544 = vector.extract_strided_slice %541 {offsets = [0, 64], sizes = [8, 64], strides = [1, 1]} : vector<8x128xf32> to vector<8x64xf32>
    %c32_288 = arith.constant 32 : index
    %c64_289 = arith.constant 64 : index
    %545 = vector.load %arg11[%c32_288, %c64_289] : memref<128x128xf32, #tpu.memory_space<vmem>>, vector<8x64xf32>
    tpu.vector_store %arg11[%c32_288, %c64_289], %544 {strides = array<i32>} : memref<128x128xf32, #tpu.memory_space<vmem>>, vector<8x64xf32>,
    %c96_290 = arith.constant 96 : index
    %c0_291 = arith.constant 0 : index
    %546 = vector.load %arg10[%c96_290, %c0_291] : memref<128x512xf32, #tpu.memory_space<vmem>>, vector<8x512xf32>
    %cst_292 = arith.constant dense<0.000000e+00> : vector<8x512xf32>
    %547 = tpu.matmul %541, %87, %cst_292 {dimension_numbers = #tpu.dot_dimension_numbers<[1], [0], [0], [1], [0, 0, 1, 1], [], []>} : vector<8x128xf32>, vector<128x512xf32>, vector<8x512xf32> -> vector<8x512xf32>
    %548 = arith.addf %546, %547 : vector<8x512xf32>
    %549 = vector.extract_strided_slice %548 {offsets = [0, 0], sizes = [8, 128], strides = [1, 1]} : vector<8x512xf32> to vector<8x128xf32>
    %cst_293 = arith.constant 0.000000e+00 : f32
    %550 = vector.broadcast %cst_293 : f32 to vector<8x128xf32>
    %551 = arith.subf %550, %549 : vector<8x128xf32>
    %552 = math.exp %551 : vector<8x128xf32>
    %cst_294 = arith.constant 1.000000e+00 : f32
    %553 = vector.broadcast %cst_294 : f32 to vector<8x128xf32>
    %554 = arith.addf %553, %552 : vector<8x128xf32>
    %cst_295 = arith.constant 1.000000e+00 : f32
    %555 = vector.broadcast %cst_295 : f32 to vector<8x128xf32>
    %556 = arith.divf %555, %554 : vector<8x128xf32>
    %557 = vector.extract_strided_slice %548 {offsets = [0, 128], sizes = [8, 128], strides = [1, 1]} : vector<8x512xf32> to vector<8x128xf32>
    %cst_296 = arith.constant 0.000000e+00 : f32
    %558 = vector.broadcast %cst_296 : f32 to vector<8x128xf32>
    %559 = arith.subf %558, %557 : vector<8x128xf32>
    %560 = math.exp %559 : vector<8x128xf32>
    %cst_297 = arith.constant 1.000000e+00 : f32
    %561 = vector.broadcast %cst_297 : f32 to vector<8x128xf32>
    %562 = arith.addf %561, %560 : vector<8x128xf32>
    %cst_298 = arith.constant 1.000000e+00 : f32
    %563 = vector.broadcast %cst_298 : f32 to vector<8x128xf32>
    %564 = arith.divf %563, %562 : vector<8x128xf32>
    %565 = vector.extract_strided_slice %548 {offsets = [0, 256], sizes = [8, 128], strides = [1, 1]} : vector<8x512xf32> to vector<8x128xf32>
    %566 = math.tanh %565 : vector<8x128xf32>
    %567 = vector.extract_strided_slice %548 {offsets = [0, 384], sizes = [8, 128], strides = [1, 1]} : vector<8x512xf32> to vector<8x128xf32>
    %cst_299 = arith.constant 0.000000e+00 : f32
    %568 = vector.broadcast %cst_299 : f32 to vector<8x128xf32>
    %569 = arith.subf %568, %567 : vector<8x128xf32>
    %570 = math.exp %569 : vector<8x128xf32>
    %cst_300 = arith.constant 1.000000e+00 : f32
    %571 = vector.broadcast %cst_300 : f32 to vector<8x128xf32>
    %572 = arith.addf %571, %570 : vector<8x128xf32>
    %cst_301 = arith.constant 1.000000e+00 : f32
    %573 = vector.broadcast %cst_301 : f32 to vector<8x128xf32>
    %574 = arith.divf %573, %572 : vector<8x128xf32>
    %575 = arith.mulf %564, %539 : vector<8x128xf32>
    %576 = arith.mulf %556, %566 : vector<8x128xf32>
    %577 = arith.addf %575, %576 : vector<8x128xf32>
    %578 = math.tanh %577 : vector<8x128xf32>
    %579 = arith.mulf %574, %578 : vector<8x128xf32>
    %580 = vector.extract_strided_slice %579 {offsets = [0, 0], sizes = [8, 64], strides = [1, 1]} : vector<8x128xf32> to vector<8x64xf32>
    %c96_302 = arith.constant 96 : index
    %c0_303 = arith.constant 0 : index
    %581 = vector.load %arg11[%c96_302, %c0_303] : memref<128x128xf32, #tpu.memory_space<vmem>>, vector<8x64xf32>
    tpu.vector_store %arg11[%c96_302, %c0_303], %580 {strides = array<i32>} : memref<128x128xf32, #tpu.memory_space<vmem>>, vector<8x64xf32>,
    %582 = vector.extract_strided_slice %579 {offsets = [0, 64], sizes = [8, 64], strides = [1, 1]} : vector<8x128xf32> to vector<8x64xf32>
    %c24_304 = arith.constant 24 : index
    %c64_305 = arith.constant 64 : index
    %583 = vector.load %arg11[%c24_304, %c64_305] : memref<128x128xf32, #tpu.memory_space<vmem>>, vector<8x64xf32>
    tpu.vector_store %arg11[%c24_304, %c64_305], %582 {strides = array<i32>} : memref<128x128xf32, #tpu.memory_space<vmem>>, vector<8x64xf32>,
    %c104_306 = arith.constant 104 : index
    %c0_307 = arith.constant 0 : index
    %584 = vector.load %arg10[%c104_306, %c0_307] : memref<128x512xf32, #tpu.memory_space<vmem>>, vector<8x512xf32>
    %cst_308 = arith.constant dense<0.000000e+00> : vector<8x512xf32>
    %585 = tpu.matmul %579, %87, %cst_308 {dimension_numbers = #tpu.dot_dimension_numbers<[1], [0], [0], [1], [0, 0, 1, 1], [], []>} : vector<8x128xf32>, vector<128x512xf32>, vector<8x512xf32> -> vector<8x512xf32>
    %586 = arith.addf %584, %585 : vector<8x512xf32>
    %587 = vector.extract_strided_slice %586 {offsets = [0, 0], sizes = [8, 128], strides = [1, 1]} : vector<8x512xf32> to vector<8x128xf32>
    %cst_309 = arith.constant 0.000000e+00 : f32
    %588 = vector.broadcast %cst_309 : f32 to vector<8x128xf32>
    %589 = arith.subf %588, %587 : vector<8x128xf32>
    %590 = math.exp %589 : vector<8x128xf32>
    %cst_310 = arith.constant 1.000000e+00 : f32
    %591 = vector.broadcast %cst_310 : f32 to vector<8x128xf32>
    %592 = arith.addf %591, %590 : vector<8x128xf32>
    %cst_311 = arith.constant 1.000000e+00 : f32
    %593 = vector.broadcast %cst_311 : f32 to vector<8x128xf32>
    %594 = arith.divf %593, %592 : vector<8x128xf32>
    %595 = vector.extract_strided_slice %586 {offsets = [0, 128], sizes = [8, 128], strides = [1, 1]} : vector<8x512xf32> to vector<8x128xf32>
    %cst_312 = arith.constant 0.000000e+00 : f32
    %596 = vector.broadcast %cst_312 : f32 to vector<8x128xf32>
    %597 = arith.subf %596, %595 : vector<8x128xf32>
    %598 = math.exp %597 : vector<8x128xf32>
    %cst_313 = arith.constant 1.000000e+00 : f32
    %599 = vector.broadcast %cst_313 : f32 to vector<8x128xf32>
    %600 = arith.addf %599, %598 : vector<8x128xf32>
    %cst_314 = arith.constant 1.000000e+00 : f32
    %601 = vector.broadcast %cst_314 : f32 to vector<8x128xf32>
    %602 = arith.divf %601, %600 : vector<8x128xf32>
    %603 = vector.extract_strided_slice %586 {offsets = [0, 256], sizes = [8, 128], strides = [1, 1]} : vector<8x512xf32> to vector<8x128xf32>
    %604 = math.tanh %603 : vector<8x128xf32>
    %605 = vector.extract_strided_slice %586 {offsets = [0, 384], sizes = [8, 128], strides = [1, 1]} : vector<8x512xf32> to vector<8x128xf32>
    %cst_315 = arith.constant 0.000000e+00 : f32
    %606 = vector.broadcast %cst_315 : f32 to vector<8x128xf32>
    %607 = arith.subf %606, %605 : vector<8x128xf32>
    %608 = math.exp %607 : vector<8x128xf32>
    %cst_316 = arith.constant 1.000000e+00 : f32
    %609 = vector.broadcast %cst_316 : f32 to vector<8x128xf32>
    %610 = arith.addf %609, %608 : vector<8x128xf32>
    %cst_317 = arith.constant 1.000000e+00 : f32
    %611 = vector.broadcast %cst_317 : f32 to vector<8x128xf32>
    %612 = arith.divf %611, %610 : vector<8x128xf32>
    %613 = arith.mulf %602, %577 : vector<8x128xf32>
    %614 = arith.mulf %594, %604 : vector<8x128xf32>
    %615 = arith.addf %613, %614 : vector<8x128xf32>
    %616 = math.tanh %615 : vector<8x128xf32>
    %617 = arith.mulf %612, %616 : vector<8x128xf32>
    %618 = vector.extract_strided_slice %617 {offsets = [0, 0], sizes = [8, 64], strides = [1, 1]} : vector<8x128xf32> to vector<8x64xf32>
    %c104_318 = arith.constant 104 : index
    %c0_319 = arith.constant 0 : index
    %619 = vector.load %arg11[%c104_318, %c0_319] : memref<128x128xf32, #tpu.memory_space<vmem>>, vector<8x64xf32>
    tpu.vector_store %arg11[%c104_318, %c0_319], %618 {strides = array<i32>} : memref<128x128xf32, #tpu.memory_space<vmem>>, vector<8x64xf32>,
    %620 = vector.extract_strided_slice %617 {offsets = [0, 64], sizes = [8, 64], strides = [1, 1]} : vector<8x128xf32> to vector<8x64xf32>
    %c16_320 = arith.constant 16 : index
    %c64_321 = arith.constant 64 : index
    %621 = vector.load %arg11[%c16_320, %c64_321] : memref<128x128xf32, #tpu.memory_space<vmem>>, vector<8x64xf32>
    tpu.vector_store %arg11[%c16_320, %c64_321], %620 {strides = array<i32>} : memref<128x128xf32, #tpu.memory_space<vmem>>, vector<8x64xf32>,
    %c112_322 = arith.constant 112 : index
    %c0_323 = arith.constant 0 : index
    %622 = vector.load %arg10[%c112_322, %c0_323] : memref<128x512xf32, #tpu.memory_space<vmem>>, vector<8x512xf32>
    %cst_324 = arith.constant dense<0.000000e+00> : vector<8x512xf32>
    %623 = tpu.matmul %617, %87, %cst_324 {dimension_numbers = #tpu.dot_dimension_numbers<[1], [0], [0], [1], [0, 0, 1, 1], [], []>} : vector<8x128xf32>, vector<128x512xf32>, vector<8x512xf32> -> vector<8x512xf32>
    %624 = arith.addf %622, %623 : vector<8x512xf32>
    %625 = vector.extract_strided_slice %624 {offsets = [0, 0], sizes = [8, 128], strides = [1, 1]} : vector<8x512xf32> to vector<8x128xf32>
    %cst_325 = arith.constant 0.000000e+00 : f32
    %626 = vector.broadcast %cst_325 : f32 to vector<8x128xf32>
    %627 = arith.subf %626, %625 : vector<8x128xf32>
    %628 = math.exp %627 : vector<8x128xf32>
    %cst_326 = arith.constant 1.000000e+00 : f32
    %629 = vector.broadcast %cst_326 : f32 to vector<8x128xf32>
    %630 = arith.addf %629, %628 : vector<8x128xf32>
    %cst_327 = arith.constant 1.000000e+00 : f32
    %631 = vector.broadcast %cst_327 : f32 to vector<8x128xf32>
    %632 = arith.divf %631, %630 : vector<8x128xf32>
    %633 = vector.extract_strided_slice %624 {offsets = [0, 128], sizes = [8, 128], strides = [1, 1]} : vector<8x512xf32> to vector<8x128xf32>
    %cst_328 = arith.constant 0.000000e+00 : f32
    %634 = vector.broadcast %cst_328 : f32 to vector<8x128xf32>
    %635 = arith.subf %634, %633 : vector<8x128xf32>
    %636 = math.exp %635 : vector<8x128xf32>
    %cst_329 = arith.constant 1.000000e+00 : f32
    %637 = vector.broadcast %cst_329 : f32 to vector<8x128xf32>
    %638 = arith.addf %637, %636 : vector<8x128xf32>
    %cst_330 = arith.constant 1.000000e+00 : f32
    %639 = vector.broadcast %cst_330 : f32 to vector<8x128xf32>
    %640 = arith.divf %639, %638 : vector<8x128xf32>
    %641 = vector.extract_strided_slice %624 {offsets = [0, 256], sizes = [8, 128], strides = [1, 1]} : vector<8x512xf32> to vector<8x128xf32>
    %642 = math.tanh %641 : vector<8x128xf32>
    %643 = vector.extract_strided_slice %624 {offsets = [0, 384], sizes = [8, 128], strides = [1, 1]} : vector<8x512xf32> to vector<8x128xf32>
    %cst_331 = arith.constant 0.000000e+00 : f32
    %644 = vector.broadcast %cst_331 : f32 to vector<8x128xf32>
    %645 = arith.subf %644, %643 : vector<8x128xf32>
    %646 = math.exp %645 : vector<8x128xf32>
    %cst_332 = arith.constant 1.000000e+00 : f32
    %647 = vector.broadcast %cst_332 : f32 to vector<8x128xf32>
    %648 = arith.addf %647, %646 : vector<8x128xf32>
    %cst_333 = arith.constant 1.000000e+00 : f32
    %649 = vector.broadcast %cst_333 : f32 to vector<8x128xf32>
    %650 = arith.divf %649, %648 : vector<8x128xf32>
    %651 = arith.mulf %640, %615 : vector<8x128xf32>
    %652 = arith.mulf %632, %642 : vector<8x128xf32>
    %653 = arith.addf %651, %652 : vector<8x128xf32>
    %654 = math.tanh %653 : vector<8x128xf32>
    %655 = arith.mulf %650, %654 : vector<8x128xf32>
    %656 = vector.extract_strided_slice %655 {offsets = [0, 0], sizes = [8, 64], strides = [1, 1]} : vector<8x128xf32> to vector<8x64xf32>
    %c112_334 = arith.constant 112 : index
    %c0_335 = arith.constant 0 : index
    %657 = vector.load %arg11[%c112_334, %c0_335] : memref<128x128xf32, #tpu.memory_space<vmem>>, vector<8x64xf32>
    tpu.vector_store %arg11[%c112_334, %c0_335], %656 {strides = array<i32>} : memref<128x128xf32, #tpu.memory_space<vmem>>, vector<8x64xf32>,
    %658 = vector.extract_strided_slice %655 {offsets = [0, 64], sizes = [8, 64], strides = [1, 1]} : vector<8x128xf32> to vector<8x64xf32>
    %c8_336 = arith.constant 8 : index
    %c64_337 = arith.constant 64 : index
    %659 = vector.load %arg11[%c8_336, %c64_337] : memref<128x128xf32, #tpu.memory_space<vmem>>, vector<8x64xf32>
    tpu.vector_store %arg11[%c8_336, %c64_337], %658 {strides = array<i32>} : memref<128x128xf32, #tpu.memory_space<vmem>>, vector<8x64xf32>,
    %c120_338 = arith.constant 120 : index
    %c0_339 = arith.constant 0 : index
    %660 = vector.load %arg10[%c120_338, %c0_339] : memref<128x512xf32, #tpu.memory_space<vmem>>, vector<8x512xf32>
    %cst_340 = arith.constant dense<0.000000e+00> : vector<8x512xf32>
    %661 = tpu.matmul %655, %87, %cst_340 {dimension_numbers = #tpu.dot_dimension_numbers<[1], [0], [0], [1], [0, 0, 1, 1], [], []>} : vector<8x128xf32>, vector<128x512xf32>, vector<8x512xf32> -> vector<8x512xf32>
    %662 = arith.addf %660, %661 : vector<8x512xf32>
    %663 = vector.extract_strided_slice %662 {offsets = [0, 0], sizes = [8, 128], strides = [1, 1]} : vector<8x512xf32> to vector<8x128xf32>
    %cst_341 = arith.constant 0.000000e+00 : f32
    %664 = vector.broadcast %cst_341 : f32 to vector<8x128xf32>
    %665 = arith.subf %664, %663 : vector<8x128xf32>
    %666 = math.exp %665 : vector<8x128xf32>
    %cst_342 = arith.constant 1.000000e+00 : f32
    %667 = vector.broadcast %cst_342 : f32 to vector<8x128xf32>
    %668 = arith.addf %667, %666 : vector<8x128xf32>
    %cst_343 = arith.constant 1.000000e+00 : f32
    %669 = vector.broadcast %cst_343 : f32 to vector<8x128xf32>
    %670 = arith.divf %669, %668 : vector<8x128xf32>
    %671 = vector.extract_strided_slice %662 {offsets = [0, 128], sizes = [8, 128], strides = [1, 1]} : vector<8x512xf32> to vector<8x128xf32>
    %cst_344 = arith.constant 0.000000e+00 : f32
    %672 = vector.broadcast %cst_344 : f32 to vector<8x128xf32>
    %673 = arith.subf %672, %671 : vector<8x128xf32>
    %674 = math.exp %673 : vector<8x128xf32>
    %cst_345 = arith.constant 1.000000e+00 : f32
    %675 = vector.broadcast %cst_345 : f32 to vector<8x128xf32>
    %676 = arith.addf %675, %674 : vector<8x128xf32>
    %cst_346 = arith.constant 1.000000e+00 : f32
    %677 = vector.broadcast %cst_346 : f32 to vector<8x128xf32>
    %678 = arith.divf %677, %676 : vector<8x128xf32>
    %679 = vector.extract_strided_slice %662 {offsets = [0, 256], sizes = [8, 128], strides = [1, 1]} : vector<8x512xf32> to vector<8x128xf32>
    %680 = math.tanh %679 : vector<8x128xf32>
    %681 = vector.extract_strided_slice %662 {offsets = [0, 384], sizes = [8, 128], strides = [1, 1]} : vector<8x512xf32> to vector<8x128xf32>
    %cst_347 = arith.constant 0.000000e+00 : f32
    %682 = vector.broadcast %cst_347 : f32 to vector<8x128xf32>
    %683 = arith.subf %682, %681 : vector<8x128xf32>
    %684 = math.exp %683 : vector<8x128xf32>
    %cst_348 = arith.constant 1.000000e+00 : f32
    %685 = vector.broadcast %cst_348 : f32 to vector<8x128xf32>
    %686 = arith.addf %685, %684 : vector<8x128xf32>
    %cst_349 = arith.constant 1.000000e+00 : f32
    %687 = vector.broadcast %cst_349 : f32 to vector<8x128xf32>
    %688 = arith.divf %687, %686 : vector<8x128xf32>
    %689 = arith.mulf %678, %653 : vector<8x128xf32>
    %690 = arith.mulf %670, %680 : vector<8x128xf32>
    %691 = arith.addf %689, %690 : vector<8x128xf32>
    %692 = math.tanh %691 : vector<8x128xf32>
    %693 = arith.mulf %688, %692 : vector<8x128xf32>
    %694 = vector.extract_strided_slice %693 {offsets = [0, 0], sizes = [8, 64], strides = [1, 1]} : vector<8x128xf32> to vector<8x64xf32>
    %c120_350 = arith.constant 120 : index
    %c0_351 = arith.constant 0 : index
    %695 = vector.load %arg11[%c120_350, %c0_351] : memref<128x128xf32, #tpu.memory_space<vmem>>, vector<8x64xf32>
    tpu.vector_store %arg11[%c120_350, %c0_351], %694 {strides = array<i32>} : memref<128x128xf32, #tpu.memory_space<vmem>>, vector<8x64xf32>,
    %696 = vector.extract_strided_slice %693 {offsets = [0, 64], sizes = [8, 64], strides = [1, 1]} : vector<8x128xf32> to vector<8x64xf32>
    %c0_352 = arith.constant 0 : index
    %c64_353 = arith.constant 64 : index
    %697 = vector.load %arg11[%c0_352, %c64_353] : memref<128x128xf32, #tpu.memory_space<vmem>>, vector<8x64xf32>
    tpu.vector_store %arg11[%c0_352, %c64_353], %696 {strides = array<i32>} : memref<128x128xf32, #tpu.memory_space<vmem>>, vector<8x64xf32>,
    %c0_354 = arith.constant 0 : index
    %c0_355 = arith.constant 0 : index
    %698 = vector.load %arg4[%c0_354, %c0_355] : memref<128x513xf32, #tpu.memory_space<vmem>>, vector<128x128xf32>
    %c0_356 = arith.constant 0 : index
    %c128_357 = arith.constant 128 : index
    %699 = vector.load %arg4[%c0_356, %c128_357] : memref<128x513xf32, #tpu.memory_space<vmem>>, vector<128x256xf32>
    %c0_358 = arith.constant 0 : index
    %c384 = arith.constant 384 : index
    %700 = vector.load %arg4[%c0_358, %c384] : memref<128x513xf32, #tpu.memory_space<vmem>>, vector<128x128xf32>
    %c0_359 = arith.constant 0 : index
    %c512 = arith.constant 512 : index
    %701 = vector.load %arg4[%c0_359, %c512] : memref<128x513xf32, #tpu.memory_space<vmem>>, vector<128x1xf32>
    %c0_360 = arith.constant 0 : index
    %c0_361 = arith.constant 0 : index
    %702 = vector.load %arg11[%c0_360, %c0_361] : memref<128x128xf32, #tpu.memory_space<vmem>>, vector<128x128xf32>
    %cst_362 = arith.constant dense<0.000000e+00> : vector<128x256xf32>
    %703 = tpu.matmul %702, %699, %cst_362 {dimension_numbers = #tpu.dot_dimension_numbers<[1], [0], [0], [1], [0, 0, 1, 1], [], []>} : vector<128x128xf32>, vector<128x256xf32>, vector<128x256xf32> -> vector<128x256xf32>
    %c0_363 = arith.constant 0 : index
    %c768 = arith.constant 768 : index
    %704 = vector.load %arg5[%c0_363, %c768] : memref<1x4224xf32, #tpu.memory_space<vmem>>, vector<1x256xf32>
    %705 = vector.broadcast %704 : vector<1x256xf32> to vector<128x256xf32>
    %706 = arith.addf %703, %705 : vector<128x256xf32>
    %c0_364 = arith.constant 0 : index
    %c0_365 = arith.constant 0 : index
    %707 = vector.load %arg12[%c0_364, %c0_365] : memref<128x256xf32, #tpu.memory_space<vmem>>, vector<128x256xf32>
    tpu.vector_store %arg12[%c0_364, %c0_365], %706 {strides = array<i32>} : memref<128x256xf32, #tpu.memory_space<vmem>>, vector<128x256xf32>,
    %c120_366 = arith.constant 120 : index
    %c0_367 = arith.constant 0 : index
    %708 = vector.load %arg11[%c120_366, %c0_367] : memref<128x128xf32, #tpu.memory_space<vmem>>, vector<8x128xf32>
    %cst_368 = arith.constant dense<0.000000e+00> : vector<8x128xf32>
    %709 = tpu.matmul %708, %698, %cst_368 {dimension_numbers = #tpu.dot_dimension_numbers<[1], [0], [0], [1], [0, 0, 1, 1], [], []>} : vector<8x128xf32>, vector<128x128xf32>, vector<8x128xf32> -> vector<8x128xf32>
    %c0_369 = arith.constant 0 : index
    %c640 = arith.constant 640 : index
    %710 = vector.load %arg5[%c0_369, %c640] : memref<1x4224xf32, #tpu.memory_space<vmem>>, vector<1x128xf32>
    %711 = vector.broadcast %710 : vector<1x128xf32> to vector<8x128xf32>
    %712 = arith.addf %709, %711 : vector<8x128xf32>
    %713 = tpu.iota {dimensions = array<i32: 0>} : vector<8x128xi32>
    %714 = tpu.iota {dimensions = array<i32: 1>} : vector<8x128xi32>
    %c7_i32 = arith.constant 7 : i32
    %715 = vector.broadcast %c7_i32 : i32 to vector<8x128xi32>
    %716 = arith.andi %714, %715 : vector<8x128xi32>
    %717 = arith.cmpi eq, %713, %716 : vector<8x128xi32>
    %c0_370 = arith.constant 0 : index
    %c0_371 = arith.constant 0 : index
    %718 = vector.load %arg12[%c0_370, %c0_371] : memref<128x256xf32, #tpu.memory_space<vmem>>, vector<128x32xf32>
    %c0_372 = arith.constant 0 : index
    %c128_373 = arith.constant 128 : index
    %719 = vector.load %arg12[%c0_372, %c128_373] : memref<128x256xf32, #tpu.memory_space<vmem>>, vector<128x32xf32>
    %720 = vector.extract_strided_slice %712 {offsets = [0, 0], sizes = [8, 32], strides = [1, 1]} : vector<8x128xf32> to vector<8x32xf32>
    %cst_374 = arith.constant dense<0.000000e+00> : vector<8x128xf32>
    %721 = tpu.matmul %720, %718, %cst_374 {dimension_numbers = #tpu.dot_dimension_numbers<[1], [1], [0], [0], [0, 0, 1, 0], [], []>} : vector<8x32xf32>, vector<128x32xf32>, vector<8x128xf32> -> vector<8x128xf32>
    %cst_375 = arith.constant 0.176776692 : f32
    %722 = vector.broadcast %cst_375 : f32 to vector<8x128xf32>
    %723 = arith.mulf %721, %722 : vector<8x128xf32>
    %cst_376 = arith.constant -1.000000e+30 : f32
    %724 = vector.broadcast %cst_376 : f32 to vector<8x128xf32>
    %725 = arith.select %717, %723, %724 : vector<8x128xi1>, vector<8x128xf32>
    %cst_377 = arith.constant dense<0xFF800000> : vector<8xf32>
    %726 = vector.multi_reduction <maximumf>, %725, %cst_377 [1] : vector<8x128xf32> to vector<8xf32>
    %727 = vector.shape_cast %726 : vector<8xf32> to vector<8x1xf32>
    %728 = vector.broadcast %727 : vector<8x1xf32> to vector<8x128xf32>
    %729 = arith.subf %725, %728 : vector<8x128xf32>
    %730 = math.exp %729 : vector<8x128xf32>
    %cst_378 = arith.constant 0.000000e+00 : f32
    %731 = vector.broadcast %cst_378 : f32 to vector<8x128xf32>
    %732 = arith.select %717, %730, %731 : vector<8x128xi1>, vector<8x128xf32>
    %cst_379 = arith.constant dense<0.000000e+00> : vector<8xf32>
    %733 = vector.multi_reduction <add>, %732, %cst_379 [1] : vector<8x128xf32> to vector<8xf32>
    %734 = vector.shape_cast %733 : vector<8xf32> to vector<8x1xf32>
    %735 = tpu.reciprocal %734 {approx = true} : vector<8x1xf32> -> vector<8x1xf32>
    %736 = vector.broadcast %735 : vector<8x1xf32> to vector<8x128xf32>
    %737 = arith.mulf %732, %736 : vector<8x128xf32>
    %cst_380 = arith.constant dense<0.000000e+00> : vector<8x32xf32>
    %738 = tpu.matmul %737, %719, %cst_380 {dimension_numbers = #tpu.dot_dimension_numbers<[1], [0], [0], [1], [0, 0, 1, 1], [], []>} : vector<8x128xf32>, vector<128x32xf32>, vector<8x32xf32> -> vector<8x32xf32>
    %c0_381 = arith.constant 0 : index
    %c32_382 = arith.constant 32 : index
    %739 = vector.load %arg12[%c0_381, %c32_382] : memref<128x256xf32, #tpu.memory_space<vmem>>, vector<128x32xf32>
    %c0_383 = arith.constant 0 : index
    %c160 = arith.constant 160 : index
    %740 = vector.load %arg12[%c0_383, %c160] : memref<128x256xf32, #tpu.memory_space<vmem>>, vector<128x32xf32>
    %741 = vector.extract_strided_slice %712 {offsets = [0, 32], sizes = [8, 32], strides = [1, 1]} : vector<8x128xf32> to vector<8x32xf32>
    %cst_384 = arith.constant dense<0.000000e+00> : vector<8x128xf32>
    %742 = tpu.matmul %741, %739, %cst_384 {dimension_numbers = #tpu.dot_dimension_numbers<[1], [1], [0], [0], [0, 0, 1, 0], [], []>} : vector<8x32xf32>, vector<128x32xf32>, vector<8x128xf32> -> vector<8x128xf32>
    %cst_385 = arith.constant 0.176776692 : f32
    %743 = vector.broadcast %cst_385 : f32 to vector<8x128xf32>
    %744 = arith.mulf %742, %743 : vector<8x128xf32>
    %cst_386 = arith.constant -1.000000e+30 : f32
    %745 = vector.broadcast %cst_386 : f32 to vector<8x128xf32>
    %746 = arith.select %717, %744, %745 : vector<8x128xi1>, vector<8x128xf32>
    %cst_387 = arith.constant dense<0xFF800000> : vector<8xf32>
    %747 = vector.multi_reduction <maximumf>, %746, %cst_387 [1] : vector<8x128xf32> to vector<8xf32>
    %748 = vector.shape_cast %747 : vector<8xf32> to vector<8x1xf32>
    %749 = vector.broadcast %748 : vector<8x1xf32> to vector<8x128xf32>
    %750 = arith.subf %746, %749 : vector<8x128xf32>
    %751 = math.exp %750 : vector<8x128xf32>
    %cst_388 = arith.constant 0.000000e+00 : f32
    %752 = vector.broadcast %cst_388 : f32 to vector<8x128xf32>
    %753 = arith.select %717, %751, %752 : vector<8x128xi1>, vector<8x128xf32>
    %cst_389 = arith.constant dense<0.000000e+00> : vector<8xf32>
    %754 = vector.multi_reduction <add>, %753, %cst_389 [1] : vector<8x128xf32> to vector<8xf32>
    %755 = vector.shape_cast %754 : vector<8xf32> to vector<8x1xf32>
    %756 = tpu.reciprocal %755 {approx = true} : vector<8x1xf32> -> vector<8x1xf32>
    %757 = vector.broadcast %756 : vector<8x1xf32> to vector<8x128xf32>
    %758 = arith.mulf %753, %757 : vector<8x128xf32>
    %cst_390 = arith.constant dense<0.000000e+00> : vector<8x32xf32>
    %759 = tpu.matmul %758, %740, %cst_390 {dimension_numbers = #tpu.dot_dimension_numbers<[1], [0], [0], [1], [0, 0, 1, 1], [], []>} : vector<8x128xf32>, vector<128x32xf32>, vector<8x32xf32> -> vector<8x32xf32>
    %c0_391 = arith.constant 0 : index
    %c64_392 = arith.constant 64 : index
    %760 = vector.load %arg12[%c0_391, %c64_392] : memref<128x256xf32, #tpu.memory_space<vmem>>, vector<128x32xf32>
    %c0_393 = arith.constant 0 : index
    %c192 = arith.constant 192 : index
    %761 = vector.load %arg12[%c0_393, %c192] : memref<128x256xf32, #tpu.memory_space<vmem>>, vector<128x32xf32>
    %762 = vector.extract_strided_slice %712 {offsets = [0, 64], sizes = [8, 32], strides = [1, 1]} : vector<8x128xf32> to vector<8x32xf32>
    %cst_394 = arith.constant dense<0.000000e+00> : vector<8x128xf32>
    %763 = tpu.matmul %762, %760, %cst_394 {dimension_numbers = #tpu.dot_dimension_numbers<[1], [1], [0], [0], [0, 0, 1, 0], [], []>} : vector<8x32xf32>, vector<128x32xf32>, vector<8x128xf32> -> vector<8x128xf32>
    %cst_395 = arith.constant 0.176776692 : f32
    %764 = vector.broadcast %cst_395 : f32 to vector<8x128xf32>
    %765 = arith.mulf %763, %764 : vector<8x128xf32>
    %cst_396 = arith.constant -1.000000e+30 : f32
    %766 = vector.broadcast %cst_396 : f32 to vector<8x128xf32>
    %767 = arith.select %717, %765, %766 : vector<8x128xi1>, vector<8x128xf32>
    %cst_397 = arith.constant dense<0xFF800000> : vector<8xf32>
    %768 = vector.multi_reduction <maximumf>, %767, %cst_397 [1] : vector<8x128xf32> to vector<8xf32>
    %769 = vector.shape_cast %768 : vector<8xf32> to vector<8x1xf32>
    %770 = vector.broadcast %769 : vector<8x1xf32> to vector<8x128xf32>
    %771 = arith.subf %767, %770 : vector<8x128xf32>
    %772 = math.exp %771 : vector<8x128xf32>
    %cst_398 = arith.constant 0.000000e+00 : f32
    %773 = vector.broadcast %cst_398 : f32 to vector<8x128xf32>
    %774 = arith.select %717, %772, %773 : vector<8x128xi1>, vector<8x128xf32>
    %cst_399 = arith.constant dense<0.000000e+00> : vector<8xf32>
    %775 = vector.multi_reduction <add>, %774, %cst_399 [1] : vector<8x128xf32> to vector<8xf32>
    %776 = vector.shape_cast %775 : vector<8xf32> to vector<8x1xf32>
    %777 = tpu.reciprocal %776 {approx = true} : vector<8x1xf32> -> vector<8x1xf32>
    %778 = vector.broadcast %777 : vector<8x1xf32> to vector<8x128xf32>
    %779 = arith.mulf %774, %778 : vector<8x128xf32>
    %cst_400 = arith.constant dense<0.000000e+00> : vector<8x32xf32>
    %780 = tpu.matmul %779, %761, %cst_400 {dimension_numbers = #tpu.dot_dimension_numbers<[1], [0], [0], [1], [0, 0, 1, 1], [], []>} : vector<8x128xf32>, vector<128x32xf32>, vector<8x32xf32> -> vector<8x32xf32>
    %c0_401 = arith.constant 0 : index
    %c96_402 = arith.constant 96 : index
    %781 = vector.load %arg12[%c0_401, %c96_402] : memref<128x256xf32, #tpu.memory_space<vmem>>, vector<128x32xf32>
    %c0_403 = arith.constant 0 : index
    %c224 = arith.constant 224 : index
    %782 = vector.load %arg12[%c0_403, %c224] : memref<128x256xf32, #tpu.memory_space<vmem>>, vector<128x32xf32>
    %783 = vector.extract_strided_slice %712 {offsets = [0, 96], sizes = [8, 32], strides = [1, 1]} : vector<8x128xf32> to vector<8x32xf32>
    %cst_404 = arith.constant dense<0.000000e+00> : vector<8x128xf32>
    %784 = tpu.matmul %783, %781, %cst_404 {dimension_numbers = #tpu.dot_dimension_numbers<[1], [1], [0], [0], [0, 0, 1, 0], [], []>} : vector<8x32xf32>, vector<128x32xf32>, vector<8x128xf32> -> vector<8x128xf32>
    %cst_405 = arith.constant 0.176776692 : f32
    %785 = vector.broadcast %cst_405 : f32 to vector<8x128xf32>
    %786 = arith.mulf %784, %785 : vector<8x128xf32>
    %cst_406 = arith.constant -1.000000e+30 : f32
    %787 = vector.broadcast %cst_406 : f32 to vector<8x128xf32>
    %788 = arith.select %717, %786, %787 : vector<8x128xi1>, vector<8x128xf32>
    %cst_407 = arith.constant dense<0xFF800000> : vector<8xf32>
    %789 = vector.multi_reduction <maximumf>, %788, %cst_407 [1] : vector<8x128xf32> to vector<8xf32>
    %790 = vector.shape_cast %789 : vector<8xf32> to vector<8x1xf32>
    %791 = vector.broadcast %790 : vector<8x1xf32> to vector<8x128xf32>
    %792 = arith.subf %788, %791 : vector<8x128xf32>
    %793 = math.exp %792 : vector<8x128xf32>
    %cst_408 = arith.constant 0.000000e+00 : f32
    %794 = vector.broadcast %cst_408 : f32 to vector<8x128xf32>
    %795 = arith.select %717, %793, %794 : vector<8x128xi1>, vector<8x128xf32>
    %cst_409 = arith.constant dense<0.000000e+00> : vector<8xf32>
    %796 = vector.multi_reduction <add>, %795, %cst_409 [1] : vector<8x128xf32> to vector<8xf32>
    %797 = vector.shape_cast %796 : vector<8xf32> to vector<8x1xf32>
    %798 = tpu.reciprocal %797 {approx = true} : vector<8x1xf32> -> vector<8x1xf32>
    %799 = vector.broadcast %798 : vector<8x1xf32> to vector<8x128xf32>
    %800 = arith.mulf %795, %799 : vector<8x128xf32>
    %cst_410 = arith.constant dense<0.000000e+00> : vector<8x32xf32>
    %801 = tpu.matmul %800, %782, %cst_410 {dimension_numbers = #tpu.dot_dimension_numbers<[1], [0], [0], [1], [0, 0, 1, 1], [], []>} : vector<8x128xf32>, vector<128x32xf32>, vector<8x32xf32> -> vector<8x32xf32>
    %802 = tpu.concatenate %738, %759, %780, %801 in 1 : vector<8x32xf32>, vector<8x32xf32>, vector<8x32xf32>, vector<8x32xf32> -> vector<8x128xf32>
    %cst_411 = arith.constant dense<0.000000e+00> : vector<8x128xf32>
    %803 = tpu.matmul %802, %700, %cst_411 {dimension_numbers = #tpu.dot_dimension_numbers<[1], [0], [0], [1], [0, 0, 1, 1], [], []>} : vector<8x128xf32>, vector<128x128xf32>, vector<8x128xf32> -> vector<8x128xf32>
    %c0_412 = arith.constant 0 : index
    %c1024 = arith.constant 1024 : index
    %804 = vector.load %arg5[%c0_412, %c1024] : memref<1x4224xf32, #tpu.memory_space<vmem>>, vector<1x128xf32>
    %805 = vector.broadcast %804 : vector<1x128xf32> to vector<8x128xf32>
    %806 = arith.addf %803, %805 : vector<8x128xf32>
    %807 = arith.addf %708, %806 : vector<8x128xf32>
    %c0_413 = arith.constant 0 : index
    %c1152 = arith.constant 1152 : index
    %808 = vector.load %arg5[%c0_413, %c1152] : memref<1x4224xf32, #tpu.memory_space<vmem>>, vector<1x128xf32>
    %c0_414 = arith.constant 0 : index
    %c1280 = arith.constant 1280 : index
    %809 = vector.load %arg5[%c0_414, %c1280] : memref<1x4224xf32, #tpu.memory_space<vmem>>, vector<1x128xf32>
    %cst_415 = arith.constant dense<0.000000e+00> : vector<8xf32>
    %810 = vector.multi_reduction <add>, %807, %cst_415 [1] : vector<8x128xf32> to vector<8xf32>
    %811 = vector.shape_cast %810 : vector<8xf32> to vector<8x1xf32>
    %cst_416 = arith.constant 1.280000e+02 : f32
    %812 = vector.broadcast %cst_416 : f32 to vector<8x1xf32>
    %813 = arith.divf %811, %812 : vector<8x1xf32>
    %814 = vector.broadcast %813 : vector<8x1xf32> to vector<8x128xf32>
    %815 = arith.subf %807, %814 : vector<8x128xf32>
    %816 = vector.broadcast %813 : vector<8x1xf32> to vector<8x128xf32>
    %817 = arith.subf %807, %816 : vector<8x128xf32>
    %818 = arith.mulf %815, %817 : vector<8x128xf32>
    %cst_417 = arith.constant dense<0.000000e+00> : vector<8xf32>
    %819 = vector.multi_reduction <add>, %818, %cst_417 [1] : vector<8x128xf32> to vector<8xf32>
    %820 = vector.shape_cast %819 : vector<8xf32> to vector<8x1xf32>
    %cst_418 = arith.constant 1.280000e+02 : f32
    %821 = vector.broadcast %cst_418 : f32 to vector<8x1xf32>
    %822 = arith.divf %820, %821 : vector<8x1xf32>
    %823 = vector.broadcast %813 : vector<8x1xf32> to vector<8x128xf32>
    %824 = arith.subf %807, %823 : vector<8x128xf32>
    %cst_419 = arith.constant 9.99999974E-6 : f32
    %825 = vector.broadcast %cst_419 : f32 to vector<8x1xf32>
    %826 = arith.addf %822, %825 : vector<8x1xf32>
    %827 = math.rsqrt %826 : vector<8x1xf32>
    %828 = vector.broadcast %827 : vector<8x1xf32> to vector<8x128xf32>
    %829 = arith.mulf %824, %828 : vector<8x128xf32>
    %830 = vector.broadcast %808 : vector<1x128xf32> to vector<8x128xf32>
    %831 = arith.mulf %829, %830 : vector<8x128xf32>
    %832 = vector.broadcast %809 : vector<1x128xf32> to vector<8x128xf32>
    %833 = arith.addf %831, %832 : vector<8x128xf32>
    %c0_i32_420 = arith.constant 0 : i32
    %834 = tpu.memref_slice %arg15[%c0_i32_420] : memref<2x!tpu.dma_semaphore, #tpu.memory_space<semaphore_mem>> -> memref<1x!tpu.dma_semaphore, #tpu.memory_space<semaphore_mem>>
    %835 = tpu.memref_squeeze %834 : memref<1x!tpu.dma_semaphore, #tpu.memory_space<semaphore_mem>> -> memref<!tpu.dma_semaphore, #tpu.memory_space<semaphore_mem>>
    tpu.wait_dma2 semaphore(%835 : memref<!tpu.dma_semaphore, #tpu.memory_space<semaphore_mem>>) src(%arg6 : memref<128x2048xbf16, #tpu.memory_space<any>>) dst(%arg13 : memref<128x2048xbf16, #tpu.memory_space<vmem>>)
    %c1_i32_421 = arith.constant 1 : i32
    %836 = tpu.memref_slice %arg15[%c1_i32_421] : memref<2x!tpu.dma_semaphore, #tpu.memory_space<semaphore_mem>> -> memref<1x!tpu.dma_semaphore, #tpu.memory_space<semaphore_mem>>
    %837 = tpu.memref_squeeze %836 : memref<1x!tpu.dma_semaphore, #tpu.memory_space<semaphore_mem>> -> memref<!tpu.dma_semaphore, #tpu.memory_space<semaphore_mem>>
    tpu.wait_dma2 semaphore(%837 : memref<!tpu.dma_semaphore, #tpu.memory_space<semaphore_mem>>) src(%arg7 : memref<2048x128xbf16, #tpu.memory_space<any>>) dst(%arg14 : memref<2048x128xbf16, #tpu.memory_space<vmem>>)
    %838 = arith.truncf %833 : vector<8x128xf32> to vector<8x128xbf16>
    %c0_422 = arith.constant 0 : index
    %c0_423 = arith.constant 0 : index
    %839 = vector.load %arg13[%c0_422, %c0_423] : memref<128x2048xbf16, #tpu.memory_space<vmem>>, vector<128x2048xbf16>
    %cst_424 = arith.constant dense<0.000000e+00> : vector<8x2048xf32>
    %840 = tpu.matmul %838, %839, %cst_424 {dimension_numbers = #tpu.dot_dimension_numbers<[1], [0], [0], [1], [0, 0, 1, 1], [], []>} : vector<8x128xbf16>, vector<128x2048xbf16>, vector<8x2048xf32> -> vector<8x2048xf32>
    %c0_425 = arith.constant 0 : index
    %c1408 = arith.constant 1408 : index
    %841 = vector.load %arg5[%c0_425, %c1408] : memref<1x4224xf32, #tpu.memory_space<vmem>>, vector<1x2048xf32>
    %842 = vector.broadcast %841 : vector<1x2048xf32> to vector<8x2048xf32>
    %843 = arith.addf %840, %842 : vector<8x2048xf32>
    %cst_426 = arith.constant 0.000000e+00 : f32
    %844 = vector.broadcast %cst_426 : f32 to vector<8x2048xf32>
    %845 = arith.maximumf %843, %844 : vector<8x2048xf32>
    %846 = arith.truncf %845 : vector<8x2048xf32> to vector<8x2048xbf16>
    %c0_427 = arith.constant 0 : index
    %c0_428 = arith.constant 0 : index
    %847 = vector.load %arg14[%c0_427, %c0_428] : memref<2048x128xbf16, #tpu.memory_space<vmem>>, vector<2048x128xbf16>
    %cst_429 = arith.constant dense<0.000000e+00> : vector<8x128xf32>
    %848 = tpu.matmul %846, %847, %cst_429 {dimension_numbers = #tpu.dot_dimension_numbers<[1], [0], [0], [1], [0, 0, 1, 1], [], []>} : vector<8x2048xbf16>, vector<2048x128xbf16>, vector<8x128xf32> -> vector<8x128xf32>
    %c0_430 = arith.constant 0 : index
    %c3456 = arith.constant 3456 : index
    %849 = vector.load %arg5[%c0_430, %c3456] : memref<1x4224xf32, #tpu.memory_space<vmem>>, vector<1x128xf32>
    %850 = vector.broadcast %849 : vector<1x128xf32> to vector<8x128xf32>
    %851 = arith.addf %848, %850 : vector<8x128xf32>
    %852 = arith.addf %833, %851 : vector<8x128xf32>
    %c0_431 = arith.constant 0 : index
    %c3584 = arith.constant 3584 : index
    %853 = vector.load %arg5[%c0_431, %c3584] : memref<1x4224xf32, #tpu.memory_space<vmem>>, vector<1x128xf32>
    %c0_432 = arith.constant 0 : index
    %c3712 = arith.constant 3712 : index
    %854 = vector.load %arg5[%c0_432, %c3712] : memref<1x4224xf32, #tpu.memory_space<vmem>>, vector<1x128xf32>
    %cst_433 = arith.constant dense<0.000000e+00> : vector<8xf32>
    %855 = vector.multi_reduction <add>, %852, %cst_433 [1] : vector<8x128xf32> to vector<8xf32>
    %856 = vector.shape_cast %855 : vector<8xf32> to vector<8x1xf32>
    %cst_434 = arith.constant 1.280000e+02 : f32
    %857 = vector.broadcast %cst_434 : f32 to vector<8x1xf32>
    %858 = arith.divf %856, %857 : vector<8x1xf32>
    %859 = vector.broadcast %858 : vector<8x1xf32> to vector<8x128xf32>
    %860 = arith.subf %852, %859 : vector<8x128xf32>
    %861 = vector.broadcast %858 : vector<8x1xf32> to vector<8x128xf32>
    %862 = arith.subf %852, %861 : vector<8x128xf32>
    %863 = arith.mulf %860, %862 : vector<8x128xf32>
    %cst_435 = arith.constant dense<0.000000e+00> : vector<8xf32>
    %864 = vector.multi_reduction <add>, %863, %cst_435 [1] : vector<8x128xf32> to vector<8xf32>
    %865 = vector.shape_cast %864 : vector<8xf32> to vector<8x1xf32>
    %cst_436 = arith.constant 1.280000e+02 : f32
    %866 = vector.broadcast %cst_436 : f32 to vector<8x1xf32>
    %867 = arith.divf %865, %866 : vector<8x1xf32>
    %868 = vector.broadcast %858 : vector<8x1xf32> to vector<8x128xf32>
    %869 = arith.subf %852, %868 : vector<8x128xf32>
    %cst_437 = arith.constant 9.99999974E-6 : f32
    %870 = vector.broadcast %cst_437 : f32 to vector<8x1xf32>
    %871 = arith.addf %867, %870 : vector<8x1xf32>
    %872 = math.rsqrt %871 : vector<8x1xf32>
    %873 = vector.broadcast %872 : vector<8x1xf32> to vector<8x128xf32>
    %874 = arith.mulf %869, %873 : vector<8x128xf32>
    %875 = vector.broadcast %853 : vector<1x128xf32> to vector<8x128xf32>
    %876 = arith.mulf %874, %875 : vector<8x128xf32>
    %877 = vector.broadcast %854 : vector<1x128xf32> to vector<8x128xf32>
    %878 = arith.addf %876, %877 : vector<8x128xf32>
    %c0_438 = arith.constant 0 : index
    %c3840 = arith.constant 3840 : index
    %879 = vector.load %arg5[%c0_438, %c3840] : memref<1x4224xf32, #tpu.memory_space<vmem>>, vector<1x128xf32>
    %c0_439 = arith.constant 0 : index
    %c3968 = arith.constant 3968 : index
    %880 = vector.load %arg5[%c0_439, %c3968] : memref<1x4224xf32, #tpu.memory_space<vmem>>, vector<1x128xf32>
    %cst_440 = arith.constant dense<0.000000e+00> : vector<8xf32>
    %881 = vector.multi_reduction <add>, %878, %cst_440 [1] : vector<8x128xf32> to vector<8xf32>
    %882 = vector.shape_cast %881 : vector<8xf32> to vector<8x1xf32>
    %cst_441 = arith.constant 1.280000e+02 : f32
    %883 = vector.broadcast %cst_441 : f32 to vector<8x1xf32>
    %884 = arith.divf %882, %883 : vector<8x1xf32>
    %885 = vector.broadcast %884 : vector<8x1xf32> to vector<8x128xf32>
    %886 = arith.subf %878, %885 : vector<8x128xf32>
    %887 = vector.broadcast %884 : vector<8x1xf32> to vector<8x128xf32>
    %888 = arith.subf %878, %887 : vector<8x128xf32>
    %889 = arith.mulf %886, %888 : vector<8x128xf32>
    %cst_442 = arith.constant dense<0.000000e+00> : vector<8xf32>
    %890 = vector.multi_reduction <add>, %889, %cst_442 [1] : vector<8x128xf32> to vector<8xf32>
    %891 = vector.shape_cast %890 : vector<8xf32> to vector<8x1xf32>
    %cst_443 = arith.constant 1.280000e+02 : f32
    %892 = vector.broadcast %cst_443 : f32 to vector<8x1xf32>
    %893 = arith.divf %891, %892 : vector<8x1xf32>
    %894 = vector.broadcast %884 : vector<8x1xf32> to vector<8x128xf32>
    %895 = arith.subf %878, %894 : vector<8x128xf32>
    %cst_444 = arith.constant 9.99999974E-6 : f32
    %896 = vector.broadcast %cst_444 : f32 to vector<8x1xf32>
    %897 = arith.addf %893, %896 : vector<8x1xf32>
    %898 = math.rsqrt %897 : vector<8x1xf32>
    %899 = vector.broadcast %898 : vector<8x1xf32> to vector<8x128xf32>
    %900 = arith.mulf %895, %899 : vector<8x128xf32>
    %901 = vector.broadcast %879 : vector<1x128xf32> to vector<8x128xf32>
    %902 = arith.mulf %900, %901 : vector<8x128xf32>
    %903 = vector.broadcast %880 : vector<1x128xf32> to vector<8x128xf32>
    %904 = arith.addf %902, %903 : vector<8x128xf32>
    %cst_445 = arith.constant dense<0.000000e+00> : vector<8x1xf32>
    %905 = tpu.matmul %904, %701, %cst_445 {dimension_numbers = #tpu.dot_dimension_numbers<[1], [0], [0], [1], [0, 0, 1, 1], [], []>} : vector<8x128xf32>, vector<128x1xf32>, vector<8x1xf32> -> vector<8x1xf32>
    %c0_446 = arith.constant 0 : index
    %c4096 = arith.constant 4096 : index
    %906 = vector.load %arg5[%c0_446, %c4096] : memref<1x4224xf32, #tpu.memory_space<vmem>>, vector<1x1xf32>
    %907 = vector.broadcast %906 : vector<1x1xf32> to vector<8x1xf32>
    %908 = arith.addf %905, %907 : vector<8x1xf32>
    %c0_447 = arith.constant 0 : index
    %c0_448 = arith.constant 0 : index
    %909 = vector.load %arg8[%c0_447, %c0_448] : memref<8x1xf32, #tpu.memory_space<vmem>>, vector<8x1xf32>
    tpu.vector_store %arg8[%c0_447, %c0_448], %908 {strides = array<i32>} : memref<8x1xf32, #tpu.memory_space<vmem>>, vector<8x1xf32>,
    return
  }
}

</mosaic_0001>

<llo_original>
// kernel: custom-call
$region0: #{custom-call}
  %s0 = inlined_call_operand.vmem [shape: f32[4224], index: 0, kind: output, shape index: {}]

// kernel: forward.1
$region0: #{forward.1}
  #allocation0 [shape = 'u32[]', space=smem, size = 0x4, offset = 0x4, fixed_abs, tag = 'smem constant byte address 0x4 - core index']
  #allocation1 [shape = 'u32[144,128]{1,0:T(1,128)}', space=vmem, size = 0x12000, scoped, tag = 'internal scratch']
  #allocation2 [shape = 'f32[128,512]{1,0:T(8,128)}', space=vmem, size = 0x40000, scoped, tag = 'scratch operand']
  #allocation3 [shape = 'f32[128,512]{1,0:T(8,128)}', space=vmem, size = 0x40000, scoped, tag = 'scratch operand']
  #allocation4 [shape = 'f32[128,128]{1,0:T(8,128)}', space=vmem, size = 0x10000, scoped, tag = 'scratch operand']
  #allocation5 [shape = 'f32[128,256]{1,0:T(8,128)}', space=vmem, size = 0x20000, scoped, tag = 'scratch operand']
  #allocation6 [shape = 'bf16[128,2048]{1,0:T(16,128)(2,1)}', space=vmem, size = 0x80000, scoped, tag = 'scratch operand']
  #allocation7 [shape = 'bf16[2048,128]{1,0:T(16,128)(2,1)}', space=vmem, size = 0x80000, scoped, tag = 'scratch operand']
  #allocation8 [shape = 's32[2]{0}', space=sflag, size = 0x8, scoped, tag = 'scratch operand']
  #allocation9 [shape = 's32[]', space=sflag, size = 0x4, offset = 0, fixed_abs, tag = 'sflag constant byte address 0x0 - dummy sync flag']
  #allocation10 [shape = 's32[]', space=sflag, size = 0x4, offset = 0, fixed_abs, tag = 'sflag constant byte address 0x0 - dummy sync flag']
  %s0 = inlined_call_operand.vmem [shape: f32[128,12], index: 0, kind: input, shape index: {}]
  %s1 = inlined_call_operand.vmem [shape: f32[12,32], index: 1, kind: input, shape index: {}]
  %s2 = inlined_call_operand.vmem [shape: f32[32,512], index: 2, kind: input, shape index: {}]
  %s3 = inlined_call_operand.vmem [shape: f32[128,512], index: 3, kind: input, shape index: {}]
  %s4 = inlined_call_operand.vmem [shape: f32[128,513], index: 4, kind: input, shape index: {}]
  %s5 = inlined_call_operand.vmem [shape: f32[1,4224], index: 5, kind: input, shape index: {}]
  %s6 = inlined_call_operand.vmem [shape: bf16[128,2048], index: 6, kind: input, shape index: {}]
  %s7 = inlined_call_operand.vmem [shape: bf16[2048,128], index: 7, kind: input, shape index: {}]
  %s8 = inlined_call_operand.vmem [shape: f32[8,1], index: 8, kind: output, shape index: {}]
  %s9 = sld [smem:[#allocation0]]
  $region105: #{forward.1} parent=0
    _
  %s11 = ssub.s32 1, %s9
  %s12 = scalar_select 0, %s11, %s9
  // Predicated region
  $region2: #{forward.1} parent=0 // pred_check
    _
  $region3: #{forward.1} parent=0 // pred_check_branch
    %14 = sbr.rel (0) target = $region5
  $region4: #{forward.1} parent=0 // pred_region
    _
  $region5: #{forward.1} parent=0 // pred_fallthru
    _
  // Predicated region
  $region6: #{forward.1} parent=0 // pred_check
    _
  $region7: #{forward.1} parent=0 // pred_check_branch
    %16 = sbr.rel (0) target = $region9
  $region8: #{forward.1} parent=0 // pred_region
    _
  $region9: #{forward.1} parent=0 // pred_fallthru
    _
  // Predicated region
  $region10: #{forward.1} parent=0 // pred_check
    _
  $region11: #{forward.1} parent=0 // pred_check_branch
    %18 = sbr.rel (0) target = $region13
  $region12: #{forward.1} parent=0 // pred_region
    _
  $region13: #{forward.1} parent=0 // pred_fallthru
    _
  // Predicated region
  $region14: #{forward.1} parent=0 // pred_check
    _
  $region15: #{forward.1} parent=0 // pred_check_branch
    %20 = sbr.rel (0) target = $region17
  $region16: #{forward.1} parent=0 // pred_region
    _
  $region17: #{forward.1} parent=0 // pred_fallthru
    _
  // Predicated region
  $region18: #{forward.1} parent=0 // pred_check
    _
  $region19: #{forward.1} parent=0 // pred_check_branch
    %22 = sbr.rel (0) target = $region21
  $region20: #{forward.1} parent=0 // pred_region
    _
  $region21: #{forward.1} parent=0 // pred_fallthru
    _
  // Predicated region
  $region22: #{forward.1} parent=0 // pred_check
    _
  $region23: #{forward.1} parent=0 // pred_check_branch
    %24 = sbr.rel (0) target = $region25
  $region24: #{forward.1} parent=0 // pred_region
    _
  $region25: #{forward.1} parent=0 // pred_fallthru
    _
  %p27 = scmp.lt.u32.totalorder 4, 8
  %p28 = pneg %p27
  // Predicated region
  $region26: #{forward.1} parent=0 // pred_check
    _
  $region27: #{forward.1} parent=0 // pred_check_branch
    %30 = sbr.rel (%p27) target = $region29
  $region28: #{forward.1} parent=0 // pred_region
    %s555 = sand.u32 4, 7
    %p556 = scmp.eq.s32.totalorder %s555, 0
    %p557 = pneg %p556
    // Predicated region
    $region41: #{forward.1} parent=28 // pred_check
      _
    $region42: #{forward.1} parent=28 // pred_check_branch
      %559 = sbr.rel (%p556) target = $region44
    $region43: #{forward.1} parent=28 // pred_region
      %s560 = sand.u32 4, 7
      %s561 = ssub.s32 4, %s560
      %s562 = scalar_lea.vmem %s6, %s561
      %s563 = ssub.s32 4, %s560
      %s564 = scalar_lea.vmem [#allocation6], %s563
      loop: start=0, step=1, limit=1
      $region45: #{forward.1} parent=43 // loop_pre_header
        _
      $region46: #{forward.1} parent=43 // loop_header
        %s566 = sphi 0, %s570
        %p567 = scmp.ge.s32.totalorder %s566, 1
        %s571 = sphi %s6, %s6
        %s572 = sphi [#allocation6], [#allocation6]
      $region47: #{forward.1} parent=43 // loop_header_branch
        %569 = sbr.rel (%p567) target = $region51
      $region48: #{forward.1} parent=43 // loop_body
        _
      $region49: #{forward.1} parent=43 // loop_footer
        %s570 = sadd.s32 1, %s566
      $region50: #{forward.1} parent=43 // loop_footer_branch
        %565 = sbr.rel target = $region46
      $region51: #{forward.1} parent=43 // loop_exit
        _
      %s573 = sshllo.u32 0, %s560
      loop: start=0, step=1, limit=1
      $region52: #{forward.1} parent=43 // loop_pre_header
        _
      $region53: #{forward.1} parent=43 // loop_header
        %s575 = sphi 0, %s579
        %p576 = scmp.ge.s32.totalorder %s575, 1
        %s580 = sphi %s562, %s562
        %s581 = sphi %s564, %s564
      $region54: #{forward.1} parent=43 // loop_header_branch
        %578 = sbr.rel (%p576) target = $region58
      $region55: #{forward.1} parent=43 // loop_body
        %v582 = vld [vmem:[%s580] sm:%s573]
        %583 = vst [vmem:[%s581] sm:%s573] %v582
        %v584 = vld [vmem:[%s580 + $0x40] sm:%s573]
        %585 = vst [vmem:[%s581 + $0x4] sm:%s573] %v584
        %v586 = vld [vmem:[%s580 + $0x4] sm:%s573]
        %587 = vst [vmem:[%s581 + $0x8] sm:%s573] %v586
        %v588 = vld [vmem:[%s580 + $0x44] sm:%s573]
        %589 = vst [vmem:[%s581 + $0xc] sm:%s573] %v588
        %v590 = vld [vmem:[%s580 + $0x8] sm:%s573]
        %591 = vst [vmem:[%s581 + $0x10] sm:%s573] %v590
        %v592 = vld [vmem:[%s580 + $0x48] sm:%s573]
        %593 = vst [vmem:[%s581 + $0x14] sm:%s573] %v592
        %v594 = vld [vmem:[%s580 + $0xc] sm:%s573]
        %595 = vst [vmem:[%s581 + $0x18] sm:%s573] %v594
        %v596 = vld [vmem:[%s580 + $0x4c] sm:%s573]
        %597 = vst [vmem:[%s581 + $0x1c] sm:%s573] %v596
        %v598 = vld [vmem:[%s580 + $0x10] sm:%s573]
        %599 = vst [vmem:[%s581 + $0x20] sm:%s573] %v598
        %v600 = vld [vmem:[%s580 + $0x50] sm:%s573]
        %601 = vst [vmem:[%s581 + $0x24] sm:%s573] %v600
        %v602 = vld [vmem:[%s580 + $0x14] sm:%s573]
        %603 = vst [vmem:[%s581 + $0x28] sm:%s573] %v602
        %v604 = vld [vmem:[%s580 + $0x54] sm:%s573]
        %605 = vst [vmem:[%s581 + $0x2c] sm:%s573] %v604
        %v606 = vld [vmem:[%s580 + $0x18] sm:%s573]
        %607 = vst [vmem:[%s581 + $0x30] sm:%s573] %v606
        %v608 = vld [vmem:[%s580 + $0x58] sm:%s573]
        %609 = vst [vmem:[%s581 + $0x34] sm:%s573] %v608
        %v610 = vld [vmem:[%s580 + $0x1c] sm:%s573]
        %611 = vst [vmem:[%s581 + $0x38] sm:%s573] %v610
        %v612 = vld [vmem:[%s580 + $0x5c] sm:%s573]
        %613 = vst [vmem:[%s581 + $0x3c] sm:%s573] %v612
        %v614 = vld [vmem:[%s580 + $0x20] sm:%s573]
        %615 = vst [vmem:[%s581 + $0x40] sm:%s573] %v614
        %v616 = vld [vmem:[%s580 + $0x60] sm:%s573]
        %617 = vst [vmem:[%s581 + $0x44] sm:%s573] %v616
        %v618 = vld [vmem:[%s580 + $0x24] sm:%s573]
        %619 = vst [vmem:[%s581 + $0x48] sm:%s573] %v618
        %v620 = vld [vmem:[%s580 + $0x64] sm:%s573]
        %621 = vst [vmem:[%s581 + $0x4c] sm:%s573] %v620
        %v622 = vld [vmem:[%s580 + $0x28] sm:%s573]
        %623 = vst [vmem:[%s581 + $0x50] sm:%s573] %v622
        %v624 = vld [vmem:[%s580 + $0x68] sm:%s573]
        %625 = vst [vmem:[%s581 + $0x54] sm:%s573] %v624
        %v626 = vld [vmem:[%s580 + $0x2c] sm:%s573]
        %627 = vst [vmem:[%s581 + $0x58] sm:%s573] %v626
        %v628 = vld [vmem:[%s580 + $0x6c] sm:%s573]
        %629 = vst [vmem:[%s581 + $0x5c] sm:%s573] %v628
        %v630 = vld [vmem:[%s580 + $0x30] sm:%s573]
        %631 = vst [vmem:[%s581 + $0x60] sm:%s573] %v630
        %v632 = vld [vmem:[%s580 + $0x70] sm:%s573]
        %633 = vst [vmem:[%s581 + $0x64] sm:%s573] %v632
        %v634 = vld [vmem:[%s580 + $0x34] sm:%s573]
        %635 = vst [vmem:[%s581 + $0x68] sm:%s573] %v634
        %v636 = vld [vmem:[%s580 + $0x74] sm:%s573]
        %637 = vst [vmem:[%s581 + $0x6c] sm:%s573] %v636
        %v638 = vld [vmem:[%s580 + $0x38] sm:%s573]
        %639 = vst [vmem:[%s581 + $0x70] sm:%s573] %v638
        %v640 = vld [vmem:[%s580 + $0x78] sm:%s573]
        %641 = vst [vmem:[%s581 + $0x74] sm:%s573] %v640
        %v642 = vld [vmem:[%s580 + $0x3c] sm:%s573]
        %643 = vst [vmem:[%s581 + $0x78] sm:%s573] %v642
        %v644 = vld [vmem:[%s580 + $0x7c] sm:%s573]
        %645 = vst [vmem:[%s581 + $0x7c] sm:%s573] %v644
        %v646 = vld [vmem:[%s580 + $0x80] sm:%s573]
        %647 = vst [vmem:[%s581 + $0x80] sm:%s573] %v646
        %v648 = vld [vmem:[%s580 + $0xc0] sm:%s573]
        %649 = vst [vmem:[%s581 + $0x84] sm:%s573] %v648
        %v650 = vld [vmem:[%s580 + $0x84] sm:%s573]
        %651 = vst [vmem:[%s581 + $0x88] sm:%s573] %v650
        %v652 = vld [vmem:[%s580 + $0xc4] sm:%s573]
        %653 = vst [vmem:[%s581 + $0x8c] sm:%s573] %v652
        %v654 = vld [vmem:[%s580 + $0x88] sm:%s573]
        %655 = vst [vmem:[%s581 + $0x90] sm:%s573] %v654
        %v656 = vld [vmem:[%s580 + $0xc8] sm:%s573]
        %657 = vst [vmem:[%s581 + $0x94] sm:%s573] %v656
        %v658 = vld [vmem:[%s580 + $0x8c] sm:%s573]
        %659 = vst [vmem:[%s581 + $0x98] sm:%s573] %v658
        %v660 = vld [vmem:[%s580 + $0xcc] sm:%s573]
        %661 = vst [vmem:[%s581 + $0x9c] sm:%s573] %v660
        %v662 = vld [vmem:[%s580 + $0x90] sm:%s573]
        %663 = vst [vmem:[%s581 + $0xa0] sm:%s573] %v662
        %v664 = vld [vmem:[%s580 + $0xd0] sm:%s573]
        %665 = vst [vmem:[%s581 + $0xa4] sm:%s573] %v664
        %v666 = vld [vmem:[%s580 + $0x94] sm:%s573]
        %667 = vst [vmem:[%s581 + $0xa8] sm:%s573] %v666
        %v668 = vld [vmem:[%s580 + $0xd4] sm:%s573]
        %669 = vst [vmem:[%s581 + $0xac] sm:%s573] %v668
        %v670 = vld [vmem:[%s580 + $0x98] sm:%s573]
        %671 = vst [vmem:[%s581 + $0xb0] sm:%s573] %v670
        %v672 = vld [vmem:[%s580 + $0xd8] sm:%s573]
        %673 = vst [vmem:[%s581 + $0xb4] sm:%s573] %v672
        %v674 = vld [vmem:[%s580 + $0x9c] sm:%s573]
        %675 = vst [vmem:[%s581 + $0xb8] sm:%s573] %v674
        %v676 = vld [vmem:[%s580 + $0xdc] sm:%s573]
        %677 = vst [vmem:[%s581 + $0xbc] sm:%s573] %v676
        %v678 = vld [vmem:[%s580 + $0xa0] sm:%s573]
        %679 = vst [vmem:[%s581 + $0xc0] sm:%s573] %v678
        %v680 = vld [vmem:[%s580 + $0xe0] sm:%s573]
        %681 = vst [vmem:[%s581 + $0xc4] sm:%s573] %v680
        %v682 = vld [vmem:[%s580 + $0xa4] sm:%s573]
        %683 = vst [vmem:[%s581 + $0xc8] sm:%s573] %v682
        %v684 = vld [vmem:[%s580 + $0xe4] sm:%s573]
        %685 = vst [vmem:[%s581 + $0xcc] sm:%s573] %v684
        %v686 = vld [vmem:[%s580 + $0xa8] sm:%s573]
        %687 = vst [vmem:[%s581 + $0xd0] sm:%s573] %v686
        %v688 = vld [vmem:[%s580 + $0xe8] sm:%s573]
        %689 = vst [vmem:[%s581 + $0xd4] sm:%s573] %v688
        %v690 = vld [vmem:[%s580 + $0xac] sm:%s573]
        %691 = vst [vmem:[%s581 + $0xd8] sm:%s573] %v690
        %v692 = vld [vmem:[%s580 + $0xec] sm:%s573]
        %693 = vst [vmem:[%s581 + $0xdc] sm:%s573] %v692
        %v694 = vld [vmem:[%s580 + $0xb0] sm:%s573]
        %695 = vst [vmem:[%s581 + $0xe0] sm:%s573] %v694
        %v696 = vld [vmem:[%s580 + $0xf0] sm:%s573]
        %697 = vst [vmem:[%s581 + $0xe4] sm:%s573] %v696
        %v698 = vld [vmem:[%s580 + $0xb4] sm:%s573]
        %699 = vst [vmem:[%s581 + $0xe8] sm:%s573] %v698
        %v700 = vld [vmem:[%s580 + $0xf4] sm:%s573]
        %701 = vst [vmem:[%s581 + $0xec] sm:%s573] %v700
        %v702 = vld [vmem:[%s580 + $0xb8] sm:%s573]
        %703 = vst [vmem:[%s581 + $0xf0] sm:%s573] %v702
        %v704 = vld [vmem:[%s580 + $0xf8] sm:%s573]
        %705 = vst [vmem:[%s581 + $0xf4] sm:%s573] %v704
        %v706 = vld [vmem:[%s580 + $0xbc] sm:%s573]
        %707 = vst [vmem:[%s581 + $0xf8] sm:%s573] %v706
        %v708 = vld [vmem:[%s580 + $0xfc] sm:%s573]
        %709 = vst [vmem:[%s581 + $0xfc] sm:%s573] %v708
        %v710 = vld [vmem:[%s580 + $0x100] sm:%s573]
        %711 = vst [vmem:[%s581 + $0x100] sm:%s573] %v710
        %v712 = vld [vmem:[%s580 + $0x140] sm:%s573]
        %713 = vst [vmem:[%s581 + $0x104] sm:%s573] %v712
        %v714 = vld [vmem:[%s580 + $0x104] sm:%s573]
        %715 = vst [vmem:[%s581 + $0x108] sm:%s573] %v714
        %v716 = vld [vmem:[%s580 + $0x144] sm:%s573]
        %717 = vst [vmem:[%s581 + $0x10c] sm:%s573] %v716
        %v718 = vld [vmem:[%s580 + $0x108] sm:%s573]
        %719 = vst [vmem:[%s581 + $0x110] sm:%s573] %v718
        %v720 = vld [vmem:[%s580 + $0x148] sm:%s573]
        %721 = vst [vmem:[%s581 + $0x114] sm:%s573] %v720
        %v722 = vld [vmem:[%s580 + $0x10c] sm:%s573]
        %723 = vst [vmem:[%s581 + $0x118] sm:%s573] %v722
        %v724 = vld [vmem:[%s580 + $0x14c] sm:%s573]
        %725 = vst [vmem:[%s581 + $0x11c] sm:%s573] %v724
        %v726 = vld [vmem:[%s580 + $0x110] sm:%s573]
        %727 = vst [vmem:[%s581 + $0x120] sm:%s573] %v726
        %v728 = vld [vmem:[%s580 + $0x150] sm:%s573]
        %729 = vst [vmem:[%s581 + $0x124] sm:%s573] %v728
        %v730 = vld [vmem:[%s580 + $0x114] sm:%s573]
        %731 = vst [vmem:[%s581 + $0x128] sm:%s573] %v730
        %v732 = vld [vmem:[%s580 + $0x154] sm:%s573]
        %733 = vst [vmem:[%s581 + $0x12c] sm:%s573] %v732
        %v734 = vld [vmem:[%s580 + $0x118] sm:%s573]
        %735 = vst [vmem:[%s581 + $0x130] sm:%s573] %v734
        %v736 = vld [vmem:[%s580 + $0x158] sm:%s573]
        %737 = vst [vmem:[%s581 + $0x134] sm:%s573] %v736
        %v738 = vld [vmem:[%s580 + $0x11c] sm:%s573]
        %739 = vst [vmem:[%s581 + $0x138] sm:%s573] %v738
        %v740 = vld [vmem:[%s580 + $0x15c] sm:%s573]
        %741 = vst [vmem:[%s581 + $0x13c] sm:%s573] %v740
        %v742 = vld [vmem:[%s580 + $0x120] sm:%s573]
        %743 = vst [vmem:[%s581 + $0x140] sm:%s573] %v742
        %v744 = vld [vmem:[%s580 + $0x160] sm:%s573]
        %745 = vst [vmem:[%s581 + $0x144] sm:%s573] %v744
        %v746 = vld [vmem:[%s580 + $0x124] sm:%s573]
        %747 = vst [vmem:[%s581 + $0x148] sm:%s573] %v746
        %v748 = vld [vmem:[%s580 + $0x164] sm:%s573]
        %749 = vst [vmem:[%s581 + $0x14c] sm:%s573] %v748
        %v750 = vld [vmem:[%s580 + $0x128] sm:%s573]
        %751 = vst [vmem:[%s581 + $0x150] sm:%s573] %v750
        %v752 = vld [vmem:[%s580 + $0x168] sm:%s573]
        %753 = vst [vmem:[%s581 + $0x154] sm:%s573] %v752
        %v754 = vld [vmem:[%s580 + $0x12c] sm:%s573]
        %755 = vst [vmem:[%s581 + $0x158] sm:%s573] %v754
        %v756 = vld [vmem:[%s580 + $0x16c] sm:%s573]
        %757 = vst [vmem:[%s581 + $0x15c] sm:%s573] %v756
        %v758 = vld [vmem:[%s580 + $0x130] sm:%s573]
        %759 = vst [vmem:[%s581 + $0x160] sm:%s573] %v758
        %v760 = vld [vmem:[%s580 + $0x170] sm:%s573]
        %761 = vst [vmem:[%s581 + $0x164] sm:%s573] %v760
        %v762 = vld [vmem:[%s580 + $0x134] sm:%s573]
        %763 = vst [vmem:[%s581 + $0x168] sm:%s573] %v762
        %v764 = vld [vmem:[%s580 + $0x174] sm:%s573]
        %765 = vst [vmem:[%s581 + $0x16c] sm:%s573] %v764
        %v766 = vld [vmem:[%s580 + $0x138] sm:%s573]
        %767 = vst [vmem:[%s581 + $0x170] sm:%s573] %v766
        %v768 = vld [vmem:[%s580 + $0x178] sm:%s573]
        %769 = vst [vmem:[%s581 + $0x174] sm:%s573] %v768
        %v770 = vld [vmem:[%s580 + $0x13c] sm:%s573]
        %771 = vst [vmem:[%s581 + $0x178] sm:%s573] %v770
        %v772 = vld [vmem:[%s580 + $0x17c] sm:%s573]
        %773 = vst [vmem:[%s581 + $0x17c] sm:%s573] %v772
        %v774 = vld [vmem:[%s580 + $0x180] sm:%s573]
        %775 = vst [vmem:[%s581 + $0x180] sm:%s573] %v774
        %v776 = vld [vmem:[%s580 + $0x1c0] sm:%s573]
        %777 = vst [vmem:[%s581 + $0x184] sm:%s573] %v776
        %v778 = vld [vmem:[%s580 + $0x184] sm:%s573]
        %779 = vst [vmem:[%s581 + $0x188] sm:%s573] %v778
        %v780 = vld [vmem:[%s580 + $0x1c4] sm:%s573]
        %781 = vst [vmem:[%s581 + $0x18c] sm:%s573] %v780
        %v782 = vld [vmem:[%s580 + $0x188] sm:%s573]
        %783 = vst [vmem:[%s581 + $0x190] sm:%s573] %v782
        %v784 = vld [vmem:[%s580 + $0x1c8] sm:%s573]
        %785 = vst [vmem:[%s581 + $0x194] sm:%s573] %v784
        %v786 = vld [vmem:[%s580 + $0x18c] sm:%s573]
        %787 = vst [vmem:[%s581 + $0x198] sm:%s573] %v786
        %v788 = vld [vmem:[%s580 + $0x1cc] sm:%s573]
        %789 = vst [vmem:[%s581 + $0x19c] sm:%s573] %v788
        %v790 = vld [vmem:[%s580 + $0x190] sm:%s573]
        %791 = vst [vmem:[%s581 + $0x1a0] sm:%s573] %v790
        %v792 = vld [vmem:[%s580 + $0x1d0] sm:%s573]
        %793 = vst [vmem:[%s581 + $0x1a4] sm:%s573] %v792
        %v794 = vld [vmem:[%s580 + $0x194] sm:%s573]
        %795 = vst [vmem:[%s581 + $0x1a8] sm:%s573] %v794
        %v796 = vld [vmem:[%s580 + $0x1d4] sm:%s573]
        %797 = vst [vmem:[%s581 + $0x1ac] sm:%s573] %v796
        %v798 = vld [vmem:[%s580 + $0x198] sm:%s573]
        %799 = vst [vmem:[%s581 + $0x1b0] sm:%s573] %v798
        %v800 = vld [vmem:[%s580 + $0x1d8] sm:%s573]
        %801 = vst [vmem:[%s581 + $0x1b4] sm:%s573] %v800
        %v802 = vld [vmem:[%s580 + $0x19c] sm:%s573]
        %803 = vst [vmem:[%s581 + $0x1b8] sm:%s573] %v802
        %v804 = vld [vmem:[%s580 + $0x1dc] sm:%s573]
        %805 = vst [vmem:[%s581 + $0x1bc] sm:%s573] %v804
        %v806 = vld [vmem:[%s580 + $0x1a0] sm:%s573]
        %807 = vst [vmem:[%s581 + $0x1c0] sm:%s573] %v806
        %v808 = vld [vmem:[%s580 + $0x1e0] sm:%s573]
        %809 = vst [vmem:[%s581 + $0x1c4] sm:%s573] %v808
        %v810 = vld [vmem:[%s580 + $0x1a4] sm:%s573]
        %811 = vst [vmem:[%s581 + $0x1c8] sm:%s573] %v810
        %v812 = vld [vmem:[%s580 + $0x1e4] sm:%s573]
        %813 = vst [vmem:[%s581 + $0x1cc] sm:%s573] %v812
        %v814 = vld [vmem:[%s580 + $0x1a8] sm:%s573]
        %815 = vst [vmem:[%s581 + $0x1d0] sm:%s573] %v814
        %v816 = vld [vmem:[%s580 + $0x1e8] sm:%s573]
        %817 = vst [vmem:[%s581 + $0x1d4] sm:%s573] %v816
        %v818 = vld [vmem:[%s580 + $0x1ac] sm:%s573]
        %819 = vst [vmem:[%s581 + $0x1d8] sm:%s573] %v818
        %v820 = vld [vmem:[%s580 + $0x1ec] sm:%s573]
        %821 = vst [vmem:[%s581 + $0x1dc] sm:%s573] %v820
        %v822 = vld [vmem:[%s580 + $0x1b0] sm:%s573]
        %823 = vst [vmem:[%s581 + $0x1e0] sm:%s573] %v822
        %v824 = vld [vmem:[%s580 + $0x1f0] sm:%s573]
        %825 = vst [vmem:[%s581 + $0x1e4] sm:%s573] %v824
        %v826 = vld [vmem:[%s580 + $0x1b4] sm:%s573]
        %827 = vst [vmem:[%s581 + $0x1e8] sm:%s573] %v826
        %v828 = vld [vmem:[%s580 + $0x1f4] sm:%s573]
        %829 = vst [vmem:[%s581 + $0x1ec] sm:%s573] %v828
        %v830 = vld [vmem:[%s580 + $0x1b8] sm:%s573]
        %831 = vst [vmem:[%s581 + $0x1f0] sm:%s573] %v830
        %v832 = vld [vmem:[%s580 + $0x1f8] sm:%s573]
        %833 = vst [vmem:[%s581 + $0x1f4] sm:%s573] %v832
        %v834 = vld [vmem:[%s580 + $0x1bc] sm:%s573]
        %835 = vst [vmem:[%s581 + $0x1f8] sm:%s573] %v834
        %v836 = vld [vmem:[%s580 + $0x1fc] sm:%s573]
        %837 = vst [vmem:[%s581 + $0x1fc] sm:%s573] %v836
        %v838 = vld [vmem:[%s580 + $0x200] sm:%s573]
        %839 = vst [vmem:[%s581 + $0x200] sm:%s573] %v838
        %v840 = vld [vmem:[%s580 + $0x240] sm:%s573]
        %841 = vst [vmem:[%s581 + $0x204] sm:%s573] %v840
        %v842 = vld [vmem:[%s580 + $0x204] sm:%s573]
        %843 = vst [vmem:[%s581 + $0x208] sm:%s573] %v842
        %v844 = vld [vmem:[%s580 + $0x244] sm:%s573]
        %845 = vst [vmem:[%s581 + $0x20c] sm:%s573] %v844
        %v846 = vld [vmem:[%s580 + $0x208] sm:%s573]
        %847 = vst [vmem:[%s581 + $0x210] sm:%s573] %v846
        %v848 = vld [vmem:[%s580 + $0x248] sm:%s573]
        %849 = vst [vmem:[%s581 + $0x214] sm:%s573] %v848
        %v850 = vld [vmem:[%s580 + $0x20c] sm:%s573]
        %851 = vst [vmem:[%s581 + $0x218] sm:%s573] %v850
        %v852 = vld [vmem:[%s580 + $0x24c] sm:%s573]
        %853 = vst [vmem:[%s581 + $0x21c] sm:%s573] %v852
        %v854 = vld [vmem:[%s580 + $0x210] sm:%s573]
        %855 = vst [vmem:[%s581 + $0x220] sm:%s573] %v854
        %v856 = vld [vmem:[%s580 + $0x250] sm:%s573]
        %857 = vst [vmem:[%s581 + $0x224] sm:%s573] %v856
        %v858 = vld [vmem:[%s580 + $0x214] sm:%s573]
        %859 = vst [vmem:[%s581 + $0x228] sm:%s573] %v858
        %v860 = vld [vmem:[%s580 + $0x254] sm:%s573]
        %861 = vst [vmem:[%s581 + $0x22c] sm:%s573] %v860
        %v862 = vld [vmem:[%s580 + $0x218] sm:%s573]
        %863 = vst [vmem:[%s581 + $0x230] sm:%s573] %v862
        %v864 = vld [vmem:[%s580 + $0x258] sm:%s573]
        %865 = vst [vmem:[%s581 + $0x234] sm:%s573] %v864
        %v866 = vld [vmem:[%s580 + $0x21c] sm:%s573]
        %867 = vst [vmem:[%s581 + $0x238] sm:%s573] %v866
        %v868 = vld [vmem:[%s580 + $0x25c] sm:%s573]
        %869 = vst [vmem:[%s581 + $0x23c] sm:%s573] %v868
        %v870 = vld [vmem:[%s580 + $0x220] sm:%s573]
        %871 = vst [vmem:[%s581 + $0x240] sm:%s573] %v870
        %v872 = vld [vmem:[%s580 + $0x260] sm:%s573]
        %873 = vst [vmem:[%s581 + $0x244] sm:%s573] %v872
        %v874 = vld [vmem:[%s580 + $0x224] sm:%s573]
        %875 = vst [vmem:[%s581 + $0x248] sm:%s573] %v874
        %v876 = vld [vmem:[%s580 + $0x264] sm:%s573]
        %877 = vst [vmem:[%s581 + $0x24c] sm:%s573] %v876
        %v878 = vld [vmem:[%s580 + $0x228] sm:%s573]
        %879 = vst [vmem:[%s581 + $0x250] sm:%s573] %v878
        %v880 = vld [vmem:[%s580 + $0x268] sm:%s573]
        %881 = vst [vmem:[%s581 + $0x254] sm:%s573] %v880
        %v882 = vld [vmem:[%s580 + $0x22c] sm:%s573]
        %883 = vst [vmem:[%s581 + $0x258] sm:%s573] %v882
        %v884 = vld [vmem:[%s580 + $0x26c] sm:%s573]
        %885 = vst [vmem:[%s581 + $0x25c] sm:%s573] %v884
        %v886 = vld [vmem:[%s580 + $0x230] sm:%s573]
        %887 = vst [vmem:[%s581 + $0x260] sm:%s573] %v886
        %v888 = vld [vmem:[%s580 + $0x270] sm:%s573]
        %889 = vst [vmem:[%s581 + $0x264] sm:%s573] %v888
        %v890 = vld [vmem:[%s580 + $0x234] sm:%s573]
        %891 = vst [vmem:[%s581 + $0x268] sm:%s573] %v890
        %v892 = vld [vmem:[%s580 + $0x274] sm:%s573]
        %893 = vst [vmem:[%s581 + $0x26c] sm:%s573] %v892
        %v894 = vld [vmem:[%s580 + $0x238] sm:%s573]
        %895 = vst [vmem:[%s581 + $0x270] sm:%s573] %v894
        %v896 = vld [vmem:[%s580 + $0x278] sm:%s573]
        %897 = vst [vmem:[%s581 + $0x274] sm:%s573] %v896
        %v898 = vld [vmem:[%s580 + $0x23c] sm:%s573]
        %899 = vst [vmem:[%s581 + $0x278] sm:%s573] %v898
        %v900 = vld [vmem:[%s580 + $0x27c] sm:%s573]
        %901 = vst [vmem:[%s581 + $0x27c] sm:%s573] %v900
        %v902 = vld [vmem:[%s580 + $0x280] sm:%s573]
        %903 = vst [vmem:[%s581 + $0x280] sm:%s573] %v902
        %v904 = vld [vmem:[%s580 + $0x2c0] sm:%s573]
        %905 = vst [vmem:[%s581 + $0x284] sm:%s573] %v904
        %v906 = vld [vmem:[%s580 + $0x284] sm:%s573]
        %907 = vst [vmem:[%s581 + $0x288] sm:%s573] %v906
        %v908 = vld [vmem:[%s580 + $0x2c4] sm:%s573]
        %909 = vst [vmem:[%s581 + $0x28c] sm:%s573] %v908
        %v910 = vld [vmem:[%s580 + $0x288] sm:%s573]
        %911 = vst [vmem:[%s581 + $0x290] sm:%s573] %v910
        %v912 = vld [vmem:[%s580 + $0x2c8] sm:%s573]
        %913 = vst [vmem:[%s581 + $0x294] sm:%s573] %v912
        %v914 = vld [vmem:[%s580 + $0x28c] sm:%s573]
        %915 = vst [vmem:[%s581 + $0x298] sm:%s573] %v914
        %v916 = vld [vmem:[%s580 + $0x2cc] sm:%s573]
        %917 = vst [vmem:[%s581 + $0x29c] sm:%s573] %v916
        %v918 = vld [vmem:[%s580 + $0x290] sm:%s573]
        %919 = vst [vmem:[%s581 + $0x2a0] sm:%s573] %v918
        %v920 = vld [vmem:[%s580 + $0x2d0] sm:%s573]
        %921 = vst [vmem:[%s581 + $0x2a4] sm:%s573] %v920
        %v922 = vld [vmem:[%s580 + $0x294] sm:%s573]
        %923 = vst [vmem:[%s581 + $0x2a8] sm:%s573] %v922
        %v924 = vld [vmem:[%s580 + $0x2d4] sm:%s573]
        %925 = vst [vmem:[%s581 + $0x2ac] sm:%s573] %v924
        %v926 = vld [vmem:[%s580 + $0x298] sm:%s573]
        %927 = vst [vmem:[%s581 + $0x2b0] sm:%s573] %v926
        %v928 = vld [vmem:[%s580 + $0x2d8] sm:%s573]
        %929 = vst [vmem:[%s581 + $0x2b4] sm:%s573] %v928
        %v930 = vld [vmem:[%s580 + $0x29c] sm:%s573]
        %931 = vst [vmem:[%s581 + $0x2b8] sm:%s573] %v930
        %v932 = vld [vmem:[%s580 + $0x2dc] sm:%s573]
        %933 = vst [vmem:[%s581 + $0x2bc] sm:%s573] %v932
        %v934 = vld [vmem:[%s580 + $0x2a0] sm:%s573]
        %935 = vst [vmem:[%s581 + $0x2c0] sm:%s573] %v934
        %v936 = vld [vmem:[%s580 + $0x2e0] sm:%s573]
        %937 = vst [vmem:[%s581 + $0x2c4] sm:%s573] %v936
        %v938 = vld [vmem:[%s580 + $0x2a4] sm:%s573]
        %939 = vst [vmem:[%s581 + $0x2c8] sm:%s573] %v938
        %v940 = vld [vmem:[%s580 + $0x2e4] sm:%s573]
        %941 = vst [vmem:[%s581 + $0x2cc] sm:%s573] %v940
        %v942 = vld [vmem:[%s580 + $0x2a8] sm:%s573]
        %943 = vst [vmem:[%s581 + $0x2d0] sm:%s573] %v942
        %v944 = vld [vmem:[%s580 + $0x2e8] sm:%s573]
        %945 = vst [vmem:[%s581 + $0x2d4] sm:%s573] %v944
        %v946 = vld [vmem:[%s580 + $0x2ac] sm:%s573]
        %947 = vst [vmem:[%s581 + $0x2d8] sm:%s573] %v946
        %v948 = vld [vmem:[%s580 + $0x2ec] sm:%s573]
        %949 = vst [vmem:[%s581 + $0x2dc] sm:%s573] %v948
        %v950 = vld [vmem:[%s580 + $0x2b0] sm:%s573]
        %951 = vst [vmem:[%s581 + $0x2e0] sm:%s573] %v950
        %v952 = vld [vmem:[%s580 + $0x2f0] sm:%s573]
        %953 = vst [vmem:[%s581 + $0x2e4] sm:%s573] %v952
        %v954 = vld [vmem:[%s580 + $0x2b4] sm:%s573]
        %955 = vst [vmem:[%s581 + $0x2e8] sm:%s573] %v954
        %v956 = vld [vmem:[%s580 + $0x2f4] sm:%s573]
        %957 = vst [vmem:[%s581 + $0x2ec] sm:%s573] %v956
        %v958 = vld [vmem:[%s580 + $0x2b8] sm:%s573]
        %959 = vst [vmem:[%s581 + $0x2f0] sm:%s573] %v958
        %v960 = vld [vmem:[%s580 + $0x2f8] sm:%s573]
        %961 = vst [vmem:[%s581 + $0x2f4] sm:%s573] %v960
        %v962 = vld [vmem:[%s580 + $0x2bc] sm:%s573]
        %963 = vst [vmem:[%s581 + $0x2f8] sm:%s573] %v962
        %v964 = vld [vmem:[%s580 + $0x2fc] sm:%s573]
        %965 = vst [vmem:[%s581 + $0x2fc] sm:%s573] %v964
        %v966 = vld [vmem:[%s580 + $0x300] sm:%s573]
        %967 = vst [vmem:[%s581 + $0x300] sm:%s573] %v966
        %v968 = vld [vmem:[%s580 + $0x340] sm:%s573]
        %969 = vst [vmem:[%s581 + $0x304] sm:%s573] %v968
        %v970 = vld [vmem:[%s580 + $0x304] sm:%s573]
        %971 = vst [vmem:[%s581 + $0x308] sm:%s573] %v970
        %v972 = vld [vmem:[%s580 + $0x344] sm:%s573]
        %973 = vst [vmem:[%s581 + $0x30c] sm:%s573] %v972
        %v974 = vld [vmem:[%s580 + $0x308] sm:%s573]
        %975 = vst [vmem:[%s581 + $0x310] sm:%s573] %v974
        %v976 = vld [vmem:[%s580 + $0x348] sm:%s573]
        %977 = vst [vmem:[%s581 + $0x314] sm:%s573] %v976
        %v978 = vld [vmem:[%s580 + $0x30c] sm:%s573]
        %979 = vst [vmem:[%s581 + $0x318] sm:%s573] %v978
        %v980 = vld [vmem:[%s580 + $0x34c] sm:%s573]
        %981 = vst [vmem:[%s581 + $0x31c] sm:%s573] %v980
        %v982 = vld [vmem:[%s580 + $0x310] sm:%s573]
        %983 = vst [vmem:[%s581 + $0x320] sm:%s573] %v982
        %v984 = vld [vmem:[%s580 + $0x350] sm:%s573]
        %985 = vst [vmem:[%s581 + $0x324] sm:%s573] %v984
        %v986 = vld [vmem:[%s580 + $0x314] sm:%s573]
        %987 = vst [vmem:[%s581 + $0x328] sm:%s573] %v986
        %v988 = vld [vmem:[%s580 + $0x354] sm:%s573]
        %989 = vst [vmem:[%s581 + $0x32c] sm:%s573] %v988
        %v990 = vld [vmem:[%s580 + $0x318] sm:%s573]
        %991 = vst [vmem:[%s581 + $0x330] sm:%s573] %v990
        %v992 = vld [vmem:[%s580 + $0x358] sm:%s573]
        %993 = vst [vmem:[%s581 + $0x334] sm:%s573] %v992
        %v994 = vld [vmem:[%s580 + $0x31c] sm:%s573]
        %995 = vst [vmem:[%s581 + $0x338] sm:%s573] %v994
        %v996 = vld [vmem:[%s580 + $0x35c] sm:%s573]
        %997 = vst [vmem:[%s581 + $0x33c] sm:%s573] %v996
        %v998 = vld [vmem:[%s580 + $0x320] sm:%s573]
        %999 = vst [vmem:[%s581 + $0x340] sm:%s573] %v998
        %v1000 = vld [vmem:[%s580 + $0x360] sm:%s573]
        %1001 = vst [vmem:[%s581 + $0x344] sm:%s573] %v1000
        %v1002 = vld [vmem:[%s580 + $0x324] sm:%s573]
        %1003 = vst [vmem:[%s581 + $0x348] sm:%s573] %v1002
        %v1004 = vld [vmem:[%s580 + $0x364] sm:%s573]
        %1005 = vst [vmem:[%s581 + $0x34c] sm:%s573] %v1004
        %v1006 = vld [vmem:[%s580 + $0x328] sm:%s573]
        %1007 = vst [vmem:[%s581 + $0x350] sm:%s573] %v1006
        %v1008 = vld [vmem:[%s580 + $0x368] sm:%s573]
        %1009 = vst [vmem:[%s581 + $0x354] sm:%s573] %v1008
        %v1010 = vld [vmem:[%s580 + $0x32c] sm:%s573]
        %1011 = vst [vmem:[%s581 + $0x358] sm:%s573] %v1010
        %v1012 = vld [vmem:[%s580 + $0x36c] sm:%s573]
        %1013 = vst [vmem:[%s581 + $0x35c] sm:%s573] %v1012
        %v1014 = vld [vmem:[%s580 + $0x330] sm:%s573]
        %1015 = vst [vmem:[%s581 + $0x360] sm:%s573] %v1014
        %v1016 = vld [vmem:[%s580 + $0x370] sm:%s573]
        %1017 = vst [vmem:[%s581 + $0x364] sm:%s573] %v1016
        %v1018 = vld [vmem:[%s580 + $0x334] sm:%s573]
        %1019 = vst [vmem:[%s581 + $0x368] sm:%s573] %v1018
        %v1020 = vld [vmem:[%s580 + $0x374] sm:%s573]
        %1021 = vst [vmem:[%s581 + $0x36c] sm:%s573] %v1020
        %v1022 = vld [vmem:[%s580 + $0x338] sm:%s573]
        %1023 = vst [vmem:[%s581 + $0x370] sm:%s573] %v1022
        %v1024 = vld [vmem:[%s580 + $0x378] sm:%s573]
        %1025 = vst [vmem:[%s581 + $0x374] sm:%s573] %v1024
        %v1026 = vld [vmem:[%s580 + $0x33c] sm:%s573]
        %1027 = vst [vmem:[%s581 + $0x378] sm:%s573] %v1026
        %v1028 = vld [vmem:[%s580 + $0x37c] sm:%s573]
        %1029 = vst [vmem:[%s581 + $0x37c] sm:%s573] %v1028
        %v1030 = vld [vmem:[%s580 + $0x380] sm:%s573]
        %1031 = vst [vmem:[%s581 + $0x380] sm:%s573] %v1030
        %v1032 = vld [vmem:[%s580 + $0x3c0] sm:%s573]
        %1033 = vst [vmem:[%s581 + $0x384] sm:%s573] %v1032
        %v1034 = vld [vmem:[%s580 + $0x384] sm:%s573]
        %1035 = vst [vmem:[%s581 + $0x388] sm:%s573] %v1034
        %v1036 = vld [vmem:[%s580 + $0x3c4] sm:%s573]
        %1037 = vst [vmem:[%s581 + $0x38c] sm:%s573] %v1036
        %v1038 = vld [vmem:[%s580 + $0x388] sm:%s573]
        %1039 = vst [vmem:[%s581 + $0x390] sm:%s573] %v1038
        %v1040 = vld [vmem:[%s580 + $0x3c8] sm:%s573]
        %1041 = vst [vmem:[%s581 + $0x394] sm:%s573] %v1040
        %v1042 = vld [vmem:[%s580 + $0x38c] sm:%s573]
        %1043 = vst [vmem:[%s581 + $0x398] sm:%s573] %v1042
        %v1044 = vld [vmem:[%s580 + $0x3cc] sm:%s573]
        %1045 = vst [vmem:[%s581 + $0x39c] sm:%s573] %v1044
        %v1046 = vld [vmem:[%s580 + $0x390] sm:%s573]
        %1047 = vst [vmem:[%s581 + $0x3a0] sm:%s573] %v1046
        %v1048 = vld [vmem:[%s580 + $0x3d0] sm:%s573]
        %1049 = vst [vmem:[%s581 + $0x3a4] sm:%s573] %v1048
        %v1050 = vld [vmem:[%s580 + $0x394] sm:%s573]
        %1051 = vst [vmem:[%s581 + $0x3a8] sm:%s573] %v1050
        %v1052 = vld [vmem:[%s580 + $0x3d4] sm:%s573]
        %1053 = vst [vmem:[%s581 + $0x3ac] sm:%s573] %v1052
        %v1054 = vld [vmem:[%s580 + $0x398] sm:%s573]
        %1055 = vst [vmem:[%s581 + $0x3b0] sm:%s573] %v1054
        %v1056 = vld [vmem:[%s580 + $0x3d8] sm:%s573]
        %1057 = vst [vmem:[%s581 + $0x3b4] sm:%s573] %v1056
        %v1058 = vld [vmem:[%s580 + $0x39c] sm:%s573]
        %1059 = vst [vmem:[%s581 + $0x3b8] sm:%s573] %v1058
        %v1060 = vld [vmem:[%s580 + $0x3dc] sm:%s573]
        %1061 = vst [vmem:[%s581 + $0x3bc] sm:%s573] %v1060
        %v1062 = vld [vmem:[%s580 + $0x3a0] sm:%s573]
        %1063 = vst [vmem:[%s581 + $0x3c0] sm:%s573] %v1062
        %v1064 = vld [vmem:[%s580 + $0x3e0] sm:%s573]
        %1065 = vst [vmem:[%s581 + $0x3c4] sm:%s573] %v1064
        %v1066 = vld [vmem:[%s580 + $0x3a4] sm:%s573]
        %1067 = vst [vmem:[%s581 + $0x3c8] sm:%s573] %v1066
        %v1068 = vld [vmem:[%s580 + $0x3e4] sm:%s573]
        %1069 = vst [vmem:[%s581 + $0x3cc] sm:%s573] %v1068
        %v1070 = vld [vmem:[%s580 + $0x3a8] sm:%s573]
        %1071 = vst [vmem:[%s581 + $0x3d0] sm:%s573] %v1070
        %v1072 = vld [vmem:[%s580 + $0x3e8] sm:%s573]
        %1073 = vst [vmem:[%s581 + $0x3d4] sm:%s573] %v1072
        %v1074 = vld [vmem:[%s580 + $0x3ac] sm:%s573]
        %1075 = vst [vmem:[%s581 + $0x3d8] sm:%s573] %v1074
        %v1076 = vld [vmem:[%s580 + $0x3ec] sm:%s573]
        %1077 = vst [vmem:[%s581 + $0x3dc] sm:%s573] %v1076
        %v1078 = vld [vmem:[%s580 + $0x3b0] sm:%s573]
        %1079 = vst [vmem:[%s581 + $0x3e0] sm:%s573] %v1078
        %v1080 = vld [vmem:[%s580 + $0x3f0] sm:%s573]
        %1081 = vst [vmem:[%s581 + $0x3e4] sm:%s573] %v1080
        %v1082 = vld [vmem:[%s580 + $0x3b4] sm:%s573]
        %1083 = vst [vmem:[%s581 + $0x3e8] sm:%s573] %v1082
        %v1084 = vld [vmem:[%s580 + $0x3f4] sm:%s573]
        %1085 = vst [vmem:[%s581 + $0x3ec] sm:%s573] %v1084
        %v1086 = vld [vmem:[%s580 + $0x3b8] sm:%s573]
        %1087 = vst [vmem:[%s581 + $0x3f0] sm:%s573] %v1086
        %v1088 = vld [vmem:[%s580 + $0x3f8] sm:%s573]
        %1089 = vst [vmem:[%s581 + $0x3f4] sm:%s573] %v1088
        %v1090 = vld [vmem:[%s580 + $0x3bc] sm:%s573]
        %1091 = vst [vmem:[%s581 + $0x3f8] sm:%s573] %v1090
        %v1092 = vld [vmem:[%s580 + $0x3fc] sm:%s573]
        %1093 = vst [vmem:[%s581 + $0x3fc] sm:%s573] %v1092
      $region56: #{forward.1} parent=43 // loop_footer
        %s579 = sadd.s32 1, %s575
      $region57: #{forward.1} parent=43 // loop_footer_branch
        %574 = sbr.rel target = $region53
      $region58: #{forward.1} parent=43 // loop_exit
        _
    $region44: #{forward.1} parent=28 // pred_fallthru
      _
  $region29: #{forward.1} parent=0 // pred_fallthru
    _
  // Predicated region
  $region30: #{forward.1} parent=0 // pred_check
    %p31 = pneg %p27
  $region31: #{forward.1} parent=0 // pred_check_branch
    %33 = sbr.rel (%p31) target = $region33
  $region32: #{forward.1} parent=0 // pred_region
    %s34 = sshllo.u32 0, 4
    loop: start=0, step=1, limit=1
    $region34: #{forward.1} parent=32 // loop_pre_header
      _
    $region35: #{forward.1} parent=32 // loop_header
      %s36 = sphi 0, %s40
      %p37 = scmp.ge.s32.totalorder %s36, 1
      %s41 = sphi %s6, %s6
      %s42 = sphi [#allocation6], [#allocation6]
    $region36: #{forward.1} parent=32 // loop_header_branch
      %39 = sbr.rel (%p37) target = $region40
    $region37: #{forward.1} parent=32 // loop_body
      %v43 = vld [vmem:[%s41] sm:%s34]
      %44 = vst [vmem:[%s42] sm:%s34] %v43
      %v45 = vld [vmem:[%s41 + $0x40] sm:%s34]
      %46 = vst [vmem:[%s42 + $0x4] sm:%s34] %v45
      %v47 = vld [vmem:[%s41 + $0x4] sm:%s34]
      %48 = vst [vmem:[%s42 + $0x8] sm:%s34] %v47
      %v49 = vld [vmem:[%s41 + $0x44] sm:%s34]
      %50 = vst [vmem:[%s42 + $0xc] sm:%s34] %v49
      %v51 = vld [vmem:[%s41 + $0x8] sm:%s34]
      %52 = vst [vmem:[%s42 + $0x10] sm:%s34] %v51
      %v53 = vld [vmem:[%s41 + $0x48] sm:%s34]
      %54 = vst [vmem:[%s42 + $0x14] sm:%s34] %v53
      %v55 = vld [vmem:[%s41 + $0xc] sm:%s34]
      %56 = vst [vmem:[%s42 + $0x18] sm:%s34] %v55
      %v57 = vld [vmem:[%s41 + $0x4c] sm:%s34]
      %58 = vst [vmem:[%s42 + $0x1c] sm:%s34] %v57
      %v59 = vld [vmem:[%s41 + $0x10] sm:%s34]
      %60 = vst [vmem:[%s42 + $0x20] sm:%s34] %v59
      %v61 = vld [vmem:[%s41 + $0x50] sm:%s34]
      %62 = vst [vmem:[%s42 + $0x24] sm:%s34] %v61
      %v63 = vld [vmem:[%s41 + $0x14] sm:%s34]
      %64 = vst [vmem:[%s42 + $0x28] sm:%s34] %v63
      %v65 = vld [vmem:[%s41 + $0x54] sm:%s34]
      %66 = vst [vmem:[%s42 + $0x2c] sm:%s34] %v65
      %v67 = vld [vmem:[%s41 + $0x18] sm:%s34]
      %68 = vst [vmem:[%s42 + $0x30] sm:%s34] %v67
      %v69 = vld [vmem:[%s41 + $0x58] sm:%s34]
      %70 = vst [vmem:[%s42 + $0x34] sm:%s34] %v69
      %v71 = vld [vmem:[%s41 + $0x1c] sm:%s34]
      %72 = vst [vmem:[%s42 + $0x38] sm:%s34] %v71
      %v73 = vld [vmem:[%s41 + $0x5c] sm:%s34]
      %74 = vst [vmem:[%s42 + $0x3c] sm:%s34] %v73
      %v75 = vld [vmem:[%s41 + $0x20] sm:%s34]
      %76 = vst [vmem:[%s42 + $0x40] sm:%s34] %v75
      %v77 = vld [vmem:[%s41 + $0x60] sm:%s34]
      %78 = vst [vmem:[%s42 + $0x44] sm:%s34] %v77
      %v79 = vld [vmem:[%s41 + $0x24] sm:%s34]
      %80 = vst [vmem:[%s42 + $0x48] sm:%s34] %v79
      %v81 = vld [vmem:[%s41 + $0x64] sm:%s34]
      %82 = vst [vmem:[%s42 + $0x4c] sm:%s34] %v81
      %v83 = vld [vmem:[%s41 + $0x28] sm:%s34]
      %84 = vst [vmem:[%s42 + $0x50] sm:%s34] %v83
      %v85 = vld [vmem:[%s41 + $0x68] sm:%s34]
      %86 = vst [vmem:[%s42 + $0x54] sm:%s34] %v85
      %v87 = vld [vmem:[%s41 + $0x2c] sm:%s34]
      %88 = vst [vmem:[%s42 + $0x58] sm:%s34] %v87
      %v89 = vld [vmem:[%s41 + $0x6c] sm:%s34]
      %90 = vst [vmem:[%s42 + $0x5c] sm:%s34] %v89
      %v91 = vld [vmem:[%s41 + $0x30] sm:%s34]
      %92 = vst [vmem:[%s42 + $0x60] sm:%s34] %v91
      %v93 = vld [vmem:[%s41 + $0x70] sm:%s34]
      %94 = vst [vmem:[%s42 + $0x64] sm:%s34] %v93
      %v95 = vld [vmem:[%s41 + $0x34] sm:%s34]
      %96 = vst [vmem:[%s42 + $0x68] sm:%s34] %v95
      %v97 = vld [vmem:[%s41 + $0x74] sm:%s34]
      %98 = vst [vmem:[%s42 + $0x6c] sm:%s34] %v97
      %v99 = vld [vmem:[%s41 + $0x38] sm:%s34]
      %100 = vst [vmem:[%s42 + $0x70] sm:%s34] %v99
      %v101 = vld [vmem:[%s41 + $0x78] sm:%s34]
      %102 = vst [vmem:[%s42 + $0x74] sm:%s34] %v101
      %v103 = vld [vmem:[%s41 + $0x3c] sm:%s34]
      %104 = vst [vmem:[%s42 + $0x78] sm:%s34] %v103
      %v105 = vld [vmem:[%s41 + $0x7c] sm:%s34]
      %106 = vst [vmem:[%s42 + $0x7c] sm:%s34] %v105
      %v107 = vld [vmem:[%s41 + $0x80] sm:%s34]
      %108 = vst [vmem:[%s42 + $0x80] sm:%s34] %v107
      %v109 = vld [vmem:[%s41 + $0xc0] sm:%s34]
      %110 = vst [vmem:[%s42 + $0x84] sm:%s34] %v109
      %v111 = vld [vmem:[%s41 + $0x84] sm:%s34]
      %112 = vst [vmem:[%s42 + $0x88] sm:%s34] %v111
      %v113 = vld [vmem:[%s41 + $0xc4] sm:%s34]
      %114 = vst [vmem:[%s42 + $0x8c] sm:%s34] %v113
      %v115 = vld [vmem:[%s41 + $0x88] sm:%s34]
      %116 = vst [vmem:[%s42 + $0x90] sm:%s34] %v115
      %v117 = vld [vmem:[%s41 + $0xc8] sm:%s34]
      %118 = vst [vmem:[%s42 + $0x94] sm:%s34] %v117
      %v119 = vld [vmem:[%s41 + $0x8c] sm:%s34]
      %120 = vst [vmem:[%s42 + $0x98] sm:%s34] %v119
      %v121 = vld [vmem:[%s41 + $0xcc] sm:%s34]
      %122 = vst [vmem:[%s42 + $0x9c] sm:%s34] %v121
      %v123 = vld [vmem:[%s41 + $0x90] sm:%s34]
      %124 = vst [vmem:[%s42 + $0xa0] sm:%s34] %v123
      %v125 = vld [vmem:[%s41 + $0xd0] sm:%s34]
      %126 = vst [vmem:[%s42 + $0xa4] sm:%s34] %v125
      %v127 = vld [vmem:[%s41 + $0x94] sm:%s34]
      %128 = vst [vmem:[%s42 + $0xa8] sm:%s34] %v127
      %v129 = vld [vmem:[%s41 + $0xd4] sm:%s34]
      %130 = vst [vmem:[%s42 + $0xac] sm:%s34] %v129
      %v131 = vld [vmem:[%s41 + $0x98] sm:%s34]
      %132 = vst [vmem:[%s42 + $0xb0] sm:%s34] %v131
      %v133 = vld [vmem:[%s41 + $0xd8] sm:%s34]
      %134 = vst [vmem:[%s42 + $0xb4] sm:%s34] %v133
      %v135 = vld [vmem:[%s41 + $0x9c] sm:%s34]
      %136 = vst [vmem:[%s42 + $0xb8] sm:%s34] %v135
      %v137 = vld [vmem:[%s41 + $0xdc] sm:%s34]
      %138 = vst [vmem:[%s42 + $0xbc] sm:%s34] %v137
      %v139 = vld [vmem:[%s41 + $0xa0] sm:%s34]
      %140 = vst [vmem:[%s42 + $0xc0] sm:%s34] %v139
      %v141 = vld [vmem:[%s41 + $0xe0] sm:%s34]
      %142 = vst [vmem:[%s42 + $0xc4] sm:%s34] %v141
      %v143 = vld [vmem:[%s41 + $0xa4] sm:%s34]
      %144 = vst [vmem:[%s42 + $0xc8] sm:%s34] %v143
      %v145 = vld [vmem:[%s41 + $0xe4] sm:%s34]
      %146 = vst [vmem:[%s42 + $0xcc] sm:%s34] %v145
      %v147 = vld [vmem:[%s41 + $0xa8] sm:%s34]
      %148 = vst [vmem:[%s42 + $0xd0] sm:%s34] %v147
      %v149 = vld [vmem:[%s41 + $0xe8] sm:%s34]
      %150 = vst [vmem:[%s42 + $0xd4] sm:%s34] %v149
      %v151 = vld [vmem:[%s41 + $0xac] sm:%s34]
      %152 = vst [vmem:[%s42 + $0xd8] sm:%s34] %v151
      %v153 = vld [vmem:[%s41 + $0xec] sm:%s34]
      %154 = vst [vmem:[%s42 + $0xdc] sm:%s34] %v153
      %v155 = vld [vmem:[%s41 + $0xb0] sm:%s34]
      %156 = vst [vmem:[%s42 + $0xe0] sm:%s34] %v155
      %v157 = vld [vmem:[%s41 + $0xf0] sm:%s34]
      %158 = vst [vmem:[%s42 + $0xe4] sm:%s34] %v157
      %v159 = vld [vmem:[%s41 + $0xb4] sm:%s34]
      %160 = vst [vmem:[%s42 + $0xe8] sm:%s34] %v159
      %v161 = vld [vmem:[%s41 + $0xf4] sm:%s34]
      %162 = vst [vmem:[%s42 + $0xec] sm:%s34] %v161
      %v163 = vld [vmem:[%s41 + $0xb8] sm:%s34]
      %164 = vst [vmem:[%s42 + $0xf0] sm:%s34] %v163
      %v165 = vld [vmem:[%s41 + $0xf8] sm:%s34]
      %166 = vst [vmem:[%s42 + $0xf4] sm:%s34] %v165
      %v167 = vld [vmem:[%s41 + $0xbc] sm:%s34]
      %168 = vst [vmem:[%s42 + $0xf8] sm:%s34] %v167
      %v169 = vld [vmem:[%s41 + $0xfc] sm:%s34]
      %170 = vst [vmem:[%s42 + $0xfc] sm:%s34] %v169
      %v171 = vld [vmem:[%s41 + $0x100] sm:%s34]
      %172 = vst [vmem:[%s42 + $0x100] sm:%s34] %v171
      %v173 = vld [vmem:[%s41 + $0x140] sm:%s34]
      %174 = vst [vmem:[%s42 + $0x104] sm:%s34] %v173
      %v175 = vld [vmem:[%s41 + $0x104] sm:%s34]
      %176 = vst [vmem:[%s42 + $0x108] sm:%s34] %v175
      %v177 = vld [vmem:[%s41 + $0x144] sm:%s34]
      %178 = vst [vmem:[%s42 + $0x10c] sm:%s34] %v177
      %v179 = vld [vmem:[%s41 + $0x108] sm:%s34]
      %180 = vst [vmem:[%s42 + $0x110] sm:%s34] %v179
      %v181 = vld [vmem:[%s41 + $0x148] sm:%s34]
      %182 = vst [vmem:[%s42 + $0x114] sm:%s34] %v181
      %v183 = vld [vmem:[%s41 + $0x10c] sm:%s34]
      %184 = vst [vmem:[%s42 + $0x118] sm:%s34] %v183
      %v185 = vld [vmem:[%s41 + $0x14c] sm:%s34]
      %186 = vst [vmem:[%s42 + $0x11c] sm:%s34] %v185
      %v187 = vld [vmem:[%s41 + $0x110] sm:%s34]
      %188 = vst [vmem:[%s42 + $0x120] sm:%s34] %v187
      %v189 = vld [vmem:[%s41 + $0x150] sm:%s34]
      %190 = vst [vmem:[%s42 + $0x124] sm:%s34] %v189
      %v191 = vld [vmem:[%s41 + $0x114] sm:%s34]
      %192 = vst [vmem:[%s42 + $0x128] sm:%s34] %v191
      %v193 = vld [vmem:[%s41 + $0x154] sm:%s34]
      %194 = vst [vmem:[%s42 + $0x12c] sm:%s34] %v193
      %v195 = vld [vmem:[%s41 + $0x118] sm:%s34]
      %196 = vst [vmem:[%s42 + $0x130] sm:%s34] %v195
      %v197 = vld [vmem:[%s41 + $0x158] sm:%s34]
      %198 = vst [vmem:[%s42 + $0x134] sm:%s34] %v197
      %v199 = vld [vmem:[%s41 + $0x11c] sm:%s34]
      %200 = vst [vmem:[%s42 + $0x138] sm:%s34] %v199
      %v201 = vld [vmem:[%s41 + $0x15c] sm:%s34]
      %202 = vst [vmem:[%s42 + $0x13c] sm:%s34] %v201
      %v203 = vld [vmem:[%s41 + $0x120] sm:%s34]
      %204 = vst [vmem:[%s42 + $0x140] sm:%s34] %v203
      %v205 = vld [vmem:[%s41 + $0x160] sm:%s34]
      %206 = vst [vmem:[%s42 + $0x144] sm:%s34] %v205
      %v207 = vld [vmem:[%s41 + $0x124] sm:%s34]
      %208 = vst [vmem:[%s42 + $0x148] sm:%s34] %v207
      %v209 = vld [vmem:[%s41 + $0x164] sm:%s34]
      %210 = vst [vmem:[%s42 + $0x14c] sm:%s34] %v209
      %v211 = vld [vmem:[%s41 + $0x128] sm:%s34]
      %212 = vst [vmem:[%s42 + $0x150] sm:%s34] %v211
      %v213 = vld [vmem:[%s41 + $0x168] sm:%s34]
      %214 = vst [vmem:[%s42 + $0x154] sm:%s34] %v213
      %v215 = vld [vmem:[%s41 + $0x12c] sm:%s34]
      %216 = vst [vmem:[%s42 + $0x158] sm:%s34] %v215
      %v217 = vld [vmem:[%s41 + $0x16c] sm:%s34]
      %218 = vst [vmem:[%s42 + $0x15c] sm:%s34] %v217
      %v219 = vld [vmem:[%s41 + $0x130] sm:%s34]
      %220 = vst [vmem:[%s42 + $0x160] sm:%s34] %v219
      %v221 = vld [vmem:[%s41 + $0x170] sm:%s34]
      %222 = vst [vmem:[%s42 + $0x164] sm:%s34] %v221
      %v223 = vld [vmem:[%s41 + $0x134] sm:%s34]
      %224 = vst [vmem:[%s42 + $0x168] sm:%s34] %v223
      %v225 = vld [vmem:[%s41 + $0x174] sm:%s34]
      %226 = vst [vmem:[%s42 + $0x16c] sm:%s34] %v225
      %v227 = vld [vmem:[%s41 + $0x138] sm:%s34]
      %228 = vst [vmem:[%s42 + $0x170] sm:%s34] %v227
      %v229 = vld [vmem:[%s41 + $0x178] sm:%s34]
      %230 = vst [vmem:[%s42 + $0x174] sm:%s34] %v229
      %v231 = vld [vmem:[%s41 + $0x13c] sm:%s34]
      %232 = vst [vmem:[%s42 + $0x178] sm:%s34] %v231
      %v233 = vld [vmem:[%s41 + $0x17c] sm:%s34]
      %234 = vst [vmem:[%s42 + $0x17c] sm:%s34] %v233
      %v235 = vld [vmem:[%s41 + $0x180] sm:%s34]
      %236 = vst [vmem:[%s42 + $0x180] sm:%s34] %v235
      %v237 = vld [vmem:[%s41 + $0x1c0] sm:%s34]
      %238 = vst [vmem:[%s42 + $0x184] sm:%s34] %v237
      %v239 = vld [vmem:[%s41 + $0x184] sm:%s34]
      %240 = vst [vmem:[%s42 + $0x188] sm:%s34] %v239
      %v241 = vld [vmem:[%s41 + $0x1c4] sm:%s34]
      %242 = vst [vmem:[%s42 + $0x18c] sm:%s34] %v241
      %v243 = vld [vmem:[%s41 + $0x188] sm:%s34]
      %244 = vst [vmem:[%s42 + $0x190] sm:%s34] %v243
      %v245 = vld [vmem:[%s41 + $0x1c8] sm:%s34]
      %246 = vst [vmem:[%s42 + $0x194] sm:%s34] %v245
      %v247 = vld [vmem:[%s41 + $0x18c] sm:%s34]
      %248 = vst [vmem:[%s42 + $0x198] sm:%s34] %v247
      %v249 = vld [vmem:[%s41 + $0x1cc] sm:%s34]
      %250 = vst [vmem:[%s42 + $0x19c] sm:%s34] %v249
      %v251 = vld [vmem:[%s41 + $0x190] sm:%s34]
      %252 = vst [vmem:[%s42 + $0x1a0] sm:%s34] %v251
      %v253 = vld [vmem:[%s41 + $0x1d0] sm:%s34]
      %254 = vst [vmem:[%s42 + $0x1a4] sm:%s34] %v253
      %v255 = vld [vmem:[%s41 + $0x194] sm:%s34]
      %256 = vst [vmem:[%s42 + $0x1a8] sm:%s34] %v255
      %v257 = vld [vmem:[%s41 + $0x1d4] sm:%s34]
      %258 = vst [vmem:[%s42 + $0x1ac] sm:%s34] %v257
      %v259 = vld [vmem:[%s41 + $0x198] sm:%s34]
      %260 = vst [vmem:[%s42 + $0x1b0] sm:%s34] %v259
      %v261 = vld [vmem:[%s41 + $0x1d8] sm:%s34]
      %262 = vst [vmem:[%s42 + $0x1b4] sm:%s34] %v261
      %v263 = vld [vmem:[%s41 + $0x19c] sm:%s34]
      %264 = vst [vmem:[%s42 + $0x1b8] sm:%s34] %v263
      %v265 = vld [vmem:[%s41 + $0x1dc] sm:%s34]
      %266 = vst [vmem:[%s42 + $0x1bc] sm:%s34] %v265
      %v267 = vld [vmem:[%s41 + $0x1a0] sm:%s34]
      %268 = vst [vmem:[%s42 + $0x1c0] sm:%s34] %v267
      %v269 = vld [vmem:[%s41 + $0x1e0] sm:%s34]
      %270 = vst [vmem:[%s42 + $0x1c4] sm:%s34] %v269
      %v271 = vld [vmem:[%s41 + $0x1a4] sm:%s34]
      %272 = vst [vmem:[%s42 + $0x1c8] sm:%s34] %v271
      %v273 = vld [vmem:[%s41 + $0x1e4] sm:%s34]
      %274 = vst [vmem:[%s42 + $0x1cc] sm:%s34] %v273
      %v275 = vld [vmem:[%s41 + $0x1a8] sm:%s34]
      %276 = vst [vmem:[%s42 + $0x1d0] sm:%s34] %v275
      %v277 = vld [vmem:[%s41 + $0x1e8] sm:%s34]
      %278 = vst [vmem:[%s42 + $0x1d4] sm:%s34] %v277
      %v279 = vld [vmem:[%s41 + $0x1ac] sm:%s34]
      %280 = vst [vmem:[%s42 + $0x1d8] sm:%s34] %v279
      %v281 = vld [vmem:[%s41 + $0x1ec] sm:%s34]
      %282 = vst [vmem:[%s42 + $0x1dc] sm:%s34] %v281
      %v283 = vld [vmem:[%s41 + $0x1b0] sm:%s34]
      %284 = vst [vmem:[%s42 + $0x1e0] sm:%s34] %v283
      %v285 = vld [vmem:[%s41 + $0x1f0] sm:%s34]
      %286 = vst [vmem:[%s42 + $0x1e4] sm:%s34] %v285
      %v287 = vld [vmem:[%s41 + $0x1b4] sm:%s34]
      %288 = vst [vmem:[%s42 + $0x1e8] sm:%s34] %v287
      %v289 = vld [vmem:[%s41 + $0x1f4] sm:%s34]
      %290 = vst [vmem:[%s42 + $0x1ec] sm:%s34] %v289
      %v291 = vld [vmem:[%s41 + $0x1b8] sm:%s34]
      %292 = vst [vmem:[%s42 + $0x1f0] sm:%s34] %v291
      %v293 = vld [vmem:[%s41 + $0x1f8] sm:%s34]
      %294 = vst [vmem:[%s42 + $0x1f4] sm:%s34] %v293
      %v295 = vld [vmem:[%s41 + $0x1bc] sm:%s34]
      %296 = vst [vmem:[%s42 + $0x1f8] sm:%s34] %v295
      %v297 = vld [vmem:[%s41 + $0x1fc] sm:%s34]
      %298 = vst [vmem:[%s42 + $0x1fc] sm:%s34] %v297
      %v299 = vld [vmem:[%s41 + $0x200] sm:%s34]
      %300 = vst [vmem:[%s42 + $0x200] sm:%s34] %v299
      %v301 = vld [vmem:[%s41 + $0x240] sm:%s34]
      %302 = vst [vmem:[%s42 + $0x204] sm:%s34] %v301
      %v303 = vld [vmem:[%s41 + $0x204] sm:%s34]
      %304 = vst [vmem:[%s42 + $0x208] sm:%s34] %v303
      %v305 = vld [vmem:[%s41 + $0x244] sm:%s34]
      %306 = vst [vmem:[%s42 + $0x20c] sm:%s34] %v305
      %v307 = vld [vmem:[%s41 + $0x208] sm:%s34]
      %308 = vst [vmem:[%s42 + $0x210] sm:%s34] %v307
      %v309 = vld [vmem:[%s41 + $0x248] sm:%s34]
      %310 = vst [vmem:[%s42 + $0x214] sm:%s34] %v309
      %v311 = vld [vmem:[%s41 + $0x20c] sm:%s34]
      %312 = vst [vmem:[%s42 + $0x218] sm:%s34] %v311
      %v313 = vld [vmem:[%s41 + $0x24c] sm:%s34]
      %314 = vst [vmem:[%s42 + $0x21c] sm:%s34] %v313
      %v315 = vld [vmem:[%s41 + $0x210] sm:%s34]
      %316 = vst [vmem:[%s42 + $0x220] sm:%s34] %v315
      %v317 = vld [vmem:[%s41 + $0x250] sm:%s34]
      %318 = vst [vmem:[%s42 + $0x224] sm:%s34] %v317
      %v319 = vld [vmem:[%s41 + $0x214] sm:%s34]
      %320 = vst [vmem:[%s42 + $0x228] sm:%s34] %v319
      %v321 = vld [vmem:[%s41 + $0x254] sm:%s34]
      %322 = vst [vmem:[%s42 + $0x22c] sm:%s34] %v321
      %v323 = vld [vmem:[%s41 + $0x218] sm:%s34]
      %324 = vst [vmem:[%s42 + $0x230] sm:%s34] %v323
      %v325 = vld [vmem:[%s41 + $0x258] sm:%s34]
      %326 = vst [vmem:[%s42 + $0x234] sm:%s34] %v325
      %v327 = vld [vmem:[%s41 + $0x21c] sm:%s34]
      %328 = vst [vmem:[%s42 + $0x238] sm:%s34] %v327
      %v329 = vld [vmem:[%s41 + $0x25c] sm:%s34]
      %330 = vst [vmem:[%s42 + $0x23c] sm:%s34] %v329
      %v331 = vld [vmem:[%s41 + $0x220] sm:%s34]
      %332 = vst [vmem:[%s42 + $0x240] sm:%s34] %v331
      %v333 = vld [vmem:[%s41 + $0x260] sm:%s34]
      %334 = vst [vmem:[%s42 + $0x244] sm:%s34] %v333
      %v335 = vld [vmem:[%s41 + $0x224] sm:%s34]
      %336 = vst [vmem:[%s42 + $0x248] sm:%s34] %v335
      %v337 = vld [vmem:[%s41 + $0x264] sm:%s34]
      %338 = vst [vmem:[%s42 + $0x24c] sm:%s34] %v337
      %v339 = vld [vmem:[%s41 + $0x228] sm:%s34]
      %340 = vst [vmem:[%s42 + $0x250] sm:%s34] %v339
      %v341 = vld [vmem:[%s41 + $0x268] sm:%s34]
      %342 = vst [vmem:[%s42 + $0x254] sm:%s34] %v341
      %v343 = vld [vmem:[%s41 + $0x22c] sm:%s34]
      %344 = vst [vmem:[%s42 + $0x258] sm:%s34] %v343
      %v345 = vld [vmem:[%s41 + $0x26c] sm:%s34]
      %346 = vst [vmem:[%s42 + $0x25c] sm:%s34] %v345
      %v347 = vld [vmem:[%s41 + $0x230] sm:%s34]
      %348 = vst [vmem:[%s42 + $0x260] sm:%s34] %v347
      %v349 = vld [vmem:[%s41 + $0x270] sm:%s34]
      %350 = vst [vmem:[%s42 + $0x264] sm:%s34] %v349
      %v351 = vld [vmem:[%s41 + $0x234] sm:%s34]
      %352 = vst [vmem:[%s42 + $0x268] sm:%s34] %v351
      %v353 = vld [vmem:[%s41 + $0x274] sm:%s34]
      %354 = vst [vmem:[%s42 + $0x26c] sm:%s34] %v353
      %v355 = vld [vmem:[%s41 + $0x238] sm:%s34]
      %356 = vst [vmem:[%s42 + $0x270] sm:%s34] %v355
      %v357 = vld [vmem:[%s41 + $0x278] sm:%s34]
      %358 = vst [vmem:[%s42 + $0x274] sm:%s34] %v357
      %v359 = vld [vmem:[%s41 + $0x23c] sm:%s34]
      %360 = vst [vmem:[%s42 + $0x278] sm:%s34] %v359
      %v361 = vld [vmem:[%s41 + $0x27c] sm:%s34]
      %362 = vst [vmem:[%s42 + $0x27c] sm:%s34] %v361
      %v363 = vld [vmem:[%s41 + $0x280] sm:%s34]
      %364 = vst [vmem:[%s42 + $0x280] sm:%s34] %v363
      %v365 = vld [vmem:[%s41 + $0x2c0] sm:%s34]
      %366 = vst [vmem:[%s42 + $0x284] sm:%s34] %v365
      %v367 = vld [vmem:[%s41 + $0x284] sm:%s34]
      %368 = vst [vmem:[%s42 + $0x288] sm:%s34] %v367
      %v369 = vld [vmem:[%s41 + $0x2c4] sm:%s34]
      %370 = vst [vmem:[%s42 + $0x28c] sm:%s34] %v369
      %v371 = vld [vmem:[%s41 + $0x288] sm:%s34]
      %372 = vst [vmem:[%s42 + $0x290] sm:%s34] %v371
      %v373 = vld [vmem:[%s41 + $0x2c8] sm:%s34]
      %374 = vst [vmem:[%s42 + $0x294] sm:%s34] %v373
      %v375 = vld [vmem:[%s41 + $0x28c] sm:%s34]
      %376 = vst [vmem:[%s42 + $0x298] sm:%s34] %v375
      %v377 = vld [vmem:[%s41 + $0x2cc] sm:%s34]
      %378 = vst [vmem:[%s42 + $0x29c] sm:%s34] %v377
      %v379 = vld [vmem:[%s41 + $0x290] sm:%s34]
      %380 = vst [vmem:[%s42 + $0x2a0] sm:%s34] %v379
      %v381 = vld [vmem:[%s41 + $0x2d0] sm:%s34]
      %382 = vst [vmem:[%s42 + $0x2a4] sm:%s34] %v381
      %v383 = vld [vmem:[%s41 + $0x294] sm:%s34]
      %384 = vst [vmem:[%s42 + $0x2a8] sm:%s34] %v383
      %v385 = vld [vmem:[%s41 + $0x2d4] sm:%s34]
      %386 = vst [vmem:[%s42 + $0x2ac] sm:%s34] %v385
      %v387 = vld [vmem:[%s41 + $0x298] sm:%s34]
      %388 = vst [vmem:[%s42 + $0x2b0] sm:%s34] %v387
      %v389 = vld [vmem:[%s41 + $0x2d8] sm:%s34]
      %390 = vst [vmem:[%s42 + $0x2b4] sm:%s34] %v389
      %v391 = vld [vmem:[%s41 + $0x29c] sm:%s34]
      %392 = vst [vmem:[%s42 + $0x2b8] sm:%s34] %v391
      %v393 = vld [vmem:[%s41 + $0x2dc] sm:%s34]
      %394 = vst [vmem:[%s42 + $0x2bc] sm:%s34] %v393
      %v395 = vld [vmem:[%s41 + $0x2a0] sm:%s34]
      %396 = vst [vmem:[%s42 + $0x2c0] sm:%s34] %v395
      %v397 = vld [vmem:[%s41 + $0x2e0] sm:%s34]
      %398 = vst [vmem:[%s42 + $0x2c4] sm:%s34] %v397
      %v399 = vld [vmem:[%s41 + $0x2a4] sm:%s34]
      %400 = vst [vmem:[%s42 + $0x2c8] sm:%s34] %v399
      %v401 = vld [vmem:[%s41 + $0x2e4] sm:%s34]
      %402 = vst [vmem:[%s42 + $0x2cc] sm:%s34] %v401
      %v403 = vld [vmem:[%s41 + $0x2a8] sm:%s34]
      %404 = vst [vmem:[%s42 + $0x2d0] sm:%s34] %v403
      %v405 = vld [vmem:[%s41 + $0x2e8] sm:%s34]
      %406 = vst [vmem:[%s42 + $0x2d4] sm:%s34] %v405
      %v407 = vld [vmem:[%s41 + $0x2ac] sm:%s34]
      %408 = vst [vmem:[%s42 + $0x2d8] sm:%s34] %v407
      %v409 = vld [vmem:[%s41 + $0x2ec] sm:%s34]
      %410 = vst [vmem:[%s42 + $0x2dc] sm:%s34] %v409
      %v411 = vld [vmem:[%s41 + $0x2b0] sm:%s34]
      %412 = vst [vmem:[%s42 + $0x2e0] sm:%s34] %v411
      %v413 = vld [vmem:[%s41 + $0x2f0] sm:%s34]
      %414 = vst [vmem:[%s42 + $0x2e4] sm:%s34] %v413
      %v415 = vld [vmem:[%s41 + $0x2b4] sm:%s34]
      %416 = vst [vmem:[%s42 + $0x2e8] sm:%s34] %v415
      %v417 = vld [vmem:[%s41 + $0x2f4] sm:%s34]
      %418 = vst [vmem:[%s42 + $0x2ec] sm:%s34] %v417
      %v419 = vld [vmem:[%s41 + $0x2b8] sm:%s34]
      %420 = vst [vmem:[%s42 + $0x2f0] sm:%s34] %v419
      %v421 = vld [vmem:[%s41 + $0x2f8] sm:%s34]
      %422 = vst [vmem:[%s42 + $0x2f4] sm:%s34] %v421
      %v423 = vld [vmem:[%s41 + $0x2bc] sm:%s34]
      %424 = vst [vmem:[%s42 + $0x2f8] sm:%s34] %v423
      %v425 = vld [vmem:[%s41 + $0x2fc] sm:%s34]
      %426 = vst [vmem:[%s42 + $0x2fc] sm:%s34] %v425
      %v427 = vld [vmem:[%s41 + $0x300] sm:%s34]
      %428 = vst [vmem:[%s42 + $0x300] sm:%s34] %v427
      %v429 = vld [vmem:[%s41 + $0x340] sm:%s34]
      %430 = vst [vmem:[%s42 + $0x304] sm:%s34] %v429
      %v431 = vld [vmem:[%s41 + $0x304] sm:%s34]
      %432 = vst [vmem:[%s42 + $0x308] sm:%s34] %v431
      %v433 = vld [vmem:[%s41 + $0x344] sm:%s34]
      %434 = vst [vmem:[%s42 + $0x30c] sm:%s34] %v433
      %v435 = vld [vmem:[%s41 + $0x308] sm:%s34]
      %436 = vst [vmem:[%s42 + $0x310] sm:%s34] %v435
      %v437 = vld [vmem:[%s41 + $0x348] sm:%s34]
      %438 = vst [vmem:[%s42 + $0x314] sm:%s34] %v437
      %v439 = vld [vmem:[%s41 + $0x30c] sm:%s34]
      %440 = vst [vmem:[%s42 + $0x318] sm:%s34] %v439
      %v441 = vld [vmem:[%s41 + $0x34c] sm:%s34]
      %442 = vst [vmem:[%s42 + $0x31c] sm:%s34] %v441
      %v443 = vld [vmem:[%s41 + $0x310] sm:%s34]
      %444 = vst [vmem:[%s42 + $0x320] sm:%s34] %v443
      %v445 = vld [vmem:[%s41 + $0x350] sm:%s34]
      %446 = vst [vmem:[%s42 + $0x324] sm:%s34] %v445
      %v447 = vld [vmem:[%s41 + $0x314] sm:%s34]
      %448 = vst [vmem:[%s42 + $0x328] sm:%s34] %v447
      %v449 = vld [vmem:[%s41 + $0x354] sm:%s34]
      %450 = vst [vmem:[%s42 + $0x32c] sm:%s34] %v449
      %v451 = vld [vmem:[%s41 + $0x318] sm:%s34]
      %452 = vst [vmem:[%s42 + $0x330] sm:%s34] %v451
      %v453 = vld [vmem:[%s41 + $0x358] sm:%s34]
      %454 = vst [vmem:[%s42 + $0x334] sm:%s34] %v453
      %v455 = vld [vmem:[%s41 + $0x31c] sm:%s34]
      %456 = vst [vmem:[%s42 + $0x338] sm:%s34] %v455
      %v457 = vld [vmem:[%s41 + $0x35c] sm:%s34]
      %458 = vst [vmem:[%s42 + $0x33c] sm:%s34] %v457
      %v459 = vld [vmem:[%s41 + $0x320] sm:%s34]
      %460 = vst [vmem:[%s42 + $0x340] sm:%s34] %v459
      %v461 = vld [vmem:[%s41 + $0x360] sm:%s34]
      %462 = vst [vmem:[%s42 + $0x344] sm:%s34] %v461
      %v463 = vld [vmem:[%s41 + $0x324] sm:%s34]
      %464 = vst [vmem:[%s42 + $0x348] sm:%s34] %v463
      %v465 = vld [vmem:[%s41 + $0x364] sm:%s34]
      %466 = vst [vmem:[%s42 + $0x34c] sm:%s34] %v465
      %v467 = vld [vmem:[%s41 + $0x328] sm:%s34]
      %468 = vst [vmem:[%s42 + $0x350] sm:%s34] %v467
      %v469 = vld [vmem:[%s41 + $0x368] sm:%s34]
      %470 = vst [vmem:[%s42 + $0x354] sm:%s34] %v469
      %v471 = vld [vmem:[%s41 + $0x32c] sm:%s34]
      %472 = vst [vmem:[%s42 + $0x358] sm:%s34] %v471
      %v473 = vld [vmem:[%s41 + $0x36c] sm:%s34]
      %474 = vst [vmem:[%s42 + $0x35c] sm:%s34] %v473
      %v475 = vld [vmem:[%s41 + $0x330] sm:%s34]
      %476 = vst [vmem:[%s42 + $0x360] sm:%s34] %v475
      %v477 = vld [vmem:[%s41 + $0x370] sm:%s34]
      %478 = vst [vmem:[%s42 + $0x364] sm:%s34] %v477
      %v479 = vld [vmem:[%s41 + $0x334] sm:%s34]
      %480 = vst [vmem:[%s42 + $0x368] sm:%s34] %v479
      %v481 = vld [vmem:[%s41 + $0x374] sm:%s34]
      %482 = vst [vmem:[%s42 + $0x36c] sm:%s34] %v481
      %v483 = vld [vmem:[%s41 + $0x338] sm:%s34]
      %484 = vst [vmem:[%s42 + $0x370] sm:%s34] %v483
      %v485 = vld [vmem:[%s41 + $0x378] sm:%s34]
      %486 = vst [vmem:[%s42 + $0x374] sm:%s34] %v485
      %v487 = vld [vmem:[%s41 + $0x33c] sm:%s34]
      %488 = vst [vmem:[%s42 + $0x378] sm:%s34] %v487
      %v489 = vld [vmem:[%s41 + $0x37c] sm:%s34]
      %490 = vst [vmem:[%s42 + $0x37c] sm:%s34] %v489
      %v491 = vld [vmem:[%s41 + $0x380] sm:%s34]
      %492 = vst [vmem:[%s42 + $0x380] sm:%s34] %v491
      %v493 = vld [vmem:[%s41 + $0x3c0] sm:%s34]
      %494 = vst [vmem:[%s42 + $0x384] sm:%s34] %v493
      %v495 = vld [vmem:[%s41 + $0x384] sm:%s34]
      %496 = vst [vmem:[%s42 + $0x388] sm:%s34] %v495
      %v497 = vld [vmem:[%s41 + $0x3c4] sm:%s34]
      %498 = vst [vmem:[%s42 + $0x38c] sm:%s34] %v497
      %v499 = vld [vmem:[%s41 + $0x388] sm:%s34]
      %500 = vst [vmem:[%s42 + $0x390] sm:%s34] %v499
      %v501 = vld [vmem:[%s41 + $0x3c8] sm:%s34]
      %502 = vst [vmem:[%s42 + $0x394] sm:%s34] %v501
      %v503 = vld [vmem:[%s41 + $0x38c] sm:%s34]
      %504 = vst [vmem:[%s42 + $0x398] sm:%s34] %v503
      %v505 = vld [vmem:[%s41 + $0x3cc] sm:%s34]
      %506 = vst [vmem:[%s42 + $0x39c] sm:%s34] %v505
      %v507 = vld [vmem:[%s41 + $0x390] sm:%s34]
      %508 = vst [vmem:[%s42 + $0x3a0] sm:%s34] %v507
      %v509 = vld [vmem:[%s41 + $0x3d0] sm:%s34]
      %510 = vst [vmem:[%s42 + $0x3a4] sm:%s34] %v509
      %v511 = vld [vmem:[%s41 + $0x394] sm:%s34]
      %512 = vst [vmem:[%s42 + $0x3a8] sm:%s34] %v511
      %v513 = vld [vmem:[%s41 + $0x3d4] sm:%s34]
      %514 = vst [vmem:[%s42 + $0x3ac] sm:%s34] %v513
      %v515 = vld [vmem:[%s41 + $0x398] sm:%s34]
      %516 = vst [vmem:[%s42 + $0x3b0] sm:%s34] %v515
      %v517 = vld [vmem:[%s41 + $0x3d8] sm:%s34]
      %518 = vst [vmem:[%s42 + $0x3b4] sm:%s34] %v517
      %v519 = vld [vmem:[%s41 + $0x39c] sm:%s34]
      %520 = vst [vmem:[%s42 + $0x3b8] sm:%s34] %v519
      %v521 = vld [vmem:[%s41 + $0x3dc] sm:%s34]
      %522 = vst [vmem:[%s42 + $0x3bc] sm:%s34] %v521
      %v523 = vld [vmem:[%s41 + $0x3a0] sm:%s34]
      %524 = vst [vmem:[%s42 + $0x3c0] sm:%s34] %v523
      %v525 = vld [vmem:[%s41 + $0x3e0] sm:%s34]
      %526 = vst [vmem:[%s42 + $0x3c4] sm:%s34] %v525
      %v527 = vld [vmem:[%s41 + $0x3a4] sm:%s34]
      %528 = vst [vmem:[%s42 + $0x3c8] sm:%s34] %v527
      %v529 = vld [vmem:[%s41 + $0x3e4] sm:%s34]
      %530 = vst [vmem:[%s42 + $0x3cc] sm:%s34] %v529
      %v531 = vld [vmem:[%s41 + $0x3a8] sm:%s34]
      %532 = vst [vmem:[%s42 + $0x3d0] sm:%s34] %v531
      %v533 = vld [vmem:[%s41 + $0x3e8] sm:%s34]
      %534 = vst [vmem:[%s42 + $0x3d4] sm:%s34] %v533
      %v535 = vld [vmem:[%s41 + $0x3ac] sm:%s34]
      %536 = vst [vmem:[%s42 + $0x3d8] sm:%s34] %v535
      %v537 = vld [vmem:[%s41 + $0x3ec] sm:%s34]
      %538 = vst [vmem:[%s42 + $0x3dc] sm:%s34] %v537
      %v539 = vld [vmem:[%s41 + $0x3b0] sm:%s34]
      %540 = vst [vmem:[%s42 + $0x3e0] sm:%s34] %v539
      %v541 = vld [vmem:[%s41 + $0x3f0] sm:%s34]
      %542 = vst [vmem:[%s42 + $0x3e4] sm:%s34] %v541
      %v543 = vld [vmem:[%s41 + $0x3b4] sm:%s34]
      %544 = vst [vmem:[%s42 + $0x3e8] sm:%s34] %v543
      %v545 = vld [vmem:[%s41 + $0x3f4] sm:%s34]
      %546 = vst [vmem:[%s42 + $0x3ec] sm:%s34] %v545
      %v547 = vld [vmem:[%s41 + $0x3b8] sm:%s34]
      %548 = vst [vmem:[%s42 + $0x3f0] sm:%s34] %v547
      %v549 = vld [vmem:[%s41 + $0x3f8] sm:%s34]
      %550 = vst [vmem:[%s42 + $0x3f4] sm:%s34] %v549
      %v551 = vld [vmem:[%s41 + $0x3bc] sm:%s34]
      %552 = vst [vmem:[%s42 + $0x3f8] sm:%s34] %v551
      %v553 = vld [vmem:[%s41 + $0x3fc] sm:%s34]
      %554 = vst [vmem:[%s42 + $0x3fc] sm:%s34] %v553
    $region38: #{forward.1} parent=32 // loop_footer
      %s40 = sadd.s32 1, %s36
    $region39: #{forward.1} parent=32 // loop_footer_branch
      %35 = sbr.rel target = $region35
    $region40: #{forward.1} parent=32 // loop_exit
      _
  $region33: #{forward.1} parent=0 // pred_fallthru
    _
  // Predicated region
  $region59: #{forward.1} parent=0 // pred_check
    _
  $region60: #{forward.1} parent=0 // pred_check_branch
    %1096 = sbr.rel (0) target = $region62
  $region61: #{forward.1} parent=0 // pred_region
    %1097 = vsyncadd [#allocation8], 16384
  $region62: #{forward.1} parent=0 // pred_fallthru
    _
  %s1098 = scalar_lea.sflag [#allocation8], 1
  %p1100 = scmp.lt.u32.totalorder 1024, 8
  %p1101 = pneg %p1100
  // Predicated region
  $region63: #{forward.1} parent=0 // pred_check
    _
  $region64: #{forward.1} parent=0 // pred_check_branch
    %1103 = sbr.rel (%p1100) target = $region66
  $region65: #{forward.1} parent=0 // pred_region
    %s1118 = sand.u32 1024, 7
    %p1119 = scmp.eq.s32.totalorder %s1118, 0
    // Predicated region
    $region78: #{forward.1} parent=65 // pred_check
      %p1120 = pneg %p1119
    $region79: #{forward.1} parent=65 // pred_check_branch
      %1122 = sbr.rel (%p1120) target = $region81
    $region80: #{forward.1} parent=65 // pred_region
      loop: start=0, step=1, limit=1
      $region82: #{forward.1} parent=80 // loop_pre_header
        _
      $region83: #{forward.1} parent=80 // loop_header
        %s1124 = sphi 0, %s1128
        %p1125 = scmp.ge.s32.totalorder %s1124, 1
        %s1129 = sphi %s7, %s7
        %s1130 = sphi [#allocation7], [#allocation7]
      $region84: #{forward.1} parent=80 // loop_header_branch
        %1127 = sbr.rel (%p1125) target = $region88
      $region85: #{forward.1} parent=80 // loop_body
        %v1131 = vld [vmem:[%s1129] sm:$0xff]
        %1132 = vst [vmem:[%s1130] sm:$0xff] %v1131
        %v1133 = vld [vmem:[%s1129 + $0x8] sm:$0xff]
        %1134 = vst [vmem:[%s1130 + $0x8] sm:$0xff] %v1133
        %v1135 = vld [vmem:[%s1129 + $0x10] sm:$0xff]
        %1136 = vst [vmem:[%s1130 + $0x10] sm:$0xff] %v1135
        %v1137 = vld [vmem:[%s1129 + $0x18] sm:$0xff]
        %1138 = vst [vmem:[%s1130 + $0x18] sm:$0xff] %v1137
        %v1139 = vld [vmem:[%s1129 + $0x20] sm:$0xff]
        %1140 = vst [vmem:[%s1130 + $0x20] sm:$0xff] %v1139
        %v1141 = vld [vmem:[%s1129 + $0x28] sm:$0xff]
        %1142 = vst [vmem:[%s1130 + $0x28] sm:$0xff] %v1141
        %v1143 = vld [vmem:[%s1129 + $0x30] sm:$0xff]
        %1144 = vst [vmem:[%s1130 + $0x30] sm:$0xff] %v1143
        %v1145 = vld [vmem:[%s1129 + $0x38] sm:$0xff]
        %1146 = vst [vmem:[%s1130 + $0x38] sm:$0xff] %v1145
        %v1147 = vld [vmem:[%s1129 + $0x40] sm:$0xff]
        %1148 = vst [vmem:[%s1130 + $0x40] sm:$0xff] %v1147
        %v1149 = vld [vmem:[%s1129 + $0x48] sm:$0xff]
        %1150 = vst [vmem:[%s1130 + $0x48] sm:$0xff] %v1149
        %v1151 = vld [vmem:[%s1129 + $0x50] sm:$0xff]
        %1152 = vst [vmem:[%s1130 + $0x50] sm:$0xff] %v1151
        %v1153 = vld [vmem:[%s1129 + $0x58] sm:$0xff]
        %1154 = vst [vmem:[%s1130 + $0x58] sm:$0xff] %v1153
        %v1155 = vld [vmem:[%s1129 + $0x60] sm:$0xff]
        %1156 = vst [vmem:[%s1130 + $0x60] sm:$0xff] %v1155
        %v1157 = vld [vmem:[%s1129 + $0x68] sm:$0xff]
        %1158 = vst [vmem:[%s1130 + $0x68] sm:$0xff] %v1157
        %v1159 = vld [vmem:[%s1129 + $0x70] sm:$0xff]
        %1160 = vst [vmem:[%s1130 + $0x70] sm:$0xff] %v1159
        %v1161 = vld [vmem:[%s1129 + $0x78] sm:$0xff]
        %1162 = vst [vmem:[%s1130 + $0x78] sm:$0xff] %v1161
        %v1163 = vld [vmem:[%s1129 + $0x80] sm:$0xff]
        %1164 = vst [vmem:[%s1130 + $0x80] sm:$0xff] %v1163
        %v1165 = vld [vmem:[%s1129 + $0x88] sm:$0xff]
        %1166 = vst [vmem:[%s1130 + $0x88] sm:$0xff] %v1165
        %v1167 = vld [vmem:[%s1129 + $0x90] sm:$0xff]
        %1168 = vst [vmem:[%s1130 + $0x90] sm:$0xff] %v1167
        %v1169 = vld [vmem:[%s1129 + $0x98] sm:$0xff]
        %1170 = vst [vmem:[%s1130 + $0x98] sm:$0xff] %v1169
        %v1171 = vld [vmem:[%s1129 + $0xa0] sm:$0xff]
        %1172 = vst [vmem:[%s1130 + $0xa0] sm:$0xff] %v1171
        %v1173 = vld [vmem:[%s1129 + $0xa8] sm:$0xff]
        %1174 = vst [vmem:[%s1130 + $0xa8] sm:$0xff] %v1173
        %v1175 = vld [vmem:[%s1129 + $0xb0] sm:$0xff]
        %1176 = vst [vmem:[%s1130 + $0xb0] sm:$0xff] %v1175
        %v1177 = vld [vmem:[%s1129 + $0xb8] sm:$0xff]
        %1178 = vst [vmem:[%s1130 + $0xb8] sm:$0xff] %v1177
        %v1179 = vld [vmem:[%s1129 + $0xc0] sm:$0xff]
        %1180 = vst [vmem:[%s1130 + $0xc0] sm:$0xff] %v1179
        %v1181 = vld [vmem:[%s1129 + $0xc8] sm:$0xff]
        %1182 = vst [vmem:[%s1130 + $0xc8] sm:$0xff] %v1181
        %v1183 = vld [vmem:[%s1129 + $0xd0] sm:$0xff]
        %1184 = vst [vmem:[%s1130 + $0xd0] sm:$0xff] %v1183
        %v1185 = vld [vmem:[%s1129 + $0xd8] sm:$0xff]
        %1186 = vst [vmem:[%s1130 + $0xd8] sm:$0xff] %v1185
        %v1187 = vld [vmem:[%s1129 + $0xe0] sm:$0xff]
        %1188 = vst [vmem:[%s1130 + $0xe0] sm:$0xff] %v1187
        %v1189 = vld [vmem:[%s1129 + $0xe8] sm:$0xff]
        %1190 = vst [vmem:[%s1130 + $0xe8] sm:$0xff] %v1189
        %v1191 = vld [vmem:[%s1129 + $0xf0] sm:$0xff]
        %1192 = vst [vmem:[%s1130 + $0xf0] sm:$0xff] %v1191
        %v1193 = vld [vmem:[%s1129 + $0xf8] sm:$0xff]
        %1194 = vst [vmem:[%s1130 + $0xf8] sm:$0xff] %v1193
        %v1195 = vld [vmem:[%s1129 + $0x100] sm:$0xff]
        %1196 = vst [vmem:[%s1130 + $0x100] sm:$0xff] %v1195
        %v1197 = vld [vmem:[%s1129 + $0x108] sm:$0xff]
        %1198 = vst [vmem:[%s1130 + $0x108] sm:$0xff] %v1197
        %v1199 = vld [vmem:[%s1129 + $0x110] sm:$0xff]
        %1200 = vst [vmem:[%s1130 + $0x110] sm:$0xff] %v1199
        %v1201 = vld [vmem:[%s1129 + $0x118] sm:$0xff]
        %1202 = vst [vmem:[%s1130 + $0x118] sm:$0xff] %v1201
        %v1203 = vld [vmem:[%s1129 + $0x120] sm:$0xff]
        %1204 = vst [vmem:[%s1130 + $0x120] sm:$0xff] %v1203
        %v1205 = vld [vmem:[%s1129 + $0x128] sm:$0xff]
        %1206 = vst [vmem:[%s1130 + $0x128] sm:$0xff] %v1205
        %v1207 = vld [vmem:[%s1129 + $0x130] sm:$0xff]
        %1208 = vst [vmem:[%s1130 + $0x130] sm:$0xff] %v1207
        %v1209 = vld [vmem:[%s1129 + $0x138] sm:$0xff]
        %1210 = vst [vmem:[%s1130 + $0x138] sm:$0xff] %v1209
        %v1211 = vld [vmem:[%s1129 + $0x140] sm:$0xff]
        %1212 = vst [vmem:[%s1130 + $0x140] sm:$0xff] %v1211
        %v1213 = vld [vmem:[%s1129 + $0x148] sm:$0xff]
        %1214 = vst [vmem:[%s1130 + $0x148] sm:$0xff] %v1213
        %v1215 = vld [vmem:[%s1129 + $0x150] sm:$0xff]
        %1216 = vst [vmem:[%s1130 + $0x150] sm:$0xff] %v1215
        %v1217 = vld [vmem:[%s1129 + $0x158] sm:$0xff]
        %1218 = vst [vmem:[%s1130 + $0x158] sm:$0xff] %v1217
        %v1219 = vld [vmem:[%s1129 + $0x160] sm:$0xff]
        %1220 = vst [vmem:[%s1130 + $0x160] sm:$0xff] %v1219
        %v1221 = vld [vmem:[%s1129 + $0x168] sm:$0xff]
        %1222 = vst [vmem:[%s1130 + $0x168] sm:$0xff] %v1221
        %v1223 = vld [vmem:[%s1129 + $0x170] sm:$0xff]
        %1224 = vst [vmem:[%s1130 + $0x170] sm:$0xff] %v1223
        %v1225 = vld [vmem:[%s1129 + $0x178] sm:$0xff]
        %1226 = vst [vmem:[%s1130 + $0x178] sm:$0xff] %v1225
        %v1227 = vld [vmem:[%s1129 + $0x180] sm:$0xff]
        %1228 = vst [vmem:[%s1130 + $0x180] sm:$0xff] %v1227
        %v1229 = vld [vmem:[%s1129 + $0x188] sm:$0xff]
        %1230 = vst [vmem:[%s1130 + $0x188] sm:$0xff] %v1229
        %v1231 = vld [vmem:[%s1129 + $0x190] sm:$0xff]
        %1232 = vst [vmem:[%s1130 + $0x190] sm:$0xff] %v1231
        %v1233 = vld [vmem:[%s1129 + $0x198] sm:$0xff]
        %1234 = vst [vmem:[%s1130 + $0x198] sm:$0xff] %v1233
        %v1235 = vld [vmem:[%s1129 + $0x1a0] sm:$0xff]
        %1236 = vst [vmem:[%s1130 + $0x1a0] sm:$0xff] %v1235
        %v1237 = vld [vmem:[%s1129 + $0x1a8] sm:$0xff]
        %1238 = vst [vmem:[%s1130 + $0x1a8] sm:$0xff] %v1237
        %v1239 = vld [vmem:[%s1129 + $0x1b0] sm:$0xff]
        %1240 = vst [vmem:[%s1130 + $0x1b0] sm:$0xff] %v1239
        %v1241 = vld [vmem:[%s1129 + $0x1b8] sm:$0xff]
        %1242 = vst [vmem:[%s1130 + $0x1b8] sm:$0xff] %v1241
        %v1243 = vld [vmem:[%s1129 + $0x1c0] sm:$0xff]
        %1244 = vst [vmem:[%s1130 + $0x1c0] sm:$0xff] %v1243
        %v1245 = vld [vmem:[%s1129 + $0x1c8] sm:$0xff]
        %1246 = vst [vmem:[%s1130 + $0x1c8] sm:$0xff] %v1245
        %v1247 = vld [vmem:[%s1129 + $0x1d0] sm:$0xff]
        %1248 = vst [vmem:[%s1130 + $0x1d0] sm:$0xff] %v1247
        %v1249 = vld [vmem:[%s1129 + $0x1d8] sm:$0xff]
        %1250 = vst [vmem:[%s1130 + $0x1d8] sm:$0xff] %v1249
        %v1251 = vld [vmem:[%s1129 + $0x1e0] sm:$0xff]
        %1252 = vst [vmem:[%s1130 + $0x1e0] sm:$0xff] %v1251
        %v1253 = vld [vmem:[%s1129 + $0x1e8] sm:$0xff]
        %1254 = vst [vmem:[%s1130 + $0x1e8] sm:$0xff] %v1253
        %v1255 = vld [vmem:[%s1129 + $0x1f0] sm:$0xff]
        %1256 = vst [vmem:[%s1130 + $0x1f0] sm:$0xff] %v1255
        %v1257 = vld [vmem:[%s1129 + $0x1f8] sm:$0xff]
        %1258 = vst [vmem:[%s1130 + $0x1f8] sm:$0xff] %v1257
        %v1259 = vld [vmem:[%s1129 + $0x200] sm:$0xff]
        %1260 = vst [vmem:[%s1130 + $0x200] sm:$0xff] %v1259
        %v1261 = vld [vmem:[%s1129 + $0x208] sm:$0xff]
        %1262 = vst [vmem:[%s1130 + $0x208] sm:$0xff] %v1261
        %v1263 = vld [vmem:[%s1129 + $0x210] sm:$0xff]
        %1264 = vst [vmem:[%s1130 + $0x210] sm:$0xff] %v1263
        %v1265 = vld [vmem:[%s1129 + $0x218] sm:$0xff]
        %1266 = vst [vmem:[%s1130 + $0x218] sm:$0xff] %v1265
        %v1267 = vld [vmem:[%s1129 + $0x220] sm:$0xff]
        %1268 = vst [vmem:[%s1130 + $0x220] sm:$0xff] %v1267
        %v1269 = vld [vmem:[%s1129 + $0x228] sm:$0xff]
        %1270 = vst [vmem:[%s1130 + $0x228] sm:$0xff] %v1269
        %v1271 = vld [vmem:[%s1129 + $0x230] sm:$0xff]
        %1272 = vst [vmem:[%s1130 + $0x230] sm:$0xff] %v1271
        %v1273 = vld [vmem:[%s1129 + $0x238] sm:$0xff]
        %1274 = vst [vmem:[%s1130 + $0x238] sm:$0xff] %v1273
        %v1275 = vld [vmem:[%s1129 + $0x240] sm:$0xff]
        %1276 = vst [vmem:[%s1130 + $0x240] sm:$0xff] %v1275
        %v1277 = vld [vmem:[%s1129 + $0x248] sm:$0xff]
        %1278 = vst [vmem:[%s1130 + $0x248] sm:$0xff] %v1277
        %v1279 = vld [vmem:[%s1129 + $0x250] sm:$0xff]
        %1280 = vst [vmem:[%s1130 + $0x250] sm:$0xff] %v1279
        %v1281 = vld [vmem:[%s1129 + $0x258] sm:$0xff]
        %1282 = vst [vmem:[%s1130 + $0x258] sm:$0xff] %v1281
        %v1283 = vld [vmem:[%s1129 + $0x260] sm:$0xff]
        %1284 = vst [vmem:[%s1130 + $0x260] sm:$0xff] %v1283
        %v1285 = vld [vmem:[%s1129 + $0x268] sm:$0xff]
        %1286 = vst [vmem:[%s1130 + $0x268] sm:$0xff] %v1285
        %v1287 = vld [vmem:[%s1129 + $0x270] sm:$0xff]
        %1288 = vst [vmem:[%s1130 + $0x270] sm:$0xff] %v1287
        %v1289 = vld [vmem:[%s1129 + $0x278] sm:$0xff]
        %1290 = vst [vmem:[%s1130 + $0x278] sm:$0xff] %v1289
        %v1291 = vld [vmem:[%s1129 + $0x280] sm:$0xff]
        %1292 = vst [vmem:[%s1130 + $0x280] sm:$0xff] %v1291
        %v1293 = vld [vmem:[%s1129 + $0x288] sm:$0xff]
        %1294 = vst [vmem:[%s1130 + $0x288] sm:$0xff] %v1293
        %v1295 = vld [vmem:[%s1129 + $0x290] sm:$0xff]
        %1296 = vst [vmem:[%s1130 + $0x290] sm:$0xff] %v1295
        %v1297 = vld [vmem:[%s1129 + $0x298] sm:$0xff]
        %1298 = vst [vmem:[%s1130 + $0x298] sm:$0xff] %v1297
        %v1299 = vld [vmem:[%s1129 + $0x2a0] sm:$0xff]
        %1300 = vst [vmem:[%s1130 + $0x2a0] sm:$0xff] %v1299
        %v1301 = vld [vmem:[%s1129 + $0x2a8] sm:$0xff]
        %1302 = vst [vmem:[%s1130 + $0x2a8] sm:$0xff] %v1301
        %v1303 = vld [vmem:[%s1129 + $0x2b0] sm:$0xff]
        %1304 = vst [vmem:[%s1130 + $0x2b0] sm:$0xff] %v1303
        %v1305 = vld [vmem:[%s1129 + $0x2b8] sm:$0xff]
        %1306 = vst [vmem:[%s1130 + $0x2b8] sm:$0xff] %v1305
        %v1307 = vld [vmem:[%s1129 + $0x2c0] sm:$0xff]
        %1308 = vst [vmem:[%s1130 + $0x2c0] sm:$0xff] %v1307
        %v1309 = vld [vmem:[%s1129 + $0x2c8] sm:$0xff]
        %1310 = vst [vmem:[%s1130 + $0x2c8] sm:$0xff] %v1309
        %v1311 = vld [vmem:[%s1129 + $0x2d0] sm:$0xff]
        %1312 = vst [vmem:[%s1130 + $0x2d0] sm:$0xff] %v1311
        %v1313 = vld [vmem:[%s1129 + $0x2d8] sm:$0xff]
        %1314 = vst [vmem:[%s1130 + $0x2d8] sm:$0xff] %v1313
        %v1315 = vld [vmem:[%s1129 + $0x2e0] sm:$0xff]
        %1316 = vst [vmem:[%s1130 + $0x2e0] sm:$0xff] %v1315
        %v1317 = vld [vmem:[%s1129 + $0x2e8] sm:$0xff]
        %1318 = vst [vmem:[%s1130 + $0x2e8] sm:$0xff] %v1317
        %v1319 = vld [vmem:[%s1129 + $0x2f0] sm:$0xff]
        %1320 = vst [vmem:[%s1130 + $0x2f0] sm:$0xff] %v1319
        %v1321 = vld [vmem:[%s1129 + $0x2f8] sm:$0xff]
        %1322 = vst [vmem:[%s1130 + $0x2f8] sm:$0xff] %v1321
        %v1323 = vld [vmem:[%s1129 + $0x300] sm:$0xff]
        %1324 = vst [vmem:[%s1130 + $0x300] sm:$0xff] %v1323
        %v1325 = vld [vmem:[%s1129 + $0x308] sm:$0xff]
        %1326 = vst [vmem:[%s1130 + $0x308] sm:$0xff] %v1325
        %v1327 = vld [vmem:[%s1129 + $0x310] sm:$0xff]
        %1328 = vst [vmem:[%s1130 + $0x310] sm:$0xff] %v1327
        %v1329 = vld [vmem:[%s1129 + $0x318] sm:$0xff]
        %1330 = vst [vmem:[%s1130 + $0x318] sm:$0xff] %v1329
        %v1331 = vld [vmem:[%s1129 + $0x320] sm:$0xff]
        %1332 = vst [vmem:[%s1130 + $0x320] sm:$0xff] %v1331
        %v1333 = vld [vmem:[%s1129 + $0x328] sm:$0xff]
        %1334 = vst [vmem:[%s1130 + $0x328] sm:$0xff] %v1333
        %v1335 = vld [vmem:[%s1129 + $0x330] sm:$0xff]
        %1336 = vst [vmem:[%s1130 + $0x330] sm:$0xff] %v1335
        %v1337 = vld [vmem:[%s1129 + $0x338] sm:$0xff]
        %1338 = vst [vmem:[%s1130 + $0x338] sm:$0xff] %v1337
        %v1339 = vld [vmem:[%s1129 + $0x340] sm:$0xff]
        %1340 = vst [vmem:[%s1130 + $0x340] sm:$0xff] %v1339
        %v1341 = vld [vmem:[%s1129 + $0x348] sm:$0xff]
        %1342 = vst [vmem:[%s1130 + $0x348] sm:$0xff] %v1341
        %v1343 = vld [vmem:[%s1129 + $0x350] sm:$0xff]
        %1344 = vst [vmem:[%s1130 + $0x350] sm:$0xff] %v1343
        %v1345 = vld [vmem:[%s1129 + $0x358] sm:$0xff]
        %1346 = vst [vmem:[%s1130 + $0x358] sm:$0xff] %v1345
        %v1347 = vld [vmem:[%s1129 + $0x360] sm:$0xff]
        %1348 = vst [vmem:[%s1130 + $0x360] sm:$0xff] %v1347
        %v1349 = vld [vmem:[%s1129 + $0x368] sm:$0xff]
        %1350 = vst [vmem:[%s1130 + $0x368] sm:$0xff] %v1349
        %v1351 = vld [vmem:[%s1129 + $0x370] sm:$0xff]
        %1352 = vst [vmem:[%s1130 + $0x370] sm:$0xff] %v1351
        %v1353 = vld [vmem:[%s1129 + $0x378] sm:$0xff]
        %1354 = vst [vmem:[%s1130 + $0x378] sm:$0xff] %v1353
        %v1355 = vld [vmem:[%s1129 + $0x380] sm:$0xff]
        %1356 = vst [vmem:[%s1130 + $0x380] sm:$0xff] %v1355
        %v1357 = vld [vmem:[%s1129 + $0x388] sm:$0xff]
        %1358 = vst [vmem:[%s1130 + $0x388] sm:$0xff] %v1357
        %v1359 = vld [vmem:[%s1129 + $0x390] sm:$0xff]
        %1360 = vst [vmem:[%s1130 + $0x390] sm:$0xff] %v1359
        %v1361 = vld [vmem:[%s1129 + $0x398] sm:$0xff]
        %1362 = vst [vmem:[%s1130 + $0x398] sm:$0xff] %v1361
        %v1363 = vld [vmem:[%s1129 + $0x3a0] sm:$0xff]
        %1364 = vst [vmem:[%s1130 + $0x3a0] sm:$0xff] %v1363
        %v1365 = vld [vmem:[%s1129 + $0x3a8] sm:$0xff]
        %1366 = vst [vmem:[%s1130 + $0x3a8] sm:$0xff] %v1365
        %v1367 = vld [vmem:[%s1129 + $0x3b0] sm:$0xff]
        %1368 = vst [vmem:[%s1130 + $0x3b0] sm:$0xff] %v1367
        %v1369 = vld [vmem:[%s1129 + $0x3b8] sm:$0xff]
        %1370 = vst [vmem:[%s1130 + $0x3b8] sm:$0xff] %v1369
        %v1371 = vld [vmem:[%s1129 + $0x3c0] sm:$0xff]
        %1372 = vst [vmem:[%s1130 + $0x3c0] sm:$0xff] %v1371
        %v1373 = vld [vmem:[%s1129 + $0x3c8] sm:$0xff]
        %1374 = vst [vmem:[%s1130 + $0x3c8] sm:$0xff] %v1373
        %v1375 = vld [vmem:[%s1129 + $0x3d0] sm:$0xff]
        %1376 = vst [vmem:[%s1130 + $0x3d0] sm:$0xff] %v1375
        %v1377 = vld [vmem:[%s1129 + $0x3d8] sm:$0xff]
        %1378 = vst [vmem:[%s1130 + $0x3d8] sm:$0xff] %v1377
        %v1379 = vld [vmem:[%s1129 + $0x3e0] sm:$0xff]
        %1380 = vst [vmem:[%s1130 + $0x3e0] sm:$0xff] %v1379
        %v1381 = vld [vmem:[%s1129 + $0x3e8] sm:$0xff]
        %1382 = vst [vmem:[%s1130 + $0x3e8] sm:$0xff] %v1381
        %v1383 = vld [vmem:[%s1129 + $0x3f0] sm:$0xff]
        %1384 = vst [vmem:[%s1130 + $0x3f0] sm:$0xff] %v1383
        %v1385 = vld [vmem:[%s1129 + $0x3f8] sm:$0xff]
        %1386 = vst [vmem:[%s1130 + $0x3f8] sm:$0xff] %v1385
      $region86: #{forward.1} parent=80 // loop_footer
        %s1128 = sadd.s32 1, %s1124
      $region87: #{forward.1} parent=80 // loop_footer_branch
        %1123 = sbr.rel target = $region83
      $region88: #{forward.1} parent=80 // loop_exit
        _
    $region81: #{forward.1} parent=65 // pred_fallthru
      _
    %p1387 = pneg %p1119
    // Predicated region
    $region89: #{forward.1} parent=65 // pred_check
      _
    $region90: #{forward.1} parent=65 // pred_check_branch
      %1389 = sbr.rel (%p1119) target = $region92
    $region91: #{forward.1} parent=65 // pred_region
      %s1390 = sand.u32 1024, 7
    $region92: #{forward.1} parent=65 // pred_fallthru
      _
  $region66: #{forward.1} parent=0 // pred_fallthru
    _
  // Predicated region
  $region67: #{forward.1} parent=0 // pred_check
    %p1104 = pneg %p1100
  $region68: #{forward.1} parent=0 // pred_check_branch
    %1106 = sbr.rel (%p1104) target = $region70
  $region69: #{forward.1} parent=0 // pred_region
    %s1107 = sshllo.u32 0, 1024
    loop: start=0, step=1, limit=1
    $region71: #{forward.1} parent=69 // loop_pre_header
      _
    $region72: #{forward.1} parent=69 // loop_header
      %s1109 = sphi 0, %s1113
      %p1110 = scmp.ge.s32.totalorder %s1109, 1
      %s1114 = sphi %s7, %s7
      %s1115 = sphi [#allocation7], [#allocation7]
    $region73: #{forward.1} parent=69 // loop_header_branch
      %1112 = sbr.rel (%p1110) target = $region77
    $region74: #{forward.1} parent=69 // loop_body
      %v1116 = vld [vmem:[%s1114] sm:%s1107]
      %1117 = vst [vmem:[%s1115] sm:%s1107] %v1116
    $region75: #{forward.1} parent=69 // loop_footer
      %s1113 = sadd.s32 1, %s1109
    $region76: #{forward.1} parent=69 // loop_footer_branch
      %1108 = sbr.rel target = $region72
    $region77: #{forward.1} parent=69 // loop_exit
      _
  $region70: #{forward.1} parent=0 // pred_fallthru
    _
  // Predicated region
  $region93: #{forward.1} parent=0 // pred_check
    _
  $region94: #{forward.1} parent=0 // pred_check_branch
    %1393 = sbr.rel (0) target = $region96
  $region95: #{forward.1} parent=0 // pred_region
    %1394 = vsyncadd %s1098, 16384
  $region96: #{forward.1} parent=0 // pred_fallthru
    _
  %v1395 = vld [vmem:[%s0] sm:$0xff]
  %v1396 = vld [vmem:[%s0 + $0x8] sm:$0xff]
  %v1397 = vld [vmem:[%s0 + $0x10] sm:$0xff]
  %v1398 = vld [vmem:[%s0 + $0x18] sm:$0xff]
  %v1399 = vld [vmem:[%s0 + $0x20] sm:$0xff]
  %v1400 = vld [vmem:[%s0 + $0x28] sm:$0xff]
  %v1401 = vld [vmem:[%s0 + $0x30] sm:$0xff]
  %v1402 = vld [vmem:[%s0 + $0x38] sm:$0xff]
  %v1403 = vld [vmem:[%s0 + $0x40] sm:$0xff]
  %v1404 = vld [vmem:[%s0 + $0x48] sm:$0xff]
  %v1405 = vld [vmem:[%s0 + $0x50] sm:$0xff]
  %v1406 = vld [vmem:[%s0 + $0x58] sm:$0xff]
  %v1407 = vld [vmem:[%s0 + $0x60] sm:$0xff]
  %v1408 = vld [vmem:[%s0 + $0x68] sm:$0xff]
  %v1409 = vld [vmem:[%s0 + $0x70] sm:$0xff]
  %v1410 = vld [vmem:[%s0 + $0x78] sm:$0xff]
  %v1411 = vld [vmem:[%s1] sm:$0xff]
  %v1412 = vld [vmem:[%s1 + $0x8] sm:$0xf]
  %v1413 = vld [vmem:[%s5] sm:$0x1]
  %v1415 = vlaneseq
  %v1416 = vshrl.u32 %v1415, 7
  %v1417 = vsub.s32 0, %v1416
  %v1418 = vrot.slane %v1413, %v1417
  %vm1420 = vcmask 97280
  %v1422 = vsel %vm1420, %v1395, 0
  %v1425 = vsel %vm1420, %v1396, 0
  %v1428 = vsel %vm1420, %v1397, 0
  %v1431 = vsel %vm1420, %v1398, 0
  %v1434 = vsel %vm1420, %v1399, 0
  %v1437 = vsel %vm1420, %v1400, 0
  %v1440 = vsel %vm1420, %v1401, 0
  %v1443 = vsel %vm1420, %v1402, 0
  %v1446 = vsel %vm1420, %v1403, 0
  %v1449 = vsel %vm1420, %v1404, 0
  %v1452 = vsel %vm1420, %v1405, 0
  %v1455 = vsel %vm1420, %v1406, 0
  %v1458 = vsel %vm1420, %v1407, 0
  %v1461 = vsel %vm1420, %v1408, 0
  %v1464 = vsel %vm1420, %v1409, 0
  %v1467 = vsel %vm1420, %v1410, 0
  %vm1469 = vcmask 1043456
  %v1471 = vsel %vm1469, %v1412, 0
  %1473 = vmatprep.subr.mxu0 0.0
  %1474 = vmatpush1.msra.mxu0 %v1411
  %1475 = vmatprep.subr.mxu0 0.0
  %1476 = vmatpush1.msra.mxu0 %v1471
  %1477 = vmatprep.subr.mxu0 0.0
  %1478 = vmatpush1.msra.mxu0 0.0
  %1479 = vmatprep.subr.mxu0 0.0
  %1480 = vmatpush1.msra.mxu0 0.0
  %1481 = vmatprep.subr.mxu0 0.0
  %1482 = vmatpush1.msra.mxu0 0.0
  %1483 = vmatprep.subr.mxu0 0.0
  %1484 = vmatpush1.msra.mxu0 0.0
  %1485 = vmatprep.subr.mxu0 0.0
  %1486 = vmatpush1.msra.mxu0 0.0
  %1487 = vmatprep.subr.mxu0 0.0
  %1488 = vmatpush1.msra.mxu0 0.0
  %1489 = vmatprep.subr.mxu0 0.0
  %1490 = vmatpush1.msra.mxu0 0.0
  %1491 = vmatprep.subr.mxu0 0.0
  %1492 = vmatpush1.msra.mxu0 0.0
  %1493 = vmatprep.subr.mxu0 0.0
  %1494 = vmatpush1.msra.mxu0 0.0
  %1495 = vmatprep.subr.mxu0 0.0
  %1496 = vmatpush1.msra.mxu0 0.0
  %1497 = vmatprep.subr.mxu0 0.0
  %1498 = vmatpush1.msra.mxu0 0.0
  %1499 = vmatprep.subr.mxu0 0.0
  %1500 = vmatpush1.msra.mxu0 0.0
  %1501 = vmatprep.subr.mxu0 0.0
  %1502 = vmatpush1.msra.mxu0 0.0
  %1503 = vmatprep.subr.mxu0 0.0
  %1504 = vmatpush1.msra.mxu0 0.0
  %1505 = vmatprep.subr.mxu0 0.0
  %1506 = vmatpush1.msra.mxu0 0.0
  %1507 = vmatprep.subr.mxu0 0.0
  %1508 = vmatpush1.msra.mxu0 0.0
  %1509 = vmatprep.subr.mxu0 0.0
  %1510 = vmatpush1.msra.mxu0 0.0
  %1511 = vmatprep.subr.mxu0 0.0
  %1512 = vmatpush1.msra.mxu0 0.0
  %1513 = vmatprep.subr.mxu0 0.0
  %1514 = vmatpush1.msra.mxu0 0.0
  %1515 = vmatprep.subr.mxu0 0.0
  %1516 = vmatpush1.msra.mxu0 0.0
  %1517 = vmatprep.subr.mxu0 0.0
  %1518 = vmatpush1.msra.mxu0 0.0
  %1519 = vmatprep.subr.mxu0 0.0
  %1520 = vmatpush1.msra.mxu0 0.0
  %1521 = vmatprep.subr.mxu0 0.0
  %1522 = vmatpush1.msra.mxu0 0.0
  %1523 = vmatprep.subr.mxu0 0.0
  %1524 = vmatpush1.msra.mxu0 0.0
  %1525 = vmatprep.subr.mxu0 0.0
  %1526 = vmatpush1.msra.mxu0 0.0
  %1527 = vmatprep.subr.mxu0 0.0
  %1528 = vmatpush1.msra.mxu0 0.0
  %1529 = vmatprep.subr.mxu0 0.0
  %1530 = vmatpush1.msra.mxu0 0.0
  %1531 = vmatprep.subr.mxu0 0.0
  %1532 = vmatpush1.msra.mxu0 0.0
  %1533 = vmatprep.subr.mxu0 0.0
  %1534 = vmatpush1.msra.mxu0 0.0
  %1535 = vmatprep.subr.mxu0 0.0
  %1536 = vmatpush1.msra.mxu0 0.0
  %1537 = vmatprep.mubr.f32.mxu0 0.0
  %1538 = vmatmul.mubr.f32.gmra.mrb[0].mxu0 %v1422
  %v1539 = vpop.f32.mrb[0].mxu0
  %v1540 = vadd.f32 %v1418, %v1539
  %v1541 = vpop.f32.mrb[0].mxu0
  %1542 = vmatprep.mubr.f32.mxu0 0.0
  %1543 = vmatmul.mubr.f32.gmra.mrb[0].mxu0 %v1425
  %v1544 = vpop.f32.mrb[0].mxu0
  %v1545 = vadd.f32 %v1418, %v1544
  %v1546 = vpop.f32.mrb[0].mxu0
  %1547 = vmatprep.mubr.f32.mxu0 0.0
  %1548 = vmatmul.mubr.f32.gmra.mrb[0].mxu0 %v1428
  %v1549 = vpop.f32.mrb[0].mxu0
  %v1550 = vadd.f32 %v1418, %v1549
  %v1551 = vpop.f32.mrb[0].mxu0
  %1552 = vmatprep.mubr.f32.mxu0 0.0
  %1553 = vmatmul.mubr.f32.gmra.mrb[0].mxu0 %v1431
  %v1554 = vpop.f32.mrb[0].mxu0
  %v1555 = vadd.f32 %v1418, %v1554
  %v1556 = vpop.f32.mrb[0].mxu0
  %1557 = vmatprep.mubr.f32.mxu0 0.0
  %1558 = vmatmul.mubr.f32.gmra.mrb[0].mxu0 %v1434
  %v1559 = vpop.f32.mrb[0].mxu0
  %v1560 = vadd.f32 %v1418, %v1559
  %v1561 = vpop.f32.mrb[0].mxu0
  %1562 = vmatprep.mubr.f32.mxu0 0.0
  %1563 = vmatmul.mubr.f32.gmra.mrb[0].mxu0 %v1437
  %v1564 = vpop.f32.mrb[0].mxu0
  %v1565 = vadd.f32 %v1418, %v1564
  %v1566 = vpop.f32.mrb[0].mxu0
  %1567 = vmatprep.mubr.f32.mxu0 0.0
  %1568 = vmatmul.mubr.f32.gmra.mrb[0].mxu0 %v1440
  %v1569 = vpop.f32.mrb[0].mxu0
  %v1570 = vadd.f32 %v1418, %v1569
  %v1571 = vpop.f32.mrb[0].mxu0
  %1572 = vmatprep.mubr.f32.mxu0 0.0
  %1573 = vmatmul.mubr.f32.gmra.mrb[0].mxu0 %v1443
  %v1574 = vpop.f32.mrb[0].mxu0
  %v1575 = vadd.f32 %v1418, %v1574
  %v1576 = vpop.f32.mrb[0].mxu0
  %1577 = vmatprep.mubr.f32.mxu0 0.0
  %1578 = vmatmul.mubr.f32.gmra.mrb[0].mxu0 %v1446
  %v1579 = vpop.f32.mrb[0].mxu0
  %v1580 = vadd.f32 %v1418, %v1579
  %v1581 = vpop.f32.mrb[0].mxu0
  %1582 = vmatprep.mubr.f32.mxu0 0.0
  %1583 = vmatmul.mubr.f32.gmra.mrb[0].mxu0 %v1449
  %v1584 = vpop.f32.mrb[0].mxu0
  %v1585 = vadd.f32 %v1418, %v1584
  %v1586 = vpop.f32.mrb[0].mxu0
  %1587 = vmatprep.mubr.f32.mxu0 0.0
  %1588 = vmatmul.mubr.f32.gmra.mrb[0].mxu0 %v1452
  %v1589 = vpop.f32.mrb[0].mxu0
  %v1590 = vadd.f32 %v1418, %v1589
  %v1591 = vpop.f32.mrb[0].mxu0
  %1592 = vmatprep.mubr.f32.mxu0 0.0
  %1593 = vmatmul.mubr.f32.gmra.mrb[0].mxu0 %v1455
  %v1594 = vpop.f32.mrb[0].mxu0
  %v1595 = vadd.f32 %v1418, %v1594
  %v1596 = vpop.f32.mrb[0].mxu0
  %1597 = vmatprep.mubr.f32.mxu0 0.0
  %1598 = vmatmul.mubr.f32.gmra.mrb[0].mxu0 %v1458
  %v1599 = vpop.f32.mrb[0].mxu0
  %v1600 = vadd.f32 %v1418, %v1599
  %v1601 = vpop.f32.mrb[0].mxu0
  %1602 = vmatprep.mubr.f32.mxu0 0.0
  %1603 = vmatmul.mubr.f32.gmra.mrb[0].mxu0 %v1461
  %v1604 = vpop.f32.mrb[0].mxu0
  %v1605 = vadd.f32 %v1418, %v1604
  %v1606 = vpop.f32.mrb[0].mxu0
  %1607 = vmatprep.mubr.f32.mxu0 0.0
  %1608 = vmatmul.mubr.f32.gmra.mrb[0].mxu0 %v1464
  %v1609 = vpop.f32.mrb[0].mxu0
  %v1610 = vadd.f32 %v1418, %v1609
  %v1611 = vpop.f32.mrb[0].mxu0
  %1612 = vmatprep.mubr.f32.mxu0 0.0
  %1613 = vmatmul.mubr.f32.gmra.mrb[0].mxu0 %v1467
  %v1614 = vpop.f32.mrb[0].mxu0
  %v1615 = vadd.f32 %v1418, %v1614
  %v1616 = vpop.f32.mrb[0].mxu0
  %1617 = vdwg.mxu0
  %v1618 = vmax.f32 %v1540, 0.0
  %v1619 = vmax.f32 %v1545, 0.0
  %v1620 = vmax.f32 %v1550, 0.0
  %v1621 = vmax.f32 %v1555, 0.0
  %v1622 = vmax.f32 %v1560, 0.0
  %v1623 = vmax.f32 %v1565, 0.0
  %v1624 = vmax.f32 %v1570, 0.0
  %v1625 = vmax.f32 %v1575, 0.0
  %v1626 = vmax.f32 %v1580, 0.0
  %v1627 = vmax.f32 %v1585, 0.0
  %v1628 = vmax.f32 %v1590, 0.0
  %v1629 = vmax.f32 %v1595, 0.0
  %v1630 = vmax.f32 %v1600, 0.0
  %v1631 = vmax.f32 %v1605, 0.0
  %v1632 = vmax.f32 %v1610, 0.0
  %v1633 = vmax.f32 %v1615, 0.0
  %v1634 = vld [vmem:[%s2] sm:$0xff]
  %v1635 = vld [vmem:[%s2 + $0x8] sm:$0xff]
  %v1636 = vld [vmem:[%s2 + $0x10] sm:$0xff]
  %v1637 = vld [vmem:[%s2 + $0x18] sm:$0xff]
  %v1638 = vld [vmem:[%s2 + $0x20] sm:$0xff]
  %v1639 = vld [vmem:[%s2 + $0x28] sm:$0xff]
  %v1640 = vld [vmem:[%s2 + $0x30] sm:$0xff]
  %v1641 = vld [vmem:[%s2 + $0x38] sm:$0xff]
  %v1642 = vld [vmem:[%s2 + $0x40] sm:$0xff]
  %v1643 = vld [vmem:[%s2 + $0x48] sm:$0xff]
  %v1644 = vld [vmem:[%s2 + $0x50] sm:$0xff]
  %v1645 = vld [vmem:[%s2 + $0x58] sm:$0xff]
  %v1646 = vld [vmem:[%s2 + $0x60] sm:$0xff]
  %v1647 = vld [vmem:[%s2 + $0x68] sm:$0xff]
  %v1648 = vld [vmem:[%s2 + $0x70] sm:$0xff]
  %v1649 = vld [vmem:[%s2 + $0x78] sm:$0xff]
  %v1650 = vld [vmem:[%s5 + $0x1] sm:$0xf]
  %v1652 = vlaneseq
  %v1653 = vshrl.u32 %v1652, 7
  %v1654 = vsub.s32 0, %v1653
  %v1655 = vrot.slane %v1650, %v1654
  %v1656 = vlaneseq
  %v1657 = vshrl.u32 %v1656, 7
  %v1658 = vsub.s32 1, %v1657
  %v1659 = vrot.slane %v1650, %v1658
  %v1660 = vlaneseq
  %v1661 = vshrl.u32 %v1660, 7
  %v1662 = vsub.s32 2, %v1661
  %v1663 = vrot.slane %v1650, %v1662
  %v1664 = vlaneseq
  %v1665 = vshrl.u32 %v1664, 7
  %v1666 = vsub.s32 3, %v1665
  %v1667 = vrot.slane %v1650, %v1666
  %vm1672 = vcmask 261120
  %v1674 = vsel %vm1672, %v1618, 0
  %v1677 = vsel %vm1672, %v1619, 0
  %v1680 = vsel %vm1672, %v1620, 0
  %v1683 = vsel %vm1672, %v1621, 0
  %v1686 = vsel %vm1672, %v1622, 0
  %v1689 = vsel %vm1672, %v1623, 0
  %v1692 = vsel %vm1672, %v1624, 0
  %v1695 = vsel %vm1672, %v1625, 0
  %v1698 = vsel %vm1672, %v1626, 0
  %v1701 = vsel %vm1672, %v1627, 0
  %v1704 = vsel %vm1672, %v1628, 0
  %v1707 = vsel %vm1672, %v1629, 0
  %v1710 = vsel %vm1672, %v1630, 0
  %v1713 = vsel %vm1672, %v1631, 0
  %v1716 = vsel %vm1672, %v1632, 0
  %v1719 = vsel %vm1672, %v1633, 0
  %1721 = vmatprep.subr.mxu0 %v1635
  %1722 = vmatpush1.msra.mxu0 %v1634
  %1723 = vmatprep.subr.mxu0 %v1639
  %1724 = vmatpush1.msra.mxu0 %v1638
  %1725 = vmatprep.subr.mxu0 %v1643
  %1726 = vmatpush1.msra.mxu0 %v1642
  %1727 = vmatprep.subr.mxu0 %v1647
  %1728 = vmatpush1.msra.mxu0 %v1646
  %1729 = vmatprep.subr.mxu0 0.0
  %1730 = vmatpush1.msra.mxu0 0.0
  %1731 = vmatprep.subr.mxu0 0.0
  %1732 = vmatpush1.msra.mxu0 0.0
  %1733 = vmatprep.subr.mxu0 0.0
  %1734 = vmatpush1.msra.mxu0 0.0
  %1735 = vmatprep.subr.mxu0 0.0
  %1736 = vmatpush1.msra.mxu0 0.0
  %1737 = vmatprep.subr.mxu0 0.0
  %1738 = vmatpush1.msra.mxu0 0.0
  %1739 = vmatprep.subr.mxu0 0.0
  %1740 = vmatpush1.msra.mxu0 0.0
  %1741 = vmatprep.subr.mxu0 0.0
  %1742 = vmatpush1.msra.mxu0 0.0
  %1743 = vmatprep.subr.mxu0 0.0
  %1744 = vmatpush1.msra.mxu0 0.0
  %1745 = vmatprep.subr.mxu0 0.0
  %1746 = vmatpush1.msra.mxu0 0.0
  %1747 = vmatprep.subr.mxu0 0.0
  %1748 = vmatpush1.msra.mxu0 0.0
  %1749 = vmatprep.subr.mxu0 0.0
  %1750 = vmatpush1.msra.mxu0 0.0
  %1751 = vmatprep.subr.mxu0 0.0
  %1752 = vmatpush1.msra.mxu0 0.0
  %1753 = vmatprep.subr.mxu0 0.0
  %1754 = vmatpush1.msra.mxu0 0.0
  %1755 = vmatprep.subr.mxu0 0.0
  %1756 = vmatpush1.msra.mxu0 0.0
  %1757 = vmatprep.subr.mxu0 0.0
  %1758 = vmatpush1.msra.mxu0 0.0
  %1759 = vmatprep.subr.mxu0 0.0
  %1760 = vmatpush1.msra.mxu0 0.0
  %1761 = vmatprep.subr.mxu0 0.0
  %1762 = vmatpush1.msra.mxu0 0.0
  %1763 = vmatprep.subr.mxu0 0.0
  %1764 = vmatpush1.msra.mxu0 0.0
  %1765 = vmatprep.subr.mxu0 0.0
  %1766 = vmatpush1.msra.mxu0 0.0
  %1767 = vmatprep.subr.mxu0 0.0
  %1768 = vmatpush1.msra.mxu0 0.0
  %1769 = vmatprep.subr.mxu0 0.0
  %1770 = vmatpush1.msra.mxu0 0.0
  %1771 = vmatprep.subr.mxu0 0.0
  %1772 = vmatpush1.msra.mxu0 0.0
  %1773 = vmatprep.subr.mxu0 0.0
  %1774 = vmatpush1.msra.mxu0 0.0
  %1775 = vmatprep.subr.mxu0 0.0
  %1776 = vmatpush1.msra.mxu0 0.0
  %1777 = vmatprep.subr.mxu0 0.0
  %1778 = vmatpush1.msra.mxu0 0.0
  %1779 = vmatprep.subr.mxu0 0.0
  %1780 = vmatpush1.msra.mxu0 0.0
  %1781 = vmatprep.subr.mxu0 0.0
  %1782 = vmatpush1.msra.mxu0 0.0
  %1783 = vmatprep.subr.mxu0 0.0
  %1784 = vmatpush1.msra.mxu0 0.0
  %1785 = vmatprep.mubr.f32.mxu0 0.0
  %1786 = vmatmul.mubr.f32.gmra.mrb[0].mxu0 %v1674
  %v1787 = vpop.f32.mrb[0].mxu0
  %v1788 = vadd.f32 %v1655, %v1787
  %v1789 = vpop.f32.mrb[0].mxu0
  %v1790 = vadd.f32 %v1659, %v1789
  %1791 = vmatprep.mubr.f32.mxu0 0.0
  %1792 = vmatmul.mubr.f32.gmra.mrb[0].mxu0 %v1677
  %v1793 = vpop.f32.mrb[0].mxu0
  %v1794 = vadd.f32 %v1655, %v1793
  %v1795 = vpop.f32.mrb[0].mxu0
  %v1796 = vadd.f32 %v1659, %v1795
  %1797 = vmatprep.mubr.f32.mxu0 0.0
  %1798 = vmatmul.mubr.f32.gmra.mrb[0].mxu0 %v1680
  %v1799 = vpop.f32.mrb[0].mxu0
  %v1800 = vadd.f32 %v1655, %v1799
  %v1801 = vpop.f32.mrb[0].mxu0
  %v1802 = vadd.f32 %v1659, %v1801
  %1803 = vmatprep.mubr.f32.mxu0 0.0
  %1804 = vmatmul.mubr.f32.gmra.mrb[0].mxu0 %v1683
  %v1805 = vpop.f32.mrb[0].mxu0
  %v1806 = vadd.f32 %v1655, %v1805
  %v1807 = vpop.f32.mrb[0].mxu0
  %v1808 = vadd.f32 %v1659, %v1807
  %1809 = vmatprep.mubr.f32.mxu0 0.0
  %1810 = vmatmul.mubr.f32.gmra.mrb[0].mxu0 %v1686
  %v1811 = vpop.f32.mrb[0].mxu0
  %v1812 = vadd.f32 %v1655, %v1811
  %v1813 = vpop.f32.mrb[0].mxu0
  %v1814 = vadd.f32 %v1659, %v1813
  %1815 = vmatprep.mubr.f32.mxu0 0.0
  %1816 = vmatmul.mubr.f32.gmra.mrb[0].mxu0 %v1689
  %v1817 = vpop.f32.mrb[0].mxu0
  %v1818 = vadd.f32 %v1655, %v1817
  %v1819 = vpop.f32.mrb[0].mxu0
  %v1820 = vadd.f32 %v1659, %v1819
  %1821 = vmatprep.mubr.f32.mxu0 0.0
  %1822 = vmatmul.mubr.f32.gmra.mrb[0].mxu0 %v1692
  %v1823 = vpop.f32.mrb[0].mxu0
  %v1824 = vadd.f32 %v1655, %v1823
  %v1825 = vpop.f32.mrb[0].mxu0
  %v1826 = vadd.f32 %v1659, %v1825
  %1827 = vmatprep.mubr.f32.mxu0 0.0
  %1828 = vmatmul.mubr.f32.gmra.mrb[0].mxu0 %v1695
  %v1829 = vpop.f32.mrb[0].mxu0
  %v1830 = vadd.f32 %v1655, %v1829
  %v1831 = vpop.f32.mrb[0].mxu0
  %v1832 = vadd.f32 %v1659, %v1831
  %1833 = vmatprep.mubr.f32.mxu0 0.0
  %1834 = vmatmul.mubr.f32.gmra.mrb[0].mxu0 %v1698
  %v1835 = vpop.f32.mrb[0].mxu0
  %v1836 = vadd.f32 %v1655, %v1835
  %v1837 = vpop.f32.mrb[0].mxu0
  %v1838 = vadd.f32 %v1659, %v1837
  %1839 = vmatprep.mubr.f32.mxu0 0.0
  %1840 = vmatmul.mubr.f32.gmra.mrb[0].mxu0 %v1701
  %v1841 = vpop.f32.mrb[0].mxu0
  %v1842 = vadd.f32 %v1655, %v1841
  %v1843 = vpop.f32.mrb[0].mxu0
  %v1844 = vadd.f32 %v1659, %v1843
  %1845 = vmatprep.mubr.f32.mxu0 0.0
  %1846 = vmatmul.mubr.f32.gmra.mrb[0].mxu0 %v1704
  %v1847 = vpop.f32.mrb[0].mxu0
  %v1848 = vadd.f32 %v1655, %v1847
  %v1849 = vpop.f32.mrb[0].mxu0
  %v1850 = vadd.f32 %v1659, %v1849
  %1851 = vmatprep.mubr.f32.mxu0 0.0
  %1852 = vmatmul.mubr.f32.gmra.mrb[0].mxu0 %v1707
  %v1853 = vpop.f32.mrb[0].mxu0
  %v1854 = vadd.f32 %v1655, %v1853
  %v1855 = vpop.f32.mrb[0].mxu0
  %v1856 = vadd.f32 %v1659, %v1855
  %1857 = vmatprep.mubr.f32.mxu0 0.0
  %1858 = vmatmul.mubr.f32.gmra.mrb[0].mxu0 %v1710
  %v1859 = vpop.f32.mrb[0].mxu0
  %v1860 = vadd.f32 %v1655, %v1859
  %v1861 = vpop.f32.mrb[0].mxu0
  %v1862 = vadd.f32 %v1659, %v1861
  %1863 = vmatprep.mubr.f32.mxu0 0.0
  %1864 = vmatmul.mubr.f32.gmra.mrb[0].mxu0 %v1713
  %v1865 = vpop.f32.mrb[0].mxu0
  %v1866 = vadd.f32 %v1655, %v1865
  %v1867 = vpop.f32.mrb[0].mxu0
  %v1868 = vadd.f32 %v1659, %v1867
  %1869 = vmatprep.mubr.f32.mxu0 0.0
  %1870 = vmatmul.mubr.f32.gmra.mrb[0].mxu0 %v1716
  %v1871 = vpop.f32.mrb[0].mxu0
  %v1872 = vadd.f32 %v1655, %v1871
  %v1873 = vpop.f32.mrb[0].mxu0
  %v1874 = vadd.f32 %v1659, %v1873
  %1875 = vmatprep.mubr.f32.mxu0 0.0
  %1876 = vmatmul.mubr.f32.gmra.mrb[0].mxu0 %v1719
  %v1877 = vpop.f32.mrb[0].mxu0
  %v1878 = vadd.f32 %v1655, %v1877
  %v1879 = vpop.f32.mrb[0].mxu0
  %v1880 = vadd.f32 %v1659, %v1879
  %1881 = vdwg.mxu0
  %1882 = vmatprep.subr.mxu0 %v1637
  %1883 = vmatpush1.msra.mxu0 %v1636
  %1884 = vmatprep.subr.mxu0 %v1641
  %1885 = vmatpush1.msra.mxu0 %v1640
  %1886 = vmatprep.subr.mxu0 %v1645
  %1887 = vmatpush1.msra.mxu0 %v1644
  %1888 = vmatprep.subr.mxu0 %v1649
  %1889 = vmatpush1.msra.mxu0 %v1648
  %1890 = vmatprep.subr.mxu0 0.0
  %1891 = vmatpush1.msra.mxu0 0.0
  %1892 = vmatprep.subr.mxu0 0.0
  %1893 = vmatpush1.msra.mxu0 0.0
  %1894 = vmatprep.subr.mxu0 0.0
  %1895 = vmatpush1.msra.mxu0 0.0
  %1896 = vmatprep.subr.mxu0 0.0
  %1897 = vmatpush1.msra.mxu0 0.0
  %1898 = vmatprep.subr.mxu0 0.0
  %1899 = vmatpush1.msra.mxu0 0.0
  %1900 = vmatprep.subr.mxu0 0.0
  %1901 = vmatpush1.msra.mxu0 0.0
  %1902 = vmatprep.subr.mxu0 0.0
  %1903 = vmatpush1.msra.mxu0 0.0
  %1904 = vmatprep.subr.mxu0 0.0
  %1905 = vmatpush1.msra.mxu0 0.0
  %1906 = vmatprep.subr.mxu0 0.0
  %1907 = vmatpush1.msra.mxu0 0.0
  %1908 = vmatprep.subr.mxu0 0.0
  %1909 = vmatpush1.msra.mxu0 0.0
  %1910 = vmatprep.subr.mxu0 0.0
  %1911 = vmatpush1.msra.mxu0 0.0
  %1912 = vmatprep.subr.mxu0 0.0
  %1913 = vmatpush1.msra.mxu0 0.0
  %1914 = vmatprep.subr.mxu0 0.0
  %1915 = vmatpush1.msra.mxu0 0.0
  %1916 = vmatprep.subr.mxu0 0.0
  %1917 = vmatpush1.msra.mxu0 0.0
  %1918 = vmatprep.subr.mxu0 0.0
  %1919 = vmatpush1.msra.mxu0 0.0
  %1920 = vmatprep.subr.mxu0 0.0
  %1921 = vmatpush1.msra.mxu0 0.0
  %1922 = vmatprep.subr.mxu0 0.0
  %1923 = vmatpush1.msra.mxu0 0.0
  %1924 = vmatprep.subr.mxu0 0.0
  %1925 = vmatpush1.msra.mxu0 0.0
  %1926 = vmatprep.subr.mxu0 0.0
  %1927 = vmatpush1.msra.mxu0 0.0
  %1928 = vmatprep.subr.mxu0 0.0
  %1929 = vmatpush1.msra.mxu0 0.0
  %1930 = vmatprep.subr.mxu0 0.0
  %1931 = vmatpush1.msra.mxu0 0.0
  %1932 = vmatprep.subr.mxu0 0.0
  %1933 = vmatpush1.msra.mxu0 0.0
  %1934 = vmatprep.subr.mxu0 0.0
  %1935 = vmatpush1.msra.mxu0 0.0
  %1936 = vmatprep.subr.mxu0 0.0
  %1937 = vmatpush1.msra.mxu0 0.0
  %1938 = vmatprep.subr.mxu0 0.0
  %1939 = vmatpush1.msra.mxu0 0.0
  %1940 = vmatprep.subr.mxu0 0.0
  %1941 = vmatpush1.msra.mxu0 0.0
  %1942 = vmatprep.subr.mxu0 0.0
  %1943 = vmatpush1.msra.mxu0 0.0
  %1944 = vmatprep.subr.mxu0 0.0
  %1945 = vmatpush1.msra.mxu0 0.0
  %1946 = vmatprep.mubr.f32.mxu0 0.0
  %1947 = vmatmul.mubr.f32.gmra.mrb[0].mxu0 %v1674
  %v1948 = vpop.f32.mrb[0].mxu0
  %v1949 = vadd.f32 %v1663, %v1948
  %v1950 = vpop.f32.mrb[0].mxu0
  %v1951 = vadd.f32 %v1667, %v1950
  %1952 = vmatprep.mubr.f32.mxu0 0.0
  %1953 = vmatmul.mubr.f32.gmra.mrb[0].mxu0 %v1677
  %v1954 = vpop.f32.mrb[0].mxu0
  %v1955 = vadd.f32 %v1663, %v1954
  %v1956 = vpop.f32.mrb[0].mxu0
  %v1957 = vadd.f32 %v1667, %v1956
  %1958 = vmatprep.mubr.f32.mxu0 0.0
  %1959 = vmatmul.mubr.f32.gmra.mrb[0].mxu0 %v1680
  %v1960 = vpop.f32.mrb[0].mxu0
  %v1961 = vadd.f32 %v1663, %v1960
  %v1962 = vpop.f32.mrb[0].mxu0
  %v1963 = vadd.f32 %v1667, %v1962
  %1964 = vmatprep.mubr.f32.mxu0 0.0
  %1965 = vmatmul.mubr.f32.gmra.mrb[0].mxu0 %v1683
  %v1966 = vpop.f32.mrb[0].mxu0
  %v1967 = vadd.f32 %v1663, %v1966
  %v1968 = vpop.f32.mrb[0].mxu0
  %v1969 = vadd.f32 %v1667, %v1968
  %1970 = vmatprep.mubr.f32.mxu0 0.0
  %1971 = vmatmul.mubr.f32.gmra.mrb[0].mxu0 %v1686
  %v1972 = vpop.f32.mrb[0].mxu0
  %v1973 = vadd.f32 %v1663, %v1972
  %v1974 = vpop.f32.mrb[0].mxu0
  %v1975 = vadd.f32 %v1667, %v1974
  %1976 = vmatprep.mubr.f32.mxu0 0.0
  %1977 = vmatmul.mubr.f32.gmra.mrb[0].mxu0 %v1689
  %v1978 = vpop.f32.mrb[0].mxu0
  %v1979 = vadd.f32 %v1663, %v1978
  %v1980 = vpop.f32.mrb[0].mxu0
  %v1981 = vadd.f32 %v1667, %v1980
  %1982 = vmatprep.mubr.f32.mxu0 0.0
  %1983 = vmatmul.mubr.f32.gmra.mrb[0].mxu0 %v1692
  %v1984 = vpop.f32.mrb[0].mxu0
  %v1985 = vadd.f32 %v1663, %v1984
  %v1986 = vpop.f32.mrb[0].mxu0
  %v1987 = vadd.f32 %v1667, %v1986
  %1988 = vmatprep.mubr.f32.mxu0 0.0
  %1989 = vmatmul.mubr.f32.gmra.mrb[0].mxu0 %v1695
  %v1990 = vpop.f32.mrb[0].mxu0
  %v1991 = vadd.f32 %v1663, %v1990
  %v1992 = vpop.f32.mrb[0].mxu0
  %v1993 = vadd.f32 %v1667, %v1992
  %1994 = vmatprep.mubr.f32.mxu0 0.0
  %1995 = vmatmul.mubr.f32.gmra.mrb[0].mxu0 %v1698
  %v1996 = vpop.f32.mrb[0].mxu0
  %v1997 = vadd.f32 %v1663, %v1996
  %v1998 = vpop.f32.mrb[0].mxu0
  %v1999 = vadd.f32 %v1667, %v1998
  %2000 = vmatprep.mubr.f32.mxu0 0.0
  %2001 = vmatmul.mubr.f32.gmra.mrb[0].mxu0 %v1701
  %v2002 = vpop.f32.mrb[0].mxu0
  %v2003 = vadd.f32 %v1663, %v2002
  %v2004 = vpop.f32.mrb[0].mxu0
  %v2005 = vadd.f32 %v1667, %v2004
  %2006 = vmatprep.mubr.f32.mxu0 0.0
  %2007 = vmatmul.mubr.f32.gmra.mrb[0].mxu0 %v1704
  %v2008 = vpop.f32.mrb[0].mxu0
  %v2009 = vadd.f32 %v1663, %v2008
  %v2010 = vpop.f32.mrb[0].mxu0
  %v2011 = vadd.f32 %v1667, %v2010
  %2012 = vmatprep.mubr.f32.mxu0 0.0
  %2013 = vmatmul.mubr.f32.gmra.mrb[0].mxu0 %v1707
  %v2014 = vpop.f32.mrb[0].mxu0
  %v2015 = vadd.f32 %v1663, %v2014
  %v2016 = vpop.f32.mrb[0].mxu0
  %v2017 = vadd.f32 %v1667, %v2016
  %2018 = vmatprep.mubr.f32.mxu0 0.0
  %2019 = vmatmul.mubr.f32.gmra.mrb[0].mxu0 %v1710
  %v2020 = vpop.f32.mrb[0].mxu0
  %v2021 = vadd.f32 %v1663, %v2020
  %v2022 = vpop.f32.mrb[0].mxu0
  %v2023 = vadd.f32 %v1667, %v2022
  %2024 = vmatprep.mubr.f32.mxu0 0.0
  %2025 = vmatmul.mubr.f32.gmra.mrb[0].mxu0 %v1713
  %v2026 = vpop.f32.mrb[0].mxu0
  %v2027 = vadd.f32 %v1663, %v2026
  %v2028 = vpop.f32.mrb[0].mxu0
  %v2029 = vadd.f32 %v1667, %v2028
  %2030 = vmatprep.mubr.f32.mxu0 0.0
  %2031 = vmatmul.mubr.f32.gmra.mrb[0].mxu0 %v1716
  %v2032 = vpop.f32.mrb[0].mxu0
  %v2033 = vadd.f32 %v1663, %v2032
  %v2034 = vpop.f32.mrb[0].mxu0
  %v2035 = vadd.f32 %v1667, %v2034
  %2036 = vmatprep.mubr.f32.mxu0 0.0
  %2037 = vmatmul.mubr.f32.gmra.mrb[0].mxu0 %v1719
  %v2038 = vpop.f32.mrb[0].mxu0
  %v2039 = vadd.f32 %v1663, %v2038
  %v2040 = vpop.f32.mrb[0].mxu0
  %v2041 = vadd.f32 %v1667, %v2040
  %2042 = vdwg.mxu0
  %2043 = vst [vmem:[#allocation2] sm:$0xff] %v1788
  %2044 = vst [vmem:[#allocation2 + $0x8] sm:$0xff] %v1790
  %2045 = vst [vmem:[#allocation2 + $0x10] sm:$0xff] %v1949
  %2046 = vst [vmem:[#allocation2 + $0x18] sm:$0xff] %v1951
  %2047 = vst [vmem:[#allocation2 + $0x20] sm:$0xff] %v1794
  %2048 = vst [vmem:[#allocation2 + $0x28] sm:$0xff] %v1796
  %2049 = vst [vmem:[#allocation2 + $0x30] sm:$0xff] %v1955
  %2050 = vst [vmem:[#allocation2 + $0x38] sm:$0xff] %v1957
  %2051 = vst [vmem:[#allocation2 + $0x40] sm:$0xff] %v1800
  %2052 = vst [vmem:[#allocation2 + $0x48] sm:$0xff] %v1802
  %2053 = vst [vmem:[#allocation2 + $0x50] sm:$0xff] %v1961
  %2054 = vst [vmem:[#allocation2 + $0x58] sm:$0xff] %v1963
  %2055 = vst [vmem:[#allocation2 + $0x60] sm:$0xff] %v1806
  %2056 = vst [vmem:[#allocation2 + $0x68] sm:$0xff] %v1808
  %2057 = vst [vmem:[#allocation2 + $0x70] sm:$0xff] %v1967
  %2058 = vst [vmem:[#allocation2 + $0x78] sm:$0xff] %v1969
  %2059 = vst [vmem:[#allocation2 + $0x80] sm:$0xff] %v1812
  %2060 = vst [vmem:[#allocation2 + $0x88] sm:$0xff] %v1814
  %2061 = vst [vmem:[#allocation2 + $0x90] sm:$0xff] %v1973
  %2062 = vst [vmem:[#allocation2 + $0x98] sm:$0xff] %v1975
  %2063 = vst [vmem:[#allocation2 + $0xa0] sm:$0xff] %v1818
  %2064 = vst [vmem:[#allocation2 + $0xa8] sm:$0xff] %v1820
  %2065 = vst [vmem:[#allocation2 + $0xb0] sm:$0xff] %v1979
  %2066 = vst [vmem:[#allocation2 + $0xb8] sm:$0xff] %v1981
  %2067 = vst [vmem:[#allocation2 + $0xc0] sm:$0xff] %v1824
  %2068 = vst [vmem:[#allocation2 + $0xc8] sm:$0xff] %v1826
  %2069 = vst [vmem:[#allocation2 + $0xd0] sm:$0xff] %v1985
  %2070 = vst [vmem:[#allocation2 + $0xd8] sm:$0xff] %v1987
  %2071 = vst [vmem:[#allocation2 + $0xe0] sm:$0xff] %v1830
  %2072 = vst [vmem:[#allocation2 + $0xe8] sm:$0xff] %v1832
  %2073 = vst [vmem:[#allocation2 + $0xf0] sm:$0xff] %v1991
  %2074 = vst [vmem:[#allocation2 + $0xf8] sm:$0xff] %v1993
  %2075 = vst [vmem:[#allocation2 + $0x100] sm:$0xff] %v1836
  %2076 = vst [vmem:[#allocation2 + $0x108] sm:$0xff] %v1838
  %2077 = vst [vmem:[#allocation2 + $0x110] sm:$0xff] %v1997
  %2078 = vst [vmem:[#allocation2 + $0x118] sm:$0xff] %v1999
  %2079 = vst [vmem:[#allocation2 + $0x120] sm:$0xff] %v1842
  %2080 = vst [vmem:[#allocation2 + $0x128] sm:$0xff] %v1844
  %2081 = vst [vmem:[#allocation2 + $0x130] sm:$0xff] %v2003
  %2082 = vst [vmem:[#allocation2 + $0x138] sm:$0xff] %v2005
  %2083 = vst [vmem:[#allocation2 + $0x140] sm:$0xff] %v1848
  %2084 = vst [vmem:[#allocation2 + $0x148] sm:$0xff] %v1850
  %2085 = vst [vmem:[#allocation2 + $0x150] sm:$0xff] %v2009
  %2086 = vst [vmem:[#allocation2 + $0x158] sm:$0xff] %v2011
  %2087 = vst [vmem:[#allocation2 + $0x160] sm:$0xff] %v1854
  %2088 = vst [vmem:[#allocation2 + $0x168] sm:$0xff] %v1856
  %2089 = vst [vmem:[#allocation2 + $0x170] sm:$0xff] %v2015
  %2090 = vst [vmem:[#allocation2 + $0x178] sm:$0xff] %v2017
  %2091 = vst [vmem:[#allocation2 + $0x180] sm:$0xff] %v1860
  %2092 = vst [vmem:[#allocation2 + $0x188] sm:$0xff] %v1862
  %2093 = vst [vmem:[#allocation2 + $0x190] sm:$0xff] %v2021
  %2094 = vst [vmem:[#allocation2 + $0x198] sm:$0xff] %v2023
  %2095 = vst [vmem:[#allocation2 + $0x1a0] sm:$0xff] %v1866
  %2096 = vst [vmem:[#allocation2 + $0x1a8] sm:$0xff] %v1868
  %2097 = vst [vmem:[#allocation2 + $0x1b0] sm:$0xff] %v2027
  %2098 = vst [vmem:[#allocation2 + $0x1b8] sm:$0xff] %v2029
  %2099 = vst [vmem:[#allocation2 + $0x1c0] sm:$0xff] %v1872
  %2100 = vst [vmem:[#allocation2 + $0x1c8] sm:$0xff] %v1874
  %2101 = vst [vmem:[#allocation2 + $0x1d0] sm:$0xff] %v2033
  %2102 = vst [vmem:[#allocation2 + $0x1d8] sm:$0xff] %v2035
  %2103 = vst [vmem:[#allocation2 + $0x1e0] sm:$0xff] %v1878
  %2104 = vst [vmem:[#allocation2 + $0x1e8] sm:$0xff] %v1880
  %2105 = vst [vmem:[#allocation2 + $0x1f0] sm:$0xff] %v2039
  %2106 = vst [vmem:[#allocation2 + $0x1f8] sm:$0xff] %v2041
  %v2107 = vlaneseq
  %v2108 = vand.u32 %v2107, 127
  %v2109 = vadd.s32 %v2108, 128
  %v2110 = vadd.s32 %v2108, 256
  %v2111 = vadd.s32 %v2108, 384
  %v2112 = vand.u32 %v2108, 64
  %v2113 = vand.u32 %v2109, 64
  %v2114 = vand.u32 %v2110, 64
  %v2115 = vand.u32 %v2111, 64
  %vm2116 = vcmp.eq.s32.totalorder %v2112, 0
  %vm2117 = vcmp.eq.s32.totalorder %v2113, 0
  %vm2118 = vcmp.eq.s32.totalorder %v2114, 0
  %vm2119 = vcmp.eq.s32.totalorder %v2115, 0
  %v2120 = vld [vmem:[#allocation2] sm:$0xff]
  %v2121 = vld [vmem:[#allocation2 + $0x8] sm:$0xff]
  %v2122 = vld [vmem:[#allocation2 + $0x10] sm:$0xff]
  %v2123 = vld [vmem:[#allocation2 + $0x18] sm:$0xff]
  %v2124 = vld [vmem:[#allocation2 + $0x1e0] sm:$0xff]
  %v2125 = vld [vmem:[#allocation2 + $0x1e8] sm:$0xff]
  %v2126 = vld [vmem:[#allocation2 + $0x1f0] sm:$0xff]
  %v2127 = vld [vmem:[#allocation2 + $0x1f8] sm:$0xff]
  %v2128 = vsel %vm2116, %v2120, %v2124
  %v2129 = vsel %vm2117, %v2121, %v2125
  %v2130 = vsel %vm2118, %v2122, %v2126
  %v2131 = vsel %vm2119, %v2123, %v2127
  %2132 = vst [vmem:[#allocation3] sm:$0xff] %v2128
  %2133 = vst [vmem:[#allocation3 + $0x8] sm:$0xff] %v2129
  %2134 = vst [vmem:[#allocation3 + $0x10] sm:$0xff] %v2130
  %2135 = vst [vmem:[#allocation3 + $0x18] sm:$0xff] %v2131
  %v2136 = vld [vmem:[#allocation2 + $0x20] sm:$0xff]
  %v2137 = vld [vmem:[#allocation2 + $0x28] sm:$0xff]
  %v2138 = vld [vmem:[#allocation2 + $0x30] sm:$0xff]
  %v2139 = vld [vmem:[#allocation2 + $0x38] sm:$0xff]
  %v2140 = vld [vmem:[#allocation2 + $0x1c0] sm:$0xff]
  %v2141 = vld [vmem:[#allocation2 + $0x1c8] sm:$0xff]
  %v2142 = vld [vmem:[#allocation2 + $0x1d0] sm:$0xff]
  %v2143 = vld [vmem:[#allocation2 + $0x1d8] sm:$0xff]
  %v2144 = vsel %vm2116, %v2136, %v2140
  %v2145 = vsel %vm2117, %v2137, %v2141
  %v2146 = vsel %vm2118, %v2138, %v2142
  %v2147 = vsel %vm2119, %v2139, %v2143
  %2148 = vst [vmem:[#allocation3 + $0x20] sm:$0xff] %v2144
  %2149 = vst [vmem:[#allocation3 + $0x28] sm:$0xff] %v2145
  %2150 = vst [vmem:[#allocation3 + $0x30] sm:$0xff] %v2146
  %2151 = vst [vmem:[#allocation3 + $0x38] sm:$0xff] %v2147
  %v2152 = vld [vmem:[#allocation2 + $0x40] sm:$0xff]
  %v2153 = vld [vmem:[#allocation2 + $0x48] sm:$0xff]
  %v2154 = vld [vmem:[#allocation2 + $0x50] sm:$0xff]
  %v2155 = vld [vmem:[#allocation2 + $0x58] sm:$0xff]
  %v2156 = vld [vmem:[#allocation2 + $0x1a0] sm:$0xff]
  %v2157 = vld [vmem:[#allocation2 + $0x1a8] sm:$0xff]
  %v2158 = vld [vmem:[#allocation2 + $0x1b0] sm:$0xff]
  %v2159 = vld [vmem:[#allocation2 + $0x1b8] sm:$0xff]
  %v2160 = vsel %vm2116, %v2152, %v2156
  %v2161 = vsel %vm2117, %v2153, %v2157
  %v2162 = vsel %vm2118, %v2154, %v2158
  %v2163 = vsel %vm2119, %v2155, %v2159
  %2164 = vst [vmem:[#allocation3 + $0x40] sm:$0xff] %v2160
  %2165 = vst [vmem:[#allocation3 + $0x48] sm:$0xff] %v2161
  %2166 = vst [vmem:[#allocation3 + $0x50] sm:$0xff] %v2162
  %2167 = vst [vmem:[#allocation3 + $0x58] sm:$0xff] %v2163
  %v2168 = vld [vmem:[#allocation2 + $0x60] sm:$0xff]
  %v2169 = vld [vmem:[#allocation2 + $0x68] sm:$0xff]
  %v2170 = vld [vmem:[#allocation2 + $0x70] sm:$0xff]
  %v2171 = vld [vmem:[#allocation2 + $0x78] sm:$0xff]
  %v2172 = vld [vmem:[#allocation2 + $0x180] sm:$0xff]
  %v2173 = vld [vmem:[#allocation2 + $0x188] sm:$0xff]
  %v2174 = vld [vmem:[#allocation2 + $0x190] sm:$0xff]
  %v2175 = vld [vmem:[#allocation2 + $0x198] sm:$0xff]
  %v2176 = vsel %vm2116, %v2168, %v2172
  %v2177 = vsel %vm2117, %v2169, %v2173
  %v2178 = vsel %vm2118, %v2170, %v2174
  %v2179 = vsel %vm2119, %v2171, %v2175
  %2180 = vst [vmem:[#allocation3 + $0x60] sm:$0xff] %v2176
  %2181 = vst [vmem:[#allocation3 + $0x68] sm:$0xff] %v2177
  %2182 = vst [vmem:[#allocation3 + $0x70] sm:$0xff] %v2178
  %2183 = vst [vmem:[#allocation3 + $0x78] sm:$0xff] %v2179
  %v2184 = vld [vmem:[#allocation2 + $0x80] sm:$0xff]
  %v2185 = vld [vmem:[#allocation2 + $0x88] sm:$0xff]
  %v2186 = vld [vmem:[#allocation2 + $0x90] sm:$0xff]
  %v2187 = vld [vmem:[#allocation2 + $0x98] sm:$0xff]
  %v2188 = vld [vmem:[#allocation2 + $0x160] sm:$0xff]
  %v2189 = vld [vmem:[#allocation2 + $0x168] sm:$0xff]
  %v2190 = vld [vmem:[#allocation2 + $0x170] sm:$0xff]
  %v2191 = vld [vmem:[#allocation2 + $0x178] sm:$0xff]
  %v2192 = vsel %vm2116, %v2184, %v2188
  %v2193 = vsel %vm2117, %v2185, %v2189
  %v2194 = vsel %vm2118, %v2186, %v2190
  %v2195 = vsel %vm2119, %v2187, %v2191
  %2196 = vst [vmem:[#allocation3 + $0x80] sm:$0xff] %v2192
  %2197 = vst [vmem:[#allocation3 + $0x88] sm:$0xff] %v2193
  %2198 = vst [vmem:[#allocation3 + $0x90] sm:$0xff] %v2194
  %2199 = vst [vmem:[#allocation3 + $0x98] sm:$0xff] %v2195
  %v2200 = vld [vmem:[#allocation2 + $0xa0] sm:$0xff]
  %v2201 = vld [vmem:[#allocation2 + $0xa8] sm:$0xff]
  %v2202 = vld [vmem:[#allocation2 + $0xb0] sm:$0xff]
  %v2203 = vld [vmem:[#allocation2 + $0xb8] sm:$0xff]
  %v2204 = vld [vmem:[#allocation2 + $0x140] sm:$0xff]
  %v2205 = vld [vmem:[#allocation2 + $0x148] sm:$0xff]
  %v2206 = vld [vmem:[#allocation2 + $0x150] sm:$0xff]
  %v2207 = vld [vmem:[#allocation2 + $0x158] sm:$0xff]
  %v2208 = vsel %vm2116, %v2200, %v2204
  %v2209 = vsel %vm2117, %v2201, %v2205
  %v2210 = vsel %vm2118, %v2202, %v2206
  %v2211 = vsel %vm2119, %v2203, %v2207
  %2212 = vst [vmem:[#allocation3 + $0xa0] sm:$0xff] %v2208
  %2213 = vst [vmem:[#allocation3 + $0xa8] sm:$0xff] %v2209
  %2214 = vst [vmem:[#allocation3 + $0xb0] sm:$0xff] %v2210
  %2215 = vst [vmem:[#allocation3 + $0xb8] sm:$0xff] %v2211
  %v2216 = vld [vmem:[#allocation2 + $0xc0] sm:$0xff]
  %v2217 = vld [vmem:[#allocation2 + $0xc8] sm:$0xff]
  %v2218 = vld [vmem:[#allocation2 + $0xd0] sm:$0xff]
  %v2219 = vld [vmem:[#allocation2 + $0xd8] sm:$0xff]
  %v2220 = vld [vmem:[#allocation2 + $0x120] sm:$0xff]
  %v2221 = vld [vmem:[#allocation2 + $0x128] sm:$0xff]
  %v2222 = vld [vmem:[#allocation2 + $0x130] sm:$0xff]
  %v2223 = vld [vmem:[#allocation2 + $0x138] sm:$0xff]
  %v2224 = vsel %vm2116, %v2216, %v2220
  %v2225 = vsel %vm2117, %v2217, %v2221
  %v2226 = vsel %vm2118, %v2218, %v2222
  %v2227 = vsel %vm2119, %v2219, %v2223
  %2228 = vst [vmem:[#allocation3 + $0xc0] sm:$0xff] %v2224
  %2229 = vst [vmem:[#allocation3 + $0xc8] sm:$0xff] %v2225
  %2230 = vst [vmem:[#allocation3 + $0xd0] sm:$0xff] %v2226
  %2231 = vst [vmem:[#allocation3 + $0xd8] sm:$0xff] %v2227
  %v2232 = vld [vmem:[#allocation2 + $0xe0] sm:$0xff]
  %v2233 = vld [vmem:[#allocation2 + $0xe8] sm:$0xff]
  %v2234 = vld [vmem:[#allocation2 + $0xf0] sm:$0xff]
  %v2235 = vld [vmem:[#allocation2 + $0xf8] sm:$0xff]
  %v2236 = vld [vmem:[#allocation2 + $0x100] sm:$0xff]
  %v2237 = vld [vmem:[#allocation2 + $0x108] sm:$0xff]
  %v2238 = vld [vmem:[#allocation2 + $0x110] sm:$0xff]
  %v2239 = vld [vmem:[#allocation2 + $0x118] sm:$0xff]
  %v2240 = vsel %vm2116, %v2232, %v2236
  %v2241 = vsel %vm2117, %v2233, %v2237
  %v2242 = vsel %vm2118, %v2234, %v2238
  %v2243 = vsel %vm2119, %v2235, %v2239
  %2244 = vst [vmem:[#allocation3 + $0xe0] sm:$0xff] %v2240
  %2245 = vst [vmem:[#allocation3 + $0xe8] sm:$0xff] %v2241
  %2246 = vst [vmem:[#allocation3 + $0xf0] sm:$0xff] %v2242
  %2247 = vst [vmem:[#allocation3 + $0xf8] sm:$0xff] %v2243
  %v2248 = vld [vmem:[#allocation2 + $0x100] sm:$0xff]
  %v2249 = vld [vmem:[#allocation2 + $0x108] sm:$0xff]
  %v2250 = vld [vmem:[#allocation2 + $0x110] sm:$0xff]
  %v2251 = vld [vmem:[#allocation2 + $0x118] sm:$0xff]
  %v2252 = vld [vmem:[#allocation2 + $0xe0] sm:$0xff]
  %v2253 = vld [vmem:[#allocation2 + $0xe8] sm:$0xff]
  %v2254 = vld [vmem:[#allocation2 + $0xf0] sm:$0xff]
  %v2255 = vld [vmem:[#allocation2 + $0xf8] sm:$0xff]
  %v2256 = vsel %vm2116, %v2248, %v2252
  %v2257 = vsel %vm2117, %v2249, %v2253
  %v2258 = vsel %vm2118, %v2250, %v2254
  %v2259 = vsel %vm2119, %v2251, %v2255
  %2260 = vst [vmem:[#allocation3 + $0x100] sm:$0xff] %v2256
  %2261 = vst [vmem:[#allocation3 + $0x108] sm:$0xff] %v2257
  %2262 = vst [vmem:[#allocation3 + $0x110] sm:$0xff] %v2258
  %2263 = vst [vmem:[#allocation3 + $0x118] sm:$0xff] %v2259
  %v2264 = vld [vmem:[#allocation2 + $0x120] sm:$0xff]
  %v2265 = vld [vmem:[#allocation2 + $0x128] sm:$0xff]
  %v2266 = vld [vmem:[#allocation2 + $0x130] sm:$0xff]
  %v2267 = vld [vmem:[#allocation2 + $0x138] sm:$0xff]
  %v2268 = vld [vmem:[#allocation2 + $0xc0] sm:$0xff]
  %v2269 = vld [vmem:[#allocation2 + $0xc8] sm:$0xff]
  %v2270 = vld [vmem:[#allocation2 + $0xd0] sm:$0xff]
  %v2271 = vld [vmem:[#allocation2 + $0xd8] sm:$0xff]
  %v2272 = vsel %vm2116, %v2264, %v2268
  %v2273 = vsel %vm2117, %v2265, %v2269
  %v2274 = vsel %vm2118, %v2266, %v2270
  %v2275 = vsel %vm2119, %v2267, %v2271
  %2276 = vst [vmem:[#allocation3 + $0x120] sm:$0xff] %v2272
  %2277 = vst [vmem:[#allocation3 + $0x128] sm:$0xff] %v2273
  %2278 = vst [vmem:[#allocation3 + $0x130] sm:$0xff] %v2274
  %2279 = vst [vmem:[#allocation3 + $0x138] sm:$0xff] %v2275
  %v2280 = vld [vmem:[#allocation2 + $0x140] sm:$0xff]
  %v2281 = vld [vmem:[#allocation2 + $0x148] sm:$0xff]
  %v2282 = vld [vmem:[#allocation2 + $0x150] sm:$0xff]
  %v2283 = vld [vmem:[#allocation2 + $0x158] sm:$0xff]
  %v2284 = vld [vmem:[#allocation2 + $0xa0] sm:$0xff]
  %v2285 = vld [vmem:[#allocation2 + $0xa8] sm:$0xff]
  %v2286 = vld [vmem:[#allocation2 + $0xb0] sm:$0xff]
  %v2287 = vld [vmem:[#allocation2 + $0xb8] sm:$0xff]
  %v2288 = vsel %vm2116, %v2280, %v2284
  %v2289 = vsel %vm2117, %v2281, %v2285
  %v2290 = vsel %vm2118, %v2282, %v2286
  %v2291 = vsel %vm2119, %v2283, %v2287
  %2292 = vst [vmem:[#allocation3 + $0x140] sm:$0xff] %v2288
  %2293 = vst [vmem:[#allocation3 + $0x148] sm:$0xff] %v2289
  %2294 = vst [vmem:[#allocation3 + $0x150] sm:$0xff] %v2290
  %2295 = vst [vmem:[#allocation3 + $0x158] sm:$0xff] %v2291
  %v2296 = vld [vmem:[#allocation2 + $0x160] sm:$0xff]
  %v2297 = vld [vmem:[#allocation2 + $0x168] sm:$0xff]
  %v2298 = vld [vmem:[#allocation2 + $0x170] sm:$0xff]
  %v2299 = vld [vmem:[#allocation2 + $0x178] sm:$0xff]
  %v2300 = vld [vmem:[#allocation2 + $0x80] sm:$0xff]
  %v2301 = vld [vmem:[#allocation2 + $0x88] sm:$0xff]
  %v2302 = vld [vmem:[#allocation2 + $0x90] sm:$0xff]
  %v2303 = vld [vmem:[#allocation2 + $0x98] sm:$0xff]
  %v2304 = vsel %vm2116, %v2296, %v2300
  %v2305 = vsel %vm2117, %v2297, %v2301
  %v2306 = vsel %vm2118, %v2298, %v2302
  %v2307 = vsel %vm2119, %v2299, %v2303
  %2308 = vst [vmem:[#allocation3 + $0x160] sm:$0xff] %v2304
  %2309 = vst [vmem:[#allocation3 + $0x168] sm:$0xff] %v2305
  %2310 = vst [vmem:[#allocation3 + $0x170] sm:$0xff] %v2306
  %2311 = vst [vmem:[#allocation3 + $0x178] sm:$0xff] %v2307
  %v2312 = vld [vmem:[#allocation2 + $0x180] sm:$0xff]
  %v2313 = vld [vmem:[#allocation2 + $0x188] sm:$0xff]
  %v2314 = vld [vmem:[#allocation2 + $0x190] sm:$0xff]
  %v2315 = vld [vmem:[#allocation2 + $0x198] sm:$0xff]
  %v2316 = vld [vmem:[#allocation2 + $0x60] sm:$0xff]
  %v2317 = vld [vmem:[#allocation2 + $0x68] sm:$0xff]
  %v2318 = vld [vmem:[#allocation2 + $0x70] sm:$0xff]
  %v2319 = vld [vmem:[#allocation2 + $0x78] sm:$0xff]
  %v2320 = vsel %vm2116, %v2312, %v2316
  %v2321 = vsel %vm2117, %v2313, %v2317
  %v2322 = vsel %vm2118, %v2314, %v2318
  %v2323 = vsel %vm2119, %v2315, %v2319
  %2324 = vst [vmem:[#allocation3 + $0x180] sm:$0xff] %v2320
  %2325 = vst [vmem:[#allocation3 + $0x188] sm:$0xff] %v2321
  %2326 = vst [vmem:[#allocation3 + $0x190] sm:$0xff] %v2322
  %2327 = vst [vmem:[#allocation3 + $0x198] sm:$0xff] %v2323
  %v2328 = vld [vmem:[#allocation2 + $0x1a0] sm:$0xff]
  %v2329 = vld [vmem:[#allocation2 + $0x1a8] sm:$0xff]
  %v2330 = vld [vmem:[#allocation2 + $0x1b0] sm:$0xff]
  %v2331 = vld [vmem:[#allocation2 + $0x1b8] sm:$0xff]
  %v2332 = vld [vmem:[#allocation2 + $0x40] sm:$0xff]
  %v2333 = vld [vmem:[#allocation2 + $0x48] sm:$0xff]
  %v2334 = vld [vmem:[#allocation2 + $0x50] sm:$0xff]
  %v2335 = vld [vmem:[#allocation2 + $0x58] sm:$0xff]
  %v2336 = vsel %vm2116, %v2328, %v2332
  %v2337 = vsel %vm2117, %v2329, %v2333
  %v2338 = vsel %vm2118, %v2330, %v2334
  %v2339 = vsel %vm2119, %v2331, %v2335
  %2340 = vst [vmem:[#allocation3 + $0x1a0] sm:$0xff] %v2336
  %2341 = vst [vmem:[#allocation3 + $0x1a8] sm:$0xff] %v2337
  %2342 = vst [vmem:[#allocation3 + $0x1b0] sm:$0xff] %v2338
  %2343 = vst [vmem:[#allocation3 + $0x1b8] sm:$0xff] %v2339
  %v2344 = vld [vmem:[#allocation2 + $0x1c0] sm:$0xff]
  %v2345 = vld [vmem:[#allocation2 + $0x1c8] sm:$0xff]
  %v2346 = vld [vmem:[#allocation2 + $0x1d0] sm:$0xff]
  %v2347 = vld [vmem:[#allocation2 + $0x1d8] sm:$0xff]
  %v2348 = vld [vmem:[#allocation2 + $0x20] sm:$0xff]
  %v2349 = vld [vmem:[#allocation2 + $0x28] sm:$0xff]
  %v2350 = vld [vmem:[#allocation2 + $0x30] sm:$0xff]
  %v2351 = vld [vmem:[#allocation2 + $0x38] sm:$0xff]
  %v2352 = vsel %vm2116, %v2344, %v2348
  %v2353 = vsel %vm2117, %v2345, %v2349
  %v2354 = vsel %vm2118, %v2346, %v2350
  %v2355 = vsel %vm2119, %v2347, %v2351
  %2356 = vst [vmem:[#allocation3 + $0x1c0] sm:$0xff] %v2352
  %2357 = vst [vmem:[#allocation3 + $0x1c8] sm:$0xff] %v2353
  %2358 = vst [vmem:[#allocation3 + $0x1d0] sm:$0xff] %v2354
  %2359 = vst [vmem:[#allocation3 + $0x1d8] sm:$0xff] %v2355
  %v2360 = vld [vmem:[#allocation2 + $0x1e0] sm:$0xff]
  %v2361 = vld [vmem:[#allocation2 + $0x1e8] sm:$0xff]
  %v2362 = vld [vmem:[#allocation2 + $0x1f0] sm:$0xff]
  %v2363 = vld [vmem:[#allocation2 + $0x1f8] sm:$0xff]
  %v2364 = vld [vmem:[#allocation2] sm:$0xff]
  %v2365 = vld [vmem:[#allocation2 + $0x8] sm:$0xff]
  %v2366 = vld [vmem:[#allocation2 + $0x10] sm:$0xff]
  %v2367 = vld [vmem:[#allocation2 + $0x18] sm:$0xff]
  %v2368 = vsel %vm2116, %v2360, %v2364
  %v2369 = vsel %vm2117, %v2361, %v2365
  %v2370 = vsel %vm2118, %v2362, %v2366
  %v2371 = vsel %vm2119, %v2363, %v2367
  %2372 = vst [vmem:[#allocation3 + $0x1e0] sm:$0xff] %v2368
  %2373 = vst [vmem:[#allocation3 + $0x1e8] sm:$0xff] %v2369
  %2374 = vst [vmem:[#allocation3 + $0x1f0] sm:$0xff] %v2370
  %2375 = vst [vmem:[#allocation3 + $0x1f8] sm:$0xff] %v2371
  %v2376 = vld [vmem:[%s3] sm:$0xff]
  %v2377 = vld [vmem:[%s3 + $0x8] sm:$0xff]
  %v2378 = vld [vmem:[%s3 + $0x10] sm:$0xff]
  %v2379 = vld [vmem:[%s3 + $0x18] sm:$0xff]
  %v2380 = vld [vmem:[%s3 + $0x20] sm:$0xff]
  %v2381 = vld [vmem:[%s3 + $0x28] sm:$0xff]
  %v2382 = vld [vmem:[%s3 + $0x30] sm:$0xff]
  %v2383 = vld [vmem:[%s3 + $0x38] sm:$0xff]
  %v2384 = vld [vmem:[%s3 + $0x40] sm:$0xff]
  %v2385 = vld [vmem:[%s3 + $0x48] sm:$0xff]
  %v2386 = vld [vmem:[%s3 + $0x50] sm:$0xff]
  %v2387 = vld [vmem:[%s3 + $0x58] sm:$0xff]
  %v2388 = vld [vmem:[%s3 + $0x60] sm:$0xff]
  %v2389 = vld [vmem:[%s3 + $0x68] sm:$0xff]
  %v2390 = vld [vmem:[%s3 + $0x70] sm:$0xff]
  %v2391 = vld [vmem:[%s3 + $0x78] sm:$0xff]
  %v2392 = vld [vmem:[%s3 + $0x80] sm:$0xff]
  %v2393 = vld [vmem:[%s3 + $0x88] sm:$0xff]
  %v2394 = vld [vmem:[%s3 + $0x90] sm:$0xff]
  %v2395 = vld [vmem:[%s3 + $0x98] sm:$0xff]
  %v2396 = vld [vmem:[%s3 + $0xa0] sm:$0xff]
  %v2397 = vld [vmem:[%s3 + $0xa8] sm:$0xff]
  %v2398 = vld [vmem:[%s3 + $0xb0] sm:$0xff]
  %v2399 = vld [vmem:[%s3 + $0xb8] sm:$0xff]
  %v2400 = vld [vmem:[%s3 + $0xc0] sm:$0xff]
  %v2401 = vld [vmem:[%s3 + $0xc8] sm:$0xff]
  %v2402 = vld [vmem:[%s3 + $0xd0] sm:$0xff]
  %v2403 = vld [vmem:[%s3 + $0xd8] sm:$0xff]
  %v2404 = vld [vmem:[%s3 + $0xe0] sm:$0xff]
  %v2405 = vld [vmem:[%s3 + $0xe8] sm:$0xff]
  %v2406 = vld [vmem:[%s3 + $0xf0] sm:$0xff]
  %v2407 = vld [vmem:[%s3 + $0xf8] sm:$0xff]
  %v2408 = vld [vmem:[%s3 + $0x100] sm:$0xff]
  %v2409 = vld [vmem:[%s3 + $0x108] sm:$0xff]
  %v2410 = vld [vmem:[%s3 + $0x110] sm:$0xff]
  %v2411 = vld [vmem:[%s3 + $0x118] sm:$0xff]
  %v2412 = vld [vmem:[%s3 + $0x120] sm:$0xff]
  %v2413 = vld [vmem:[%s3 + $0x128] sm:$0xff]
  %v2414 = vld [vmem:[%s3 + $0x130] sm:$0xff]
  %v2415 = vld [vmem:[%s3 + $0x138] sm:$0xff]
  %v2416 = vld [vmem:[%s3 + $0x140] sm:$0xff]
  %v2417 = vld [vmem:[%s3 + $0x148] sm:$0xff]
  %v2418 = vld [vmem:[%s3 + $0x150] sm:$0xff]
  %v2419 = vld [vmem:[%s3 + $0x158] sm:$0xff]
  %v2420 = vld [vmem:[%s3 + $0x160] sm:$0xff]
  %v2421 = vld [vmem:[%s3 + $0x168] sm:$0xff]
  %v2422 = vld [vmem:[%s3 + $0x170] sm:$0xff]
  %v2423 = vld [vmem:[%s3 + $0x178] sm:$0xff]
  %v2424 = vld [vmem:[%s3 + $0x180] sm:$0xff]
  %v2425 = vld [vmem:[%s3 + $0x188] sm:$0xff]
  %v2426 = vld [vmem:[%s3 + $0x190] sm:$0xff]
  %v2427 = vld [vmem:[%s3 + $0x198] sm:$0xff]
  %v2428 = vld [vmem:[%s3 + $0x1a0] sm:$0xff]
  %v2429 = vld [vmem:[%s3 + $0x1a8] sm:$0xff]
  %v2430 = vld [vmem:[%s3 + $0x1b0] sm:$0xff]
  %v2431 = vld [vmem:[%s3 + $0x1b8] sm:$0xff]
  %v2432 = vld [vmem:[%s3 + $0x1c0] sm:$0xff]
  %v2433 = vld [vmem:[%s3 + $0x1c8] sm:$0xff]
  %v2434 = vld [vmem:[%s3 + $0x1d0] sm:$0xff]
  %v2435 = vld [vmem:[%s3 + $0x1d8] sm:$0xff]
  %v2436 = vld [vmem:[%s3 + $0x1e0] sm:$0xff]
  %v2437 = vld [vmem:[%s3 + $0x1e8] sm:$0xff]
  %v2438 = vld [vmem:[%s3 + $0x1f0] sm:$0xff]
  %v2439 = vld [vmem:[%s3 + $0x1f8] sm:$0xff]
  %v2440 = vld [vmem:[#allocation3] sm:$0xff]
  %v2441 = vld [vmem:[#allocation3 + $0x8] sm:$0xff]
  %v2442 = vld [vmem:[#allocation3 + $0x10] sm:$0xff]
  %v2443 = vld [vmem:[#allocation3 + $0x18] sm:$0xff]
  %2444 = vmatprep.subr.mxu0 %v2377
  %2445 = vmatpush1.msra.mxu0 %v2376
  %2446 = vmatprep.subr.mxu0 %v2381
  %2447 = vmatpush1.msra.mxu0 %v2380
  %2448 = vmatprep.subr.mxu0 %v2385
  %2449 = vmatpush1.msra.mxu0 %v2384
  %2450 = vmatprep.subr.mxu0 %v2389
  %2451 = vmatpush1.msra.mxu0 %v2388
  %2452 = vmatprep.subr.mxu0 %v2393
  %2453 = vmatpush1.msra.mxu0 %v2392
  %2454 = vmatprep.subr.mxu0 %v2397
  %2455 = vmatpush1.msra.mxu0 %v2396
  %2456 = vmatprep.subr.mxu0 %v2401
  %2457 = vmatpush1.msra.mxu0 %v2400
  %2458 = vmatprep.subr.mxu0 %v2405
  %2459 = vmatpush1.msra.mxu0 %v2404
  %2460 = vmatprep.subr.mxu0 %v2409
  %2461 = vmatpush1.msra.mxu0 %v2408
  %2462 = vmatprep.subr.mxu0 %v2413
  %2463 = vmatpush1.msra.mxu0 %v2412
  %2464 = vmatprep.subr.mxu0 %v2417
  %2465 = vmatpush1.msra.mxu0 %v2416
  %2466 = vmatprep.subr.mxu0 %v2421
  %2467 = vmatpush1.msra.mxu0 %v2420
  %2468 = vmatprep.subr.mxu0 %v2425
  %2469 = vmatpush1.msra.mxu0 %v2424
  %2470 = vmatprep.subr.mxu0 %v2429
  %2471 = vmatpush1.msra.mxu0 %v2428
  %2472 = vmatprep.subr.mxu0 %v2433
  %2473 = vmatpush1.msra.mxu0 %v2432
  %2474 = vmatprep.subr.mxu0 %v2437
  %2475 = vmatpush1.msra.mxu0 %v2436
  %2476 = vmatprep.subr.mxu0 0.0
  %2477 = vmatpush1.msra.mxu0 0.0
  %2478 = vmatprep.subr.mxu0 0.0
  %2479 = vmatpush1.msra.mxu0 0.0
  %2480 = vmatprep.subr.mxu0 0.0
  %2481 = vmatpush1.msra.mxu0 0.0
  %2482 = vmatprep.subr.mxu0 0.0
  %2483 = vmatpush1.msra.mxu0 0.0
  %2484 = vmatprep.subr.mxu0 0.0
  %2485 = vmatpush1.msra.mxu0 0.0
  %2486 = vmatprep.subr.mxu0 0.0
  %2487 = vmatpush1.msra.mxu0 0.0
  %2488 = vmatprep.subr.mxu0 0.0
  %2489 = vmatpush1.msra.mxu0 0.0
  %2490 = vmatprep.subr.mxu0 0.0
  %2491 = vmatpush1.msra.mxu0 0.0
  %2492 = vmatprep.subr.mxu0 0.0
  %2493 = vmatpush1.msra.mxu0 0.0
  %2494 = vmatprep.subr.mxu0 0.0
  %2495 = vmatpush1.msra.mxu0 0.0
  %2496 = vmatprep.subr.mxu0 0.0
  %2497 = vmatpush1.msra.mxu0 0.0
  %2498 = vmatprep.subr.mxu0 0.0
  %2499 = vmatpush1.msra.mxu0 0.0
  %2500 = vmatprep.subr.mxu0 0.0
  %2501 = vmatpush1.msra.mxu0 0.0
  %2502 = vmatprep.subr.mxu0 0.0
  %2503 = vmatpush1.msra.mxu0 0.0
  %2504 = vmatprep.subr.mxu0 0.0
  %2505 = vmatpush1.msra.mxu0 0.0
  %2506 = vmatprep.subr.mxu0 0.0
  %2507 = vmatpush1.msra.mxu0 0.0
  %2508 = vmatprep.mubr.f32.mxu0 0.0
  %2509 = vmatmul.mubr.f32.gmra.mrb[0].mxu0 0.0
  %v2510 = vpop.f32.mrb[0].mxu0
  %v2511 = vadd.f32 0.0, %v2510
  %v2512 = vpop.f32.mrb[0].mxu0
  %v2513 = vadd.f32 0.0, %v2512
  %2514 = vdwg.mxu0
  %2515 = vmatprep.subr.mxu0 %v2379
  %2516 = vmatpush1.msra.mxu0 %v2378
  %2517 = vmatprep.subr.mxu0 %v2383
  %2518 = vmatpush1.msra.mxu0 %v2382
  %2519 = vmatprep.subr.mxu0 %v2387
  %2520 = vmatpush1.msra.mxu0 %v2386
  %2521 = vmatprep.subr.mxu0 %v2391
  %2522 = vmatpush1.msra.mxu0 %v2390
  %2523 = vmatprep.subr.mxu0 %v2395
  %2524 = vmatpush1.msra.mxu0 %v2394
  %2525 = vmatprep.subr.mxu0 %v2399
  %2526 = vmatpush1.msra.mxu0 %v2398
  %2527 = vmatprep.subr.mxu0 %v2403
  %2528 = vmatpush1.msra.mxu0 %v2402
  %2529 = vmatprep.subr.mxu0 %v2407
  %2530 = vmatpush1.msra.mxu0 %v2406
  %2531 = vmatprep.subr.mxu0 %v2411
  %2532 = vmatpush1.msra.mxu0 %v2410
  %2533 = vmatprep.subr.mxu0 %v2415
  %2534 = vmatpush1.msra.mxu0 %v2414
  %2535 = vmatprep.subr.mxu0 %v2419
  %2536 = vmatpush1.msra.mxu0 %v2418
  %2537 = vmatprep.subr.mxu0 %v2423
  %2538 = vmatpush1.msra.mxu0 %v2422
  %2539 = vmatprep.subr.mxu0 %v2427
  %2540 = vmatpush1.msra.mxu0 %v2426
  %2541 = vmatprep.subr.mxu0 %v2431
  %2542 = vmatpush1.msra.mxu0 %v2430
  %2543 = vmatprep.subr.mxu0 %v2435
  %2544 = vmatpush1.msra.mxu0 %v2434
  %2545 = vmatprep.subr.mxu0 %v2439
  %2546 = vmatpush1.msra.mxu0 %v2438
  %2547 = vmatprep.subr.mxu0 0.0
  %2548 = vmatpush1.msra.mxu0 0.0
  %2549 = vmatprep.subr.mxu0 0.0
  %2550 = vmatpush1.msra.mxu0 0.0
  %2551 = vmatprep.subr.mxu0 0.0
  %2552 = vmatpush1.msra.mxu0 0.0
  %2553 = vmatprep.subr.mxu0 0.0
  %2554 = vmatpush1.msra.mxu0 0.0
  %2555 = vmatprep.subr.mxu0 0.0
  %2556 = vmatpush1.msra.mxu0 0.0
  %2557 = vmatprep.subr.mxu0 0.0
  %2558 = vmatpush1.msra.mxu0 0.0
  %2559 = vmatprep.subr.mxu0 0.0
  %2560 = vmatpush1.msra.mxu0 0.0
  %2561 = vmatprep.subr.mxu0 0.0
  %2562 = vmatpush1.msra.mxu0 0.0
  %2563 = vmatprep.subr.mxu0 0.0
  %2564 = vmatpush1.msra.mxu0 0.0
  %2565 = vmatprep.subr.mxu0 0.0
  %2566 = vmatpush1.msra.mxu0 0.0
  %2567 = vmatprep.subr.mxu0 0.0
  %2568 = vmatpush1.msra.mxu0 0.0
  %2569 = vmatprep.subr.mxu0 0.0
  %2570 = vmatpush1.msra.mxu0 0.0
  %2571 = vmatprep.subr.mxu0 0.0
  %2572 = vmatpush1.msra.mxu0 0.0
  %2573 = vmatprep.subr.mxu0 0.0
  %2574 = vmatpush1.msra.mxu0 0.0
  %2575 = vmatprep.subr.mxu0 0.0
  %2576 = vmatpush1.msra.mxu0 0.0
  %2577 = vmatprep.subr.mxu0 0.0
  %2578 = vmatpush1.msra.mxu0 0.0
  %2579 = vmatprep.mubr.f32.mxu0 0.0
  %2580 = vmatmul.mubr.f32.gmra.mrb[0].mxu0 0.0
  %v2581 = vpop.f32.mrb[0].mxu0
  %v2582 = vadd.f32 0.0, %v2581
  %v2583 = vpop.f32.mrb[0].mxu0
  %v2584 = vadd.f32 0.0, %v2583
  %2585 = vdwg.mxu0
  %v2586 = vadd.f32 %v2440, %v2511
  %v2587 = vadd.f32 %v2441, %v2513
  %v2588 = vadd.f32 %v2442, %v2582
  %v2589 = vadd.f32 %v2443, %v2584
  %v2590 = vsub.f32 0.0, %v2586
  %v2591 = vmul.f32 %v2590, 1.442695
  %v2592 = vpow.pop %v2591
  %v2593 = vadd.f32 %v2592, 1.0
  %v2594 = vrcp.pop %v2593
  %v2595 = vmul.f32 1.0, %v2594
  %v2596 = vsub.f32 0.0, %v2587
  %v2597 = vmul.f32 %v2596, 1.442695
  %v2598 = vpow.pop %v2597
  %v2599 = vadd.f32 %v2598, 1.0
  %v2600 = vrcp.pop %v2599
  %v2601 = vmul.f32 1.0, %v2600
  %v2602 = vtanh.pop %v2588
  %v2603 = vsub.f32 0.0, %v2589
  %v2604 = vmul.f32 %v2603, 1.442695
  %v2605 = vpow.pop %v2604
  %v2606 = vadd.f32 %v2605, 1.0
  %v2607 = vrcp.pop %v2606
  %v2608 = vmul.f32 1.0, %v2607
  %v2609 = vmul.f32 %v2601, 0.0
  %v2610 = vmul.f32 %v2595, %v2602
  %v2611 = vadd.f32 %v2609, %v2610
  %v2612 = vtanh.pop %v2611
  %v2613 = vmul.f32 %v2608, %v2612
  %vm2614 = vcmask 523264
  %2615 = vst.msk [vmem:[#allocation4] sm:$0xff] %vm2614, %v2613
  %vm2616 = vcmask 1048064
  %2617 = vst.msk [vmem:[#allocation4 + $0x78] sm:$0xff] %vm2616, %v2613
  %v2618 = vld [vmem:[#allocation3 + $0x20] sm:$0xff]
  %v2619 = vld [vmem:[#allocation3 + $0x28] sm:$0xff]
  %v2620 = vld [vmem:[#allocation3 + $0x30] sm:$0xff]
  %v2621 = vld [vmem:[#allocation3 + $0x38] sm:$0xff]
  %2622 = vmatprep.subr.mxu0 %v2377
  %2623 = vmatpush1.msra.mxu0 %v2376
  %2624 = vmatprep.subr.mxu0 %v2381
  %2625 = vmatpush1.msra.mxu0 %v2380
  %2626 = vmatprep.subr.mxu0 %v2385
  %2627 = vmatpush1.msra.mxu0 %v2384
  %2628 = vmatprep.subr.mxu0 %v2389
  %2629 = vmatpush1.msra.mxu0 %v2388
  %2630 = vmatprep.subr.mxu0 %v2393
  %2631 = vmatpush1.msra.mxu0 %v2392
  %2632 = vmatprep.subr.mxu0 %v2397
  %2633 = vmatpush1.msra.mxu0 %v2396
  %2634 = vmatprep.subr.mxu0 %v2401
  %2635 = vmatpush1.msra.mxu0 %v2400
  %2636 = vmatprep.subr.mxu0 %v2405
  %2637 = vmatpush1.msra.mxu0 %v2404
  %2638 = vmatprep.subr.mxu0 %v2409
  %2639 = vmatpush1.msra.mxu0 %v2408
  %2640 = vmatprep.subr.mxu0 %v2413
  %2641 = vmatpush1.msra.mxu0 %v2412
  %2642 = vmatprep.subr.mxu0 %v2417
  %2643 = vmatpush1.msra.mxu0 %v2416
  %2644 = vmatprep.subr.mxu0 %v2421
  %2645 = vmatpush1.msra.mxu0 %v2420
  %2646 = vmatprep.subr.mxu0 %v2425
  %2647 = vmatpush1.msra.mxu0 %v2424
  %2648 = vmatprep.subr.mxu0 %v2429
  %2649 = vmatpush1.msra.mxu0 %v2428
  %2650 = vmatprep.subr.mxu0 %v2433
  %2651 = vmatpush1.msra.mxu0 %v2432
  %2652 = vmatprep.subr.mxu0 %v2437
  %2653 = vmatpush1.msra.mxu0 %v2436
  %2654 = vmatprep.subr.mxu0 0.0
  %2655 = vmatpush1.msra.mxu0 0.0
  %2656 = vmatprep.subr.mxu0 0.0
  %2657 = vmatpush1.msra.mxu0 0.0
  %2658 = vmatprep.subr.mxu0 0.0
  %2659 = vmatpush1.msra.mxu0 0.0
  %2660 = vmatprep.subr.mxu0 0.0
  %2661 = vmatpush1.msra.mxu0 0.0
  %2662 = vmatprep.subr.mxu0 0.0
  %2663 = vmatpush1.msra.mxu0 0.0
  %2664 = vmatprep.subr.mxu0 0.0
  %2665 = vmatpush1.msra.mxu0 0.0
  %2666 = vmatprep.subr.mxu0 0.0
  %2667 = vmatpush1.msra.mxu0 0.0
  %2668 = vmatprep.subr.mxu0 0.0
  %2669 = vmatpush1.msra.mxu0 0.0
  %2670 = vmatprep.subr.mxu0 0.0
  %2671 = vmatpush1.msra.mxu0 0.0
  %2672 = vmatprep.subr.mxu0 0.0
  %2673 = vmatpush1.msra.mxu0 0.0
  %2674 = vmatprep.subr.mxu0 0.0
  %2675 = vmatpush1.msra.mxu0 0.0
  %2676 = vmatprep.subr.mxu0 0.0
  %2677 = vmatpush1.msra.mxu0 0.0
  %2678 = vmatprep.subr.mxu0 0.0
  %2679 = vmatpush1.msra.mxu0 0.0
  %2680 = vmatprep.subr.mxu0 0.0
  %2681 = vmatpush1.msra.mxu0 0.0
  %2682 = vmatprep.subr.mxu0 0.0
  %2683 = vmatpush1.msra.mxu0 0.0
  %2684 = vmatprep.subr.mxu0 0.0
  %2685 = vmatpush1.msra.mxu0 0.0
  %2686 = vmatprep.mubr.f32.mxu0 0.0
  %2687 = vmatmul.mubr.f32.gmra.mrb[0].mxu0 %v2613
  %v2688 = vpop.f32.mrb[0].mxu0
  %v2689 = vadd.f32 0.0, %v2688
  %v2690 = vpop.f32.mrb[0].mxu0
  %v2691 = vadd.f32 0.0, %v2690
  %2692 = vdwg.mxu0
  %2693 = vmatprep.subr.mxu0 %v2379
  %2694 = vmatpush1.msra.mxu0 %v2378
  %2695 = vmatprep.subr.mxu0 %v2383
  %2696 = vmatpush1.msra.mxu0 %v2382
  %2697 = vmatprep.subr.mxu0 %v2387
  %2698 = vmatpush1.msra.mxu0 %v2386
  %2699 = vmatprep.subr.mxu0 %v2391
  %2700 = vmatpush1.msra.mxu0 %v2390
  %2701 = vmatprep.subr.mxu0 %v2395
  %2702 = vmatpush1.msra.mxu0 %v2394
  %2703 = vmatprep.subr.mxu0 %v2399
  %2704 = vmatpush1.msra.mxu0 %v2398
  %2705 = vmatprep.subr.mxu0 %v2403
  %2706 = vmatpush1.msra.mxu0 %v2402
  %2707 = vmatprep.subr.mxu0 %v2407
  %2708 = vmatpush1.msra.mxu0 %v2406
  %2709 = vmatprep.subr.mxu0 %v2411
  %2710 = vmatpush1.msra.mxu0 %v2410
  %2711 = vmatprep.subr.mxu0 %v2415
  %2712 = vmatpush1.msra.mxu0 %v2414
  %2713 = vmatprep.subr.mxu0 %v2419
  %2714 = vmatpush1.msra.mxu0 %v2418
  %2715 = vmatprep.subr.mxu0 %v2423
  %2716 = vmatpush1.msra.mxu0 %v2422
  %2717 = vmatprep.subr.mxu0 %v2427
  %2718 = vmatpush1.msra.mxu0 %v2426
  %2719 = vmatprep.subr.mxu0 %v2431
  %2720 = vmatpush1.msra.mxu0 %v2430
  %2721 = vmatprep.subr.mxu0 %v2435
  %2722 = vmatpush1.msra.mxu0 %v2434
  %2723 = vmatprep.subr.mxu0 %v2439
  %2724 = vmatpush1.msra.mxu0 %v2438
  %2725 = vmatprep.subr.mxu0 0.0
  %2726 = vmatpush1.msra.mxu0 0.0
  %2727 = vmatprep.subr.mxu0 0.0
  %2728 = vmatpush1.msra.mxu0 0.0
  %2729 = vmatprep.subr.mxu0 0.0
  %2730 = vmatpush1.msra.mxu0 0.0
  %2731 = vmatprep.subr.mxu0 0.0
  %2732 = vmatpush1.msra.mxu0 0.0
  %2733 = vmatprep.subr.mxu0 0.0
  %2734 = vmatpush1.msra.mxu0 0.0
  %2735 = vmatprep.subr.mxu0 0.0
  %2736 = vmatpush1.msra.mxu0 0.0
  %2737 = vmatprep.subr.mxu0 0.0
  %2738 = vmatpush1.msra.mxu0 0.0
  %2739 = vmatprep.subr.mxu0 0.0
  %2740 = vmatpush1.msra.mxu0 0.0
  %2741 = vmatprep.subr.mxu0 0.0
  %2742 = vmatpush1.msra.mxu0 0.0
  %2743 = vmatprep.subr.mxu0 0.0
  %2744 = vmatpush1.msra.mxu0 0.0
  %2745 = vmatprep.subr.mxu0 0.0
  %2746 = vmatpush1.msra.mxu0 0.0
  %2747 = vmatprep.subr.mxu0 0.0
  %2748 = vmatpush1.msra.mxu0 0.0
  %2749 = vmatprep.subr.mxu0 0.0
  %2750 = vmatpush1.msra.mxu0 0.0
  %2751 = vmatprep.subr.mxu0 0.0
  %2752 = vmatpush1.msra.mxu0 0.0
  %2753 = vmatprep.subr.mxu0 0.0
  %2754 = vmatpush1.msra.mxu0 0.0
  %2755 = vmatprep.subr.mxu0 0.0
  %2756 = vmatpush1.msra.mxu0 0.0
  %2757 = vmatprep.mubr.f32.mxu0 0.0
  %2758 = vmatmul.mubr.f32.gmra.mrb[0].mxu0 %v2613
  %v2759 = vpop.f32.mrb[0].mxu0
  %v2760 = vadd.f32 0.0, %v2759
  %v2761 = vpop.f32.mrb[0].mxu0
  %v2762 = vadd.f32 0.0, %v2761
  %2763 = vdwg.mxu0
  %v2764 = vadd.f32 %v2618, %v2689
  %v2765 = vadd.f32 %v2619, %v2691
  %v2766 = vadd.f32 %v2620, %v2760
  %v2767 = vadd.f32 %v2621, %v2762
  %v2768 = vsub.f32 0.0, %v2764
  %v2769 = vmul.f32 %v2768, 1.442695
  %v2770 = vpow.pop %v2769
  %v2771 = vadd.f32 %v2770, 1.0
  %v2772 = vrcp.pop %v2771
  %v2773 = vmul.f32 1.0, %v2772
  %v2774 = vsub.f32 0.0, %v2765
  %v2775 = vmul.f32 %v2774, 1.442695
  %v2776 = vpow.pop %v2775
  %v2777 = vadd.f32 %v2776, 1.0
  %v2778 = vrcp.pop %v2777
  %v2779 = vmul.f32 1.0, %v2778
  %v2780 = vtanh.pop %v2766
  %v2781 = vsub.f32 0.0, %v2767
  %v2782 = vmul.f32 %v2781, 1.442695
  %v2783 = vpow.pop %v2782
  %v2784 = vadd.f32 %v2783, 1.0
  %v2785 = vrcp.pop %v2784
  %v2786 = vmul.f32 1.0, %v2785
  %v2787 = vmul.f32 %v2779, %v2611
  %v2788 = vmul.f32 %v2773, %v2780
  %v2789 = vadd.f32 %v2787, %v2788
  %v2790 = vtanh.pop %v2789
  %v2791 = vmul.f32 %v2786, %v2790
  %2792 = vst.msk [vmem:[#allocation4 + $0x8] sm:$0xff] %vm2614, %v2791
  %2793 = vst.msk [vmem:[#allocation4 + $0x70] sm:$0xff] %vm2616, %v2791
  %v2794 = vld [vmem:[#allocation3 + $0x40] sm:$0xff]
  %v2795 = vld [vmem:[#allocation3 + $0x48] sm:$0xff]
  %v2796 = vld [vmem:[#allocation3 + $0x50] sm:$0xff]
  %v2797 = vld [vmem:[#allocation3 + $0x58] sm:$0xff]
  %2798 = vmatprep.subr.mxu0 %v2377
  %2799 = vmatpush1.msra.mxu0 %v2376
  %2800 = vmatprep.subr.mxu0 %v2381
  %2801 = vmatpush1.msra.mxu0 %v2380
  %2802 = vmatprep.subr.mxu0 %v2385
  %2803 = vmatpush1.msra.mxu0 %v2384
  %2804 = vmatprep.subr.mxu0 %v2389
  %2805 = vmatpush1.msra.mxu0 %v2388
  %2806 = vmatprep.subr.mxu0 %v2393
  %2807 = vmatpush1.msra.mxu0 %v2392
  %2808 = vmatprep.subr.mxu0 %v2397
  %2809 = vmatpush1.msra.mxu0 %v2396
  %2810 = vmatprep.subr.mxu0 %v2401
  %2811 = vmatpush1.msra.mxu0 %v2400
  %2812 = vmatprep.subr.mxu0 %v2405
  %2813 = vmatpush1.msra.mxu0 %v2404
  %2814 = vmatprep.subr.mxu0 %v2409
  %2815 = vmatpush1.msra.mxu0 %v2408
  %2816 = vmatprep.subr.mxu0 %v2413
  %2817 = vmatpush1.msra.mxu0 %v2412
  %2818 = vmatprep.subr.mxu0 %v2417
  %2819 = vmatpush1.msra.mxu0 %v2416
  %2820 = vmatprep.subr.mxu0 %v2421
  %2821 = vmatpush1.msra.mxu0 %v2420
  %2822 = vmatprep.subr.mxu0 %v2425
  %2823 = vmatpush1.msra.mxu0 %v2424
  %2824 = vmatprep.subr.mxu0 %v2429
  %2825 = vmatpush1.msra.mxu0 %v2428
  %2826 = vmatprep.subr.mxu0 %v2433
  %2827 = vmatpush1.msra.mxu0 %v2432
  %2828 = vmatprep.subr.mxu0 %v2437
  %2829 = vmatpush1.msra.mxu0 %v2436
  %2830 = vmatprep.subr.mxu0 0.0
  %2831 = vmatpush1.msra.mxu0 0.0
  %2832 = vmatprep.subr.mxu0 0.0
  %2833 = vmatpush1.msra.mxu0 0.0
  %2834 = vmatprep.subr.mxu0 0.0
  %2835 = vmatpush1.msra.mxu0 0.0
  %2836 = vmatprep.subr.mxu0 0.0
  %2837 = vmatpush1.msra.mxu0 0.0
  %2838 = vmatprep.subr.mxu0 0.0
  %2839 = vmatpush1.msra.mxu0 0.0
  %2840 = vmatprep.subr.mxu0 0.0
  %2841 = vmatpush1.msra.mxu0 0.0
  %2842 = vmatprep.subr.mxu0 0.0
  %2843 = vmatpush1.msra.mxu0 0.0
  %2844 = vmatprep.subr.mxu0 0.0
  %2845 = vmatpush1.msra.mxu0 0.0
  %2846 = vmatprep.subr.mxu0 0.0
  %2847 = vmatpush1.msra.mxu0 0.0
  %2848 = vmatprep.subr.mxu0 0.0
  %2849 = vmatpush1.msra.mxu0 0.0
  %2850 = vmatprep.subr.mxu0 0.0
  %2851 = vmatpush1.msra.mxu0 0.0
  %2852 = vmatprep.subr.mxu0 0.0
  %2853 = vmatpush1.msra.mxu0 0.0
  %2854 = vmatprep.subr.mxu0 0.0
  %2855 = vmatpush1.msra.mxu0 0.0
  %2856 = vmatprep.subr.mxu0 0.0
  %2857 = vmatpush1.msra.mxu0 0.0
  %2858 = vmatprep.subr.mxu0 0.0
  %2859 = vmatpush1.msra.mxu0 0.0
  %2860 = vmatprep.subr.mxu0 0.0
  %2861 = vmatpush1.msra.mxu0 0.0
  %2862 = vmatprep.mubr.f32.mxu0 0.0
  %2863 = vmatmul.mubr.f32.gmra.mrb[0].mxu0 %v2791
  %v2864 = vpop.f32.mrb[0].mxu0
  %v2865 = vadd.f32 0.0, %v2864
  %v2866 = vpop.f32.mrb[0].mxu0
  %v2867 = vadd.f32 0.0, %v2866
  %2868 = vdwg.mxu0
  %2869 = vmatprep.subr.mxu0 %v2379
  %2870 = vmatpush1.msra.mxu0 %v2378
  %2871 = vmatprep.subr.mxu0 %v2383
  %2872 = vmatpush1.msra.mxu0 %v2382
  %2873 = vmatprep.subr.mxu0 %v2387
  %2874 = vmatpush1.msra.mxu0 %v2386
  %2875 = vmatprep.subr.mxu0 %v2391
  %2876 = vmatpush1.msra.mxu0 %v2390
  %2877 = vmatprep.subr.mxu0 %v2395
  %2878 = vmatpush1.msra.mxu0 %v2394
  %2879 = vmatprep.subr.mxu0 %v2399
  %2880 = vmatpush1.msra.mxu0 %v2398
  %2881 = vmatprep.subr.mxu0 %v2403
  %2882 = vmatpush1.msra.mxu0 %v2402
  %2883 = vmatprep.subr.mxu0 %v2407
  %2884 = vmatpush1.msra.mxu0 %v2406
  %2885 = vmatprep.subr.mxu0 %v2411
  %2886 = vmatpush1.msra.mxu0 %v2410
  %2887 = vmatprep.subr.mxu0 %v2415
  %2888 = vmatpush1.msra.mxu0 %v2414
  %2889 = vmatprep.subr.mxu0 %v2419
  %2890 = vmatpush1.msra.mxu0 %v2418
  %2891 = vmatprep.subr.mxu0 %v2423
  %2892 = vmatpush1.msra.mxu0 %v2422
  %2893 = vmatprep.subr.mxu0 %v2427
  %2894 = vmatpush1.msra.mxu0 %v2426
  %2895 = vmatprep.subr.mxu0 %v2431
  %2896 = vmatpush1.msra.mxu0 %v2430
  %2897 = vmatprep.subr.mxu0 %v2435
  %2898 = vmatpush1.msra.mxu0 %v2434
  %2899 = vmatprep.subr.mxu0 %v2439
  %2900 = vmatpush1.msra.mxu0 %v2438
  %2901 = vmatprep.subr.mxu0 0.0
  %2902 = vmatpush1.msra.mxu0 0.0
  %2903 = vmatprep.subr.mxu0 0.0
  %2904 = vmatpush1.msra.mxu0 0.0
  %2905 = vmatprep.subr.mxu0 0.0
  %2906 = vmatpush1.msra.mxu0 0.0
  %2907 = vmatprep.subr.mxu0 0.0
  %2908 = vmatpush1.msra.mxu0 0.0
  %2909 = vmatprep.subr.mxu0 0.0
  %2910 = vmatpush1.msra.mxu0 0.0
  %2911 = vmatprep.subr.mxu0 0.0
  %2912 = vmatpush1.msra.mxu0 0.0
  %2913 = vmatprep.subr.mxu0 0.0
  %2914 = vmatpush1.msra.mxu0 0.0
  %2915 = vmatprep.subr.mxu0 0.0
  %2916 = vmatpush1.msra.mxu0 0.0
  %2917 = vmatprep.subr.mxu0 0.0
  %2918 = vmatpush1.msra.mxu0 0.0
  %2919 = vmatprep.subr.mxu0 0.0
  %2920 = vmatpush1.msra.mxu0 0.0
  %2921 = vmatprep.subr.mxu0 0.0
  %2922 = vmatpush1.msra.mxu0 0.0
  %2923 = vmatprep.subr.mxu0 0.0
  %2924 = vmatpush1.msra.mxu0 0.0
  %2925 = vmatprep.subr.mxu0 0.0
  %2926 = vmatpush1.msra.mxu0 0.0
  %2927 = vmatprep.subr.mxu0 0.0
  %2928 = vmatpush1.msra.mxu0 0.0
  %2929 = vmatprep.subr.mxu0 0.0
  %2930 = vmatpush1.msra.mxu0 0.0
  %2931 = vmatprep.subr.mxu0 0.0
  %2932 = vmatpush1.msra.mxu0 0.0
  %2933 = vmatprep.mubr.f32.mxu0 0.0
  %2934 = vmatmul.mubr.f32.gmra.mrb[0].mxu0 %v2791
  %v2935 = vpop.f32.mrb[0].mxu0
  %v2936 = vadd.f32 0.0, %v2935
  %v2937 = vpop.f32.mrb[0].mxu0
  %v2938 = vadd.f32 0.0, %v2937
  %2939 = vdwg.mxu0
  %v2940 = vadd.f32 %v2794, %v2865
  %v2941 = vadd.f32 %v2795, %v2867
  %v2942 = vadd.f32 %v2796, %v2936
  %v2943 = vadd.f32 %v2797, %v2938
  %v2944 = vsub.f32 0.0, %v2940
  %v2945 = vmul.f32 %v2944, 1.442695
  %v2946 = vpow.pop %v2945
  %v2947 = vadd.f32 %v2946, 1.0
  %v2948 = vrcp.pop %v2947
  %v2949 = vmul.f32 1.0, %v2948
  %v2950 = vsub.f32 0.0, %v2941
  %v2951 = vmul.f32 %v2950, 1.442695
  %v2952 = vpow.pop %v2951
  %v2953 = vadd.f32 %v2952, 1.0
  %v2954 = vrcp.pop %v2953
  %v2955 = vmul.f32 1.0, %v2954
  %v2956 = vtanh.pop %v2942
  %v2957 = vsub.f32 0.0, %v2943
  %v2958 = vmul.f32 %v2957, 1.442695
  %v2959 = vpow.pop %v2958
  %v2960 = vadd.f32 %v2959, 1.0
  %v2961 = vrcp.pop %v2960
  %v2962 = vmul.f32 1.0, %v2961
  %v2963 = vmul.f32 %v2955, %v2789
  %v2964 = vmul.f32 %v2949, %v2956
  %v2965 = vadd.f32 %v2963, %v2964
  %v2966 = vtanh.pop %v2965
  %v2967 = vmul.f32 %v2962, %v2966
  %2968 = vst.msk [vmem:[#allocation4 + $0x10] sm:$0xff] %vm2614, %v2967
  %2969 = vst.msk [vmem:[#allocation4 + $0x68] sm:$0xff] %vm2616, %v2967
  %v2970 = vld [vmem:[#allocation3 + $0x60] sm:$0xff]
  %v2971 = vld [vmem:[#allocation3 + $0x68] sm:$0xff]
  %v2972 = vld [vmem:[#allocation3 + $0x70] sm:$0xff]
  %v2973 = vld [vmem:[#allocation3 + $0x78] sm:$0xff]
  %2974 = vmatprep.subr.mxu0 %v2377
  %2975 = vmatpush1.msra.mxu0 %v2376
  %2976 = vmatprep.subr.mxu0 %v2381
  %2977 = vmatpush1.msra.mxu0 %v2380
  %2978 = vmatprep.subr.mxu0 %v2385
  %2979 = vmatpush1.msra.mxu0 %v2384
  %2980 = vmatprep.subr.mxu0 %v2389
  %2981 = vmatpush1.msra.mxu0 %v2388
  %2982 = vmatprep.subr.mxu0 %v2393
  %2983 = vmatpush1.msra.mxu0 %v2392
  %2984 = vmatprep.subr.mxu0 %v2397
  %2985 = vmatpush1.msra.mxu0 %v2396
  %2986 = vmatprep.subr.mxu0 %v2401
  %2987 = vmatpush1.msra.mxu0 %v2400
  %2988 = vmatprep.subr.mxu0 %v2405
  %2989 = vmatpush1.msra.mxu0 %v2404
  %2990 = vmatprep.subr.mxu0 %v2409
  %2991 = vmatpush1.msra.mxu0 %v2408
  %2992 = vmatprep.subr.mxu0 %v2413
  %2993 = vmatpush1.msra.mxu0 %v2412
  %2994 = vmatprep.subr.mxu0 %v2417
  %2995 = vmatpush1.msra.mxu0 %v2416
  %2996 = vmatprep.subr.mxu0 %v2421
  %2997 = vmatpush1.msra.mxu0 %v2420
  %2998 = vmatprep.subr.mxu0 %v2425
  %2999 = vmatpush1.msra.mxu0 %v2424
  %3000 = vmatprep.subr.mxu0 %v2429
  %3001 = vmatpush1.msra.mxu0 %v2428
  %3002 = vmatprep.subr.mxu0 %v2433
  %3003 = vmatpush1.msra.mxu0 %v2432
  %3004 = vmatprep.subr.mxu0 %v2437
  %3005 = vmatpush1.msra.mxu0 %v2436
  %3006 = vmatprep.subr.mxu0 0.0
  %3007 = vmatpush1.msra.mxu0 0.0
  %3008 = vmatprep.subr.mxu0 0.0
  %3009 = vmatpush1.msra.mxu0 0.0
  %3010 = vmatprep.subr.mxu0 0.0
  %3011 = vmatpush1.msra.mxu0 0.0
  %3012 = vmatprep.subr.mxu0 0.0
  %3013 = vmatpush1.msra.mxu0 0.0
  %3014 = vmatprep.subr.mxu0 0.0
  %3015 = vmatpush1.msra.mxu0 0.0
  %3016 = vmatprep.subr.mxu0 0.0
  %3017 = vmatpush1.msra.mxu0 0.0
  %3018 = vmatprep.subr.mxu0 0.0
  %3019 = vmatpush1.msra.mxu0 0.0
  %3020 = vmatprep.subr.mxu0 0.0
  %3021 = vmatpush1.msra.mxu0 0.0
  %3022 = vmatprep.subr.mxu0 0.0
  %3023 = vmatpush1.msra.mxu0 0.0
  %3024 = vmatprep.subr.mxu0 0.0
  %3025 = vmatpush1.msra.mxu0 0.0
  %3026 = vmatprep.subr.mxu0 0.0
  %3027 = vmatpush1.msra.mxu0 0.0
  %3028 = vmatprep.subr.mxu0 0.0
  %3029 = vmatpush1.msra.mxu0 0.0
  %3030 = vmatprep.subr.mxu0 0.0
  %3031 = vmatpush1.msra.mxu0 0.0
  %3032 = vmatprep.subr.mxu0 0.0
  %3033 = vmatpush1.msra.mxu0 0.0
  %3034 = vmatprep.subr.mxu0 0.0
  %3035 = vmatpush1.msra.mxu0 0.0
  %3036 = vmatprep.subr.mxu0 0.0
  %3037 = vmatpush1.msra.mxu0 0.0
  %3038 = vmatprep.mubr.f32.mxu0 0.0
  %3039 = vmatmul.mubr.f32.gmra.mrb[0].mxu0 %v2967
  %v3040 = vpop.f32.mrb[0].mxu0
  %v3041 = vadd.f32 0.0, %v3040
  %v3042 = vpop.f32.mrb[0].mxu0
  %v3043 = vadd.f32 0.0, %v3042
  %3044 = vdwg.mxu0
  %3045 = vmatprep.subr.mxu0 %v2379
  %3046 = vmatpush1.msra.mxu0 %v2378
  %3047 = vmatprep.subr.mxu0 %v2383
  %3048 = vmatpush1.msra.mxu0 %v2382
  %3049 = vmatprep.subr.mxu0 %v2387
  %3050 = vmatpush1.msra.mxu0 %v2386
  %3051 = vmatprep.subr.mxu0 %v2391
  %3052 = vmatpush1.msra.mxu0 %v2390
  %3053 = vmatprep.subr.mxu0 %v2395
  %3054 = vmatpush1.msra.mxu0 %v2394
  %3055 = vmatprep.subr.mxu0 %v2399
  %3056 = vmatpush1.msra.mxu0 %v2398
  %3057 = vmatprep.subr.mxu0 %v2403
  %3058 = vmatpush1.msra.mxu0 %v2402
  %3059 = vmatprep.subr.mxu0 %v2407
  %3060 = vmatpush1.msra.mxu0 %v2406
  %3061 = vmatprep.subr.mxu0 %v2411
  %3062 = vmatpush1.msra.mxu0 %v2410
  %3063 = vmatprep.subr.mxu0 %v2415
  %3064 = vmatpush1.msra.mxu0 %v2414
  %3065 = vmatprep.subr.mxu0 %v2419
  %3066 = vmatpush1.msra.mxu0 %v2418
  %3067 = vmatprep.subr.mxu0 %v2423
  %3068 = vmatpush1.msra.mxu0 %v2422
  %3069 = vmatprep.subr.mxu0 %v2427
  %3070 = vmatpush1.msra.mxu0 %v2426
  %3071 = vmatprep.subr.mxu0 %v2431
  %3072 = vmatpush1.msra.mxu0 %v2430
  %3073 = vmatprep.subr.mxu0 %v2435
  %3074 = vmatpush1.msra.mxu0 %v2434
  %3075 = vmatprep.subr.mxu0 %v2439
  %3076 = vmatpush1.msra.mxu0 %v2438
  %3077 = vmatprep.subr.mxu0 0.0
  %3078 = vmatpush1.msra.mxu0 0.0
  %3079 = vmatprep.subr.mxu0 0.0
  %3080 = vmatpush1.msra.mxu0 0.0
  %3081 = vmatprep.subr.mxu0 0.0
  %3082 = vmatpush1.msra.mxu0 0.0
  %3083 = vmatprep.subr.mxu0 0.0
  %3084 = vmatpush1.msra.mxu0 0.0
  %3085 = vmatprep.subr.mxu0 0.0
  %3086 = vmatpush1.msra.mxu0 0.0
  %3087 = vmatprep.subr.mxu0 0.0
  %3088 = vmatpush1.msra.mxu0 0.0
  %3089 = vmatprep.subr.mxu0 0.0
  %3090 = vmatpush1.msra.mxu0 0.0
  %3091 = vmatprep.subr.mxu0 0.0
  %3092 = vmatpush1.msra.mxu0 0.0
  %3093 = vmatprep.subr.mxu0 0.0
  %3094 = vmatpush1.msra.mxu0 0.0
  %3095 = vmatprep.subr.mxu0 0.0
  %3096 = vmatpush1.msra.mxu0 0.0
  %3097 = vmatprep.subr.mxu0 0.0
  %3098 = vmatpush1.msra.mxu0 0.0
  %3099 = vmatprep.subr.mxu0 0.0
  %3100 = vmatpush1.msra.mxu0 0.0
  %3101 = vmatprep.subr.mxu0 0.0
  %3102 = vmatpush1.msra.mxu0 0.0
  %3103 = vmatprep.subr.mxu0 0.0
  %3104 = vmatpush1.msra.mxu0 0.0
  %3105 = vmatprep.subr.mxu0 0.0
  %3106 = vmatpush1.msra.mxu0 0.0
  %3107 = vmatprep.subr.mxu0 0.0
  %3108 = vmatpush1.msra.mxu0 0.0
  %3109 = vmatprep.mubr.f32.mxu0 0.0
  %3110 = vmatmul.mubr.f32.gmra.mrb[0].mxu0 %v2967
  %v3111 = vpop.f32.mrb[0].mxu0
  %v3112 = vadd.f32 0.0, %v3111
  %v3113 = vpop.f32.mrb[0].mxu0
  %v3114 = vadd.f32 0.0, %v3113
  %3115 = vdwg.mxu0
  %v3116 = vadd.f32 %v2970, %v3041
  %v3117 = vadd.f32 %v2971, %v3043
  %v3118 = vadd.f32 %v2972, %v3112
  %v3119 = vadd.f32 %v2973, %v3114
  %v3120 = vsub.f32 0.0, %v3116
  %v3121 = vmul.f32 %v3120, 1.442695
  %v3122 = vpow.pop %v3121
  %v3123 = vadd.f32 %v3122, 1.0
  %v3124 = vrcp.pop %v3123
  %v3125 = vmul.f32 1.0, %v3124
  %v3126 = vsub.f32 0.0, %v3117
  %v3127 = vmul.f32 %v3126, 1.442695
  %v3128 = vpow.pop %v3127
  %v3129 = vadd.f32 %v3128, 1.0
  %v3130 = vrcp.pop %v3129
  %v3131 = vmul.f32 1.0, %v3130
  %v3132 = vtanh.pop %v3118
  %v3133 = vsub.f32 0.0, %v3119
  %v3134 = vmul.f32 %v3133, 1.442695
  %v3135 = vpow.pop %v3134
  %v3136 = vadd.f32 %v3135, 1.0
  %v3137 = vrcp.pop %v3136
  %v3138 = vmul.f32 1.0, %v3137
  %v3139 = vmul.f32 %v3131, %v2965
  %v3140 = vmul.f32 %v3125, %v3132
  %v3141 = vadd.f32 %v3139, %v3140
  %v3142 = vtanh.pop %v3141
  %v3143 = vmul.f32 %v3138, %v3142
  %3144 = vst.msk [vmem:[#allocation4 + $0x18] sm:$0xff] %vm2614, %v3143
  %3145 = vst.msk [vmem:[#allocation4 + $0x60] sm:$0xff] %vm2616, %v3143
  %v3146 = vld [vmem:[#allocation3 + $0x80] sm:$0xff]
  %v3147 = vld [vmem:[#allocation3 + $0x88] sm:$0xff]
  %v3148 = vld [vmem:[#allocation3 + $0x90] sm:$0xff]
  %v3149 = vld [vmem:[#allocation3 + $0x98] sm:$0xff]
  %3150 = vmatprep.subr.mxu0 %v2377
  %3151 = vmatpush1.msra.mxu0 %v2376
  %3152 = vmatprep.subr.mxu0 %v2381
  %3153 = vmatpush1.msra.mxu0 %v2380
  %3154 = vmatprep.subr.mxu0 %v2385
  %3155 = vmatpush1.msra.mxu0 %v2384
  %3156 = vmatprep.subr.mxu0 %v2389
  %3157 = vmatpush1.msra.mxu0 %v2388
  %3158 = vmatprep.subr.mxu0 %v2393
  %3159 = vmatpush1.msra.mxu0 %v2392
  %3160 = vmatprep.subr.mxu0 %v2397
  %3161 = vmatpush1.msra.mxu0 %v2396
  %3162 = vmatprep.subr.mxu0 %v2401
  %3163 = vmatpush1.msra.mxu0 %v2400
  %3164 = vmatprep.subr.mxu0 %v2405
  %3165 = vmatpush1.msra.mxu0 %v2404
  %3166 = vmatprep.subr.mxu0 %v2409
  %3167 = vmatpush1.msra.mxu0 %v2408
  %3168 = vmatprep.subr.mxu0 %v2413
  %3169 = vmatpush1.msra.mxu0 %v2412
  %3170 = vmatprep.subr.mxu0 %v2417
  %3171 = vmatpush1.msra.mxu0 %v2416
  %3172 = vmatprep.subr.mxu0 %v2421
  %3173 = vmatpush1.msra.mxu0 %v2420
  %3174 = vmatprep.subr.mxu0 %v2425
  %3175 = vmatpush1.msra.mxu0 %v2424
  %3176 = vmatprep.subr.mxu0 %v2429
  %3177 = vmatpush1.msra.mxu0 %v2428
  %3178 = vmatprep.subr.mxu0 %v2433
  %3179 = vmatpush1.msra.mxu0 %v2432
  %3180 = vmatprep.subr.mxu0 %v2437
  %3181 = vmatpush1.msra.mxu0 %v2436
  %3182 = vmatprep.subr.mxu0 0.0
  %3183 = vmatpush1.msra.mxu0 0.0
  %3184 = vmatprep.subr.mxu0 0.0
  %3185 = vmatpush1.msra.mxu0 0.0
  %3186 = vmatprep.subr.mxu0 0.0
  %3187 = vmatpush1.msra.mxu0 0.0
  %3188 = vmatprep.subr.mxu0 0.0
  %3189 = vmatpush1.msra.mxu0 0.0
  %3190 = vmatprep.subr.mxu0 0.0
  %3191 = vmatpush1.msra.mxu0 0.0
  %3192 = vmatprep.subr.mxu0 0.0
  %3193 = vmatpush1.msra.mxu0 0.0
  %3194 = vmatprep.subr.mxu0 0.0
  %3195 = vmatpush1.msra.mxu0 0.0
  %3196 = vmatprep.subr.mxu0 0.0
  %3197 = vmatpush1.msra.mxu0 0.0
  %3198 = vmatprep.subr.mxu0 0.0
  %3199 = vmatpush1.msra.mxu0 0.0
  %3200 = vmatprep.subr.mxu0 0.0
  %3201 = vmatpush1.msra.mxu0 0.0
  %3202 = vmatprep.subr.mxu0 0.0
  %3203 = vmatpush1.msra.mxu0 0.0
  %3204 = vmatprep.subr.mxu0 0.0
  %3205 = vmatpush1.msra.mxu0 0.0
  %3206 = vmatprep.subr.mxu0 0.0
  %3207 = vmatpush1.msra.mxu0 0.0
  %3208 = vmatprep.subr.mxu0 0.0
  %3209 = vmatpush1.msra.mxu0 0.0
  %3210 = vmatprep.subr.mxu0 0.0
  %3211 = vmatpush1.msra.mxu0 0.0
  %3212 = vmatprep.subr.mxu0 0.0
  %3213 = vmatpush1.msra.mxu0 0.0
  %3214 = vmatprep.mubr.f32.mxu0 0.0
  %3215 = vmatmul.mubr.f32.gmra.mrb[0].mxu0 %v3143
  %v3216 = vpop.f32.mrb[0].mxu0
  %v3217 = vadd.f32 0.0, %v3216
  %v3218 = vpop.f32.mrb[0].mxu0
  %v3219 = vadd.f32 0.0, %v3218
  %3220 = vdwg.mxu0
  %3221 = vmatprep.subr.mxu0 %v2379
  %3222 = vmatpush1.msra.mxu0 %v2378
  %3223 = vmatprep.subr.mxu0 %v2383
  %3224 = vmatpush1.msra.mxu0 %v2382
  %3225 = vmatprep.subr.mxu0 %v2387
  %3226 = vmatpush1.msra.mxu0 %v2386
  %3227 = vmatprep.subr.mxu0 %v2391
  %3228 = vmatpush1.msra.mxu0 %v2390
  %3229 = vmatprep.subr.mxu0 %v2395
  %3230 = vmatpush1.msra.mxu0 %v2394
  %3231 = vmatprep.subr.mxu0 %v2399
  %3232 = vmatpush1.msra.mxu0 %v2398
  %3233 = vmatprep.subr.mxu0 %v2403
  %3234 = vmatpush1.msra.mxu0 %v2402
  %3235 = vmatprep.subr.mxu0 %v2407
  %3236 = vmatpush1.msra.mxu0 %v2406
  %3237 = vmatprep.subr.mxu0 %v2411
  %3238 = vmatpush1.msra.mxu0 %v2410
  %3239 = vmatprep.subr.mxu0 %v2415
  %3240 = vmatpush1.msra.mxu0 %v2414
  %3241 = vmatprep.subr.mxu0 %v2419
  %3242 = vmatpush1.msra.mxu0 %v2418
  %3243 = vmatprep.subr.mxu0 %v2423
  %3244 = vmatpush1.msra.mxu0 %v2422
  %3245 = vmatprep.subr.mxu0 %v2427
  %3246 = vmatpush1.msra.mxu0 %v2426
  %3247 = vmatprep.subr.mxu0 %v2431
  %3248 = vmatpush1.msra.mxu0 %v2430
  %3249 = vmatprep.subr.mxu0 %v2435
  %3250 = vmatpush1.msra.mxu0 %v2434
  %3251 = vmatprep.subr.mxu0 %v2439
  %3252 = vmatpush1.msra.mxu0 %v2438
  %3253 = vmatprep.subr.mxu0 0.0
  %3254 = vmatpush1.msra.mxu0 0.0
  %3255 = vmatprep.subr.mxu0 0.0
  %3256 = vmatpush1.msra.mxu0 0.0
  %3257 = vmatprep.subr.mxu0 0.0
  %3258 = vmatpush1.msra.mxu0 0.0
  %3259 = vmatprep.subr.mxu0 0.0
  %3260 = vmatpush1.msra.mxu0 0.0
  %3261 = vmatprep.subr.mxu0 0.0
  %3262 = vmatpush1.msra.mxu0 0.0
  %3263 = vmatprep.subr.mxu0 0.0
  %3264 = vmatpush1.msra.mxu0 0.0
  %3265 = vmatprep.subr.mxu0 0.0
  %3266 = vmatpush1.msra.mxu0 0.0
  %3267 = vmatprep.subr.mxu0 0.0
  %3268 = vmatpush1.msra.mxu0 0.0
  %3269 = vmatprep.subr.mxu0 0.0
  %3270 = vmatpush1.msra.mxu0 0.0
  %3271 = vmatprep.subr.mxu0 0.0
  %3272 = vmatpush1.msra.mxu0 0.0
  %3273 = vmatprep.subr.mxu0 0.0
  %3274 = vmatpush1.msra.mxu0 0.0
  %3275 = vmatprep.subr.mxu0 0.0
  %3276 = vmatpush1.msra.mxu0 0.0
  %3277 = vmatprep.subr.mxu0 0.0
  %3278 = vmatpush1.msra.mxu0 0.0
  %3279 = vmatprep.subr.mxu0 0.0
  %3280 = vmatpush1.msra.mxu0 0.0
  %3281 = vmatprep.subr.mxu0 0.0
  %3282 = vmatpush1.msra.mxu0 0.0
  %3283 = vmatprep.subr.mxu0 0.0
  %3284 = vmatpush1.msra.mxu0 0.0
  %3285 = vmatprep.mubr.f32.mxu0 0.0
  %3286 = vmatmul.mubr.f32.gmra.mrb[0].mxu0 %v3143
  %v3287 = vpop.f32.mrb[0].mxu0
  %v3288 = vadd.f32 0.0, %v3287
  %v3289 = vpop.f32.mrb[0].mxu0
  %v3290 = vadd.f32 0.0, %v3289
  %3291 = vdwg.mxu0
  %v3292 = vadd.f32 %v3146, %v3217
  %v3293 = vadd.f32 %v3147, %v3219
  %v3294 = vadd.f32 %v3148, %v3288
  %v3295 = vadd.f32 %v3149, %v3290
  %v3296 = vsub.f32 0.0, %v3292
  %v3297 = vmul.f32 %v3296, 1.442695
  %v3298 = vpow.pop %v3297
  %v3299 = vadd.f32 %v3298, 1.0
  %v3300 = vrcp.pop %v3299
  %v3301 = vmul.f32 1.0, %v3300
  %v3302 = vsub.f32 0.0, %v3293
  %v3303 = vmul.f32 %v3302, 1.442695
  %v3304 = vpow.pop %v3303
  %v3305 = vadd.f32 %v3304, 1.0
  %v3306 = vrcp.pop %v3305
  %v3307 = vmul.f32 1.0, %v3306
  %v3308 = vtanh.pop %v3294
  %v3309 = vsub.f32 0.0, %v3295
  %v3310 = vmul.f32 %v3309, 1.442695
  %v3311 = vpow.pop %v3310
  %v3312 = vadd.f32 %v3311, 1.0
  %v3313 = vrcp.pop %v3312
  %v3314 = vmul.f32 1.0, %v3313
  %v3315 = vmul.f32 %v3307, %v3141
  %v3316 = vmul.f32 %v3301, %v3308
  %v3317 = vadd.f32 %v3315, %v3316
  %v3318 = vtanh.pop %v3317
  %v3319 = vmul.f32 %v3314, %v3318
  %3320 = vst.msk [vmem:[#allocation4 + $0x20] sm:$0xff] %vm2614, %v3319
  %3321 = vst.msk [vmem:[#allocation4 + $0x58] sm:$0xff] %vm2616, %v3319
  %v3322 = vld [vmem:[#allocation3 + $0xa0] sm:$0xff]
  %v3323 = vld [vmem:[#allocation3 + $0xa8] sm:$0xff]
  %v3324 = vld [vmem:[#allocation3 + $0xb0] sm:$0xff]
  %v3325 = vld [vmem:[#allocation3 + $0xb8] sm:$0xff]
  %3326 = vmatprep.subr.mxu0 %v2377
  %3327 = vmatpush1.msra.mxu0 %v2376
  %3328 = vmatprep.subr.mxu0 %v2381
  %3329 = vmatpush1.msra.mxu0 %v2380
  %3330 = vmatprep.subr.mxu0 %v2385
  %3331 = vmatpush1.msra.mxu0 %v2384
  %3332 = vmatprep.subr.mxu0 %v2389
  %3333 = vmatpush1.msra.mxu0 %v2388
  %3334 = vmatprep.subr.mxu0 %v2393
  %3335 = vmatpush1.msra.mxu0 %v2392
  %3336 = vmatprep.subr.mxu0 %v2397
  %3337 = vmatpush1.msra.mxu0 %v2396
  %3338 = vmatprep.subr.mxu0 %v2401
  %3339 = vmatpush1.msra.mxu0 %v2400
  %3340 = vmatprep.subr.mxu0 %v2405
  %3341 = vmatpush1.msra.mxu0 %v2404
  %3342 = vmatprep.subr.mxu0 %v2409
  %3343 = vmatpush1.msra.mxu0 %v2408
  %3344 = vmatprep.subr.mxu0 %v2413
  %3345 = vmatpush1.msra.mxu0 %v2412
  %3346 = vmatprep.subr.mxu0 %v2417
  %3347 = vmatpush1.msra.mxu0 %v2416
  %3348 = vmatprep.subr.mxu0 %v2421
  %3349 = vmatpush1.msra.mxu0 %v2420
  %3350 = vmatprep.subr.mxu0 %v2425
  %3351 = vmatpush1.msra.mxu0 %v2424
  %3352 = vmatprep.subr.mxu0 %v2429
  %3353 = vmatpush1.msra.mxu0 %v2428
  %3354 = vmatprep.subr.mxu0 %v2433
  %3355 = vmatpush1.msra.mxu0 %v2432
  %3356 = vmatprep.subr.mxu0 %v2437
  %3357 = vmatpush1.msra.mxu0 %v2436
  %3358 = vmatprep.subr.mxu0 0.0
  %3359 = vmatpush1.msra.mxu0 0.0
  %3360 = vmatprep.subr.mxu0 0.0
  %3361 = vmatpush1.msra.mxu0 0.0
  %3362 = vmatprep.subr.mxu0 0.0
  %3363 = vmatpush1.msra.mxu0 0.0
  %3364 = vmatprep.subr.mxu0 0.0
  %3365 = vmatpush1.msra.mxu0 0.0
  %3366 = vmatprep.subr.mxu0 0.0
  %3367 = vmatpush1.msra.mxu0 0.0
  %3368 = vmatprep.subr.mxu0 0.0
  %3369 = vmatpush1.msra.mxu0 0.0
  %3370 = vmatprep.subr.mxu0 0.0
  %3371 = vmatpush1.msra.mxu0 0.0
  %3372 = vmatprep.subr.mxu0 0.0
  %3373 = vmatpush1.msra.mxu0 0.0
  %3374 = vmatprep.subr.mxu0 0.0
  %3375 = vmatpush1.msra.mxu0 0.0
  %3376 = vmatprep.subr.mxu0 0.0
  %3377 = vmatpush1.msra.mxu0 0.0
  %3378 = vmatprep.subr.mxu0 0.0
  %3379 = vmatpush1.msra.mxu0 0.0
  %3380 = vmatprep.subr.mxu0 0.0
  %3381 = vmatpush1.msra.mxu0 0.0
  %3382 = vmatprep.subr.mxu0 0.0
  %3383 = vmatpush1.msra.mxu0 0.0
  %3384 = vmatprep.subr.mxu0 0.0
  %3385 = vmatpush1.msra.mxu0 0.0
  %3386 = vmatprep.subr.mxu0 0.0
  %3387 = vmatpush1.msra.mxu0 0.0
  %3388 = vmatprep.subr.mxu0 0.0
  %3389 = vmatpush1.msra.mxu0 0.0
  %3390 = vmatprep.mubr.f32.mxu0 0.0
  %3391 = vmatmul.mubr.f32.gmra.mrb[0].mxu0 %v3319
  %v3392 = vpop.f32.mrb[0].mxu0
  %v3393 = vadd.f32 0.0, %v3392
  %v3394 = vpop.f32.mrb[0].mxu0
  %v3395 = vadd.f32 0.0, %v3394
  %3396 = vdwg.mxu0
  %3397 = vmatprep.subr.mxu0 %v2379
  %3398 = vmatpush1.msra.mxu0 %v2378
  %3399 = vmatprep.subr.mxu0 %v2383
  %3400 = vmatpush1.msra.mxu0 %v2382
  %3401 = vmatprep.subr.mxu0 %v2387
  %3402 = vmatpush1.msra.mxu0 %v2386
  %3403 = vmatprep.subr.mxu0 %v2391
  %3404 = vmatpush1.msra.mxu0 %v2390
  %3405 = vmatprep.subr.mxu0 %v2395
  %3406 = vmatpush1.msra.mxu0 %v2394
  %3407 = vmatprep.subr.mxu0 %v2399
  %3408 = vmatpush1.msra.mxu0 %v2398
  %3409 = vmatprep.subr.mxu0 %v2403
  %3410 = vmatpush1.msra.mxu0 %v2402
  %3411 = vmatprep.subr.mxu0 %v2407
  %3412 = vmatpush1.msra.mxu0 %v2406
  %3413 = vmatprep.subr.mxu0 %v2411
  %3414 = vmatpush1.msra.mxu0 %v2410
  %3415 = vmatprep.subr.mxu0 %v2415
  %3416 = vmatpush1.msra.mxu0 %v2414
  %3417 = vmatprep.subr.mxu0 %v2419
  %3418 = vmatpush1.msra.mxu0 %v2418
  %3419 = vmatprep.subr.mxu0 %v2423
  %3420 = vmatpush1.msra.mxu0 %v2422
  %3421 = vmatprep.subr.mxu0 %v2427
  %3422 = vmatpush1.msra.mxu0 %v2426
  %3423 = vmatprep.subr.mxu0 %v2431
  %3424 = vmatpush1.msra.mxu0 %v2430
  %3425 = vmatprep.subr.mxu0 %v2435
  %3426 = vmatpush1.msra.mxu0 %v2434
  %3427 = vmatprep.subr.mxu0 %v2439
  %3428 = vmatpush1.msra.mxu0 %v2438
  %3429 = vmatprep.subr.mxu0 0.0
  %3430 = vmatpush1.msra.mxu0 0.0
  %3431 = vmatprep.subr.mxu0 0.0
  %3432 = vmatpush1.msra.mxu0 0.0
  %3433 = vmatprep.subr.mxu0 0.0
  %3434 = vmatpush1.msra.mxu0 0.0
  %3435 = vmatprep.subr.mxu0 0.0
  %3436 = vmatpush1.msra.mxu0 0.0
  %3437 = vmatprep.subr.mxu0 0.0
  %3438 = vmatpush1.msra.mxu0 0.0
  %3439 = vmatprep.subr.mxu0 0.0
  %3440 = vmatpush1.msra.mxu0 0.0
  %3441 = vmatprep.subr.mxu0 0.0
  %3442 = vmatpush1.msra.mxu0 0.0
  %3443 = vmatprep.subr.mxu0 0.0
  %3444 = vmatpush1.msra.mxu0 0.0
  %3445 = vmatprep.subr.mxu0 0.0
  %3446 = vmatpush1.msra.mxu0 0.0
  %3447 = vmatprep.subr.mxu0 0.0
  %3448 = vmatpush1.msra.mxu0 0.0
  %3449 = vmatprep.subr.mxu0 0.0
  %3450 = vmatpush1.msra.mxu0 0.0
  %3451 = vmatprep.subr.mxu0 0.0
  %3452 = vmatpush1.msra.mxu0 0.0
  %3453 = vmatprep.subr.mxu0 0.0
  %3454 = vmatpush1.msra.mxu0 0.0
  %3455 = vmatprep.subr.mxu0 0.0
  %3456 = vmatpush1.msra.mxu0 0.0
  %3457 = vmatprep.subr.mxu0 0.0
  %3458 = vmatpush1.msra.mxu0 0.0
  %3459 = vmatprep.subr.mxu0 0.0
  %3460 = vmatpush1.msra.mxu0 0.0
  %3461 = vmatprep.mubr.f32.mxu0 0.0
  %3462 = vmatmul.mubr.f32.gmra.mrb[0].mxu0 %v3319
  %v3463 = vpop.f32.mrb[0].mxu0
  %v3464 = vadd.f32 0.0, %v3463
  %v3465 = vpop.f32.mrb[0].mxu0
  %v3466 = vadd.f32 0.0, %v3465
  %3467 = vdwg.mxu0
  %v3468 = vadd.f32 %v3322, %v3393
  %v3469 = vadd.f32 %v3323, %v3395
  %v3470 = vadd.f32 %v3324, %v3464
  %v3471 = vadd.f32 %v3325, %v3466
  %v3472 = vsub.f32 0.0, %v3468
  %v3473 = vmul.f32 %v3472, 1.442695
  %v3474 = vpow.pop %v3473
  %v3475 = vadd.f32 %v3474, 1.0
  %v3476 = vrcp.pop %v3475
  %v3477 = vmul.f32 1.0, %v3476
  %v3478 = vsub.f32 0.0, %v3469
  %v3479 = vmul.f32 %v3478, 1.442695
  %v3480 = vpow.pop %v3479
  %v3481 = vadd.f32 %v3480, 1.0
  %v3482 = vrcp.pop %v3481
  %v3483 = vmul.f32 1.0, %v3482
  %v3484 = vtanh.pop %v3470
  %v3485 = vsub.f32 0.0, %v3471
  %v3486 = vmul.f32 %v3485, 1.442695
  %v3487 = vpow.pop %v3486
  %v3488 = vadd.f32 %v3487, 1.0
  %v3489 = vrcp.pop %v3488
  %v3490 = vmul.f32 1.0, %v3489
  %v3491 = vmul.f32 %v3483, %v3317
  %v3492 = vmul.f32 %v3477, %v3484
  %v3493 = vadd.f32 %v3491, %v3492
  %v3494 = vtanh.pop %v3493
  %v3495 = vmul.f32 %v3490, %v3494
  %3496 = vst.msk [vmem:[#allocation4 + $0x28] sm:$0xff] %vm2614, %v3495
  %3497 = vst.msk [vmem:[#allocation4 + $0x50] sm:$0xff] %vm2616, %v3495
  %v3498 = vld [vmem:[#allocation3 + $0xc0] sm:$0xff]
  %v3499 = vld [vmem:[#allocation3 + $0xc8] sm:$0xff]
  %v3500 = vld [vmem:[#allocation3 + $0xd0] sm:$0xff]
  %v3501 = vld [vmem:[#allocation3 + $0xd8] sm:$0xff]
  %3502 = vmatprep.subr.mxu0 %v2377
  %3503 = vmatpush1.msra.mxu0 %v2376
  %3504 = vmatprep.subr.mxu0 %v2381
  %3505 = vmatpush1.msra.mxu0 %v2380
  %3506 = vmatprep.subr.mxu0 %v2385
  %3507 = vmatpush1.msra.mxu0 %v2384
  %3508 = vmatprep.subr.mxu0 %v2389
  %3509 = vmatpush1.msra.mxu0 %v2388
  %3510 = vmatprep.subr.mxu0 %v2393
  %3511 = vmatpush1.msra.mxu0 %v2392
  %3512 = vmatprep.subr.mxu0 %v2397
  %3513 = vmatpush1.msra.mxu0 %v2396
  %3514 = vmatprep.subr.mxu0 %v2401
  %3515 = vmatpush1.msra.mxu0 %v2400
  %3516 = vmatprep.subr.mxu0 %v2405
  %3517 = vmatpush1.msra.mxu0 %v2404
  %3518 = vmatprep.subr.mxu0 %v2409
  %3519 = vmatpush1.msra.mxu0 %v2408
  %3520 = vmatprep.subr.mxu0 %v2413
  %3521 = vmatpush1.msra.mxu0 %v2412
  %3522 = vmatprep.subr.mxu0 %v2417
  %3523 = vmatpush1.msra.mxu0 %v2416
  %3524 = vmatprep.subr.mxu0 %v2421
  %3525 = vmatpush1.msra.mxu0 %v2420
  %3526 = vmatprep.subr.mxu0 %v2425
  %3527 = vmatpush1.msra.mxu0 %v2424
  %3528 = vmatprep.subr.mxu0 %v2429
  %3529 = vmatpush1.msra.mxu0 %v2428
  %3530 = vmatprep.subr.mxu0 %v2433
  %3531 = vmatpush1.msra.mxu0 %v2432
  %3532 = vmatprep.subr.mxu0 %v2437
  %3533 = vmatpush1.msra.mxu0 %v2436
  %3534 = vmatprep.subr.mxu0 0.0
  %3535 = vmatpush1.msra.mxu0 0.0
  %3536 = vmatprep.subr.mxu0 0.0
  %3537 = vmatpush1.msra.mxu0 0.0
  %3538 = vmatprep.subr.mxu0 0.0
  %3539 = vmatpush1.msra.mxu0 0.0
  %3540 = vmatprep.subr.mxu0 0.0
  %3541 = vmatpush1.msra.mxu0 0.0
  %3542 = vmatprep.subr.mxu0 0.0
  %3543 = vmatpush1.msra.mxu0 0.0
  %3544 = vmatprep.subr.mxu0 0.0
  %3545 = vmatpush1.msra.mxu0 0.0
  %3546 = vmatprep.subr.mxu0 0.0
  %3547 = vmatpush1.msra.mxu0 0.0
  %3548 = vmatprep.subr.mxu0 0.0
  %3549 = vmatpush1.msra.mxu0 0.0
  %3550 = vmatprep.subr.mxu0 0.0
  %3551 = vmatpush1.msra.mxu0 0.0
  %3552 = vmatprep.subr.mxu0 0.0
  %3553 = vmatpush1.msra.mxu0 0.0
  %3554 = vmatprep.subr.mxu0 0.0
  %3555 = vmatpush1.msra.mxu0 0.0
  %3556 = vmatprep.subr.mxu0 0.0
  %3557 = vmatpush1.msra.mxu0 0.0
  %3558 = vmatprep.subr.mxu0 0.0
  %3559 = vmatpush1.msra.mxu0 0.0
  %3560 = vmatprep.subr.mxu0 0.0
  %3561 = vmatpush1.msra.mxu0 0.0
  %3562 = vmatprep.subr.mxu0 0.0
  %3563 = vmatpush1.msra.mxu0 0.0
  %3564 = vmatprep.subr.mxu0 0.0
  %3565 = vmatpush1.msra.mxu0 0.0
  %3566 = vmatprep.mubr.f32.mxu0 0.0
  %3567 = vmatmul.mubr.f32.gmra.mrb[0].mxu0 %v3495
  %v3568 = vpop.f32.mrb[0].mxu0
  %v3569 = vadd.f32 0.0, %v3568
  %v3570 = vpop.f32.mrb[0].mxu0
  %v3571 = vadd.f32 0.0, %v3570
  %3572 = vdwg.mxu0
  %3573 = vmatprep.subr.mxu0 %v2379
  %3574 = vmatpush1.msra.mxu0 %v2378
  %3575 = vmatprep.subr.mxu0 %v2383
  %3576 = vmatpush1.msra.mxu0 %v2382
  %3577 = vmatprep.subr.mxu0 %v2387
  %3578 = vmatpush1.msra.mxu0 %v2386
  %3579 = vmatprep.subr.mxu0 %v2391
  %3580 = vmatpush1.msra.mxu0 %v2390
  %3581 = vmatprep.subr.mxu0 %v2395
  %3582 = vmatpush1.msra.mxu0 %v2394
  %3583 = vmatprep.subr.mxu0 %v2399
  %3584 = vmatpush1.msra.mxu0 %v2398
  %3585 = vmatprep.subr.mxu0 %v2403
  %3586 = vmatpush1.msra.mxu0 %v2402
  %3587 = vmatprep.subr.mxu0 %v2407
  %3588 = vmatpush1.msra.mxu0 %v2406
  %3589 = vmatprep.subr.mxu0 %v2411
  %3590 = vmatpush1.msra.mxu0 %v2410
  %3591 = vmatprep.subr.mxu0 %v2415
  %3592 = vmatpush1.msra.mxu0 %v2414
  %3593 = vmatprep.subr.mxu0 %v2419
  %3594 = vmatpush1.msra.mxu0 %v2418
  %3595 = vmatprep.subr.mxu0 %v2423
  %3596 = vmatpush1.msra.mxu0 %v2422
  %3597 = vmatprep.subr.mxu0 %v2427
  %3598 = vmatpush1.msra.mxu0 %v2426
  %3599 = vmatprep.subr.mxu0 %v2431
  %3600 = vmatpush1.msra.mxu0 %v2430
  %3601 = vmatprep.subr.mxu0 %v2435
  %3602 = vmatpush1.msra.mxu0 %v2434
  %3603 = vmatprep.subr.mxu0 %v2439
  %3604 = vmatpush1.msra.mxu0 %v2438
  %3605 = vmatprep.subr.mxu0 0.0
  %3606 = vmatpush1.msra.mxu0 0.0
  %3607 = vmatprep.subr.mxu0 0.0
  %3608 = vmatpush1.msra.mxu0 0.0
  %3609 = vmatprep.subr.mxu0 0.0
  %3610 = vmatpush1.msra.mxu0 0.0
  %3611 = vmatprep.subr.mxu0 0.0
  %3612 = vmatpush1.msra.mxu0 0.0
  %3613 = vmatprep.subr.mxu0 0.0
  %3614 = vmatpush1.msra.mxu0 0.0
  %3615 = vmatprep.subr.mxu0 0.0
  %3616 = vmatpush1.msra.mxu0 0.0
  %3617 = vmatprep.subr.mxu0 0.0
  %3618 = vmatpush1.msra.mxu0 0.0
  %3619 = vmatprep.subr.mxu0 0.0
  %3620 = vmatpush1.msra.mxu0 0.0
  %3621 = vmatprep.subr.mxu0 0.0
  %3622 = vmatpush1.msra.mxu0 0.0
  %3623 = vmatprep.subr.mxu0 0.0
  %3624 = vmatpush1.msra.mxu0 0.0
  %3625 = vmatprep.subr.mxu0 0.0
  %3626 = vmatpush1.msra.mxu0 0.0
  %3627 = vmatprep.subr.mxu0 0.0
  %3628 = vmatpush1.msra.mxu0 0.0
  %3629 = vmatprep.subr.mxu0 0.0
  %3630 = vmatpush1.msra.mxu0 0.0
  %3631 = vmatprep.subr.mxu0 0.0
  %3632 = vmatpush1.msra.mxu0 0.0
  %3633 = vmatprep.subr.mxu0 0.0
  %3634 = vmatpush1.msra.mxu0 0.0
  %3635 = vmatprep.subr.mxu0 0.0
  %3636 = vmatpush1.msra.mxu0 0.0
  %3637 = vmatprep.mubr.f32.mxu0 0.0
  %3638 = vmatmul.mubr.f32.gmra.mrb[0].mxu0 %v3495
  %v3639 = vpop.f32.mrb[0].mxu0
  %v3640 = vadd.f32 0.0, %v3639
  %v3641 = vpop.f32.mrb[0].mxu0
  %v3642 = vadd.f32 0.0, %v3641
  %3643 = vdwg.mxu0
  %v3644 = vadd.f32 %v3498, %v3569
  %v3645 = vadd.f32 %v3499, %v3571
  %v3646 = vadd.f32 %v3500, %v3640
  %v3647 = vadd.f32 %v3501, %v3642
  %v3648 = vsub.f32 0.0, %v3644
  %v3649 = vmul.f32 %v3648, 1.442695
  %v3650 = vpow.pop %v3649
  %v3651 = vadd.f32 %v3650, 1.0
  %v3652 = vrcp.pop %v3651
  %v3653 = vmul.f32 1.0, %v3652
  %v3654 = vsub.f32 0.0, %v3645
  %v3655 = vmul.f32 %v3654, 1.442695
  %v3656 = vpow.pop %v3655
  %v3657 = vadd.f32 %v3656, 1.0
  %v3658 = vrcp.pop %v3657
  %v3659 = vmul.f32 1.0, %v3658
  %v3660 = vtanh.pop %v3646
  %v3661 = vsub.f32 0.0, %v3647
  %v3662 = vmul.f32 %v3661, 1.442695
  %v3663 = vpow.pop %v3662
  %v3664 = vadd.f32 %v3663, 1.0
  %v3665 = vrcp.pop %v3664
  %v3666 = vmul.f32 1.0, %v3665
  %v3667 = vmul.f32 %v3659, %v3493
  %v3668 = vmul.f32 %v3653, %v3660
  %v3669 = vadd.f32 %v3667, %v3668
  %v3670 = vtanh.pop %v3669
  %v3671 = vmul.f32 %v3666, %v3670
  %3672 = vst.msk [vmem:[#allocation4 + $0x30] sm:$0xff] %vm2614, %v3671
  %3673 = vst.msk [vmem:[#allocation4 + $0x48] sm:$0xff] %vm2616, %v3671
  %v3674 = vld [vmem:[#allocation3 + $0xe0] sm:$0xff]
  %v3675 = vld [vmem:[#allocation3 + $0xe8] sm:$0xff]
  %v3676 = vld [vmem:[#allocation3 + $0xf0] sm:$0xff]
  %v3677 = vld [vmem:[#allocation3 + $0xf8] sm:$0xff]
  %3678 = vmatprep.subr.mxu0 %v2377
  %3679 = vmatpush1.msra.mxu0 %v2376
  %3680 = vmatprep.subr.mxu0 %v2381
  %3681 = vmatpush1.msra.mxu0 %v2380
  %3682 = vmatprep.subr.mxu0 %v2385
  %3683 = vmatpush1.msra.mxu0 %v2384
  %3684 = vmatprep.subr.mxu0 %v2389
  %3685 = vmatpush1.msra.mxu0 %v2388
  %3686 = vmatprep.subr.mxu0 %v2393
  %3687 = vmatpush1.msra.mxu0 %v2392
  %3688 = vmatprep.subr.mxu0 %v2397
  %3689 = vmatpush1.msra.mxu0 %v2396
  %3690 = vmatprep.subr.mxu0 %v2401
  %3691 = vmatpush1.msra.mxu0 %v2400
  %3692 = vmatprep.subr.mxu0 %v2405
  %3693 = vmatpush1.msra.mxu0 %v2404
  %3694 = vmatprep.subr.mxu0 %v2409
  %3695 = vmatpush1.msra.mxu0 %v2408
  %3696 = vmatprep.subr.mxu0 %v2413
  %3697 = vmatpush1.msra.mxu0 %v2412
  %3698 = vmatprep.subr.mxu0 %v2417
  %3699 = vmatpush1.msra.mxu0 %v2416
  %3700 = vmatprep.subr.mxu0 %v2421
  %3701 = vmatpush1.msra.mxu0 %v2420
  %3702 = vmatprep.subr.mxu0 %v2425
  %3703 = vmatpush1.msra.mxu0 %v2424
  %3704 = vmatprep.subr.mxu0 %v2429
  %3705 = vmatpush1.msra.mxu0 %v2428
  %3706 = vmatprep.subr.mxu0 %v2433
  %3707 = vmatpush1.msra.mxu0 %v2432
  %3708 = vmatprep.subr.mxu0 %v2437
  %3709 = vmatpush1.msra.mxu0 %v2436
  %3710 = vmatprep.subr.mxu0 0.0
  %3711 = vmatpush1.msra.mxu0 0.0
  %3712 = vmatprep.subr.mxu0 0.0
  %3713 = vmatpush1.msra.mxu0 0.0
  %3714 = vmatprep.subr.mxu0 0.0
  %3715 = vmatpush1.msra.mxu0 0.0
  %3716 = vmatprep.subr.mxu0 0.0
  %3717 = vmatpush1.msra.mxu0 0.0
  %3718 = vmatprep.subr.mxu0 0.0
  %3719 = vmatpush1.msra.mxu0 0.0
  %3720 = vmatprep.subr.mxu0 0.0
  %3721 = vmatpush1.msra.mxu0 0.0
  %3722 = vmatprep.subr.mxu0 0.0
  %3723 = vmatpush1.msra.mxu0 0.0
  %3724 = vmatprep.subr.mxu0 0.0
  %3725 = vmatpush1.msra.mxu0 0.0
  %3726 = vmatprep.subr.mxu0 0.0
  %3727 = vmatpush1.msra.mxu0 0.0
  %3728 = vmatprep.subr.mxu0 0.0
  %3729 = vmatpush1.msra.mxu0 0.0
  %3730 = vmatprep.subr.mxu0 0.0
  %3731 = vmatpush1.msra.mxu0 0.0
  %3732 = vmatprep.subr.mxu0 0.0
  %3733 = vmatpush1.msra.mxu0 0.0
  %3734 = vmatprep.subr.mxu0 0.0
  %3735 = vmatpush1.msra.mxu0 0.0
  %3736 = vmatprep.subr.mxu0 0.0
  %3737 = vmatpush1.msra.mxu0 0.0
  %3738 = vmatprep.subr.mxu0 0.0
  %3739 = vmatpush1.msra.mxu0 0.0
  %3740 = vmatprep.subr.mxu0 0.0
  %3741 = vmatpush1.msra.mxu0 0.0
  %3742 = vmatprep.mubr.f32.mxu0 0.0
  %3743 = vmatmul.mubr.f32.gmra.mrb[0].mxu0 %v3671
  %v3744 = vpop.f32.mrb[0].mxu0
  %v3745 = vadd.f32 0.0, %v3744
  %v3746 = vpop.f32.mrb[0].mxu0
  %v3747 = vadd.f32 0.0, %v3746
  %3748 = vdwg.mxu0
  %3749 = vmatprep.subr.mxu0 %v2379
  %3750 = vmatpush1.msra.mxu0 %v2378
  %3751 = vmatprep.subr.mxu0 %v2383
  %3752 = vmatpush1.msra.mxu0 %v2382
  %3753 = vmatprep.subr.mxu0 %v2387
  %3754 = vmatpush1.msra.mxu0 %v2386
  %3755 = vmatprep.subr.mxu0 %v2391
  %3756 = vmatpush1.msra.mxu0 %v2390
  %3757 = vmatprep.subr.mxu0 %v2395
  %3758 = vmatpush1.msra.mxu0 %v2394
  %3759 = vmatprep.subr.mxu0 %v2399
  %3760 = vmatpush1.msra.mxu0 %v2398
  %3761 = vmatprep.subr.mxu0 %v2403
  %3762 = vmatpush1.msra.mxu0 %v2402
  %3763 = vmatprep.subr.mxu0 %v2407
  %3764 = vmatpush1.msra.mxu0 %v2406
  %3765 = vmatprep.subr.mxu0 %v2411
  %3766 = vmatpush1.msra.mxu0 %v2410
  %3767 = vmatprep.subr.mxu0 %v2415
  %3768 = vmatpush1.msra.mxu0 %v2414
  %3769 = vmatprep.subr.mxu0 %v2419
  %3770 = vmatpush1.msra.mxu0 %v2418
  %3771 = vmatprep.subr.mxu0 %v2423
  %3772 = vmatpush1.msra.mxu0 %v2422
  %3773 = vmatprep.subr.mxu0 %v2427
  %3774 = vmatpush1.msra.mxu0 %v2426
  %3775 = vmatprep.subr.mxu0 %v2431
  %3776 = vmatpush1.msra.mxu0 %v2430
  %3777 = vmatprep.subr.mxu0 %v2435
  %3778 = vmatpush1.msra.mxu0 %v2434
  %3779 = vmatprep.subr.mxu0 %v2439
  %3780 = vmatpush1.msra.mxu0 %v2438
  %3781 = vmatprep.subr.mxu0 0.0
  %3782 = vmatpush1.msra.mxu0 0.0
  %3783 = vmatprep.subr.mxu0 0.0
  %3784 = vmatpush1.msra.mxu0 0.0
  %3785 = vmatprep.subr.mxu0 0.0
  %3786 = vmatpush1.msra.mxu0 0.0
  %3787 = vmatprep.subr.mxu0 0.0
  %3788 = vmatpush1.msra.mxu0 0.0
  %3789 = vmatprep.subr.mxu0 0.0
  %3790 = vmatpush1.msra.mxu0 0.0
  %3791 = vmatprep.subr.mxu0 0.0
  %3792 = vmatpush1.msra.mxu0 0.0
  %3793 = vmatprep.subr.mxu0 0.0
  %3794 = vmatpush1.msra.mxu0 0.0
  %3795 = vmatprep.subr.mxu0 0.0
  %3796 = vmatpush1.msra.mxu0 0.0
  %3797 = vmatprep.subr.mxu0 0.0
  %3798 = vmatpush1.msra.mxu0 0.0
  %3799 = vmatprep.subr.mxu0 0.0
  %3800 = vmatpush1.msra.mxu0 0.0
  %3801 = vmatprep.subr.mxu0 0.0
  %3802 = vmatpush1.msra.mxu0 0.0
  %3803 = vmatprep.subr.mxu0 0.0
  %3804 = vmatpush1.msra.mxu0 0.0
  %3805 = vmatprep.subr.mxu0 0.0
  %3806 = vmatpush1.msra.mxu0 0.0
  %3807 = vmatprep.subr.mxu0 0.0
  %3808 = vmatpush1.msra.mxu0 0.0
  %3809 = vmatprep.subr.mxu0 0.0
  %3810 = vmatpush1.msra.mxu0 0.0
  %3811 = vmatprep.subr.mxu0 0.0
  %3812 = vmatpush1.msra.mxu0 0.0
  %3813 = vmatprep.mubr.f32.mxu0 0.0
  %3814 = vmatmul.mubr.f32.gmra.mrb[0].mxu0 %v3671
  %v3815 = vpop.f32.mrb[0].mxu0
  %v3816 = vadd.f32 0.0, %v3815
  %v3817 = vpop.f32.mrb[0].mxu0
  %v3818 = vadd.f32 0.0, %v3817
  %3819 = vdwg.mxu0
  %v3820 = vadd.f32 %v3674, %v3745
  %v3821 = vadd.f32 %v3675, %v3747
  %v3822 = vadd.f32 %v3676, %v3816
  %v3823 = vadd.f32 %v3677, %v3818
  %v3824 = vsub.f32 0.0, %v3820
  %v3825 = vmul.f32 %v3824, 1.442695
  %v3826 = vpow.pop %v3825
  %v3827 = vadd.f32 %v3826, 1.0
  %v3828 = vrcp.pop %v3827
  %v3829 = vmul.f32 1.0, %v3828
  %v3830 = vsub.f32 0.0, %v3821
  %v3831 = vmul.f32 %v3830, 1.442695
  %v3832 = vpow.pop %v3831
  %v3833 = vadd.f32 %v3832, 1.0
  %v3834 = vrcp.pop %v3833
  %v3835 = vmul.f32 1.0, %v3834
  %v3836 = vtanh.pop %v3822
  %v3837 = vsub.f32 0.0, %v3823
  %v3838 = vmul.f32 %v3837, 1.442695
  %v3839 = vpow.pop %v3838
  %v3840 = vadd.f32 %v3839, 1.0
  %v3841 = vrcp.pop %v3840
  %v3842 = vmul.f32 1.0, %v3841
  %v3843 = vmul.f32 %v3835, %v3669
  %v3844 = vmul.f32 %v3829, %v3836
  %v3845 = vadd.f32 %v3843, %v3844
  %v3846 = vtanh.pop %v3845
  %v3847 = vmul.f32 %v3842, %v3846
  %3848 = vst.msk [vmem:[#allocation4 + $0x38] sm:$0xff] %vm2614, %v3847
  %3849 = vst.msk [vmem:[#allocation4 + $0x40] sm:$0xff] %vm2616, %v3847
  %v3850 = vld [vmem:[#allocation3 + $0x100] sm:$0xff]
  %v3851 = vld [vmem:[#allocation3 + $0x108] sm:$0xff]
  %v3852 = vld [vmem:[#allocation3 + $0x110] sm:$0xff]
  %v3853 = vld [vmem:[#allocation3 + $0x118] sm:$0xff]
  %3854 = vmatprep.subr.mxu0 %v2377
  %3855 = vmatpush1.msra.mxu0 %v2376
  %3856 = vmatprep.subr.mxu0 %v2381
  %3857 = vmatpush1.msra.mxu0 %v2380
  %3858 = vmatprep.subr.mxu0 %v2385
  %3859 = vmatpush1.msra.mxu0 %v2384
  %3860 = vmatprep.subr.mxu0 %v2389
  %3861 = vmatpush1.msra.mxu0 %v2388
  %3862 = vmatprep.subr.mxu0 %v2393
  %3863 = vmatpush1.msra.mxu0 %v2392
  %3864 = vmatprep.subr.mxu0 %v2397
  %3865 = vmatpush1.msra.mxu0 %v2396
  %3866 = vmatprep.subr.mxu0 %v2401
  %3867 = vmatpush1.msra.mxu0 %v2400
  %3868 = vmatprep.subr.mxu0 %v2405
  %3869 = vmatpush1.msra.mxu0 %v2404
  %3870 = vmatprep.subr.mxu0 %v2409
  %3871 = vmatpush1.msra.mxu0 %v2408
  %3872 = vmatprep.subr.mxu0 %v2413
  %3873 = vmatpush1.msra.mxu0 %v2412
  %3874 = vmatprep.subr.mxu0 %v2417
  %3875 = vmatpush1.msra.mxu0 %v2416
  %3876 = vmatprep.subr.mxu0 %v2421
  %3877 = vmatpush1.msra.mxu0 %v2420
  %3878 = vmatprep.subr.mxu0 %v2425
  %3879 = vmatpush1.msra.mxu0 %v2424
  %3880 = vmatprep.subr.mxu0 %v2429
  %3881 = vmatpush1.msra.mxu0 %v2428
  %3882 = vmatprep.subr.mxu0 %v2433
  %3883 = vmatpush1.msra.mxu0 %v2432
  %3884 = vmatprep.subr.mxu0 %v2437
  %3885 = vmatpush1.msra.mxu0 %v2436
  %3886 = vmatprep.subr.mxu0 0.0
  %3887 = vmatpush1.msra.mxu0 0.0
  %3888 = vmatprep.subr.mxu0 0.0
  %3889 = vmatpush1.msra.mxu0 0.0
  %3890 = vmatprep.subr.mxu0 0.0
  %3891 = vmatpush1.msra.mxu0 0.0
  %3892 = vmatprep.subr.mxu0 0.0
  %3893 = vmatpush1.msra.mxu0 0.0
  %3894 = vmatprep.subr.mxu0 0.0
  %3895 = vmatpush1.msra.mxu0 0.0
  %3896 = vmatprep.subr.mxu0 0.0
  %3897 = vmatpush1.msra.mxu0 0.0
  %3898 = vmatprep.subr.mxu0 0.0
  %3899 = vmatpush1.msra.mxu0 0.0
  %3900 = vmatprep.subr.mxu0 0.0
  %3901 = vmatpush1.msra.mxu0 0.0
  %3902 = vmatprep.subr.mxu0 0.0
  %3903 = vmatpush1.msra.mxu0 0.0
  %3904 = vmatprep.subr.mxu0 0.0
  %3905 = vmatpush1.msra.mxu0 0.0
  %3906 = vmatprep.subr.mxu0 0.0
  %3907 = vmatpush1.msra.mxu0 0.0
  %3908 = vmatprep.subr.mxu0 0.0
  %3909 = vmatpush1.msra.mxu0 0.0
  %3910 = vmatprep.subr.mxu0 0.0
  %3911 = vmatpush1.msra.mxu0 0.0
  %3912 = vmatprep.subr.mxu0 0.0
  %3913 = vmatpush1.msra.mxu0 0.0
  %3914 = vmatprep.subr.mxu0 0.0
  %3915 = vmatpush1.msra.mxu0 0.0
  %3916 = vmatprep.subr.mxu0 0.0
  %3917 = vmatpush1.msra.mxu0 0.0
  %3918 = vmatprep.mubr.f32.mxu0 0.0
  %3919 = vmatmul.mubr.f32.gmra.mrb[0].mxu0 %v3847
  %v3920 = vpop.f32.mrb[0].mxu0
  %v3921 = vadd.f32 0.0, %v3920
  %v3922 = vpop.f32.mrb[0].mxu0
  %v3923 = vadd.f32 0.0, %v3922
  %3924 = vdwg.mxu0
  %3925 = vmatprep.subr.mxu0 %v2379
  %3926 = vmatpush1.msra.mxu0 %v2378
  %3927 = vmatprep.subr.mxu0 %v2383
  %3928 = vmatpush1.msra.mxu0 %v2382
  %3929 = vmatprep.subr.mxu0 %v2387
  %3930 = vmatpush1.msra.mxu0 %v2386
  %3931 = vmatprep.subr.mxu0 %v2391
  %3932 = vmatpush1.msra.mxu0 %v2390
  %3933 = vmatprep.subr.mxu0 %v2395
  %3934 = vmatpush1.msra.mxu0 %v2394
  %3935 = vmatprep.subr.mxu0 %v2399
  %3936 = vmatpush1.msra.mxu0 %v2398
  %3937 = vmatprep.subr.mxu0 %v2403
  %3938 = vmatpush1.msra.mxu0 %v2402
  %3939 = vmatprep.subr.mxu0 %v2407
  %3940 = vmatpush1.msra.mxu0 %v2406
  %3941 = vmatprep.subr.mxu0 %v2411
  %3942 = vmatpush1.msra.mxu0 %v2410
  %3943 = vmatprep.subr.mxu0 %v2415
  %3944 = vmatpush1.msra.mxu0 %v2414
  %3945 = vmatprep.subr.mxu0 %v2419
  %3946 = vmatpush1.msra.mxu0 %v2418
  %3947 = vmatprep.subr.mxu0 %v2423
  %3948 = vmatpush1.msra.mxu0 %v2422
  %3949 = vmatprep.subr.mxu0 %v2427
  %3950 = vmatpush1.msra.mxu0 %v2426
  %3951 = vmatprep.subr.mxu0 %v2431
  %3952 = vmatpush1.msra.mxu0 %v2430
  %3953 = vmatprep.subr.mxu0 %v2435
  %3954 = vmatpush1.msra.mxu0 %v2434
  %3955 = vmatprep.subr.mxu0 %v2439
  %3956 = vmatpush1.msra.mxu0 %v2438
  %3957 = vmatprep.subr.mxu0 0.0
  %3958 = vmatpush1.msra.mxu0 0.0
  %3959 = vmatprep.subr.mxu0 0.0
  %3960 = vmatpush1.msra.mxu0 0.0
  %3961 = vmatprep.subr.mxu0 0.0
  %3962 = vmatpush1.msra.mxu0 0.0
  %3963 = vmatprep.subr.mxu0 0.0
  %3964 = vmatpush1.msra.mxu0 0.0
  %3965 = vmatprep.subr.mxu0 0.0
  %3966 = vmatpush1.msra.mxu0 0.0
  %3967 = vmatprep.subr.mxu0 0.0
  %3968 = vmatpush1.msra.mxu0 0.0
  %3969 = vmatprep.subr.mxu0 0.0
  %3970 = vmatpush1.msra.mxu0 0.0
  %3971 = vmatprep.subr.mxu0 0.0
  %3972 = vmatpush1.msra.mxu0 0.0
  %3973 = vmatprep.subr.mxu0 0.0
  %3974 = vmatpush1.msra.mxu0 0.0
  %3975 = vmatprep.subr.mxu0 0.0
  %3976 = vmatpush1.msra.mxu0 0.0
  %3977 = vmatprep.subr.mxu0 0.0
  %3978 = vmatpush1.msra.mxu0 0.0
  %3979 = vmatprep.subr.mxu0 0.0
  %3980 = vmatpush1.msra.mxu0 0.0
  %3981 = vmatprep.subr.mxu0 0.0
  %3982 = vmatpush1.msra.mxu0 0.0
  %3983 = vmatprep.subr.mxu0 0.0
  %3984 = vmatpush1.msra.mxu0 0.0
  %3985 = vmatprep.subr.mxu0 0.0
  %3986 = vmatpush1.msra.mxu0 0.0
  %3987 = vmatprep.subr.mxu0 0.0
  %3988 = vmatpush1.msra.mxu0 0.0
  %3989 = vmatprep.mubr.f32.mxu0 0.0
  %3990 = vmatmul.mubr.f32.gmra.mrb[0].mxu0 %v3847
  %v3991 = vpop.f32.mrb[0].mxu0
  %v3992 = vadd.f32 0.0, %v3991
  %v3993 = vpop.f32.mrb[0].mxu0
  %v3994 = vadd.f32 0.0, %v3993
  %3995 = vdwg.mxu0
  %v3996 = vadd.f32 %v3850, %v3921
  %v3997 = vadd.f32 %v3851, %v3923
  %v3998 = vadd.f32 %v3852, %v3992
  %v3999 = vadd.f32 %v3853, %v3994
  %v4000 = vsub.f32 0.0, %v3996
  %v4001 = vmul.f32 %v4000, 1.442695
  %v4002 = vpow.pop %v4001
  %v4003 = vadd.f32 %v4002, 1.0
  %v4004 = vrcp.pop %v4003
  %v4005 = vmul.f32 1.0, %v4004
  %v4006 = vsub.f32 0.0, %v3997
  %v4007 = vmul.f32 %v4006, 1.442695
  %v4008 = vpow.pop %v4007
  %v4009 = vadd.f32 %v4008, 1.0
  %v4010 = vrcp.pop %v4009
  %v4011 = vmul.f32 1.0, %v4010
  %v4012 = vtanh.pop %v3998
  %v4013 = vsub.f32 0.0, %v3999
  %v4014 = vmul.f32 %v4013, 1.442695
  %v4015 = vpow.pop %v4014
  %v4016 = vadd.f32 %v4015, 1.0
  %v4017 = vrcp.pop %v4016
  %v4018 = vmul.f32 1.0, %v4017
  %v4019 = vmul.f32 %v4011, %v3845
  %v4020 = vmul.f32 %v4005, %v4012
  %v4021 = vadd.f32 %v4019, %v4020
  %v4022 = vtanh.pop %v4021
  %v4023 = vmul.f32 %v4018, %v4022
  %4024 = vst.msk [vmem:[#allocation4 + $0x40] sm:$0xff] %vm2614, %v4023
  %4025 = vst.msk [vmem:[#allocation4 + $0x38] sm:$0xff] %vm2616, %v4023
  %v4026 = vld [vmem:[#allocation3 + $0x120] sm:$0xff]
  %v4027 = vld [vmem:[#allocation3 + $0x128] sm:$0xff]
  %v4028 = vld [vmem:[#allocation3 + $0x130] sm:$0xff]
  %v4029 = vld [vmem:[#allocation3 + $0x138] sm:$0xff]
  %4030 = vmatprep.subr.mxu0 %v2377
  %4031 = vmatpush1.msra.mxu0 %v2376
  %4032 = vmatprep.subr.mxu0 %v2381
  %4033 = vmatpush1.msra.mxu0 %v2380
  %4034 = vmatprep.subr.mxu0 %v2385
  %4035 = vmatpush1.msra.mxu0 %v2384
  %4036 = vmatprep.subr.mxu0 %v2389
  %4037 = vmatpush1.msra.mxu0 %v2388
  %4038 = vmatprep.subr.mxu0 %v2393
  %4039 = vmatpush1.msra.mxu0 %v2392
  %4040 = vmatprep.subr.mxu0 %v2397
  %4041 = vmatpush1.msra.mxu0 %v2396
  %4042 = vmatprep.subr.mxu0 %v2401
  %4043 = vmatpush1.msra.mxu0 %v2400
  %4044 = vmatprep.subr.mxu0 %v2405
  %4045 = vmatpush1.msra.mxu0 %v2404
  %4046 = vmatprep.subr.mxu0 %v2409
  %4047 = vmatpush1.msra.mxu0 %v2408
  %4048 = vmatprep.subr.mxu0 %v2413
  %4049 = vmatpush1.msra.mxu0 %v2412
  %4050 = vmatprep.subr.mxu0 %v2417
  %4051 = vmatpush1.msra.mxu0 %v2416
  %4052 = vmatprep.subr.mxu0 %v2421
  %4053 = vmatpush1.msra.mxu0 %v2420
  %4054 = vmatprep.subr.mxu0 %v2425
  %4055 = vmatpush1.msra.mxu0 %v2424
  %4056 = vmatprep.subr.mxu0 %v2429
  %4057 = vmatpush1.msra.mxu0 %v2428
  %4058 = vmatprep.subr.mxu0 %v2433
  %4059 = vmatpush1.msra.mxu0 %v2432
  %4060 = vmatprep.subr.mxu0 %v2437
  %4061 = vmatpush1.msra.mxu0 %v2436
  %4062 = vmatprep.subr.mxu0 0.0
  %4063 = vmatpush1.msra.mxu0 0.0
  %4064 = vmatprep.subr.mxu0 0.0
  %4065 = vmatpush1.msra.mxu0 0.0
  %4066 = vmatprep.subr.mxu0 0.0
  %4067 = vmatpush1.msra.mxu0 0.0
  %4068 = vmatprep.subr.mxu0 0.0
  %4069 = vmatpush1.msra.mxu0 0.0
  %4070 = vmatprep.subr.mxu0 0.0
  %4071 = vmatpush1.msra.mxu0 0.0
  %4072 = vmatprep.subr.mxu0 0.0
  %4073 = vmatpush1.msra.mxu0 0.0
  %4074 = vmatprep.subr.mxu0 0.0
  %4075 = vmatpush1.msra.mxu0 0.0
  %4076 = vmatprep.subr.mxu0 0.0
  %4077 = vmatpush1.msra.mxu0 0.0
  %4078 = vmatprep.subr.mxu0 0.0
  %4079 = vmatpush1.msra.mxu0 0.0
  %4080 = vmatprep.subr.mxu0 0.0
  %4081 = vmatpush1.msra.mxu0 0.0
  %4082 = vmatprep.subr.mxu0 0.0
  %4083 = vmatpush1.msra.mxu0 0.0
  %4084 = vmatprep.subr.mxu0 0.0
  %4085 = vmatpush1.msra.mxu0 0.0
  %4086 = vmatprep.subr.mxu0 0.0
  %4087 = vmatpush1.msra.mxu0 0.0
  %4088 = vmatprep.subr.mxu0 0.0
  %4089 = vmatpush1.msra.mxu0 0.0
  %4090 = vmatprep.subr.mxu0 0.0
  %4091 = vmatpush1.msra.mxu0 0.0
  %4092 = vmatprep.subr.mxu0 0.0
  %4093 = vmatpush1.msra.mxu0 0.0
  %4094 = vmatprep.mubr.f32.mxu0 0.0
  %4095 = vmatmul.mubr.f32.gmra.mrb[0].mxu0 %v4023
  %v4096 = vpop.f32.mrb[0].mxu0
  %v4097 = vadd.f32 0.0, %v4096
  %v4098 = vpop.f32.mrb[0].mxu0
  %v4099 = vadd.f32 0.0, %v4098
  %4100 = vdwg.mxu0
  %4101 = vmatprep.subr.mxu0 %v2379
  %4102 = vmatpush1.msra.mxu0 %v2378
  %4103 = vmatprep.subr.mxu0 %v2383
  %4104 = vmatpush1.msra.mxu0 %v2382
  %4105 = vmatprep.subr.mxu0 %v2387
  %4106 = vmatpush1.msra.mxu0 %v2386
  %4107 = vmatprep.subr.mxu0 %v2391
  %4108 = vmatpush1.msra.mxu0 %v2390
  %4109 = vmatprep.subr.mxu0 %v2395
  %4110 = vmatpush1.msra.mxu0 %v2394
  %4111 = vmatprep.subr.mxu0 %v2399
  %4112 = vmatpush1.msra.mxu0 %v2398
  %4113 = vmatprep.subr.mxu0 %v2403
  %4114 = vmatpush1.msra.mxu0 %v2402
  %4115 = vmatprep.subr.mxu0 %v2407
  %4116 = vmatpush1.msra.mxu0 %v2406
  %4117 = vmatprep.subr.mxu0 %v2411
  %4118 = vmatpush1.msra.mxu0 %v2410
  %4119 = vmatprep.subr.mxu0 %v2415
  %4120 = vmatpush1.msra.mxu0 %v2414
  %4121 = vmatprep.subr.mxu0 %v2419
  %4122 = vmatpush1.msra.mxu0 %v2418
  %4123 = vmatprep.subr.mxu0 %v2423
  %4124 = vmatpush1.msra.mxu0 %v2422
  %4125 = vmatprep.subr.mxu0 %v2427
  %4126 = vmatpush1.msra.mxu0 %v2426
  %4127 = vmatprep.subr.mxu0 %v2431
  %4128 = vmatpush1.msra.mxu0 %v2430
  %4129 = vmatprep.subr.mxu0 %v2435
  %4130 = vmatpush1.msra.mxu0 %v2434
  %4131 = vmatprep.subr.mxu0 %v2439
  %4132 = vmatpush1.msra.mxu0 %v2438
  %4133 = vmatprep.subr.mxu0 0.0
  %4134 = vmatpush1.msra.mxu0 0.0
  %4135 = vmatprep.subr.mxu0 0.0
  %4136 = vmatpush1.msra.mxu0 0.0
  %4137 = vmatprep.subr.mxu0 0.0
  %4138 = vmatpush1.msra.mxu0 0.0
  %4139 = vmatprep.subr.mxu0 0.0
  %4140 = vmatpush1.msra.mxu0 0.0
  %4141 = vmatprep.subr.mxu0 0.0
  %4142 = vmatpush1.msra.mxu0 0.0
  %4143 = vmatprep.subr.mxu0 0.0
  %4144 = vmatpush1.msra.mxu0 0.0
  %4145 = vmatprep.subr.mxu0 0.0
  %4146 = vmatpush1.msra.mxu0 0.0
  %4147 = vmatprep.subr.mxu0 0.0
  %4148 = vmatpush1.msra.mxu0 0.0
  %4149 = vmatprep.subr.mxu0 0.0
  %4150 = vmatpush1.msra.mxu0 0.0
  %4151 = vmatprep.subr.mxu0 0.0
  %4152 = vmatpush1.msra.mxu0 0.0
  %4153 = vmatprep.subr.mxu0 0.0
  %4154 = vmatpush1.msra.mxu0 0.0
  %4155 = vmatprep.subr.mxu0 0.0
  %4156 = vmatpush1.msra.mxu0 0.0
  %4157 = vmatprep.subr.mxu0 0.0
  %4158 = vmatpush1.msra.mxu0 0.0
  %4159 = vmatprep.subr.mxu0 0.0
  %4160 = vmatpush1.msra.mxu0 0.0
  %4161 = vmatprep.subr.mxu0 0.0
  %4162 = vmatpush1.msra.mxu0 0.0
  %4163 = vmatprep.subr.mxu0 0.0
  %4164 = vmatpush1.msra.mxu0 0.0
  %4165 = vmatprep.mubr.f32.mxu0 0.0
  %4166 = vmatmul.mubr.f32.gmra.mrb[0].mxu0 %v4023
  %v4167 = vpop.f32.mrb[0].mxu0
  %v4168 = vadd.f32 0.0, %v4167
  %v4169 = vpop.f32.mrb[0].mxu0
  %v4170 = vadd.f32 0.0, %v4169
  %4171 = vdwg.mxu0
  %v4172 = vadd.f32 %v4026, %v4097
  %v4173 = vadd.f32 %v4027, %v4099
  %v4174 = vadd.f32 %v4028, %v4168
  %v4175 = vadd.f32 %v4029, %v4170
  %v4176 = vsub.f32 0.0, %v4172
  %v4177 = vmul.f32 %v4176, 1.442695
  %v4178 = vpow.pop %v4177
  %v4179 = vadd.f32 %v4178, 1.0
  %v4180 = vrcp.pop %v4179
  %v4181 = vmul.f32 1.0, %v4180
  %v4182 = vsub.f32 0.0, %v4173
  %v4183 = vmul.f32 %v4182, 1.442695
  %v4184 = vpow.pop %v4183
  %v4185 = vadd.f32 %v4184, 1.0
  %v4186 = vrcp.pop %v4185
  %v4187 = vmul.f32 1.0, %v4186
  %v4188 = vtanh.pop %v4174
  %v4189 = vsub.f32 0.0, %v4175
  %v4190 = vmul.f32 %v4189, 1.442695
  %v4191 = vpow.pop %v4190
  %v4192 = vadd.f32 %v4191, 1.0
  %v4193 = vrcp.pop %v4192
  %v4194 = vmul.f32 1.0, %v4193
  %v4195 = vmul.f32 %v4187, %v4021
  %v4196 = vmul.f32 %v4181, %v4188
  %v4197 = vadd.f32 %v4195, %v4196
  %v4198 = vtanh.pop %v4197
  %v4199 = vmul.f32 %v4194, %v4198
  %4200 = vst.msk [vmem:[#allocation4 + $0x48] sm:$0xff] %vm2614, %v4199
  %4201 = vst.msk [vmem:[#allocation4 + $0x30] sm:$0xff] %vm2616, %v4199
  %v4202 = vld [vmem:[#allocation3 + $0x140] sm:$0xff]
  %v4203 = vld [vmem:[#allocation3 + $0x148] sm:$0xff]
  %v4204 = vld [vmem:[#allocation3 + $0x150] sm:$0xff]
  %v4205 = vld [vmem:[#allocation3 + $0x158] sm:$0xff]
  %4206 = vmatprep.subr.mxu0 %v2377
  %4207 = vmatpush1.msra.mxu0 %v2376
  %4208 = vmatprep.subr.mxu0 %v2381
  %4209 = vmatpush1.msra.mxu0 %v2380
  %4210 = vmatprep.subr.mxu0 %v2385
  %4211 = vmatpush1.msra.mxu0 %v2384
  %4212 = vmatprep.subr.mxu0 %v2389
  %4213 = vmatpush1.msra.mxu0 %v2388
  %4214 = vmatprep.subr.mxu0 %v2393
  %4215 = vmatpush1.msra.mxu0 %v2392
  %4216 = vmatprep.subr.mxu0 %v2397
  %4217 = vmatpush1.msra.mxu0 %v2396
  %4218 = vmatprep.subr.mxu0 %v2401
  %4219 = vmatpush1.msra.mxu0 %v2400
  %4220 = vmatprep.subr.mxu0 %v2405
  %4221 = vmatpush1.msra.mxu0 %v2404
  %4222 = vmatprep.subr.mxu0 %v2409
  %4223 = vmatpush1.msra.mxu0 %v2408
  %4224 = vmatprep.subr.mxu0 %v2413
  %4225 = vmatpush1.msra.mxu0 %v2412
  %4226 = vmatprep.subr.mxu0 %v2417
  %4227 = vmatpush1.msra.mxu0 %v2416
  %4228 = vmatprep.subr.mxu0 %v2421
  %4229 = vmatpush1.msra.mxu0 %v2420
  %4230 = vmatprep.subr.mxu0 %v2425
  %4231 = vmatpush1.msra.mxu0 %v2424
  %4232 = vmatprep.subr.mxu0 %v2429
  %4233 = vmatpush1.msra.mxu0 %v2428
  %4234 = vmatprep.subr.mxu0 %v2433
  %4235 = vmatpush1.msra.mxu0 %v2432
  %4236 = vmatprep.subr.mxu0 %v2437
  %4237 = vmatpush1.msra.mxu0 %v2436
  %4238 = vmatprep.subr.mxu0 0.0
  %4239 = vmatpush1.msra.mxu0 0.0
  %4240 = vmatprep.subr.mxu0 0.0
  %4241 = vmatpush1.msra.mxu0 0.0
  %4242 = vmatprep.subr.mxu0 0.0
  %4243 = vmatpush1.msra.mxu0 0.0
  %4244 = vmatprep.subr.mxu0 0.0
  %4245 = vmatpush1.msra.mxu0 0.0
  %4246 = vmatprep.subr.mxu0 0.0
  %4247 = vmatpush1.msra.mxu0 0.0
  %4248 = vmatprep.subr.mxu0 0.0
  %4249 = vmatpush1.msra.mxu0 0.0
  %4250 = vmatprep.subr.mxu0 0.0
  %4251 = vmatpush1.msra.mxu0 0.0
  %4252 = vmatprep.subr.mxu0 0.0
  %4253 = vmatpush1.msra.mxu0 0.0
  %4254 = vmatprep.subr.mxu0 0.0
  %4255 = vmatpush1.msra.mxu0 0.0
  %4256 = vmatprep.subr.mxu0 0.0
  %4257 = vmatpush1.msra.mxu0 0.0
  %4258 = vmatprep.subr.mxu0 0.0
  %4259 = vmatpush1.msra.mxu0 0.0
  %4260 = vmatprep.subr.mxu0 0.0
  %4261 = vmatpush1.msra.mxu0 0.0
  %4262 = vmatprep.subr.mxu0 0.0
  %4263 = vmatpush1.msra.mxu0 0.0
  %4264 = vmatprep.subr.mxu0 0.0
  %4265 = vmatpush1.msra.mxu0 0.0
  %4266 = vmatprep.subr.mxu0 0.0
  %4267 = vmatpush1.msra.mxu0 0.0
  %4268 = vmatprep.subr.mxu0 0.0
  %4269 = vmatpush1.msra.mxu0 0.0
  %4270 = vmatprep.mubr.f32.mxu0 0.0
  %4271 = vmatmul.mubr.f32.gmra.mrb[0].mxu0 %v4199
  %v4272 = vpop.f32.mrb[0].mxu0
  %v4273 = vadd.f32 0.0, %v4272
  %v4274 = vpop.f32.mrb[0].mxu0
  %v4275 = vadd.f32 0.0, %v4274
  %4276 = vdwg.mxu0
  %4277 = vmatprep.subr.mxu0 %v2379
  %4278 = vmatpush1.msra.mxu0 %v2378
  %4279 = vmatprep.subr.mxu0 %v2383
  %4280 = vmatpush1.msra.mxu0 %v2382
  %4281 = vmatprep.subr.mxu0 %v2387
  %4282 = vmatpush1.msra.mxu0 %v2386
  %4283 = vmatprep.subr.mxu0 %v2391
  %4284 = vmatpush1.msra.mxu0 %v2390
  %4285 = vmatprep.subr.mxu0 %v2395
  %4286 = vmatpush1.msra.mxu0 %v2394
  %4287 = vmatprep.subr.mxu0 %v2399
  %4288 = vmatpush1.msra.mxu0 %v2398
  %4289 = vmatprep.subr.mxu0 %v2403
  %4290 = vmatpush1.msra.mxu0 %v2402
  %4291 = vmatprep.subr.mxu0 %v2407
  %4292 = vmatpush1.msra.mxu0 %v2406
  %4293 = vmatprep.subr.mxu0 %v2411
  %4294 = vmatpush1.msra.mxu0 %v2410
  %4295 = vmatprep.subr.mxu0 %v2415
  %4296 = vmatpush1.msra.mxu0 %v2414
  %4297 = vmatprep.subr.mxu0 %v2419
  %4298 = vmatpush1.msra.mxu0 %v2418
  %4299 = vmatprep.subr.mxu0 %v2423
  %4300 = vmatpush1.msra.mxu0 %v2422
  %4301 = vmatprep.subr.mxu0 %v2427
  %4302 = vmatpush1.msra.mxu0 %v2426
  %4303 = vmatprep.subr.mxu0 %v2431
  %4304 = vmatpush1.msra.mxu0 %v2430
  %4305 = vmatprep.subr.mxu0 %v2435
  %4306 = vmatpush1.msra.mxu0 %v2434
  %4307 = vmatprep.subr.mxu0 %v2439
  %4308 = vmatpush1.msra.mxu0 %v2438
  %4309 = vmatprep.subr.mxu0 0.0
  %4310 = vmatpush1.msra.mxu0 0.0
  %4311 = vmatprep.subr.mxu0 0.0
  %4312 = vmatpush1.msra.mxu0 0.0
  %4313 = vmatprep.subr.mxu0 0.0
  %4314 = vmatpush1.msra.mxu0 0.0
  %4315 = vmatprep.subr.mxu0 0.0
  %4316 = vmatpush1.msra.mxu0 0.0
  %4317 = vmatprep.subr.mxu0 0.0
  %4318 = vmatpush1.msra.mxu0 0.0
  %4319 = vmatprep.subr.mxu0 0.0
  %4320 = vmatpush1.msra.mxu0 0.0
  %4321 = vmatprep.subr.mxu0 0.0
  %4322 = vmatpush1.msra.mxu0 0.0
  %4323 = vmatprep.subr.mxu0 0.0
  %4324 = vmatpush1.msra.mxu0 0.0
  %4325 = vmatprep.subr.mxu0 0.0
  %4326 = vmatpush1.msra.mxu0 0.0
  %4327 = vmatprep.subr.mxu0 0.0
  %4328 = vmatpush1.msra.mxu0 0.0
  %4329 = vmatprep.subr.mxu0 0.0
  %4330 = vmatpush1.msra.mxu0 0.0
  %4331 = vmatprep.subr.mxu0 0.0
  %4332 = vmatpush1.msra.mxu0 0.0
  %4333 = vmatprep.subr.mxu0 0.0
  %4334 = vmatpush1.msra.mxu0 0.0
  %4335 = vmatprep.subr.mxu0 0.0
  %4336 = vmatpush1.msra.mxu0 0.0
  %4337 = vmatprep.subr.mxu0 0.0
  %4338 = vmatpush1.msra.mxu0 0.0
  %4339 = vmatprep.subr.mxu0 0.0
  %4340 = vmatpush1.msra.mxu0 0.0
  %4341 = vmatprep.mubr.f32.mxu0 0.0
  %4342 = vmatmul.mubr.f32.gmra.mrb[0].mxu0 %v4199
  %v4343 = vpop.f32.mrb[0].mxu0
  %v4344 = vadd.f32 0.0, %v4343
  %v4345 = vpop.f32.mrb[0].mxu0
  %v4346 = vadd.f32 0.0, %v4345
  %4347 = vdwg.mxu0
  %v4348 = vadd.f32 %v4202, %v4273
  %v4349 = vadd.f32 %v4203, %v4275
  %v4350 = vadd.f32 %v4204, %v4344
  %v4351 = vadd.f32 %v4205, %v4346
  %v4352 = vsub.f32 0.0, %v4348
  %v4353 = vmul.f32 %v4352, 1.442695
  %v4354 = vpow.pop %v4353
  %v4355 = vadd.f32 %v4354, 1.0
  %v4356 = vrcp.pop %v4355
  %v4357 = vmul.f32 1.0, %v4356
  %v4358 = vsub.f32 0.0, %v4349
  %v4359 = vmul.f32 %v4358, 1.442695
  %v4360 = vpow.pop %v4359
  %v4361 = vadd.f32 %v4360, 1.0
  %v4362 = vrcp.pop %v4361
  %v4363 = vmul.f32 1.0, %v4362
  %v4364 = vtanh.pop %v4350
  %v4365 = vsub.f32 0.0, %v4351
  %v4366 = vmul.f32 %v4365, 1.442695
  %v4367 = vpow.pop %v4366
  %v4368 = vadd.f32 %v4367, 1.0
  %v4369 = vrcp.pop %v4368
  %v4370 = vmul.f32 1.0, %v4369
  %v4371 = vmul.f32 %v4363, %v4197
  %v4372 = vmul.f32 %v4357, %v4364
  %v4373 = vadd.f32 %v4371, %v4372
  %v4374 = vtanh.pop %v4373
  %v4375 = vmul.f32 %v4370, %v4374
  %4376 = vst.msk [vmem:[#allocation4 + $0x50] sm:$0xff] %vm2614, %v4375
  %4377 = vst.msk [vmem:[#allocation4 + $0x28] sm:$0xff] %vm2616, %v4375
  %v4378 = vld [vmem:[#allocation3 + $0x160] sm:$0xff]
  %v4379 = vld [vmem:[#allocation3 + $0x168] sm:$0xff]
  %v4380 = vld [vmem:[#allocation3 + $0x170] sm:$0xff]
  %v4381 = vld [vmem:[#allocation3 + $0x178] sm:$0xff]
  %4382 = vmatprep.subr.mxu0 %v2377
  %4383 = vmatpush1.msra.mxu0 %v2376
  %4384 = vmatprep.subr.mxu0 %v2381
  %4385 = vmatpush1.msra.mxu0 %v2380
  %4386 = vmatprep.subr.mxu0 %v2385
  %4387 = vmatpush1.msra.mxu0 %v2384
  %4388 = vmatprep.subr.mxu0 %v2389
  %4389 = vmatpush1.msra.mxu0 %v2388
  %4390 = vmatprep.subr.mxu0 %v2393
  %4391 = vmatpush1.msra.mxu0 %v2392
  %4392 = vmatprep.subr.mxu0 %v2397
  %4393 = vmatpush1.msra.mxu0 %v2396
  %4394 = vmatprep.subr.mxu0 %v2401
  %4395 = vmatpush1.msra.mxu0 %v2400
  %4396 = vmatprep.subr.mxu0 %v2405
  %4397 = vmatpush1.msra.mxu0 %v2404
  %4398 = vmatprep.subr.mxu0 %v2409
  %4399 = vmatpush1.msra.mxu0 %v2408
  %4400 = vmatprep.subr.mxu0 %v2413
  %4401 = vmatpush1.msra.mxu0 %v2412
  %4402 = vmatprep.subr.mxu0 %v2417
  %4403 = vmatpush1.msra.mxu0 %v2416
  %4404 = vmatprep.subr.mxu0 %v2421
  %4405 = vmatpush1.msra.mxu0 %v2420
  %4406 = vmatprep.subr.mxu0 %v2425
  %4407 = vmatpush1.msra.mxu0 %v2424
  %4408 = vmatprep.subr.mxu0 %v2429
  %4409 = vmatpush1.msra.mxu0 %v2428
  %4410 = vmatprep.subr.mxu0 %v2433
  %4411 = vmatpush1.msra.mxu0 %v2432
  %4412 = vmatprep.subr.mxu0 %v2437
  %4413 = vmatpush1.msra.mxu0 %v2436
  %4414 = vmatprep.subr.mxu0 0.0
  %4415 = vmatpush1.msra.mxu0 0.0
  %4416 = vmatprep.subr.mxu0 0.0
  %4417 = vmatpush1.msra.mxu0 0.0
  %4418 = vmatprep.subr.mxu0 0.0
  %4419 = vmatpush1.msra.mxu0 0.0
  %4420 = vmatprep.subr.mxu0 0.0
  %4421 = vmatpush1.msra.mxu0 0.0
  %4422 = vmatprep.subr.mxu0 0.0
  %4423 = vmatpush1.msra.mxu0 0.0
  %4424 = vmatprep.subr.mxu0 0.0
  %4425 = vmatpush1.msra.mxu0 0.0
  %4426 = vmatprep.subr.mxu0 0.0
  %4427 = vmatpush1.msra.mxu0 0.0
  %4428 = vmatprep.subr.mxu0 0.0
  %4429 = vmatpush1.msra.mxu0 0.0
  %4430 = vmatprep.subr.mxu0 0.0
  %4431 = vmatpush1.msra.mxu0 0.0
  %4432 = vmatprep.subr.mxu0 0.0
  %4433 = vmatpush1.msra.mxu0 0.0
  %4434 = vmatprep.subr.mxu0 0.0
  %4435 = vmatpush1.msra.mxu0 0.0
  %4436 = vmatprep.subr.mxu0 0.0
  %4437 = vmatpush1.msra.mxu0 0.0
  %4438 = vmatprep.subr.mxu0 0.0
  %4439 = vmatpush1.msra.mxu0 0.0
  %4440 = vmatprep.subr.mxu0 0.0
  %4441 = vmatpush1.msra.mxu0 0.0
  %4442 = vmatprep.subr.mxu0 0.0
  %4443 = vmatpush1.msra.mxu0 0.0
  %4444 = vmatprep.subr.mxu0 0.0
  %4445 = vmatpush1.msra.mxu0 0.0
  %4446 = vmatprep.mubr.f32.mxu0 0.0
  %4447 = vmatmul.mubr.f32.gmra.mrb[0].mxu0 %v4375
  %v4448 = vpop.f32.mrb[0].mxu0
  %v4449 = vadd.f32 0.0, %v4448
  %v4450 = vpop.f32.mrb[0].mxu0
  %v4451 = vadd.f32 0.0, %v4450
  %4452 = vdwg.mxu0
  %4453 = vmatprep.subr.mxu0 %v2379
  %4454 = vmatpush1.msra.mxu0 %v2378
  %4455 = vmatprep.subr.mxu0 %v2383
  %4456 = vmatpush1.msra.mxu0 %v2382
  %4457 = vmatprep.subr.mxu0 %v2387
  %4458 = vmatpush1.msra.mxu0 %v2386
  %4459 = vmatprep.subr.mxu0 %v2391
  %4460 = vmatpush1.msra.mxu0 %v2390
  %4461 = vmatprep.subr.mxu0 %v2395
  %4462 = vmatpush1.msra.mxu0 %v2394
  %4463 = vmatprep.subr.mxu0 %v2399
  %4464 = vmatpush1.msra.mxu0 %v2398
  %4465 = vmatprep.subr.mxu0 %v2403
  %4466 = vmatpush1.msra.mxu0 %v2402
  %4467 = vmatprep.subr.mxu0 %v2407
  %4468 = vmatpush1.msra.mxu0 %v2406
  %4469 = vmatprep.subr.mxu0 %v2411
  %4470 = vmatpush1.msra.mxu0 %v2410
  %4471 = vmatprep.subr.mxu0 %v2415
  %4472 = vmatpush1.msra.mxu0 %v2414
  %4473 = vmatprep.subr.mxu0 %v2419
  %4474 = vmatpush1.msra.mxu0 %v2418
  %4475 = vmatprep.subr.mxu0 %v2423
  %4476 = vmatpush1.msra.mxu0 %v2422
  %4477 = vmatprep.subr.mxu0 %v2427
  %4478 = vmatpush1.msra.mxu0 %v2426
  %4479 = vmatprep.subr.mxu0 %v2431
  %4480 = vmatpush1.msra.mxu0 %v2430
  %4481 = vmatprep.subr.mxu0 %v2435
  %4482 = vmatpush1.msra.mxu0 %v2434
  %4483 = vmatprep.subr.mxu0 %v2439
  %4484 = vmatpush1.msra.mxu0 %v2438
  %4485 = vmatprep.subr.mxu0 0.0
  %4486 = vmatpush1.msra.mxu0 0.0
  %4487 = vmatprep.subr.mxu0 0.0
  %4488 = vmatpush1.msra.mxu0 0.0
  %4489 = vmatprep.subr.mxu0 0.0
  %4490 = vmatpush1.msra.mxu0 0.0
  %4491 = vmatprep.subr.mxu0 0.0
  %4492 = vmatpush1.msra.mxu0 0.0
  %4493 = vmatprep.subr.mxu0 0.0
  %4494 = vmatpush1.msra.mxu0 0.0
  %4495 = vmatprep.subr.mxu0 0.0
  %4496 = vmatpush1.msra.mxu0 0.0
  %4497 = vmatprep.subr.mxu0 0.0
  %4498 = vmatpush1.msra.mxu0 0.0
  %4499 = vmatprep.subr.mxu0 0.0
  %4500 = vmatpush1.msra.mxu0 0.0
  %4501 = vmatprep.subr.mxu0 0.0
  %4502 = vmatpush1.msra.mxu0 0.0
  %4503 = vmatprep.subr.mxu0 0.0
  %4504 = vmatpush1.msra.mxu0 0.0
  %4505 = vmatprep.subr.mxu0 0.0
  %4506 = vmatpush1.msra.mxu0 0.0
  %4507 = vmatprep.subr.mxu0 0.0
  %4508 = vmatpush1.msra.mxu0 0.0
  %4509 = vmatprep.subr.mxu0 0.0
  %4510 = vmatpush1.msra.mxu0 0.0
  %4511 = vmatprep.subr.mxu0 0.0
  %4512 = vmatpush1.msra.mxu0 0.0
  %4513 = vmatprep.subr.mxu0 0.0
  %4514 = vmatpush1.msra.mxu0 0.0
  %4515 = vmatprep.subr.mxu0 0.0
  %4516 = vmatpush1.msra.mxu0 0.0
  %4517 = vmatprep.mubr.f32.mxu0 0.0
  %4518 = vmatmul.mubr.f32.gmra.mrb[0].mxu0 %v4375
  %v4519 = vpop.f32.mrb[0].mxu0
  %v4520 = vadd.f32 0.0, %v4519
  %v4521 = vpop.f32.mrb[0].mxu0
  %v4522 = vadd.f32 0.0, %v4521
  %4523 = vdwg.mxu0
  %v4524 = vadd.f32 %v4378, %v4449
  %v4525 = vadd.f32 %v4379, %v4451
  %v4526 = vadd.f32 %v4380, %v4520
  %v4527 = vadd.f32 %v4381, %v4522
  %v4528 = vsub.f32 0.0, %v4524
  %v4529 = vmul.f32 %v4528, 1.442695
  %v4530 = vpow.pop %v4529
  %v4531 = vadd.f32 %v4530, 1.0
  %v4532 = vrcp.pop %v4531
  %v4533 = vmul.f32 1.0, %v4532
  %v4534 = vsub.f32 0.0, %v4525
  %v4535 = vmul.f32 %v4534, 1.442695
  %v4536 = vpow.pop %v4535
  %v4537 = vadd.f32 %v4536, 1.0
  %v4538 = vrcp.pop %v4537
  %v4539 = vmul.f32 1.0, %v4538
  %v4540 = vtanh.pop %v4526
  %v4541 = vsub.f32 0.0, %v4527
  %v4542 = vmul.f32 %v4541, 1.442695
  %v4543 = vpow.pop %v4542
  %v4544 = vadd.f32 %v4543, 1.0
  %v4545 = vrcp.pop %v4544
  %v4546 = vmul.f32 1.0, %v4545
  %v4547 = vmul.f32 %v4539, %v4373
  %v4548 = vmul.f32 %v4533, %v4540
  %v4549 = vadd.f32 %v4547, %v4548
  %v4550 = vtanh.pop %v4549
  %v4551 = vmul.f32 %v4546, %v4550
  %4552 = vst.msk [vmem:[#allocation4 + $0x58] sm:$0xff] %vm2614, %v4551
  %4553 = vst.msk [vmem:[#allocation4 + $0x20] sm:$0xff] %vm2616, %v4551
  %v4554 = vld [vmem:[#allocation3 + $0x180] sm:$0xff]
  %v4555 = vld [vmem:[#allocation3 + $0x188] sm:$0xff]
  %v4556 = vld [vmem:[#allocation3 + $0x190] sm:$0xff]
  %v4557 = vld [vmem:[#allocation3 + $0x198] sm:$0xff]
  %4558 = vmatprep.subr.mxu0 %v2377
  %4559 = vmatpush1.msra.mxu0 %v2376
  %4560 = vmatprep.subr.mxu0 %v2381
  %4561 = vmatpush1.msra.mxu0 %v2380
  %4562 = vmatprep.subr.mxu0 %v2385
  %4563 = vmatpush1.msra.mxu0 %v2384
  %4564 = vmatprep.subr.mxu0 %v2389
  %4565 = vmatpush1.msra.mxu0 %v2388
  %4566 = vmatprep.subr.mxu0 %v2393
  %4567 = vmatpush1.msra.mxu0 %v2392
  %4568 = vmatprep.subr.mxu0 %v2397
  %4569 = vmatpush1.msra.mxu0 %v2396
  %4570 = vmatprep.subr.mxu0 %v2401
  %4571 = vmatpush1.msra.mxu0 %v2400
  %4572 = vmatprep.subr.mxu0 %v2405
  %4573 = vmatpush1.msra.mxu0 %v2404
  %4574 = vmatprep.subr.mxu0 %v2409
  %4575 = vmatpush1.msra.mxu0 %v2408
  %4576 = vmatprep.subr.mxu0 %v2413
  %4577 = vmatpush1.msra.mxu0 %v2412
  %4578 = vmatprep.subr.mxu0 %v2417
  %4579 = vmatpush1.msra.mxu0 %v2416
  %4580 = vmatprep.subr.mxu0 %v2421
  %4581 = vmatpush1.msra.mxu0 %v2420
  %4582 = vmatprep.subr.mxu0 %v2425
  %4583 = vmatpush1.msra.mxu0 %v2424
  %4584 = vmatprep.subr.mxu0 %v2429
  %4585 = vmatpush1.msra.mxu0 %v2428
  %4586 = vmatprep.subr.mxu0 %v2433
  %4587 = vmatpush1.msra.mxu0 %v2432
  %4588 = vmatprep.subr.mxu0 %v2437
  %4589 = vmatpush1.msra.mxu0 %v2436
  %4590 = vmatprep.subr.mxu0 0.0
  %4591 = vmatpush1.msra.mxu0 0.0
  %4592 = vmatprep.subr.mxu0 0.0
  %4593 = vmatpush1.msra.mxu0 0.0
  %4594 = vmatprep.subr.mxu0 0.0
  %4595 = vmatpush1.msra.mxu0 0.0
  %4596 = vmatprep.subr.mxu0 0.0
  %4597 = vmatpush1.msra.mxu0 0.0
  %4598 = vmatprep.subr.mxu0 0.0
  %4599 = vmatpush1.msra.mxu0 0.0
  %4600 = vmatprep.subr.mxu0 0.0
  %4601 = vmatpush1.msra.mxu0 0.0
  %4602 = vmatprep.subr.mxu0 0.0
  %4603 = vmatpush1.msra.mxu0 0.0
  %4604 = vmatprep.subr.mxu0 0.0
  %4605 = vmatpush1.msra.mxu0 0.0
  %4606 = vmatprep.subr.mxu0 0.0
  %4607 = vmatpush1.msra.mxu0 0.0
  %4608 = vmatprep.subr.mxu0 0.0
  %4609 = vmatpush1.msra.mxu0 0.0
  %4610 = vmatprep.subr.mxu0 0.0
  %4611 = vmatpush1.msra.mxu0 0.0
  %4612 = vmatprep.subr.mxu0 0.0
  %4613 = vmatpush1.msra.mxu0 0.0
  %4614 = vmatprep.subr.mxu0 0.0
  %4615 = vmatpush1.msra.mxu0 0.0
  %4616 = vmatprep.subr.mxu0 0.0
  %4617 = vmatpush1.msra.mxu0 0.0
  %4618 = vmatprep.subr.mxu0 0.0
  %4619 = vmatpush1.msra.mxu0 0.0
  %4620 = vmatprep.subr.mxu0 0.0
  %4621 = vmatpush1.msra.mxu0 0.0
  %4622 = vmatprep.mubr.f32.mxu0 0.0
  %4623 = vmatmul.mubr.f32.gmra.mrb[0].mxu0 %v4551
  %v4624 = vpop.f32.mrb[0].mxu0
  %v4625 = vadd.f32 0.0, %v4624
  %v4626 = vpop.f32.mrb[0].mxu0
  %v4627 = vadd.f32 0.0, %v4626
  %4628 = vdwg.mxu0
  %4629 = vmatprep.subr.mxu0 %v2379
  %4630 = vmatpush1.msra.mxu0 %v2378
  %4631 = vmatprep.subr.mxu0 %v2383
  %4632 = vmatpush1.msra.mxu0 %v2382
  %4633 = vmatprep.subr.mxu0 %v2387
  %4634 = vmatpush1.msra.mxu0 %v2386
  %4635 = vmatprep.subr.mxu0 %v2391
  %4636 = vmatpush1.msra.mxu0 %v2390
  %4637 = vmatprep.subr.mxu0 %v2395
  %4638 = vmatpush1.msra.mxu0 %v2394
  %4639 = vmatprep.subr.mxu0 %v2399
  %4640 = vmatpush1.msra.mxu0 %v2398
  %4641 = vmatprep.subr.mxu0 %v2403
  %4642 = vmatpush1.msra.mxu0 %v2402
  %4643 = vmatprep.subr.mxu0 %v2407
  %4644 = vmatpush1.msra.mxu0 %v2406
  %4645 = vmatprep.subr.mxu0 %v2411
  %4646 = vmatpush1.msra.mxu0 %v2410
  %4647 = vmatprep.subr.mxu0 %v2415
  %4648 = vmatpush1.msra.mxu0 %v2414
  %4649 = vmatprep.subr.mxu0 %v2419
  %4650 = vmatpush1.msra.mxu0 %v2418
  %4651 = vmatprep.subr.mxu0 %v2423
  %4652 = vmatpush1.msra.mxu0 %v2422
  %4653 = vmatprep.subr.mxu0 %v2427
  %4654 = vmatpush1.msra.mxu0 %v2426
  %4655 = vmatprep.subr.mxu0 %v2431
  %4656 = vmatpush1.msra.mxu0 %v2430
  %4657 = vmatprep.subr.mxu0 %v2435
  %4658 = vmatpush1.msra.mxu0 %v2434
  %4659 = vmatprep.subr.mxu0 %v2439
  %4660 = vmatpush1.msra.mxu0 %v2438
  %4661 = vmatprep.subr.mxu0 0.0
  %4662 = vmatpush1.msra.mxu0 0.0
  %4663 = vmatprep.subr.mxu0 0.0
  %4664 = vmatpush1.msra.mxu0 0.0
  %4665 = vmatprep.subr.mxu0 0.0
  %4666 = vmatpush1.msra.mxu0 0.0
  %4667 = vmatprep.subr.mxu0 0.0
  %4668 = vmatpush1.msra.mxu0 0.0
  %4669 = vmatprep.subr.mxu0 0.0
  %4670 = vmatpush1.msra.mxu0 0.0
  %4671 = vmatprep.subr.mxu0 0.0
  %4672 = vmatpush1.msra.mxu0 0.0
  %4673 = vmatprep.subr.mxu0 0.0
  %4674 = vmatpush1.msra.mxu0 0.0
  %4675 = vmatprep.subr.mxu0 0.0
  %4676 = vmatpush1.msra.mxu0 0.0
  %4677 = vmatprep.subr.mxu0 0.0
  %4678 = vmatpush1.msra.mxu0 0.0
  %4679 = vmatprep.subr.mxu0 0.0
  %4680 = vmatpush1.msra.mxu0 0.0
  %4681 = vmatprep.subr.mxu0 0.0
  %4682 = vmatpush1.msra.mxu0 0.0
  %4683 = vmatprep.subr.mxu0 0.0
  %4684 = vmatpush1.msra.mxu0 0.0
  %4685 = vmatprep.subr.mxu0 0.0
  %4686 = vmatpush1.msra.mxu0 0.0
  %4687 = vmatprep.subr.mxu0 0.0
  %4688 = vmatpush1.msra.mxu0 0.0
  %4689 = vmatprep.subr.mxu0 0.0
  %4690 = vmatpush1.msra.mxu0 0.0
  %4691 = vmatprep.subr.mxu0 0.0
  %4692 = vmatpush1.msra.mxu0 0.0
  %4693 = vmatprep.mubr.f32.mxu0 0.0
  %4694 = vmatmul.mubr.f32.gmra.mrb[0].mxu0 %v4551
  %v4695 = vpop.f32.mrb[0].mxu0
  %v4696 = vadd.f32 0.0, %v4695
  %v4697 = vpop.f32.mrb[0].mxu0
  %v4698 = vadd.f32 0.0, %v4697
  %4699 = vdwg.mxu0
  %v4700 = vadd.f32 %v4554, %v4625
  %v4701 = vadd.f32 %v4555, %v4627
  %v4702 = vadd.f32 %v4556, %v4696
  %v4703 = vadd.f32 %v4557, %v4698
  %v4704 = vsub.f32 0.0, %v4700
  %v4705 = vmul.f32 %v4704, 1.442695
  %v4706 = vpow.pop %v4705
  %v4707 = vadd.f32 %v4706, 1.0
  %v4708 = vrcp.pop %v4707
  %v4709 = vmul.f32 1.0, %v4708
  %v4710 = vsub.f32 0.0, %v4701
  %v4711 = vmul.f32 %v4710, 1.442695
  %v4712 = vpow.pop %v4711
  %v4713 = vadd.f32 %v4712, 1.0
  %v4714 = vrcp.pop %v4713
  %v4715 = vmul.f32 1.0, %v4714
  %v4716 = vtanh.pop %v4702
  %v4717 = vsub.f32 0.0, %v4703
  %v4718 = vmul.f32 %v4717, 1.442695
  %v4719 = vpow.pop %v4718
  %v4720 = vadd.f32 %v4719, 1.0
  %v4721 = vrcp.pop %v4720
  %v4722 = vmul.f32 1.0, %v4721
  %v4723 = vmul.f32 %v4715, %v4549
  %v4724 = vmul.f32 %v4709, %v4716
  %v4725 = vadd.f32 %v4723, %v4724
  %v4726 = vtanh.pop %v4725
  %v4727 = vmul.f32 %v4722, %v4726
  %4728 = vst.msk [vmem:[#allocation4 + $0x60] sm:$0xff] %vm2614, %v4727
  %4729 = vst.msk [vmem:[#allocation4 + $0x18] sm:$0xff] %vm2616, %v4727
  %v4730 = vld [vmem:[#allocation3 + $0x1a0] sm:$0xff]
  %v4731 = vld [vmem:[#allocation3 + $0x1a8] sm:$0xff]
  %v4732 = vld [vmem:[#allocation3 + $0x1b0] sm:$0xff]
  %v4733 = vld [vmem:[#allocation3 + $0x1b8] sm:$0xff]
  %4734 = vmatprep.subr.mxu0 %v2377
  %4735 = vmatpush1.msra.mxu0 %v2376
  %4736 = vmatprep.subr.mxu0 %v2381
  %4737 = vmatpush1.msra.mxu0 %v2380
  %4738 = vmatprep.subr.mxu0 %v2385
  %4739 = vmatpush1.msra.mxu0 %v2384
  %4740 = vmatprep.subr.mxu0 %v2389
  %4741 = vmatpush1.msra.mxu0 %v2388
  %4742 = vmatprep.subr.mxu0 %v2393
  %4743 = vmatpush1.msra.mxu0 %v2392
  %4744 = vmatprep.subr.mxu0 %v2397
  %4745 = vmatpush1.msra.mxu0 %v2396
  %4746 = vmatprep.subr.mxu0 %v2401
  %4747 = vmatpush1.msra.mxu0 %v2400
  %4748 = vmatprep.subr.mxu0 %v2405
  %4749 = vmatpush1.msra.mxu0 %v2404
  %4750 = vmatprep.subr.mxu0 %v2409
  %4751 = vmatpush1.msra.mxu0 %v2408
  %4752 = vmatprep.subr.mxu0 %v2413
  %4753 = vmatpush1.msra.mxu0 %v2412
  %4754 = vmatprep.subr.mxu0 %v2417
  %4755 = vmatpush1.msra.mxu0 %v2416
  %4756 = vmatprep.subr.mxu0 %v2421
  %4757 = vmatpush1.msra.mxu0 %v2420
  %4758 = vmatprep.subr.mxu0 %v2425
  %4759 = vmatpush1.msra.mxu0 %v2424
  %4760 = vmatprep.subr.mxu0 %v2429
  %4761 = vmatpush1.msra.mxu0 %v2428
  %4762 = vmatprep.subr.mxu0 %v2433
  %4763 = vmatpush1.msra.mxu0 %v2432
  %4764 = vmatprep.subr.mxu0 %v2437
  %4765 = vmatpush1.msra.mxu0 %v2436
  %4766 = vmatprep.subr.mxu0 0.0
  %4767 = vmatpush1.msra.mxu0 0.0
  %4768 = vmatprep.subr.mxu0 0.0
  %4769 = vmatpush1.msra.mxu0 0.0
  %4770 = vmatprep.subr.mxu0 0.0
  %4771 = vmatpush1.msra.mxu0 0.0
  %4772 = vmatprep.subr.mxu0 0.0
  %4773 = vmatpush1.msra.mxu0 0.0
  %4774 = vmatprep.subr.mxu0 0.0
  %4775 = vmatpush1.msra.mxu0 0.0
  %4776 = vmatprep.subr.mxu0 0.0
  %4777 = vmatpush1.msra.mxu0 0.0
  %4778 = vmatprep.subr.mxu0 0.0
  %4779 = vmatpush1.msra.mxu0 0.0
  %4780 = vmatprep.subr.mxu0 0.0
  %4781 = vmatpush1.msra.mxu0 0.0
  %4782 = vmatprep.subr.mxu0 0.0
  %4783 = vmatpush1.msra.mxu0 0.0
  %4784 = vmatprep.subr.mxu0 0.0
  %4785 = vmatpush1.msra.mxu0 0.0
  %4786 = vmatprep.subr.mxu0 0.0
  %4787 = vmatpush1.msra.mxu0 0.0
  %4788 = vmatprep.subr.mxu0 0.0
  %4789 = vmatpush1.msra.mxu0 0.0
  %4790 = vmatprep.subr.mxu0 0.0
  %4791 = vmatpush1.msra.mxu0 0.0
  %4792 = vmatprep.subr.mxu0 0.0
  %4793 = vmatpush1.msra.mxu0 0.0
  %4794 = vmatprep.subr.mxu0 0.0
  %4795 = vmatpush1.msra.mxu0 0.0
  %4796 = vmatprep.subr.mxu0 0.0
  %4797 = vmatpush1.msra.mxu0 0.0
  %4798 = vmatprep.mubr.f32.mxu0 0.0
  %4799 = vmatmul.mubr.f32.gmra.mrb[0].mxu0 %v4727
  %v4800 = vpop.f32.mrb[0].mxu0
  %v4801 = vadd.f32 0.0, %v4800
  %v4802 = vpop.f32.mrb[0].mxu0
  %v4803 = vadd.f32 0.0, %v4802
  %4804 = vdwg.mxu0
  %4805 = vmatprep.subr.mxu0 %v2379
  %4806 = vmatpush1.msra.mxu0 %v2378
  %4807 = vmatprep.subr.mxu0 %v2383
  %4808 = vmatpush1.msra.mxu0 %v2382
  %4809 = vmatprep.subr.mxu0 %v2387
  %4810 = vmatpush1.msra.mxu0 %v2386
  %4811 = vmatprep.subr.mxu0 %v2391
  %4812 = vmatpush1.msra.mxu0 %v2390
  %4813 = vmatprep.subr.mxu0 %v2395
  %4814 = vmatpush1.msra.mxu0 %v2394
  %4815 = vmatprep.subr.mxu0 %v2399
  %4816 = vmatpush1.msra.mxu0 %v2398
  %4817 = vmatprep.subr.mxu0 %v2403
  %4818 = vmatpush1.msra.mxu0 %v2402
  %4819 = vmatprep.subr.mxu0 %v2407
  %4820 = vmatpush1.msra.mxu0 %v2406
  %4821 = vmatprep.subr.mxu0 %v2411
  %4822 = vmatpush1.msra.mxu0 %v2410
  %4823 = vmatprep.subr.mxu0 %v2415
  %4824 = vmatpush1.msra.mxu0 %v2414
  %4825 = vmatprep.subr.mxu0 %v2419
  %4826 = vmatpush1.msra.mxu0 %v2418
  %4827 = vmatprep.subr.mxu0 %v2423
  %4828 = vmatpush1.msra.mxu0 %v2422
  %4829 = vmatprep.subr.mxu0 %v2427
  %4830 = vmatpush1.msra.mxu0 %v2426
  %4831 = vmatprep.subr.mxu0 %v2431
  %4832 = vmatpush1.msra.mxu0 %v2430
  %4833 = vmatprep.subr.mxu0 %v2435
  %4834 = vmatpush1.msra.mxu0 %v2434
  %4835 = vmatprep.subr.mxu0 %v2439
  %4836 = vmatpush1.msra.mxu0 %v2438
  %4837 = vmatprep.subr.mxu0 0.0
  %4838 = vmatpush1.msra.mxu0 0.0
  %4839 = vmatprep.subr.mxu0 0.0
  %4840 = vmatpush1.msra.mxu0 0.0
  %4841 = vmatprep.subr.mxu0 0.0
  %4842 = vmatpush1.msra.mxu0 0.0
  %4843 = vmatprep.subr.mxu0 0.0
  %4844 = vmatpush1.msra.mxu0 0.0
  %4845 = vmatprep.subr.mxu0 0.0
  %4846 = vmatpush1.msra.mxu0 0.0
  %4847 = vmatprep.subr.mxu0 0.0
  %4848 = vmatpush1.msra.mxu0 0.0
  %4849 = vmatprep.subr.mxu0 0.0
  %4850 = vmatpush1.msra.mxu0 0.0
  %4851 = vmatprep.subr.mxu0 0.0
  %4852 = vmatpush1.msra.mxu0 0.0
  %4853 = vmatprep.subr.mxu0 0.0
  %4854 = vmatpush1.msra.mxu0 0.0
  %4855 = vmatprep.subr.mxu0 0.0
  %4856 = vmatpush1.msra.mxu0 0.0
  %4857 = vmatprep.subr.mxu0 0.0
  %4858 = vmatpush1.msra.mxu0 0.0
  %4859 = vmatprep.subr.mxu0 0.0
  %4860 = vmatpush1.msra.mxu0 0.0
  %4861 = vmatprep.subr.mxu0 0.0
  %4862 = vmatpush1.msra.mxu0 0.0
  %4863 = vmatprep.subr.mxu0 0.0
  %4864 = vmatpush1.msra.mxu0 0.0
  %4865 = vmatprep.subr.mxu0 0.0
  %4866 = vmatpush1.msra.mxu0 0.0
  %4867 = vmatprep.subr.mxu0 0.0
  %4868 = vmatpush1.msra.mxu0 0.0
  %4869 = vmatprep.mubr.f32.mxu0 0.0
  %4870 = vmatmul.mubr.f32.gmra.mrb[0].mxu0 %v4727
  %v4871 = vpop.f32.mrb[0].mxu0
  %v4872 = vadd.f32 0.0, %v4871
  %v4873 = vpop.f32.mrb[0].mxu0
  %v4874 = vadd.f32 0.0, %v4873
  %4875 = vdwg.mxu0
  %v4876 = vadd.f32 %v4730, %v4801
  %v4877 = vadd.f32 %v4731, %v4803
  %v4878 = vadd.f32 %v4732, %v4872
  %v4879 = vadd.f32 %v4733, %v4874
  %v4880 = vsub.f32 0.0, %v4876
  %v4881 = vmul.f32 %v4880, 1.442695
  %v4882 = vpow.pop %v4881
  %v4883 = vadd.f32 %v4882, 1.0
  %v4884 = vrcp.pop %v4883
  %v4885 = vmul.f32 1.0, %v4884
  %v4886 = vsub.f32 0.0, %v4877
  %v4887 = vmul.f32 %v4886, 1.442695
  %v4888 = vpow.pop %v4887
  %v4889 = vadd.f32 %v4888, 1.0
  %v4890 = vrcp.pop %v4889
  %v4891 = vmul.f32 1.0, %v4890
  %v4892 = vtanh.pop %v4878
  %v4893 = vsub.f32 0.0, %v4879
  %v4894 = vmul.f32 %v4893, 1.442695
  %v4895 = vpow.pop %v4894
  %v4896 = vadd.f32 %v4895, 1.0
  %v4897 = vrcp.pop %v4896
  %v4898 = vmul.f32 1.0, %v4897
  %v4899 = vmul.f32 %v4891, %v4725
  %v4900 = vmul.f32 %v4885, %v4892
  %v4901 = vadd.f32 %v4899, %v4900
  %v4902 = vtanh.pop %v4901
  %v4903 = vmul.f32 %v4898, %v4902
  %4904 = vst.msk [vmem:[#allocation4 + $0x68] sm:$0xff] %vm2614, %v4903
  %4905 = vst.msk [vmem:[#allocation4 + $0x10] sm:$0xff] %vm2616, %v4903
  %v4906 = vld [vmem:[#allocation3 + $0x1c0] sm:$0xff]
  %v4907 = vld [vmem:[#allocation3 + $0x1c8] sm:$0xff]
  %v4908 = vld [vmem:[#allocation3 + $0x1d0] sm:$0xff]
  %v4909 = vld [vmem:[#allocation3 + $0x1d8] sm:$0xff]
  %4910 = vmatprep.subr.mxu0 %v2377
  %4911 = vmatpush1.msra.mxu0 %v2376
  %4912 = vmatprep.subr.mxu0 %v2381
  %4913 = vmatpush1.msra.mxu0 %v2380
  %4914 = vmatprep.subr.mxu0 %v2385
  %4915 = vmatpush1.msra.mxu0 %v2384
  %4916 = vmatprep.subr.mxu0 %v2389
  %4917 = vmatpush1.msra.mxu0 %v2388
  %4918 = vmatprep.subr.mxu0 %v2393
  %4919 = vmatpush1.msra.mxu0 %v2392
  %4920 = vmatprep.subr.mxu0 %v2397
  %4921 = vmatpush1.msra.mxu0 %v2396
  %4922 = vmatprep.subr.mxu0 %v2401
  %4923 = vmatpush1.msra.mxu0 %v2400
  %4924 = vmatprep.subr.mxu0 %v2405
  %4925 = vmatpush1.msra.mxu0 %v2404
  %4926 = vmatprep.subr.mxu0 %v2409
  %4927 = vmatpush1.msra.mxu0 %v2408
  %4928 = vmatprep.subr.mxu0 %v2413
  %4929 = vmatpush1.msra.mxu0 %v2412
  %4930 = vmatprep.subr.mxu0 %v2417
  %4931 = vmatpush1.msra.mxu0 %v2416
  %4932 = vmatprep.subr.mxu0 %v2421
  %4933 = vmatpush1.msra.mxu0 %v2420
  %4934 = vmatprep.subr.mxu0 %v2425
  %4935 = vmatpush1.msra.mxu0 %v2424
  %4936 = vmatprep.subr.mxu0 %v2429
  %4937 = vmatpush1.msra.mxu0 %v2428
  %4938 = vmatprep.subr.mxu0 %v2433
  %4939 = vmatpush1.msra.mxu0 %v2432
  %4940 = vmatprep.subr.mxu0 %v2437
  %4941 = vmatpush1.msra.mxu0 %v2436
  %4942 = vmatprep.subr.mxu0 0.0
  %4943 = vmatpush1.msra.mxu0 0.0
  %4944 = vmatprep.subr.mxu0 0.0
  %4945 = vmatpush1.msra.mxu0 0.0
  %4946 = vmatprep.subr.mxu0 0.0
  %4947 = vmatpush1.msra.mxu0 0.0
  %4948 = vmatprep.subr.mxu0 0.0
  %4949 = vmatpush1.msra.mxu0 0.0
  %4950 = vmatprep.subr.mxu0 0.0
  %4951 = vmatpush1.msra.mxu0 0.0
  %4952 = vmatprep.subr.mxu0 0.0
  %4953 = vmatpush1.msra.mxu0 0.0
  %4954 = vmatprep.subr.mxu0 0.0
  %4955 = vmatpush1.msra.mxu0 0.0
  %4956 = vmatprep.subr.mxu0 0.0
  %4957 = vmatpush1.msra.mxu0 0.0
  %4958 = vmatprep.subr.mxu0 0.0
  %4959 = vmatpush1.msra.mxu0 0.0
  %4960 = vmatprep.subr.mxu0 0.0
  %4961 = vmatpush1.msra.mxu0 0.0
  %4962 = vmatprep.subr.mxu0 0.0
  %4963 = vmatpush1.msra.mxu0 0.0
  %4964 = vmatprep.subr.mxu0 0.0
  %4965 = vmatpush1.msra.mxu0 0.0
  %4966 = vmatprep.subr.mxu0 0.0
  %4967 = vmatpush1.msra.mxu0 0.0
  %4968 = vmatprep.subr.mxu0 0.0
  %4969 = vmatpush1.msra.mxu0 0.0
  %4970 = vmatprep.subr.mxu0 0.0
  %4971 = vmatpush1.msra.mxu0 0.0
  %4972 = vmatprep.subr.mxu0 0.0
  %4973 = vmatpush1.msra.mxu0 0.0
  %4974 = vmatprep.mubr.f32.mxu0 0.0
  %4975 = vmatmul.mubr.f32.gmra.mrb[0].mxu0 %v4903
  %v4976 = vpop.f32.mrb[0].mxu0
  %v4977 = vadd.f32 0.0, %v4976
  %v4978 = vpop.f32.mrb[0].mxu0
  %v4979 = vadd.f32 0.0, %v4978
  %4980 = vdwg.mxu0
  %4981 = vmatprep.subr.mxu0 %v2379
  %4982 = vmatpush1.msra.mxu0 %v2378
  %4983 = vmatprep.subr.mxu0 %v2383
  %4984 = vmatpush1.msra.mxu0 %v2382
  %4985 = vmatprep.subr.mxu0 %v2387
  %4986 = vmatpush1.msra.mxu0 %v2386
  %4987 = vmatprep.subr.mxu0 %v2391
  %4988 = vmatpush1.msra.mxu0 %v2390
  %4989 = vmatprep.subr.mxu0 %v2395
  %4990 = vmatpush1.msra.mxu0 %v2394
  %4991 = vmatprep.subr.mxu0 %v2399
  %4992 = vmatpush1.msra.mxu0 %v2398
  %4993 = vmatprep.subr.mxu0 %v2403
  %4994 = vmatpush1.msra.mxu0 %v2402
  %4995 = vmatprep.subr.mxu0 %v2407
  %4996 = vmatpush1.msra.mxu0 %v2406
  %4997 = vmatprep.subr.mxu0 %v2411
  %4998 = vmatpush1.msra.mxu0 %v2410
  %4999 = vmatprep.subr.mxu0 %v2415
  %5000 = vmatpush1.msra.mxu0 %v2414
  %5001 = vmatprep.subr.mxu0 %v2419
  %5002 = vmatpush1.msra.mxu0 %v2418
  %5003 = vmatprep.subr.mxu0 %v2423
  %5004 = vmatpush1.msra.mxu0 %v2422
  %5005 = vmatprep.subr.mxu0 %v2427
  %5006 = vmatpush1.msra.mxu0 %v2426
  %5007 = vmatprep.subr.mxu0 %v2431
  %5008 = vmatpush1.msra.mxu0 %v2430
  %5009 = vmatprep.subr.mxu0 %v2435
  %5010 = vmatpush1.msra.mxu0 %v2434
  %5011 = vmatprep.subr.mxu0 %v2439
  %5012 = vmatpush1.msra.mxu0 %v2438
  %5013 = vmatprep.subr.mxu0 0.0
  %5014 = vmatpush1.msra.mxu0 0.0
  %5015 = vmatprep.subr.mxu0 0.0
  %5016 = vmatpush1.msra.mxu0 0.0
  %5017 = vmatprep.subr.mxu0 0.0
  %5018 = vmatpush1.msra.mxu0 0.0
  %5019 = vmatprep.subr.mxu0 0.0
  %5020 = vmatpush1.msra.mxu0 0.0
  %5021 = vmatprep.subr.mxu0 0.0
  %5022 = vmatpush1.msra.mxu0 0.0
  %5023 = vmatprep.subr.mxu0 0.0
  %5024 = vmatpush1.msra.mxu0 0.0
  %5025 = vmatprep.subr.mxu0 0.0
  %5026 = vmatpush1.msra.mxu0 0.0
  %5027 = vmatprep.subr.mxu0 0.0
  %5028 = vmatpush1.msra.mxu0 0.0
  %5029 = vmatprep.subr.mxu0 0.0
  %5030 = vmatpush1.msra.mxu0 0.0
  %5031 = vmatprep.subr.mxu0 0.0
  %5032 = vmatpush1.msra.mxu0 0.0
  %5033 = vmatprep.subr.mxu0 0.0
  %5034 = vmatpush1.msra.mxu0 0.0
  %5035 = vmatprep.subr.mxu0 0.0
  %5036 = vmatpush1.msra.mxu0 0.0
  %5037 = vmatprep.subr.mxu0 0.0
  %5038 = vmatpush1.msra.mxu0 0.0
  %5039 = vmatprep.subr.mxu0 0.0
  %5040 = vmatpush1.msra.mxu0 0.0
  %5041 = vmatprep.subr.mxu0 0.0
  %5042 = vmatpush1.msra.mxu0 0.0
  %5043 = vmatprep.subr.mxu0 0.0
  %5044 = vmatpush1.msra.mxu0 0.0
  %5045 = vmatprep.mubr.f32.mxu0 0.0
  %5046 = vmatmul.mubr.f32.gmra.mrb[0].mxu0 %v4903
  %v5047 = vpop.f32.mrb[0].mxu0
  %v5048 = vadd.f32 0.0, %v5047
  %v5049 = vpop.f32.mrb[0].mxu0
  %v5050 = vadd.f32 0.0, %v5049
  %5051 = vdwg.mxu0
  %v5052 = vadd.f32 %v4906, %v4977
  %v5053 = vadd.f32 %v4907, %v4979
  %v5054 = vadd.f32 %v4908, %v5048
  %v5055 = vadd.f32 %v4909, %v5050
  %v5056 = vsub.f32 0.0, %v5052
  %v5057 = vmul.f32 %v5056, 1.442695
  %v5058 = vpow.pop %v5057
  %v5059 = vadd.f32 %v5058, 1.0
  %v5060 = vrcp.pop %v5059
  %v5061 = vmul.f32 1.0, %v5060
  %v5062 = vsub.f32 0.0, %v5053
  %v5063 = vmul.f32 %v5062, 1.442695
  %v5064 = vpow.pop %v5063
  %v5065 = vadd.f32 %v5064, 1.0
  %v5066 = vrcp.pop %v5065
  %v5067 = vmul.f32 1.0, %v5066
  %v5068 = vtanh.pop %v5054
  %v5069 = vsub.f32 0.0, %v5055
  %v5070 = vmul.f32 %v5069, 1.442695
  %v5071 = vpow.pop %v5070
  %v5072 = vadd.f32 %v5071, 1.0
  %v5073 = vrcp.pop %v5072
  %v5074 = vmul.f32 1.0, %v5073
  %v5075 = vmul.f32 %v5067, %v4901
  %v5076 = vmul.f32 %v5061, %v5068
  %v5077 = vadd.f32 %v5075, %v5076
  %v5078 = vtanh.pop %v5077
  %v5079 = vmul.f32 %v5074, %v5078
  %5080 = vst.msk [vmem:[#allocation4 + $0x70] sm:$0xff] %vm2614, %v5079
  %5081 = vst.msk [vmem:[#allocation4 + $0x8] sm:$0xff] %vm2616, %v5079
  %v5082 = vld [vmem:[#allocation3 + $0x1e0] sm:$0xff]
  %v5083 = vld [vmem:[#allocation3 + $0x1e8] sm:$0xff]
  %v5084 = vld [vmem:[#allocation3 + $0x1f0] sm:$0xff]
  %v5085 = vld [vmem:[#allocation3 + $0x1f8] sm:$0xff]
  %5086 = vmatprep.subr.mxu0 %v2377
  %5087 = vmatpush1.msra.mxu0 %v2376
  %5088 = vmatprep.subr.mxu0 %v2381
  %5089 = vmatpush1.msra.mxu0 %v2380
  %5090 = vmatprep.subr.mxu0 %v2385
  %5091 = vmatpush1.msra.mxu0 %v2384
  %5092 = vmatprep.subr.mxu0 %v2389
  %5093 = vmatpush1.msra.mxu0 %v2388
  %5094 = vmatprep.subr.mxu0 %v2393
  %5095 = vmatpush1.msra.mxu0 %v2392
  %5096 = vmatprep.subr.mxu0 %v2397
  %5097 = vmatpush1.msra.mxu0 %v2396
  %5098 = vmatprep.subr.mxu0 %v2401
  %5099 = vmatpush1.msra.mxu0 %v2400
  %5100 = vmatprep.subr.mxu0 %v2405
  %5101 = vmatpush1.msra.mxu0 %v2404
  %5102 = vmatprep.subr.mxu0 %v2409
  %5103 = vmatpush1.msra.mxu0 %v2408
  %5104 = vmatprep.subr.mxu0 %v2413
  %5105 = vmatpush1.msra.mxu0 %v2412
  %5106 = vmatprep.subr.mxu0 %v2417
  %5107 = vmatpush1.msra.mxu0 %v2416
  %5108 = vmatprep.subr.mxu0 %v2421
  %5109 = vmatpush1.msra.mxu0 %v2420
  %5110 = vmatprep.subr.mxu0 %v2425
  %5111 = vmatpush1.msra.mxu0 %v2424
  %5112 = vmatprep.subr.mxu0 %v2429
  %5113 = vmatpush1.msra.mxu0 %v2428
  %5114 = vmatprep.subr.mxu0 %v2433
  %5115 = vmatpush1.msra.mxu0 %v2432
  %5116 = vmatprep.subr.mxu0 %v2437
  %5117 = vmatpush1.msra.mxu0 %v2436
  %5118 = vmatprep.subr.mxu0 0.0
  %5119 = vmatpush1.msra.mxu0 0.0
  %5120 = vmatprep.subr.mxu0 0.0
  %5121 = vmatpush1.msra.mxu0 0.0
  %5122 = vmatprep.subr.mxu0 0.0
  %5123 = vmatpush1.msra.mxu0 0.0
  %5124 = vmatprep.subr.mxu0 0.0
  %5125 = vmatpush1.msra.mxu0 0.0
  %5126 = vmatprep.subr.mxu0 0.0
  %5127 = vmatpush1.msra.mxu0 0.0
  %5128 = vmatprep.subr.mxu0 0.0
  %5129 = vmatpush1.msra.mxu0 0.0
  %5130 = vmatprep.subr.mxu0 0.0
  %5131 = vmatpush1.msra.mxu0 0.0
  %5132 = vmatprep.subr.mxu0 0.0
  %5133 = vmatpush1.msra.mxu0 0.0
  %5134 = vmatprep.subr.mxu0 0.0
  %5135 = vmatpush1.msra.mxu0 0.0
  %5136 = vmatprep.subr.mxu0 0.0
  %5137 = vmatpush1.msra.mxu0 0.0
  %5138 = vmatprep.subr.mxu0 0.0
  %5139 = vmatpush1.msra.mxu0 0.0
  %5140 = vmatprep.subr.mxu0 0.0
  %5141 = vmatpush1.msra.mxu0 0.0
  %5142 = vmatprep.subr.mxu0 0.0
  %5143 = vmatpush1.msra.mxu0 0.0
  %5144 = vmatprep.subr.mxu0 0.0
  %5145 = vmatpush1.msra.mxu0 0.0
  %5146 = vmatprep.subr.mxu0 0.0
  %5147 = vmatpush1.msra.mxu0 0.0
  %5148 = vmatprep.subr.mxu0 0.0
  %5149 = vmatpush1.msra.mxu0 0.0
  %5150 = vmatprep.mubr.f32.mxu0 0.0
  %5151 = vmatmul.mubr.f32.gmra.mrb[0].mxu0 %v5079
  %v5152 = vpop.f32.mrb[0].mxu0
  %v5153 = vadd.f32 0.0, %v5152
  %v5154 = vpop.f32.mrb[0].mxu0
  %v5155 = vadd.f32 0.0, %v5154
  %5156 = vdwg.mxu0
  %5157 = vmatprep.subr.mxu0 %v2379
  %5158 = vmatpush1.msra.mxu0 %v2378
  %5159 = vmatprep.subr.mxu0 %v2383
  %5160 = vmatpush1.msra.mxu0 %v2382
  %5161 = vmatprep.subr.mxu0 %v2387
  %5162 = vmatpush1.msra.mxu0 %v2386
  %5163 = vmatprep.subr.mxu0 %v2391
  %5164 = vmatpush1.msra.mxu0 %v2390
  %5165 = vmatprep.subr.mxu0 %v2395
  %5166 = vmatpush1.msra.mxu0 %v2394
  %5167 = vmatprep.subr.mxu0 %v2399
  %5168 = vmatpush1.msra.mxu0 %v2398
  %5169 = vmatprep.subr.mxu0 %v2403
  %5170 = vmatpush1.msra.mxu0 %v2402
  %5171 = vmatprep.subr.mxu0 %v2407
  %5172 = vmatpush1.msra.mxu0 %v2406
  %5173 = vmatprep.subr.mxu0 %v2411
  %5174 = vmatpush1.msra.mxu0 %v2410
  %5175 = vmatprep.subr.mxu0 %v2415
  %5176 = vmatpush1.msra.mxu0 %v2414
  %5177 = vmatprep.subr.mxu0 %v2419
  %5178 = vmatpush1.msra.mxu0 %v2418
  %5179 = vmatprep.subr.mxu0 %v2423
  %5180 = vmatpush1.msra.mxu0 %v2422
  %5181 = vmatprep.subr.mxu0 %v2427
  %5182 = vmatpush1.msra.mxu0 %v2426
  %5183 = vmatprep.subr.mxu0 %v2431
  %5184 = vmatpush1.msra.mxu0 %v2430
  %5185 = vmatprep.subr.mxu0 %v2435
  %5186 = vmatpush1.msra.mxu0 %v2434
  %5187 = vmatprep.subr.mxu0 %v2439
  %5188 = vmatpush1.msra.mxu0 %v2438
  %5189 = vmatprep.subr.mxu0 0.0
  %5190 = vmatpush1.msra.mxu0 0.0
  %5191 = vmatprep.subr.mxu0 0.0
  %5192 = vmatpush1.msra.mxu0 0.0
  %5193 = vmatprep.subr.mxu0 0.0
  %5194 = vmatpush1.msra.mxu0 0.0
  %5195 = vmatprep.subr.mxu0 0.0
  %5196 = vmatpush1.msra.mxu0 0.0
  %5197 = vmatprep.subr.mxu0 0.0
  %5198 = vmatpush1.msra.mxu0 0.0
  %5199 = vmatprep.subr.mxu0 0.0
  %5200 = vmatpush1.msra.mxu0 0.0
  %5201 = vmatprep.subr.mxu0 0.0
  %5202 = vmatpush1.msra.mxu0 0.0
  %5203 = vmatprep.subr.mxu0 0.0
  %5204 = vmatpush1.msra.mxu0 0.0
  %5205 = vmatprep.subr.mxu0 0.0
  %5206 = vmatpush1.msra.mxu0 0.0
  %5207 = vmatprep.subr.mxu0 0.0
  %5208 = vmatpush1.msra.mxu0 0.0
  %5209 = vmatprep.subr.mxu0 0.0
  %5210 = vmatpush1.msra.mxu0 0.0
  %5211 = vmatprep.subr.mxu0 0.0
  %5212 = vmatpush1.msra.mxu0 0.0
  %5213 = vmatprep.subr.mxu0 0.0
  %5214 = vmatpush1.msra.mxu0 0.0
  %5215 = vmatprep.subr.mxu0 0.0
  %5216 = vmatpush1.msra.mxu0 0.0
  %5217 = vmatprep.subr.mxu0 0.0
  %5218 = vmatpush1.msra.mxu0 0.0
  %5219 = vmatprep.subr.mxu0 0.0
  %5220 = vmatpush1.msra.mxu0 0.0
  %5221 = vmatprep.mubr.f32.mxu0 0.0
  %5222 = vmatmul.mubr.f32.gmra.mrb[0].mxu0 %v5079
  %v5223 = vpop.f32.mrb[0].mxu0
  %v5224 = vadd.f32 0.0, %v5223
  %v5225 = vpop.f32.mrb[0].mxu0
  %v5226 = vadd.f32 0.0, %v5225
  %5227 = vdwg.mxu0
  %v5228 = vadd.f32 %v5082, %v5153
  %v5229 = vadd.f32 %v5083, %v5155
  %v5230 = vadd.f32 %v5084, %v5224
  %v5231 = vadd.f32 %v5085, %v5226
  %v5232 = vsub.f32 0.0, %v5228
  %v5233 = vmul.f32 %v5232, 1.442695
  %v5234 = vpow.pop %v5233
  %v5235 = vadd.f32 %v5234, 1.0
  %v5236 = vrcp.pop %v5235
  %v5237 = vmul.f32 1.0, %v5236
  %v5238 = vsub.f32 0.0, %v5229
  %v5239 = vmul.f32 %v5238, 1.442695
  %v5240 = vpow.pop %v5239
  %v5241 = vadd.f32 %v5240, 1.0
  %v5242 = vrcp.pop %v5241
  %v5243 = vmul.f32 1.0, %v5242
  %v5244 = vtanh.pop %v5230
  %v5245 = vsub.f32 0.0, %v5231
  %v5246 = vmul.f32 %v5245, 1.442695
  %v5247 = vpow.pop %v5246
  %v5248 = vadd.f32 %v5247, 1.0
  %v5249 = vrcp.pop %v5248
  %v5250 = vmul.f32 1.0, %v5249
  %v5251 = vmul.f32 %v5243, %v5077
  %v5252 = vmul.f32 %v5237, %v5244
  %v5253 = vadd.f32 %v5251, %v5252
  %v5254 = vtanh.pop %v5253
  %v5255 = vmul.f32 %v5250, %v5254
  %5256 = vst.msk [vmem:[#allocation4 + $0x78] sm:$0xff] %vm2614, %v5255
  %5257 = vst.msk [vmem:[#allocation4] sm:$0xff] %vm2616, %v5255
  %v5258 = vld [vmem:[%s4] sm:$0xff]
  %v5259 = vld [vmem:[%s4 + $0x28] sm:$0xff]
  %v5260 = vld [vmem:[%s4 + $0x50] sm:$0xff]
  %v5261 = vld [vmem:[%s4 + $0x78] sm:$0xff]
  %v5262 = vld [vmem:[%s4 + $0xa0] sm:$0xff]
  %v5263 = vld [vmem:[%s4 + $0xc8] sm:$0xff]
  %v5264 = vld [vmem:[%s4 + $0xf0] sm:$0xff]
  %v5265 = vld [vmem:[%s4 + $0x118] sm:$0xff]
  %v5266 = vld [vmem:[%s4 + $0x140] sm:$0xff]
  %v5267 = vld [vmem:[%s4 + $0x168] sm:$0xff]
  %v5268 = vld [vmem:[%s4 + $0x190] sm:$0xff]
  %v5269 = vld [vmem:[%s4 + $0x1b8] sm:$0xff]
  %v5270 = vld [vmem:[%s4 + $0x1e0] sm:$0xff]
  %v5271 = vld [vmem:[%s4 + $0x208] sm:$0xff]
  %v5272 = vld [vmem:[%s4 + $0x230] sm:$0xff]
  %v5273 = vld [vmem:[%s4 + $0x258] sm:$0xff]
  %v5274 = vld [vmem:[%s4 + $0x8] sm:$0xff]
  %v5275 = vld [vmem:[%s4 + $0x10] sm:$0xff]
  %v5276 = vld [vmem:[%s4 + $0x30] sm:$0xff]
  %v5277 = vld [vmem:[%s4 + $0x38] sm:$0xff]
  %v5278 = vld [vmem:[%s4 + $0x58] sm:$0xff]
  %v5279 = vld [vmem:[%s4 + $0x60] sm:$0xff]
  %v5280 = vld [vmem:[%s4 + $0x80] sm:$0xff]
  %v5281 = vld [vmem:[%s4 + $0x88] sm:$0xff]
  %v5282 = vld [vmem:[%s4 + $0xa8] sm:$0xff]
  %v5283 = vld [vmem:[%s4 + $0xb0] sm:$0xff]
  %v5284 = vld [vmem:[%s4 + $0xd0] sm:$0xff]
  %v5285 = vld [vmem:[%s4 + $0xd8] sm:$0xff]
  %v5286 = vld [vmem:[%s4 + $0xf8] sm:$0xff]
  %v5287 = vld [vmem:[%s4 + $0x100] sm:$0xff]
  %v5288 = vld [vmem:[%s4 + $0x120] sm:$0xff]
  %v5289 = vld [vmem:[%s4 + $0x128] sm:$0xff]
  %v5290 = vld [vmem:[%s4 + $0x148] sm:$0xff]
  %v5291 = vld [vmem:[%s4 + $0x150] sm:$0xff]
  %v5292 = vld [vmem:[%s4 + $0x170] sm:$0xff]
  %v5293 = vld [vmem:[%s4 + $0x178] sm:$0xff]
  %v5294 = vld [vmem:[%s4 + $0x198] sm:$0xff]
  %v5295 = vld [vmem:[%s4 + $0x1a0] sm:$0xff]
  %v5296 = vld [vmem:[%s4 + $0x1c0] sm:$0xff]
  %v5297 = vld [vmem:[%s4 + $0x1c8] sm:$0xff]
  %v5298 = vld [vmem:[%s4 + $0x1e8] sm:$0xff]
  %v5299 = vld [vmem:[%s4 + $0x1f0] sm:$0xff]
  %v5300 = vld [vmem:[%s4 + $0x210] sm:$0xff]
  %v5301 = vld [vmem:[%s4 + $0x218] sm:$0xff]
  %v5302 = vld [vmem:[%s4 + $0x238] sm:$0xff]
  %v5303 = vld [vmem:[%s4 + $0x240] sm:$0xff]
  %v5304 = vld [vmem:[%s4 + $0x260] sm:$0xff]
  %v5305 = vld [vmem:[%s4 + $0x268] sm:$0xff]
  %v5306 = vld [vmem:[%s4 + $0x18] sm:$0xff]
  %v5307 = vld [vmem:[%s4 + $0x40] sm:$0xff]
  %v5308 = vld [vmem:[%s4 + $0x68] sm:$0xff]
  %v5309 = vld [vmem:[%s4 + $0x90] sm:$0xff]
  %v5310 = vld [vmem:[%s4 + $0xb8] sm:$0xff]
  %v5311 = vld [vmem:[%s4 + $0xe0] sm:$0xff]
  %v5312 = vld [vmem:[%s4 + $0x108] sm:$0xff]
  %v5313 = vld [vmem:[%s4 + $0x130] sm:$0xff]
  %v5314 = vld [vmem:[%s4 + $0x158] sm:$0xff]
  %v5315 = vld [vmem:[%s4 + $0x180] sm:$0xff]
  %v5316 = vld [vmem:[%s4 + $0x1a8] sm:$0xff]
  %v5317 = vld [vmem:[%s4 + $0x1d0] sm:$0xff]
  %v5318 = vld [vmem:[%s4 + $0x1f8] sm:$0xff]
  %v5319 = vld [vmem:[%s4 + $0x220] sm:$0xff]
  %v5320 = vld [vmem:[%s4 + $0x248] sm:$0xff]
  %v5321 = vld [vmem:[%s4 + $0x270] sm:$0xff]
  %v5322 = vld [vmem:[%s4 + $0x20] sm:$0xff]
  %v5323 = vld [vmem:[%s4 + $0x48] sm:$0xff]
  %v5324 = vld [vmem:[%s4 + $0x70] sm:$0xff]
  %v5325 = vld [vmem:[%s4 + $0x98] sm:$0xff]
  %v5326 = vld [vmem:[%s4 + $0xc0] sm:$0xff]
  %v5327 = vld [vmem:[%s4 + $0xe8] sm:$0xff]
  %v5328 = vld [vmem:[%s4 + $0x110] sm:$0xff]
  %v5329 = vld [vmem:[%s4 + $0x138] sm:$0xff]
  %v5330 = vld [vmem:[%s4 + $0x160] sm:$0xff]
  %v5331 = vld [vmem:[%s4 + $0x188] sm:$0xff]
  %v5332 = vld [vmem:[%s4 + $0x1b0] sm:$0xff]
  %v5333 = vld [vmem:[%s4 + $0x1d8] sm:$0xff]
  %v5334 = vld [vmem:[%s4 + $0x200] sm:$0xff]
  %v5335 = vld [vmem:[%s4 + $0x228] sm:$0xff]
  %v5336 = vld [vmem:[%s4 + $0x250] sm:$0xff]
  %v5337 = vld [vmem:[%s4 + $0x278] sm:$0xff]
  %v5338 = vld [vmem:[#allocation4] sm:$0xff]
  %v5339 = vld [vmem:[#allocation4 + $0x8] sm:$0xff]
  %v5340 = vld [vmem:[#allocation4 + $0x10] sm:$0xff]
  %v5341 = vld [vmem:[#allocation4 + $0x18] sm:$0xff]
  %v5342 = vld [vmem:[#allocation4 + $0x20] sm:$0xff]
  %v5343 = vld [vmem:[#allocation4 + $0x28] sm:$0xff]
  %v5344 = vld [vmem:[#allocation4 + $0x30] sm:$0xff]
  %v5345 = vld [vmem:[#allocation4 + $0x38] sm:$0xff]
  %v5346 = vld [vmem:[#allocation4 + $0x40] sm:$0xff]
  %v5347 = vld [vmem:[#allocation4 + $0x48] sm:$0xff]
  %v5348 = vld [vmem:[#allocation4 + $0x50] sm:$0xff]
  %v5349 = vld [vmem:[#allocation4 + $0x58] sm:$0xff]
  %v5350 = vld [vmem:[#allocation4 + $0x60] sm:$0xff]
  %v5351 = vld [vmem:[#allocation4 + $0x68] sm:$0xff]
  %v5352 = vld [vmem:[#allocation4 + $0x70] sm:$0xff]
  %v5353 = vld [vmem:[#allocation4 + $0x78] sm:$0xff]
  %v5354 = vld [vmem:[%s5 + $0x6] sm:$0x3]
  %v5356 = vlaneseq
  %v5357 = vshrl.u32 %v5356, 7
  %v5358 = vsub.s32 0, %v5357
  %v5359 = vrot.slane %v5354, %v5358
  %v5360 = vlaneseq
  %v5361 = vshrl.u32 %v5360, 7
  %v5362 = vsub.s32 1, %v5361
  %v5363 = vrot.slane %v5354, %v5362
  %5366 = vmatprep.subr.mxu0 %v5275
  %5367 = vmatpush1.msra.mxu0 %v5274
  %5368 = vmatprep.subr.mxu0 %v5277
  %5369 = vmatpush1.msra.mxu0 %v5276
  %5370 = vmatprep.subr.mxu0 %v5279
  %5371 = vmatpush1.msra.mxu0 %v5278
  %5372 = vmatprep.subr.mxu0 %v5281
  %5373 = vmatpush1.msra.mxu0 %v5280
  %5374 = vmatprep.subr.mxu0 %v5283
  %5375 = vmatpush1.msra.mxu0 %v5282
  %5376 = vmatprep.subr.mxu0 %v5285
  %5377 = vmatpush1.msra.mxu0 %v5284
  %5378 = vmatprep.subr.mxu0 %v5287
  %5379 = vmatpush1.msra.mxu0 %v5286
  %5380 = vmatprep.subr.mxu0 %v5289
  %5381 = vmatpush1.msra.mxu0 %v5288
  %5382 = vmatprep.subr.mxu0 %v5291
  %5383 = vmatpush1.msra.mxu0 %v5290
  %5384 = vmatprep.subr.mxu0 %v5293
  %5385 = vmatpush1.msra.mxu0 %v5292
  %5386 = vmatprep.subr.mxu0 %v5295
  %5387 = vmatpush1.msra.mxu0 %v5294
  %5388 = vmatprep.subr.mxu0 %v5297
  %5389 = vmatpush1.msra.mxu0 %v5296
  %5390 = vmatprep.subr.mxu0 %v5299
  %5391 = vmatpush1.msra.mxu0 %v5298
  %5392 = vmatprep.subr.mxu0 %v5301
  %5393 = vmatpush1.msra.mxu0 %v5300
  %5394 = vmatprep.subr.mxu0 %v5303
  %5395 = vmatpush1.msra.mxu0 %v5302
  %5396 = vmatprep.subr.mxu0 %v5305
  %5397 = vmatpush1.msra.mxu0 %v5304
  %5398 = vmatprep.subr.mxu0 0.0
  %5399 = vmatpush1.msra.mxu0 0.0
  %5400 = vmatprep.subr.mxu0 0.0
  %5401 = vmatpush1.msra.mxu0 0.0
  %5402 = vmatprep.subr.mxu0 0.0
  %5403 = vmatpush1.msra.mxu0 0.0
  %5404 = vmatprep.subr.mxu0 0.0
  %5405 = vmatpush1.msra.mxu0 0.0
  %5406 = vmatprep.subr.mxu0 0.0
  %5407 = vmatpush1.msra.mxu0 0.0
  %5408 = vmatprep.subr.mxu0 0.0
  %5409 = vmatpush1.msra.mxu0 0.0
  %5410 = vmatprep.subr.mxu0 0.0
  %5411 = vmatpush1.msra.mxu0 0.0
  %5412 = vmatprep.subr.mxu0 0.0
  %5413 = vmatpush1.msra.mxu0 0.0
  %5414 = vmatprep.subr.mxu0 0.0
  %5415 = vmatpush1.msra.mxu0 0.0
  %5416 = vmatprep.subr.mxu0 0.0
  %5417 = vmatpush1.msra.mxu0 0.0
  %5418 = vmatprep.subr.mxu0 0.0
  %5419 = vmatpush1.msra.mxu0 0.0
  %5420 = vmatprep.subr.mxu0 0.0
  %5421 = vmatpush1.msra.mxu0 0.0
  %5422 = vmatprep.subr.mxu0 0.0
  %5423 = vmatpush1.msra.mxu0 0.0
  %5424 = vmatprep.subr.mxu0 0.0
  %5425 = vmatpush1.msra.mxu0 0.0
  %5426 = vmatprep.subr.mxu0 0.0
  %5427 = vmatpush1.msra.mxu0 0.0
  %5428 = vmatprep.subr.mxu0 0.0
  %5429 = vmatpush1.msra.mxu0 0.0
  %5430 = vmatprep.mubr.f32.mxu0 0.0
  %5431 = vmatmul.mubr.f32.gmra.mrb[0].mxu0 %v5338
  %v5432 = vpop.f32.mrb[0].mxu0
  %v5433 = vadd.f32 %v5359, %v5432
  %v5434 = vpop.f32.mrb[0].mxu0
  %v5435 = vadd.f32 %v5363, %v5434
  %5436 = vmatprep.mubr.f32.mxu0 0.0
  %5437 = vmatmul.mubr.f32.gmra.mrb[0].mxu0 %v5339
  %v5438 = vpop.f32.mrb[0].mxu0
  %v5439 = vadd.f32 %v5359, %v5438
  %v5440 = vpop.f32.mrb[0].mxu0
  %v5441 = vadd.f32 %v5363, %v5440
  %5442 = vmatprep.mubr.f32.mxu0 0.0
  %5443 = vmatmul.mubr.f32.gmra.mrb[0].mxu0 %v5340
  %v5444 = vpop.f32.mrb[0].mxu0
  %v5445 = vadd.f32 %v5359, %v5444
  %v5446 = vpop.f32.mrb[0].mxu0
  %v5447 = vadd.f32 %v5363, %v5446
  %5448 = vmatprep.mubr.f32.mxu0 0.0
  %5449 = vmatmul.mubr.f32.gmra.mrb[0].mxu0 %v5341
  %v5450 = vpop.f32.mrb[0].mxu0
  %v5451 = vadd.f32 %v5359, %v5450
  %v5452 = vpop.f32.mrb[0].mxu0
  %v5453 = vadd.f32 %v5363, %v5452
  %5454 = vmatprep.mubr.f32.mxu0 0.0
  %5455 = vmatmul.mubr.f32.gmra.mrb[0].mxu0 %v5342
  %v5456 = vpop.f32.mrb[0].mxu0
  %v5457 = vadd.f32 %v5359, %v5456
  %v5458 = vpop.f32.mrb[0].mxu0
  %v5459 = vadd.f32 %v5363, %v5458
  %5460 = vmatprep.mubr.f32.mxu0 0.0
  %5461 = vmatmul.mubr.f32.gmra.mrb[0].mxu0 %v5343
  %v5462 = vpop.f32.mrb[0].mxu0
  %v5463 = vadd.f32 %v5359, %v5462
  %v5464 = vpop.f32.mrb[0].mxu0
  %v5465 = vadd.f32 %v5363, %v5464
  %5466 = vmatprep.mubr.f32.mxu0 0.0
  %5467 = vmatmul.mubr.f32.gmra.mrb[0].mxu0 %v5344
  %v5468 = vpop.f32.mrb[0].mxu0
  %v5469 = vadd.f32 %v5359, %v5468
  %v5470 = vpop.f32.mrb[0].mxu0
  %v5471 = vadd.f32 %v5363, %v5470
  %5472 = vmatprep.mubr.f32.mxu0 0.0
  %5473 = vmatmul.mubr.f32.gmra.mrb[0].mxu0 %v5345
  %v5474 = vpop.f32.mrb[0].mxu0
  %v5475 = vadd.f32 %v5359, %v5474
  %v5476 = vpop.f32.mrb[0].mxu0
  %v5477 = vadd.f32 %v5363, %v5476
  %5478 = vmatprep.mubr.f32.mxu0 0.0
  %5479 = vmatmul.mubr.f32.gmra.mrb[0].mxu0 %v5346
  %v5480 = vpop.f32.mrb[0].mxu0
  %v5481 = vadd.f32 %v5359, %v5480
  %v5482 = vpop.f32.mrb[0].mxu0
  %v5483 = vadd.f32 %v5363, %v5482
  %5484 = vmatprep.mubr.f32.mxu0 0.0
  %5485 = vmatmul.mubr.f32.gmra.mrb[0].mxu0 %v5347
  %v5486 = vpop.f32.mrb[0].mxu0
  %v5487 = vadd.f32 %v5359, %v5486
  %v5488 = vpop.f32.mrb[0].mxu0
  %v5489 = vadd.f32 %v5363, %v5488
  %5490 = vmatprep.mubr.f32.mxu0 0.0
  %5491 = vmatmul.mubr.f32.gmra.mrb[0].mxu0 %v5348
  %v5492 = vpop.f32.mrb[0].mxu0
  %v5493 = vadd.f32 %v5359, %v5492
  %v5494 = vpop.f32.mrb[0].mxu0
  %v5495 = vadd.f32 %v5363, %v5494
  %5496 = vmatprep.mubr.f32.mxu0 0.0
  %5497 = vmatmul.mubr.f32.gmra.mrb[0].mxu0 %v5349
  %v5498 = vpop.f32.mrb[0].mxu0
  %v5499 = vadd.f32 %v5359, %v5498
  %v5500 = vpop.f32.mrb[0].mxu0
  %v5501 = vadd.f32 %v5363, %v5500
  %5502 = vmatprep.mubr.f32.mxu0 0.0
  %5503 = vmatmul.mubr.f32.gmra.mrb[0].mxu0 %v5350
  %v5504 = vpop.f32.mrb[0].mxu0
  %v5505 = vadd.f32 %v5359, %v5504
  %v5506 = vpop.f32.mrb[0].mxu0
  %v5507 = vadd.f32 %v5363, %v5506
  %5508 = vmatprep.mubr.f32.mxu0 0.0
  %5509 = vmatmul.mubr.f32.gmra.mrb[0].mxu0 %v5351
  %v5510 = vpop.f32.mrb[0].mxu0
  %v5511 = vadd.f32 %v5359, %v5510
  %v5512 = vpop.f32.mrb[0].mxu0
  %v5513 = vadd.f32 %v5363, %v5512
  %5514 = vmatprep.mubr.f32.mxu0 0.0
  %5515 = vmatmul.mubr.f32.gmra.mrb[0].mxu0 %v5352
  %v5516 = vpop.f32.mrb[0].mxu0
  %v5517 = vadd.f32 %v5359, %v5516
  %v5518 = vpop.f32.mrb[0].mxu0
  %v5519 = vadd.f32 %v5363, %v5518
  %5520 = vmatprep.mubr.f32.mxu0 0.0
  %5521 = vmatmul.mubr.f32.gmra.mrb[0].mxu0 %v5353
  %v5522 = vpop.f32.mrb[0].mxu0
  %v5523 = vadd.f32 %v5359, %v5522
  %v5524 = vpop.f32.mrb[0].mxu0
  %v5525 = vadd.f32 %v5363, %v5524
  %5526 = vdwg.mxu0
  %5527 = vst [vmem:[#allocation5] sm:$0xff] %v5433
  %5528 = vst [vmem:[#allocation5 + $0x8] sm:$0xff] %v5435
  %5529 = vst [vmem:[#allocation5 + $0x10] sm:$0xff] %v5439
  %5530 = vst [vmem:[#allocation5 + $0x18] sm:$0xff] %v5441
  %5531 = vst [vmem:[#allocation5 + $0x20] sm:$0xff] %v5445
  %5532 = vst [vmem:[#allocation5 + $0x28] sm:$0xff] %v5447
  %5533 = vst [vmem:[#allocation5 + $0x30] sm:$0xff] %v5451
  %5534 = vst [vmem:[#allocation5 + $0x38] sm:$0xff] %v5453
  %5535 = vst [vmem:[#allocation5 + $0x40] sm:$0xff] %v5457
  %5536 = vst [vmem:[#allocation5 + $0x48] sm:$0xff] %v5459
  %5537 = vst [vmem:[#allocation5 + $0x50] sm:$0xff] %v5463
  %5538 = vst [vmem:[#allocation5 + $0x58] sm:$0xff] %v5465
  %5539 = vst [vmem:[#allocation5 + $0x60] sm:$0xff] %v5469
  %5540 = vst [vmem:[#allocation5 + $0x68] sm:$0xff] %v5471
  %5541 = vst [vmem:[#allocation5 + $0x70] sm:$0xff] %v5475
  %5542 = vst [vmem:[#allocation5 + $0x78] sm:$0xff] %v5477
  %5543 = vst [vmem:[#allocation5 + $0x80] sm:$0xff] %v5481
  %5544 = vst [vmem:[#allocation5 + $0x88] sm:$0xff] %v5483
  %5545 = vst [vmem:[#allocation5 + $0x90] sm:$0xff] %v5487
  %5546 = vst [vmem:[#allocation5 + $0x98] sm:$0xff] %v5489
  %5547 = vst [vmem:[#allocation5 + $0xa0] sm:$0xff] %v5493
  %5548 = vst [vmem:[#allocation5 + $0xa8] sm:$0xff] %v5495
  %5549 = vst [vmem:[#allocation5 + $0xb0] sm:$0xff] %v5499
  %5550 = vst [vmem:[#allocation5 + $0xb8] sm:$0xff] %v5501
  %5551 = vst [vmem:[#allocation5 + $0xc0] sm:$0xff] %v5505
  %5552 = vst [vmem:[#allocation5 + $0xc8] sm:$0xff] %v5507
  %5553 = vst [vmem:[#allocation5 + $0xd0] sm:$0xff] %v5511
  %5554 = vst [vmem:[#allocation5 + $0xd8] sm:$0xff] %v5513
  %5555 = vst [vmem:[#allocation5 + $0xe0] sm:$0xff] %v5517
  %5556 = vst [vmem:[#allocation5 + $0xe8] sm:$0xff] %v5519
  %5557 = vst [vmem:[#allocation5 + $0xf0] sm:$0xff] %v5523
  %5558 = vst [vmem:[#allocation5 + $0xf8] sm:$0xff] %v5525
  %v5559 = vld [vmem:[#allocation4 + $0x78] sm:$0xff]
  %v5560 = vld [vmem:[%s5 + $0x5] sm:$0x1]
  %v5562 = vlaneseq
  %v5563 = vshrl.u32 %v5562, 7
  %v5564 = vsub.s32 0, %v5563
  %v5565 = vrot.slane %v5560, %v5564
  %5567 = vmatprep.subr.mxu0 0.0
  %5568 = vmatpush1.msra.mxu0 %v5258
  %5569 = vmatprep.subr.mxu0 0.0
  %5570 = vmatpush1.msra.mxu0 %v5259
  %5571 = vmatprep.subr.mxu0 0.0
  %5572 = vmatpush1.msra.mxu0 %v5260
  %5573 = vmatprep.subr.mxu0 0.0
  %5574 = vmatpush1.msra.mxu0 %v5261
  %5575 = vmatprep.subr.mxu0 0.0
  %5576 = vmatpush1.msra.mxu0 %v5262
  %5577 = vmatprep.subr.mxu0 0.0
  %5578 = vmatpush1.msra.mxu0 %v5263
  %5579 = vmatprep.subr.mxu0 0.0
  %5580 = vmatpush1.msra.mxu0 %v5264
  %5581 = vmatprep.subr.mxu0 0.0
  %5582 = vmatpush1.msra.mxu0 %v5265
  %5583 = vmatprep.subr.mxu0 0.0
  %5584 = vmatpush1.msra.mxu0 %v5266
  %5585 = vmatprep.subr.mxu0 0.0
  %5586 = vmatpush1.msra.mxu0 %v5267
  %5587 = vmatprep.subr.mxu0 0.0
  %5588 = vmatpush1.msra.mxu0 %v5268
  %5589 = vmatprep.subr.mxu0 0.0
  %5590 = vmatpush1.msra.mxu0 %v5269
  %5591 = vmatprep.subr.mxu0 0.0
  %5592 = vmatpush1.msra.mxu0 %v5270
  %5593 = vmatprep.subr.mxu0 0.0
  %5594 = vmatpush1.msra.mxu0 %v5271
  %5595 = vmatprep.subr.mxu0 0.0
  %5596 = vmatpush1.msra.mxu0 %v5272
  %5597 = vmatprep.subr.mxu0 0.0
  %5598 = vmatpush1.msra.mxu0 %v5273
  %5599 = vmatprep.subr.mxu0 0.0
  %5600 = vmatpush1.msra.mxu0 0.0
  %5601 = vmatprep.subr.mxu0 0.0
  %5602 = vmatpush1.msra.mxu0 0.0
  %5603 = vmatprep.subr.mxu0 0.0
  %5604 = vmatpush1.msra.mxu0 0.0
  %5605 = vmatprep.subr.mxu0 0.0
  %5606 = vmatpush1.msra.mxu0 0.0
  %5607 = vmatprep.subr.mxu0 0.0
  %5608 = vmatpush1.msra.mxu0 0.0
  %5609 = vmatprep.subr.mxu0 0.0
  %5610 = vmatpush1.msra.mxu0 0.0
  %5611 = vmatprep.subr.mxu0 0.0
  %5612 = vmatpush1.msra.mxu0 0.0
  %5613 = vmatprep.subr.mxu0 0.0
  %5614 = vmatpush1.msra.mxu0 0.0
  %5615 = vmatprep.subr.mxu0 0.0
  %5616 = vmatpush1.msra.mxu0 0.0
  %5617 = vmatprep.subr.mxu0 0.0
  %5618 = vmatpush1.msra.mxu0 0.0
  %5619 = vmatprep.subr.mxu0 0.0
  %5620 = vmatpush1.msra.mxu0 0.0
  %5621 = vmatprep.subr.mxu0 0.0
  %5622 = vmatpush1.msra.mxu0 0.0
  %5623 = vmatprep.subr.mxu0 0.0
  %5624 = vmatpush1.msra.mxu0 0.0
  %5625 = vmatprep.subr.mxu0 0.0
  %5626 = vmatpush1.msra.mxu0 0.0
  %5627 = vmatprep.subr.mxu0 0.0
  %5628 = vmatpush1.msra.mxu0 0.0
  %5629 = vmatprep.subr.mxu0 0.0
  %5630 = vmatpush1.msra.mxu0 0.0
  %5631 = vmatprep.mubr.f32.mxu0 0.0
  %5632 = vmatmul.mubr.f32.gmra.mrb[0].mxu0 %v5559
  %v5633 = vpop.f32.mrb[0].mxu0
  %v5634 = vadd.f32 %v5565, %v5633
  %v5635 = vpop.f32.mrb[0].mxu0
  %5636 = vdwg.mxu0
  %v5637 = vlaneseq
  %v5638 = vshrl.u32 %v5637, 7
  %v5639 = vand.u32 %v2108, 7
  %vm5640 = vcmp.eq.s32.totalorder %v5638, %v5639
  %v5641 = vld [vmem:[#allocation5] sm:$0xff]
  %v5642 = vld [vmem:[#allocation5 + $0x10] sm:$0xff]
  %v5643 = vld [vmem:[#allocation5 + $0x20] sm:$0xff]
  %v5644 = vld [vmem:[#allocation5 + $0x30] sm:$0xff]
  %v5645 = vld [vmem:[#allocation5 + $0x40] sm:$0xff]
  %v5646 = vld [vmem:[#allocation5 + $0x50] sm:$0xff]
  %v5647 = vld [vmem:[#allocation5 + $0x60] sm:$0xff]
  %v5648 = vld [vmem:[#allocation5 + $0x70] sm:$0xff]
  %v5649 = vld [vmem:[#allocation5 + $0x80] sm:$0xff]
  %v5650 = vld [vmem:[#allocation5 + $0x90] sm:$0xff]
  %v5651 = vld [vmem:[#allocation5 + $0xa0] sm:$0xff]
  %v5652 = vld [vmem:[#allocation5 + $0xb0] sm:$0xff]
  %v5653 = vld [vmem:[#allocation5 + $0xc0] sm:$0xff]
  %v5654 = vld [vmem:[#allocation5 + $0xd0] sm:$0xff]
  %v5655 = vld [vmem:[#allocation5 + $0xe0] sm:$0xff]
  %v5656 = vld [vmem:[#allocation5 + $0xf0] sm:$0xff]
  %v5657 = vld [vmem:[#allocation5 + $0x8] sm:$0xff]
  %v5658 = vld [vmem:[#allocation5 + $0x18] sm:$0xff]
  %v5659 = vld [vmem:[#allocation5 + $0x28] sm:$0xff]
  %v5660 = vld [vmem:[#allocation5 + $0x38] sm:$0xff]
  %v5661 = vld [vmem:[#allocation5 + $0x48] sm:$0xff]
  %v5662 = vld [vmem:[#allocation5 + $0x58] sm:$0xff]
  %v5663 = vld [vmem:[#allocation5 + $0x68] sm:$0xff]
  %v5664 = vld [vmem:[#allocation5 + $0x78] sm:$0xff]
  %v5665 = vld [vmem:[#allocation5 + $0x88] sm:$0xff]
  %v5666 = vld [vmem:[#allocation5 + $0x98] sm:$0xff]
  %v5667 = vld [vmem:[#allocation5 + $0xa8] sm:$0xff]
  %v5668 = vld [vmem:[#allocation5 + $0xb8] sm:$0xff]
  %v5669 = vld [vmem:[#allocation5 + $0xc8] sm:$0xff]
  %v5670 = vld [vmem:[#allocation5 + $0xd8] sm:$0xff]
  %v5671 = vld [vmem:[#allocation5 + $0xe8] sm:$0xff]
  %v5672 = vld [vmem:[#allocation5 + $0xf8] sm:$0xff]
  %v5674 = vsel %vm1672, %v5634, 0
  %v5677 = vsel %vm1672, %v5641, 0
  %v5680 = vsel %vm1672, %v5642, 0
  %v5683 = vsel %vm1672, %v5643, 0
  %v5686 = vsel %vm1672, %v5644, 0
  %v5689 = vsel %vm1672, %v5645, 0
  %v5692 = vsel %vm1672, %v5646, 0
  %v5695 = vsel %vm1672, %v5647, 0
  %v5698 = vsel %vm1672, %v5648, 0
  %v5701 = vsel %vm1672, %v5649, 0
  %v5704 = vsel %vm1672, %v5650, 0
  %v5707 = vsel %vm1672, %v5651, 0
  %v5710 = vsel %vm1672, %v5652, 0
  %v5713 = vsel %vm1672, %v5653, 0
  %v5716 = vsel %vm1672, %v5654, 0
  %v5719 = vsel %vm1672, %v5655, 0
  %v5722 = vsel %vm1672, %v5656, 0
  %5724 = vmatprep.subr.mxu0 0.0
  %5725 = vmatpush1.xpose.msra.mxu0 %v5677
  %5726 = vmatprep.subr.mxu0 0.0
  %5727 = vmatpush1.xpose.msra.mxu0 %v5680
  %5728 = vmatprep.subr.mxu0 0.0
  %5729 = vmatpush1.xpose.msra.mxu0 %v5683
  %5730 = vmatprep.subr.mxu0 0.0
  %5731 = vmatpush1.xpose.msra.mxu0 %v5686
  %5732 = vmatprep.subr.mxu0 0.0
  %5733 = vmatpush1.xpose.msra.mxu0 %v5689
  %5734 = vmatprep.subr.mxu0 0.0
  %5735 = vmatpush1.xpose.msra.mxu0 %v5692
  %5736 = vmatprep.subr.mxu0 0.0
  %5737 = vmatpush1.xpose.msra.mxu0 %v5695
  %5738 = vmatprep.subr.mxu0 0.0
  %5739 = vmatpush1.xpose.msra.mxu0 %v5698
  %5740 = vmatprep.subr.mxu0 0.0
  %5741 = vmatpush1.xpose.msra.mxu0 %v5701
  %5742 = vmatprep.subr.mxu0 0.0
  %5743 = vmatpush1.xpose.msra.mxu0 %v5704
  %5744 = vmatprep.subr.mxu0 0.0
  %5745 = vmatpush1.xpose.msra.mxu0 %v5707
  %5746 = vmatprep.subr.mxu0 0.0
  %5747 = vmatpush1.xpose.msra.mxu0 %v5710
  %5748 = vmatprep.subr.mxu0 0.0
  %5749 = vmatpush1.xpose.msra.mxu0 %v5713
  %5750 = vmatprep.subr.mxu0 0.0
  %5751 = vmatpush1.xpose.msra.mxu0 %v5716
  %5752 = vmatprep.subr.mxu0 0.0
  %5753 = vmatpush1.xpose.msra.mxu0 %v5719
  %5754 = vmatprep.subr.mxu0 0.0
  %5755 = vmatpush1.xpose.msra.mxu0 %v5722
  %5756 = vmatprep.subr.mxu0 0.0
  %5757 = vmatpush1.xpose.msra.mxu0 0.0
  %5758 = vmatprep.subr.mxu0 0.0
  %5759 = vmatpush1.xpose.msra.mxu0 0.0
  %5760 = vmatprep.subr.mxu0 0.0
  %5761 = vmatpush1.xpose.msra.mxu0 0.0
  %5762 = vmatprep.subr.mxu0 0.0
  %5763 = vmatpush1.xpose.msra.mxu0 0.0
  %5764 = vmatprep.subr.mxu0 0.0
  %5765 = vmatpush1.xpose.msra.mxu0 0.0
  %5766 = vmatprep.subr.mxu0 0.0
  %5767 = vmatpush1.xpose.msra.mxu0 0.0
  %5768 = vmatprep.subr.mxu0 0.0
  %5769 = vmatpush1.xpose.msra.mxu0 0.0
  %5770 = vmatprep.subr.mxu0 0.0
  %5771 = vmatpush1.xpose.msra.mxu0 0.0
  %5772 = vmatprep.subr.mxu0 0.0
  %5773 = vmatpush1.xpose.msra.mxu0 0.0
  %5774 = vmatprep.subr.mxu0 0.0
  %5775 = vmatpush1.xpose.msra.mxu0 0.0
  %5776 = vmatprep.subr.mxu0 0.0
  %5777 = vmatpush1.xpose.msra.mxu0 0.0
  %5778 = vmatprep.subr.mxu0 0.0
  %5779 = vmatpush1.xpose.msra.mxu0 0.0
  %5780 = vmatprep.subr.mxu0 0.0
  %5781 = vmatpush1.xpose.msra.mxu0 0.0
  %5782 = vmatprep.subr.mxu0 0.0
  %5783 = vmatpush1.xpose.msra.mxu0 0.0
  %5784 = vmatprep.subr.mxu0 0.0
  %5785 = vmatpush1.xpose.msra.mxu0 0.0
  %5786 = vmatprep.subr.mxu0 0.0
  %5787 = vmatpush1.xpose.msra.mxu0 0.0
  %5788 = vmatprep.mubr.f32.mxu0 0.0
  %5789 = vmatmul.mubr.f32.gmra.mrb[0].mxu0 %v5674
  %v5790 = vpop.f32.mrb[0].mxu0
  %v5791 = vadd.f32 0.0, %v5790
  %v5792 = vpop.f32.mrb[0].mxu0
  %5793 = vdwg.mxu0
  %v5794 = vmul.f32 %v5791, 0.17677669
  %v5795 = vsel %vm5640, %v5794, -1e+30
  %5796 = vmax.xlane.f32.xlu0 %v5795
  %v5797 = vpop.xlane.xlu0 %5796
  %v5798 = vsub.f32 %v5795, %v5797
  %v5799 = vmul.f32 %v5798, 1.442695
  %v5800 = vpow.pop %v5799
  %v5801 = vsel %vm5640, %v5800, 0.0
  %5802 = vadd.xlane.f32.xlu0 %v5801
  %v5803 = vpop.xlane.xlu0 %5802
  %v5804 = vrcp.pop %v5803
  %v5805 = vmul.f32 %v5801, %v5804
  %5806 = vmatprep.subr.mxu0 0.0
  %5807 = vmatpush1.msra.mxu0 %v5657
  %5808 = vmatprep.subr.mxu0 0.0
  %5809 = vmatpush1.msra.mxu0 %v5658
  %5810 = vmatprep.subr.mxu0 0.0
  %5811 = vmatpush1.msra.mxu0 %v5659
  %5812 = vmatprep.subr.mxu0 0.0
  %5813 = vmatpush1.msra.mxu0 %v5660
  %5814 = vmatprep.subr.mxu0 0.0
  %5815 = vmatpush1.msra.mxu0 %v5661
  %5816 = vmatprep.subr.mxu0 0.0
  %5817 = vmatpush1.msra.mxu0 %v5662
  %5818 = vmatprep.subr.mxu0 0.0
  %5819 = vmatpush1.msra.mxu0 %v5663
  %5820 = vmatprep.subr.mxu0 0.0
  %5821 = vmatpush1.msra.mxu0 %v5664
  %5822 = vmatprep.subr.mxu0 0.0
  %5823 = vmatpush1.msra.mxu0 %v5665
  %5824 = vmatprep.subr.mxu0 0.0
  %5825 = vmatpush1.msra.mxu0 %v5666
  %5826 = vmatprep.subr.mxu0 0.0
  %5827 = vmatpush1.msra.mxu0 %v5667
  %5828 = vmatprep.subr.mxu0 0.0
  %5829 = vmatpush1.msra.mxu0 %v5668
  %5830 = vmatprep.subr.mxu0 0.0
  %5831 = vmatpush1.msra.mxu0 %v5669
  %5832 = vmatprep.subr.mxu0 0.0
  %5833 = vmatpush1.msra.mxu0 %v5670
  %5834 = vmatprep.subr.mxu0 0.0
  %5835 = vmatpush1.msra.mxu0 %v5671
  %5836 = vmatprep.subr.mxu0 0.0
  %5837 = vmatpush1.msra.mxu0 %v5672
  %5838 = vmatprep.subr.mxu0 0.0
  %5839 = vmatpush1.msra.mxu0 0.0
  %5840 = vmatprep.subr.mxu0 0.0
  %5841 = vmatpush1.msra.mxu0 0.0
  %5842 = vmatprep.subr.mxu0 0.0
  %5843 = vmatpush1.msra.mxu0 0.0
  %5844 = vmatprep.subr.mxu0 0.0
  %5845 = vmatpush1.msra.mxu0 0.0
  %5846 = vmatprep.subr.mxu0 0.0
  %5847 = vmatpush1.msra.mxu0 0.0
  %5848 = vmatprep.subr.mxu0 0.0
  %5849 = vmatpush1.msra.mxu0 0.0
  %5850 = vmatprep.subr.mxu0 0.0
  %5851 = vmatpush1.msra.mxu0 0.0
  %5852 = vmatprep.subr.mxu0 0.0
  %5853 = vmatpush1.msra.mxu0 0.0
  %5854 = vmatprep.subr.mxu0 0.0
  %5855 = vmatpush1.msra.mxu0 0.0
  %5856 = vmatprep.subr.mxu0 0.0
  %5857 = vmatpush1.msra.mxu0 0.0
  %5858 = vmatprep.subr.mxu0 0.0
  %5859 = vmatpush1.msra.mxu0 0.0
  %5860 = vmatprep.subr.mxu0 0.0
  %5861 = vmatpush1.msra.mxu0 0.0
  %5862 = vmatprep.subr.mxu0 0.0
  %5863 = vmatpush1.msra.mxu0 0.0
  %5864 = vmatprep.subr.mxu0 0.0
  %5865 = vmatpush1.msra.mxu0 0.0
  %5866 = vmatprep.subr.mxu0 0.0
  %5867 = vmatpush1.msra.mxu0 0.0
  %5868 = vmatprep.subr.mxu0 0.0
  %5869 = vmatpush1.msra.mxu0 0.0
  %5870 = vmatprep.mubr.f32.mxu0 0.0
  %5871 = vmatmul.mubr.f32.gmra.mrb[0].mxu0 %v5805
  %v5872 = vpop.f32.mrb[0].mxu0
  %v5873 = vadd.f32 0.0, %v5872
  %v5874 = vpop.f32.mrb[0].mxu0
  %5875 = vdwg.mxu0
  %5876 = vrot.lane.b32.xlu0 %v5634, 96
  %v5877 = vpop.permute.xlu0 %5876
  %5878 = vrot.lane.b32.xlu0 %v5641, 96
  %v5879 = vpop.permute.xlu0 %5878
  %5880 = vrot.lane.b32.xlu0 %v5642, 96
  %v5881 = vpop.permute.xlu0 %5880
  %5882 = vrot.lane.b32.xlu0 %v5643, 96
  %v5883 = vpop.permute.xlu0 %5882
  %5884 = vrot.lane.b32.xlu0 %v5644, 96
  %v5885 = vpop.permute.xlu0 %5884
  %5886 = vrot.lane.b32.xlu0 %v5645, 96
  %v5887 = vpop.permute.xlu0 %5886
  %5888 = vrot.lane.b32.xlu0 %v5646, 96
  %v5889 = vpop.permute.xlu0 %5888
  %5890 = vrot.lane.b32.xlu0 %v5647, 96
  %v5891 = vpop.permute.xlu0 %5890
  %5892 = vrot.lane.b32.xlu0 %v5648, 96
  %v5893 = vpop.permute.xlu0 %5892
  %5894 = vrot.lane.b32.xlu0 %v5649, 96
  %v5895 = vpop.permute.xlu0 %5894
  %5896 = vrot.lane.b32.xlu0 %v5650, 96
  %v5897 = vpop.permute.xlu0 %5896
  %5898 = vrot.lane.b32.xlu0 %v5651, 96
  %v5899 = vpop.permute.xlu0 %5898
  %5900 = vrot.lane.b32.xlu0 %v5652, 96
  %v5901 = vpop.permute.xlu0 %5900
  %5902 = vrot.lane.b32.xlu0 %v5653, 96
  %v5903 = vpop.permute.xlu0 %5902
  %5904 = vrot.lane.b32.xlu0 %v5654, 96
  %v5905 = vpop.permute.xlu0 %5904
  %5906 = vrot.lane.b32.xlu0 %v5655, 96
  %v5907 = vpop.permute.xlu0 %5906
  %5908 = vrot.lane.b32.xlu0 %v5656, 96
  %v5909 = vpop.permute.xlu0 %5908
  %v5910 = vsel %vm1672, %v5877, 0
  %v5912 = vsel %vm1672, %v5879, 0
  %v5914 = vsel %vm1672, %v5881, 0
  %v5916 = vsel %vm1672, %v5883, 0
  %v5918 = vsel %vm1672, %v5885, 0
  %v5920 = vsel %vm1672, %v5887, 0
  %v5922 = vsel %vm1672, %v5889, 0
  %v5924 = vsel %vm1672, %v5891, 0
  %v5926 = vsel %vm1672, %v5893, 0
  %v5928 = vsel %vm1672, %v5895, 0
  %v5930 = vsel %vm1672, %v5897, 0
  %v5932 = vsel %vm1672, %v5899, 0
  %v5934 = vsel %vm1672, %v5901, 0
  %v5936 = vsel %vm1672, %v5903, 0
  %v5938 = vsel %vm1672, %v5905, 0
  %v5940 = vsel %vm1672, %v5907, 0
  %v5942 = vsel %vm1672, %v5909, 0
  %5944 = vmatprep.subr.mxu0 0.0
  %5945 = vmatpush1.xpose.msra.mxu0 %v5912
  %5946 = vmatprep.subr.mxu0 0.0
  %5947 = vmatpush1.xpose.msra.mxu0 %v5914
  %5948 = vmatprep.subr.mxu0 0.0
  %5949 = vmatpush1.xpose.msra.mxu0 %v5916
  %5950 = vmatprep.subr.mxu0 0.0
  %5951 = vmatpush1.xpose.msra.mxu0 %v5918
  %5952 = vmatprep.subr.mxu0 0.0
  %5953 = vmatpush1.xpose.msra.mxu0 %v5920
  %5954 = vmatprep.subr.mxu0 0.0
  %5955 = vmatpush1.xpose.msra.mxu0 %v5922
  %5956 = vmatprep.subr.mxu0 0.0
  %5957 = vmatpush1.xpose.msra.mxu0 %v5924
  %5958 = vmatprep.subr.mxu0 0.0
  %5959 = vmatpush1.xpose.msra.mxu0 %v5926
  %5960 = vmatprep.subr.mxu0 0.0
  %5961 = vmatpush1.xpose.msra.mxu0 %v5928
  %5962 = vmatprep.subr.mxu0 0.0
  %5963 = vmatpush1.xpose.msra.mxu0 %v5930
  %5964 = vmatprep.subr.mxu0 0.0
  %5965 = vmatpush1.xpose.msra.mxu0 %v5932
  %5966 = vmatprep.subr.mxu0 0.0
  %5967 = vmatpush1.xpose.msra.mxu0 %v5934
  %5968 = vmatprep.subr.mxu0 0.0
  %5969 = vmatpush1.xpose.msra.mxu0 %v5936
  %5970 = vmatprep.subr.mxu0 0.0
  %5971 = vmatpush1.xpose.msra.mxu0 %v5938
  %5972 = vmatprep.subr.mxu0 0.0
  %5973 = vmatpush1.xpose.msra.mxu0 %v5940
  %5974 = vmatprep.subr.mxu0 0.0
  %5975 = vmatpush1.xpose.msra.mxu0 %v5942
  %5976 = vmatprep.subr.mxu0 0.0
  %5977 = vmatpush1.xpose.msra.mxu0 0.0
  %5978 = vmatprep.subr.mxu0 0.0
  %5979 = vmatpush1.xpose.msra.mxu0 0.0
  %5980 = vmatprep.subr.mxu0 0.0
  %5981 = vmatpush1.xpose.msra.mxu0 0.0
  %5982 = vmatprep.subr.mxu0 0.0
  %5983 = vmatpush1.xpose.msra.mxu0 0.0
  %5984 = vmatprep.subr.mxu0 0.0
  %5985 = vmatpush1.xpose.msra.mxu0 0.0
  %5986 = vmatprep.subr.mxu0 0.0
  %5987 = vmatpush1.xpose.msra.mxu0 0.0
  %5988 = vmatprep.subr.mxu0 0.0
  %5989 = vmatpush1.xpose.msra.mxu0 0.0
  %5990 = vmatprep.subr.mxu0 0.0
  %5991 = vmatpush1.xpose.msra.mxu0 0.0
  %5992 = vmatprep.subr.mxu0 0.0
  %5993 = vmatpush1.xpose.msra.mxu0 0.0
  %5994 = vmatprep.subr.mxu0 0.0
  %5995 = vmatpush1.xpose.msra.mxu0 0.0
  %5996 = vmatprep.subr.mxu0 0.0
  %5997 = vmatpush1.xpose.msra.mxu0 0.0
  %5998 = vmatprep.subr.mxu0 0.0
  %5999 = vmatpush1.xpose.msra.mxu0 0.0
  %6000 = vmatprep.subr.mxu0 0.0
  %6001 = vmatpush1.xpose.msra.mxu0 0.0
  %6002 = vmatprep.subr.mxu0 0.0
  %6003 = vmatpush1.xpose.msra.mxu0 0.0
  %6004 = vmatprep.subr.mxu0 0.0
  %6005 = vmatpush1.xpose.msra.mxu0 0.0
  %6006 = vmatprep.subr.mxu0 0.0
  %6007 = vmatpush1.xpose.msra.mxu0 0.0
  %6008 = vmatprep.mubr.f32.mxu0 0.0
  %6009 = vmatmul.mubr.f32.gmra.mrb[0].mxu0 %v5910
  %v6010 = vpop.f32.mrb[0].mxu0
  %v6011 = vadd.f32 0.0, %v6010
  %v6012 = vpop.f32.mrb[0].mxu0
  %6013 = vdwg.mxu0
  %v6014 = vmul.f32 %v6011, 0.17677669
  %v6015 = vsel %vm5640, %v6014, -1e+30
  %6016 = vmax.xlane.f32.xlu0 %v6015
  %v6017 = vpop.xlane.xlu0 %6016
  %v6018 = vsub.f32 %v6015, %v6017
  %v6019 = vmul.f32 %v6018, 1.442695
  %v6020 = vpow.pop %v6019
  %v6021 = vsel %vm5640, %v6020, 0.0
  %6022 = vadd.xlane.f32.xlu0 %v6021
  %v6023 = vpop.xlane.xlu0 %6022
  %v6024 = vrcp.pop %v6023
  %v6025 = vmul.f32 %v6021, %v6024
  %6042 = vrot.lane.b32.xlu0 %v5657, 96
  %v6043 = vpop.permute.xlu0 %6042
  %6044 = vrot.lane.b32.xlu0 %v5658, 96
  %v6045 = vpop.permute.xlu0 %6044
  %6046 = vrot.lane.b32.xlu0 %v5659, 96
  %v6047 = vpop.permute.xlu0 %6046
  %6048 = vrot.lane.b32.xlu0 %v5660, 96
  %v6049 = vpop.permute.xlu0 %6048
  %6050 = vrot.lane.b32.xlu0 %v5661, 96
  %v6051 = vpop.permute.xlu0 %6050
  %6052 = vrot.lane.b32.xlu0 %v5662, 96
  %v6053 = vpop.permute.xlu0 %6052
  %6054 = vrot.lane.b32.xlu0 %v5663, 96
  %v6055 = vpop.permute.xlu0 %6054
  %6056 = vrot.lane.b32.xlu0 %v5664, 96
  %v6057 = vpop.permute.xlu0 %6056
  %6058 = vrot.lane.b32.xlu0 %v5665, 96
  %v6059 = vpop.permute.xlu0 %6058
  %6060 = vrot.lane.b32.xlu0 %v5666, 96
  %v6061 = vpop.permute.xlu0 %6060
  %6062 = vrot.lane.b32.xlu0 %v5667, 96
  %v6063 = vpop.permute.xlu0 %6062
  %6064 = vrot.lane.b32.xlu0 %v5668, 96
  %v6065 = vpop.permute.xlu0 %6064
  %6066 = vrot.lane.b32.xlu0 %v5669, 96
  %v6067 = vpop.permute.xlu0 %6066
  %6068 = vrot.lane.b32.xlu0 %v5670, 96
  %v6069 = vpop.permute.xlu0 %6068
  %6070 = vrot.lane.b32.xlu0 %v5671, 96
  %v6071 = vpop.permute.xlu0 %6070
  %6072 = vrot.lane.b32.xlu0 %v5672, 96
  %v6073 = vpop.permute.xlu0 %6072
  %6090 = vmatprep.subr.mxu0 0.0
  %6091 = vmatpush1.msra.mxu0 %v6043
  %6092 = vmatprep.subr.mxu0 0.0
  %6093 = vmatpush1.msra.mxu0 %v6045
  %6094 = vmatprep.subr.mxu0 0.0
  %6095 = vmatpush1.msra.mxu0 %v6047
  %6096 = vmatprep.subr.mxu0 0.0
  %6097 = vmatpush1.msra.mxu0 %v6049
  %6098 = vmatprep.subr.mxu0 0.0
  %6099 = vmatpush1.msra.mxu0 %v6051
  %6100 = vmatprep.subr.mxu0 0.0
  %6101 = vmatpush1.msra.mxu0 %v6053
  %6102 = vmatprep.subr.mxu0 0.0
  %6103 = vmatpush1.msra.mxu0 %v6055
  %6104 = vmatprep.subr.mxu0 0.0
  %6105 = vmatpush1.msra.mxu0 %v6057
  %6106 = vmatprep.subr.mxu0 0.0
  %6107 = vmatpush1.msra.mxu0 %v6059
  %6108 = vmatprep.subr.mxu0 0.0
  %6109 = vmatpush1.msra.mxu0 %v6061
  %6110 = vmatprep.subr.mxu0 0.0
  %6111 = vmatpush1.msra.mxu0 %v6063
  %6112 = vmatprep.subr.mxu0 0.0
  %6113 = vmatpush1.msra.mxu0 %v6065
  %6114 = vmatprep.subr.mxu0 0.0
  %6115 = vmatpush1.msra.mxu0 %v6067
  %6116 = vmatprep.subr.mxu0 0.0
  %6117 = vmatpush1.msra.mxu0 %v6069
  %6118 = vmatprep.subr.mxu0 0.0
  %6119 = vmatpush1.msra.mxu0 %v6071
  %6120 = vmatprep.subr.mxu0 0.0
  %6121 = vmatpush1.msra.mxu0 %v6073
  %6122 = vmatprep.subr.mxu0 0.0
  %6123 = vmatpush1.msra.mxu0 0.0
  %6124 = vmatprep.subr.mxu0 0.0
  %6125 = vmatpush1.msra.mxu0 0.0
  %6126 = vmatprep.subr.mxu0 0.0
  %6127 = vmatpush1.msra.mxu0 0.0
  %6128 = vmatprep.subr.mxu0 0.0
  %6129 = vmatpush1.msra.mxu0 0.0
  %6130 = vmatprep.subr.mxu0 0.0
  %6131 = vmatpush1.msra.mxu0 0.0
  %6132 = vmatprep.subr.mxu0 0.0
  %6133 = vmatpush1.msra.mxu0 0.0
  %6134 = vmatprep.subr.mxu0 0.0
  %6135 = vmatpush1.msra.mxu0 0.0
  %6136 = vmatprep.subr.mxu0 0.0
  %6137 = vmatpush1.msra.mxu0 0.0
  %6138 = vmatprep.subr.mxu0 0.0
  %6139 = vmatpush1.msra.mxu0 0.0
  %6140 = vmatprep.subr.mxu0 0.0
  %6141 = vmatpush1.msra.mxu0 0.0
  %6142 = vmatprep.subr.mxu0 0.0
  %6143 = vmatpush1.msra.mxu0 0.0
  %6144 = vmatprep.subr.mxu0 0.0
  %6145 = vmatpush1.msra.mxu0 0.0
  %6146 = vmatprep.subr.mxu0 0.0
  %6147 = vmatpush1.msra.mxu0 0.0
  %6148 = vmatprep.subr.mxu0 0.0
  %6149 = vmatpush1.msra.mxu0 0.0
  %6150 = vmatprep.subr.mxu0 0.0
  %6151 = vmatpush1.msra.mxu0 0.0
  %6152 = vmatprep.subr.mxu0 0.0
  %6153 = vmatpush1.msra.mxu0 0.0
  %6154 = vmatprep.mubr.f32.mxu0 0.0
  %6155 = vmatmul.mubr.f32.gmra.mrb[0].mxu0 %v6025
  %v6156 = vpop.f32.mrb[0].mxu0
  %v6157 = vadd.f32 0.0, %v6156
  %v6158 = vpop.f32.mrb[0].mxu0
  %6159 = vdwg.mxu0
  %6160 = vrot.lane.b32.xlu0 %v5634, 64
  %v6161 = vpop.permute.xlu0 %6160
  %6162 = vrot.lane.b32.xlu0 %v5641, 64
  %v6163 = vpop.permute.xlu0 %6162
  %6164 = vrot.lane.b32.xlu0 %v5642, 64
  %v6165 = vpop.permute.xlu0 %6164
  %6166 = vrot.lane.b32.xlu0 %v5643, 64
  %v6167 = vpop.permute.xlu0 %6166
  %6168 = vrot.lane.b32.xlu0 %v5644, 64
  %v6169 = vpop.permute.xlu0 %6168
  %6170 = vrot.lane.b32.xlu0 %v5645, 64
  %v6171 = vpop.permute.xlu0 %6170
  %6172 = vrot.lane.b32.xlu0 %v5646, 64
  %v6173 = vpop.permute.xlu0 %6172
  %6174 = vrot.lane.b32.xlu0 %v5647, 64
  %v6175 = vpop.permute.xlu0 %6174
  %6176 = vrot.lane.b32.xlu0 %v5648, 64
  %v6177 = vpop.permute.xlu0 %6176
  %6178 = vrot.lane.b32.xlu0 %v5649, 64
  %v6179 = vpop.permute.xlu0 %6178
  %6180 = vrot.lane.b32.xlu0 %v5650, 64
  %v6181 = vpop.permute.xlu0 %6180
  %6182 = vrot.lane.b32.xlu0 %v5651, 64
  %v6183 = vpop.permute.xlu0 %6182
  %6184 = vrot.lane.b32.xlu0 %v5652, 64
  %v6185 = vpop.permute.xlu0 %6184
  %6186 = vrot.lane.b32.xlu0 %v5653, 64
  %v6187 = vpop.permute.xlu0 %6186
  %6188 = vrot.lane.b32.xlu0 %v5654, 64
  %v6189 = vpop.permute.xlu0 %6188
  %6190 = vrot.lane.b32.xlu0 %v5655, 64
  %v6191 = vpop.permute.xlu0 %6190
  %6192 = vrot.lane.b32.xlu0 %v5656, 64
  %v6193 = vpop.permute.xlu0 %6192
  %v6194 = vsel %vm1672, %v6161, 0
  %v6196 = vsel %vm1672, %v6163, 0
  %v6198 = vsel %vm1672, %v6165, 0
  %v6200 = vsel %vm1672, %v6167, 0
  %v6202 = vsel %vm1672, %v6169, 0
  %v6204 = vsel %vm1672, %v6171, 0
  %v6206 = vsel %vm1672, %v6173, 0
  %v6208 = vsel %vm1672, %v6175, 0
  %v6210 = vsel %vm1672, %v6177, 0
  %v6212 = vsel %vm1672, %v6179, 0
  %v6214 = vsel %vm1672, %v6181, 0
  %v6216 = vsel %vm1672, %v6183, 0
  %v6218 = vsel %vm1672, %v6185, 0
  %v6220 = vsel %vm1672, %v6187, 0
  %v6222 = vsel %vm1672, %v6189, 0
  %v6224 = vsel %vm1672, %v6191, 0
  %v6226 = vsel %vm1672, %v6193, 0
  %6228 = vmatprep.subr.mxu0 0.0
  %6229 = vmatpush1.xpose.msra.mxu0 %v6196
  %6230 = vmatprep.subr.mxu0 0.0
  %6231 = vmatpush1.xpose.msra.mxu0 %v6198
  %6232 = vmatprep.subr.mxu0 0.0
  %6233 = vmatpush1.xpose.msra.mxu0 %v6200
  %6234 = vmatprep.subr.mxu0 0.0
  %6235 = vmatpush1.xpose.msra.mxu0 %v6202
  %6236 = vmatprep.subr.mxu0 0.0
  %6237 = vmatpush1.xpose.msra.mxu0 %v6204
  %6238 = vmatprep.subr.mxu0 0.0
  %6239 = vmatpush1.xpose.msra.mxu0 %v6206
  %6240 = vmatprep.subr.mxu0 0.0
  %6241 = vmatpush1.xpose.msra.mxu0 %v6208
  %6242 = vmatprep.subr.mxu0 0.0
  %6243 = vmatpush1.xpose.msra.mxu0 %v6210
  %6244 = vmatprep.subr.mxu0 0.0
  %6245 = vmatpush1.xpose.msra.mxu0 %v6212
  %6246 = vmatprep.subr.mxu0 0.0
  %6247 = vmatpush1.xpose.msra.mxu0 %v6214
  %6248 = vmatprep.subr.mxu0 0.0
  %6249 = vmatpush1.xpose.msra.mxu0 %v6216
  %6250 = vmatprep.subr.mxu0 0.0
  %6251 = vmatpush1.xpose.msra.mxu0 %v6218
  %6252 = vmatprep.subr.mxu0 0.0
  %6253 = vmatpush1.xpose.msra.mxu0 %v6220
  %6254 = vmatprep.subr.mxu0 0.0
  %6255 = vmatpush1.xpose.msra.mxu0 %v6222
  %6256 = vmatprep.subr.mxu0 0.0
  %6257 = vmatpush1.xpose.msra.mxu0 %v6224
  %6258 = vmatprep.subr.mxu0 0.0
  %6259 = vmatpush1.xpose.msra.mxu0 %v6226
  %6260 = vmatprep.subr.mxu0 0.0
  %6261 = vmatpush1.xpose.msra.mxu0 0.0
  %6262 = vmatprep.subr.mxu0 0.0
  %6263 = vmatpush1.xpose.msra.mxu0 0.0
  %6264 = vmatprep.subr.mxu0 0.0
  %6265 = vmatpush1.xpose.msra.mxu0 0.0
  %6266 = vmatprep.subr.mxu0 0.0
  %6267 = vmatpush1.xpose.msra.mxu0 0.0
  %6268 = vmatprep.subr.mxu0 0.0
  %6269 = vmatpush1.xpose.msra.mxu0 0.0
  %6270 = vmatprep.subr.mxu0 0.0
  %6271 = vmatpush1.xpose.msra.mxu0 0.0
  %6272 = vmatprep.subr.mxu0 0.0
  %6273 = vmatpush1.xpose.msra.mxu0 0.0
  %6274 = vmatprep.subr.mxu0 0.0
  %6275 = vmatpush1.xpose.msra.mxu0 0.0
  %6276 = vmatprep.subr.mxu0 0.0
  %6277 = vmatpush1.xpose.msra.mxu0 0.0
  %6278 = vmatprep.subr.mxu0 0.0
  %6279 = vmatpush1.xpose.msra.mxu0 0.0
  %6280 = vmatprep.subr.mxu0 0.0
  %6281 = vmatpush1.xpose.msra.mxu0 0.0
  %6282 = vmatprep.subr.mxu0 0.0
  %6283 = vmatpush1.xpose.msra.mxu0 0.0
  %6284 = vmatprep.subr.mxu0 0.0
  %6285 = vmatpush1.xpose.msra.mxu0 0.0
  %6286 = vmatprep.subr.mxu0 0.0
  %6287 = vmatpush1.xpose.msra.mxu0 0.0
  %6288 = vmatprep.subr.mxu0 0.0
  %6289 = vmatpush1.xpose.msra.mxu0 0.0
  %6290 = vmatprep.subr.mxu0 0.0
  %6291 = vmatpush1.xpose.msra.mxu0 0.0
  %6292 = vmatprep.mubr.f32.mxu0 0.0
  %6293 = vmatmul.mubr.f32.gmra.mrb[0].mxu0 %v6194
  %v6294 = vpop.f32.mrb[0].mxu0
  %v6295 = vadd.f32 0.0, %v6294
  %v6296 = vpop.f32.mrb[0].mxu0
  %6297 = vdwg.mxu0
  %v6298 = vmul.f32 %v6295, 0.17677669
  %v6299 = vsel %vm5640, %v6298, -1e+30
  %6300 = vmax.xlane.f32.xlu0 %v6299
  %v6301 = vpop.xlane.xlu0 %6300
  %v6302 = vsub.f32 %v6299, %v6301
  %v6303 = vmul.f32 %v6302, 1.442695
  %v6304 = vpow.pop %v6303
  %v6305 = vsel %vm5640, %v6304, 0.0
  %6306 = vadd.xlane.f32.xlu0 %v6305
  %v6307 = vpop.xlane.xlu0 %6306
  %v6308 = vrcp.pop %v6307
  %v6309 = vmul.f32 %v6305, %v6308
  %6310 = vrot.lane.b32.xlu0 %v5657, 64
  %v6311 = vpop.permute.xlu0 %6310
  %6312 = vrot.lane.b32.xlu0 %v5658, 64
  %v6313 = vpop.permute.xlu0 %6312
  %6314 = vrot.lane.b32.xlu0 %v5659, 64
  %v6315 = vpop.permute.xlu0 %6314
  %6316 = vrot.lane.b32.xlu0 %v5660, 64
  %v6317 = vpop.permute.xlu0 %6316
  %6318 = vrot.lane.b32.xlu0 %v5661, 64
  %v6319 = vpop.permute.xlu0 %6318
  %6320 = vrot.lane.b32.xlu0 %v5662, 64
  %v6321 = vpop.permute.xlu0 %6320
  %6322 = vrot.lane.b32.xlu0 %v5663, 64
  %v6323 = vpop.permute.xlu0 %6322
  %6324 = vrot.lane.b32.xlu0 %v5664, 64
  %v6325 = vpop.permute.xlu0 %6324
  %6326 = vrot.lane.b32.xlu0 %v5665, 64
  %v6327 = vpop.permute.xlu0 %6326
  %6328 = vrot.lane.b32.xlu0 %v5666, 64
  %v6329 = vpop.permute.xlu0 %6328
  %6330 = vrot.lane.b32.xlu0 %v5667, 64
  %v6331 = vpop.permute.xlu0 %6330
  %6332 = vrot.lane.b32.xlu0 %v5668, 64
  %v6333 = vpop.permute.xlu0 %6332
  %6334 = vrot.lane.b32.xlu0 %v5669, 64
  %v6335 = vpop.permute.xlu0 %6334
  %6336 = vrot.lane.b32.xlu0 %v5670, 64
  %v6337 = vpop.permute.xlu0 %6336
  %6338 = vrot.lane.b32.xlu0 %v5671, 64
  %v6339 = vpop.permute.xlu0 %6338
  %6340 = vrot.lane.b32.xlu0 %v5672, 64
  %v6341 = vpop.permute.xlu0 %6340
  %6358 = vmatprep.subr.mxu0 0.0
  %6359 = vmatpush1.msra.mxu0 %v6311
  %6360 = vmatprep.subr.mxu0 0.0
  %6361 = vmatpush1.msra.mxu0 %v6313
  %6362 = vmatprep.subr.mxu0 0.0
  %6363 = vmatpush1.msra.mxu0 %v6315
  %6364 = vmatprep.subr.mxu0 0.0
  %6365 = vmatpush1.msra.mxu0 %v6317
  %6366 = vmatprep.subr.mxu0 0.0
  %6367 = vmatpush1.msra.mxu0 %v6319
  %6368 = vmatprep.subr.mxu0 0.0
  %6369 = vmatpush1.msra.mxu0 %v6321
  %6370 = vmatprep.subr.mxu0 0.0
  %6371 = vmatpush1.msra.mxu0 %v6323
  %6372 = vmatprep.subr.mxu0 0.0
  %6373 = vmatpush1.msra.mxu0 %v6325
  %6374 = vmatprep.subr.mxu0 0.0
  %6375 = vmatpush1.msra.mxu0 %v6327
  %6376 = vmatprep.subr.mxu0 0.0
  %6377 = vmatpush1.msra.mxu0 %v6329
  %6378 = vmatprep.subr.mxu0 0.0
  %6379 = vmatpush1.msra.mxu0 %v6331
  %6380 = vmatprep.subr.mxu0 0.0
  %6381 = vmatpush1.msra.mxu0 %v6333
  %6382 = vmatprep.subr.mxu0 0.0
  %6383 = vmatpush1.msra.mxu0 %v6335
  %6384 = vmatprep.subr.mxu0 0.0
  %6385 = vmatpush1.msra.mxu0 %v6337
  %6386 = vmatprep.subr.mxu0 0.0
  %6387 = vmatpush1.msra.mxu0 %v6339
  %6388 = vmatprep.subr.mxu0 0.0
  %6389 = vmatpush1.msra.mxu0 %v6341
  %6390 = vmatprep.subr.mxu0 0.0
  %6391 = vmatpush1.msra.mxu0 0.0
  %6392 = vmatprep.subr.mxu0 0.0
  %6393 = vmatpush1.msra.mxu0 0.0
  %6394 = vmatprep.subr.mxu0 0.0
  %6395 = vmatpush1.msra.mxu0 0.0
  %6396 = vmatprep.subr.mxu0 0.0
  %6397 = vmatpush1.msra.mxu0 0.0
  %6398 = vmatprep.subr.mxu0 0.0
  %6399 = vmatpush1.msra.mxu0 0.0
  %6400 = vmatprep.subr.mxu0 0.0
  %6401 = vmatpush1.msra.mxu0 0.0
  %6402 = vmatprep.subr.mxu0 0.0
  %6403 = vmatpush1.msra.mxu0 0.0
  %6404 = vmatprep.subr.mxu0 0.0
  %6405 = vmatpush1.msra.mxu0 0.0
  %6406 = vmatprep.subr.mxu0 0.0
  %6407 = vmatpush1.msra.mxu0 0.0
  %6408 = vmatprep.subr.mxu0 0.0
  %6409 = vmatpush1.msra.mxu0 0.0
  %6410 = vmatprep.subr.mxu0 0.0
  %6411 = vmatpush1.msra.mxu0 0.0
  %6412 = vmatprep.subr.mxu0 0.0
  %6413 = vmatpush1.msra.mxu0 0.0
  %6414 = vmatprep.subr.mxu0 0.0
  %6415 = vmatpush1.msra.mxu0 0.0
  %6416 = vmatprep.subr.mxu0 0.0
  %6417 = vmatpush1.msra.mxu0 0.0
  %6418 = vmatprep.subr.mxu0 0.0
  %6419 = vmatpush1.msra.mxu0 0.0
  %6420 = vmatprep.subr.mxu0 0.0
  %6421 = vmatpush1.msra.mxu0 0.0
  %6422 = vmatprep.mubr.f32.mxu0 0.0
  %6423 = vmatmul.mubr.f32.gmra.mrb[0].mxu0 %v6309
  %v6424 = vpop.f32.mrb[0].mxu0
  %v6425 = vadd.f32 0.0, %v6424
  %v6426 = vpop.f32.mrb[0].mxu0
  %6427 = vdwg.mxu0
  %6428 = vrot.lane.b32.xlu0 %v5634, 32
  %v6429 = vpop.permute.xlu0 %6428
  %6430 = vrot.lane.b32.xlu0 %v5641, 32
  %v6431 = vpop.permute.xlu0 %6430
  %6432 = vrot.lane.b32.xlu0 %v5642, 32
  %v6433 = vpop.permute.xlu0 %6432
  %6434 = vrot.lane.b32.xlu0 %v5643, 32
  %v6435 = vpop.permute.xlu0 %6434
  %6436 = vrot.lane.b32.xlu0 %v5644, 32
  %v6437 = vpop.permute.xlu0 %6436
  %6438 = vrot.lane.b32.xlu0 %v5645, 32
  %v6439 = vpop.permute.xlu0 %6438
  %6440 = vrot.lane.b32.xlu0 %v5646, 32
  %v6441 = vpop.permute.xlu0 %6440
  %6442 = vrot.lane.b32.xlu0 %v5647, 32
  %v6443 = vpop.permute.xlu0 %6442
  %6444 = vrot.lane.b32.xlu0 %v5648, 32
  %v6445 = vpop.permute.xlu0 %6444
  %6446 = vrot.lane.b32.xlu0 %v5649, 32
  %v6447 = vpop.permute.xlu0 %6446
  %6448 = vrot.lane.b32.xlu0 %v5650, 32
  %v6449 = vpop.permute.xlu0 %6448
  %6450 = vrot.lane.b32.xlu0 %v5651, 32
  %v6451 = vpop.permute.xlu0 %6450
  %6452 = vrot.lane.b32.xlu0 %v5652, 32
  %v6453 = vpop.permute.xlu0 %6452
  %6454 = vrot.lane.b32.xlu0 %v5653, 32
  %v6455 = vpop.permute.xlu0 %6454
  %6456 = vrot.lane.b32.xlu0 %v5654, 32
  %v6457 = vpop.permute.xlu0 %6456
  %6458 = vrot.lane.b32.xlu0 %v5655, 32
  %v6459 = vpop.permute.xlu0 %6458
  %6460 = vrot.lane.b32.xlu0 %v5656, 32
  %v6461 = vpop.permute.xlu0 %6460
  %v6462 = vsel %vm1672, %v6429, 0
  %v6464 = vsel %vm1672, %v6431, 0
  %v6466 = vsel %vm1672, %v6433, 0
  %v6468 = vsel %vm1672, %v6435, 0
  %v6470 = vsel %vm1672, %v6437, 0
  %v6472 = vsel %vm1672, %v6439, 0
  %v6474 = vsel %vm1672, %v6441, 0
  %v6476 = vsel %vm1672, %v6443, 0
  %v6478 = vsel %vm1672, %v6445, 0
  %v6480 = vsel %vm1672, %v6447, 0
  %v6482 = vsel %vm1672, %v6449, 0
  %v6484 = vsel %vm1672, %v6451, 0
  %v6486 = vsel %vm1672, %v6453, 0
  %v6488 = vsel %vm1672, %v6455, 0
  %v6490 = vsel %vm1672, %v6457, 0
  %v6492 = vsel %vm1672, %v6459, 0
  %v6494 = vsel %vm1672, %v6461, 0
  %6496 = vmatprep.subr.mxu0 0.0
  %6497 = vmatpush1.xpose.msra.mxu0 %v6464
  %6498 = vmatprep.subr.mxu0 0.0
  %6499 = vmatpush1.xpose.msra.mxu0 %v6466
  %6500 = vmatprep.subr.mxu0 0.0
  %6501 = vmatpush1.xpose.msra.mxu0 %v6468
  %6502 = vmatprep.subr.mxu0 0.0
  %6503 = vmatpush1.xpose.msra.mxu0 %v6470
  %6504 = vmatprep.subr.mxu0 0.0
  %6505 = vmatpush1.xpose.msra.mxu0 %v6472
  %6506 = vmatprep.subr.mxu0 0.0
  %6507 = vmatpush1.xpose.msra.mxu0 %v6474
  %6508 = vmatprep.subr.mxu0 0.0
  %6509 = vmatpush1.xpose.msra.mxu0 %v6476
  %6510 = vmatprep.subr.mxu0 0.0
  %6511 = vmatpush1.xpose.msra.mxu0 %v6478
  %6512 = vmatprep.subr.mxu0 0.0
  %6513 = vmatpush1.xpose.msra.mxu0 %v6480
  %6514 = vmatprep.subr.mxu0 0.0
  %6515 = vmatpush1.xpose.msra.mxu0 %v6482
  %6516 = vmatprep.subr.mxu0 0.0
  %6517 = vmatpush1.xpose.msra.mxu0 %v6484
  %6518 = vmatprep.subr.mxu0 0.0
  %6519 = vmatpush1.xpose.msra.mxu0 %v6486
  %6520 = vmatprep.subr.mxu0 0.0
  %6521 = vmatpush1.xpose.msra.mxu0 %v6488
  %6522 = vmatprep.subr.mxu0 0.0
  %6523 = vmatpush1.xpose.msra.mxu0 %v6490
  %6524 = vmatprep.subr.mxu0 0.0
  %6525 = vmatpush1.xpose.msra.mxu0 %v6492
  %6526 = vmatprep.subr.mxu0 0.0
  %6527 = vmatpush1.xpose.msra.mxu0 %v6494
  %6528 = vmatprep.subr.mxu0 0.0
  %6529 = vmatpush1.xpose.msra.mxu0 0.0
  %6530 = vmatprep.subr.mxu0 0.0
  %6531 = vmatpush1.xpose.msra.mxu0 0.0
  %6532 = vmatprep.subr.mxu0 0.0
  %6533 = vmatpush1.xpose.msra.mxu0 0.0
  %6534 = vmatprep.subr.mxu0 0.0
  %6535 = vmatpush1.xpose.msra.mxu0 0.0
  %6536 = vmatprep.subr.mxu0 0.0
  %6537 = vmatpush1.xpose.msra.mxu0 0.0
  %6538 = vmatprep.subr.mxu0 0.0
  %6539 = vmatpush1.xpose.msra.mxu0 0.0
  %6540 = vmatprep.subr.mxu0 0.0
  %6541 = vmatpush1.xpose.msra.mxu0 0.0
  %6542 = vmatprep.subr.mxu0 0.0
  %6543 = vmatpush1.xpose.msra.mxu0 0.0
  %6544 = vmatprep.subr.mxu0 0.0
  %6545 = vmatpush1.xpose.msra.mxu0 0.0
  %6546 = vmatprep.subr.mxu0 0.0
  %6547 = vmatpush1.xpose.msra.mxu0 0.0
  %6548 = vmatprep.subr.mxu0 0.0
  %6549 = vmatpush1.xpose.msra.mxu0 0.0
  %6550 = vmatprep.subr.mxu0 0.0
  %6551 = vmatpush1.xpose.msra.mxu0 0.0
  %6552 = vmatprep.subr.mxu0 0.0
  %6553 = vmatpush1.xpose.msra.mxu0 0.0
  %6554 = vmatprep.subr.mxu0 0.0
  %6555 = vmatpush1.xpose.msra.mxu0 0.0
  %6556 = vmatprep.subr.mxu0 0.0
  %6557 = vmatpush1.xpose.msra.mxu0 0.0
  %6558 = vmatprep.subr.mxu0 0.0
  %6559 = vmatpush1.xpose.msra.mxu0 0.0
  %6560 = vmatprep.mubr.f32.mxu0 0.0
  %6561 = vmatmul.mubr.f32.gmra.mrb[0].mxu0 %v6462
  %v6562 = vpop.f32.mrb[0].mxu0
  %v6563 = vadd.f32 0.0, %v6562
  %v6564 = vpop.f32.mrb[0].mxu0
  %6565 = vdwg.mxu0
  %v6566 = vmul.f32 %v6563, 0.17677669
  %v6567 = vsel %vm5640, %v6566, -1e+30
  %6568 = vmax.xlane.f32.xlu0 %v6567
  %v6569 = vpop.xlane.xlu0 %6568
  %v6570 = vsub.f32 %v6567, %v6569
  %v6571 = vmul.f32 %v6570, 1.442695
  %v6572 = vpow.pop %v6571
  %v6573 = vsel %vm5640, %v6572, 0.0
  %6574 = vadd.xlane.f32.xlu0 %v6573
  %v6575 = vpop.xlane.xlu0 %6574
  %v6576 = vrcp.pop %v6575
  %v6577 = vmul.f32 %v6573, %v6576
  %6578 = vrot.lane.b32.xlu0 %v5657, 32
  %v6579 = vpop.permute.xlu0 %6578
  %6580 = vrot.lane.b32.xlu0 %v5658, 32
  %v6581 = vpop.permute.xlu0 %6580
  %6582 = vrot.lane.b32.xlu0 %v5659, 32
  %v6583 = vpop.permute.xlu0 %6582
  %6584 = vrot.lane.b32.xlu0 %v5660, 32
  %v6585 = vpop.permute.xlu0 %6584
  %6586 = vrot.lane.b32.xlu0 %v5661, 32
  %v6587 = vpop.permute.xlu0 %6586
  %6588 = vrot.lane.b32.xlu0 %v5662, 32
  %v6589 = vpop.permute.xlu0 %6588
  %6590 = vrot.lane.b32.xlu0 %v5663, 32
  %v6591 = vpop.permute.xlu0 %6590
  %6592 = vrot.lane.b32.xlu0 %v5664, 32
  %v6593 = vpop.permute.xlu0 %6592
  %6594 = vrot.lane.b32.xlu0 %v5665, 32
  %v6595 = vpop.permute.xlu0 %6594
  %6596 = vrot.lane.b32.xlu0 %v5666, 32
  %v6597 = vpop.permute.xlu0 %6596
  %6598 = vrot.lane.b32.xlu0 %v5667, 32
  %v6599 = vpop.permute.xlu0 %6598
  %6600 = vrot.lane.b32.xlu0 %v5668, 32
  %v6601 = vpop.permute.xlu0 %6600
  %6602 = vrot.lane.b32.xlu0 %v5669, 32
  %v6603 = vpop.permute.xlu0 %6602
  %6604 = vrot.lane.b32.xlu0 %v5670, 32
  %v6605 = vpop.permute.xlu0 %6604
  %6606 = vrot.lane.b32.xlu0 %v5671, 32
  %v6607 = vpop.permute.xlu0 %6606
  %6608 = vrot.lane.b32.xlu0 %v5672, 32
  %v6609 = vpop.permute.xlu0 %6608
  %6626 = vmatprep.subr.mxu0 0.0
  %6627 = vmatpush1.msra.mxu0 %v6579
  %6628 = vmatprep.subr.mxu0 0.0
  %6629 = vmatpush1.msra.mxu0 %v6581
  %6630 = vmatprep.subr.mxu0 0.0
  %6631 = vmatpush1.msra.mxu0 %v6583
  %6632 = vmatprep.subr.mxu0 0.0
  %6633 = vmatpush1.msra.mxu0 %v6585
  %6634 = vmatprep.subr.mxu0 0.0
  %6635 = vmatpush1.msra.mxu0 %v6587
  %6636 = vmatprep.subr.mxu0 0.0
  %6637 = vmatpush1.msra.mxu0 %v6589
  %6638 = vmatprep.subr.mxu0 0.0
  %6639 = vmatpush1.msra.mxu0 %v6591
  %6640 = vmatprep.subr.mxu0 0.0
  %6641 = vmatpush1.msra.mxu0 %v6593
  %6642 = vmatprep.subr.mxu0 0.0
  %6643 = vmatpush1.msra.mxu0 %v6595
  %6644 = vmatprep.subr.mxu0 0.0
  %6645 = vmatpush1.msra.mxu0 %v6597
  %6646 = vmatprep.subr.mxu0 0.0
  %6647 = vmatpush1.msra.mxu0 %v6599
  %6648 = vmatprep.subr.mxu0 0.0
  %6649 = vmatpush1.msra.mxu0 %v6601
  %6650 = vmatprep.subr.mxu0 0.0
  %6651 = vmatpush1.msra.mxu0 %v6603
  %6652 = vmatprep.subr.mxu0 0.0
  %6653 = vmatpush1.msra.mxu0 %v6605
  %6654 = vmatprep.subr.mxu0 0.0
  %6655 = vmatpush1.msra.mxu0 %v6607
  %6656 = vmatprep.subr.mxu0 0.0
  %6657 = vmatpush1.msra.mxu0 %v6609
  %6658 = vmatprep.subr.mxu0 0.0
  %6659 = vmatpush1.msra.mxu0 0.0
  %6660 = vmatprep.subr.mxu0 0.0
  %6661 = vmatpush1.msra.mxu0 0.0
  %6662 = vmatprep.subr.mxu0 0.0
  %6663 = vmatpush1.msra.mxu0 0.0
  %6664 = vmatprep.subr.mxu0 0.0
  %6665 = vmatpush1.msra.mxu0 0.0
  %6666 = vmatprep.subr.mxu0 0.0
  %6667 = vmatpush1.msra.mxu0 0.0
  %6668 = vmatprep.subr.mxu0 0.0
  %6669 = vmatpush1.msra.mxu0 0.0
  %6670 = vmatprep.subr.mxu0 0.0
  %6671 = vmatpush1.msra.mxu0 0.0
  %6672 = vmatprep.subr.mxu0 0.0
  %6673 = vmatpush1.msra.mxu0 0.0
  %6674 = vmatprep.subr.mxu0 0.0
  %6675 = vmatpush1.msra.mxu0 0.0
  %6676 = vmatprep.subr.mxu0 0.0
  %6677 = vmatpush1.msra.mxu0 0.0
  %6678 = vmatprep.subr.mxu0 0.0
  %6679 = vmatpush1.msra.mxu0 0.0
  %6680 = vmatprep.subr.mxu0 0.0
  %6681 = vmatpush1.msra.mxu0 0.0
  %6682 = vmatprep.subr.mxu0 0.0
  %6683 = vmatpush1.msra.mxu0 0.0
  %6684 = vmatprep.subr.mxu0 0.0
  %6685 = vmatpush1.msra.mxu0 0.0
  %6686 = vmatprep.subr.mxu0 0.0
  %6687 = vmatpush1.msra.mxu0 0.0
  %6688 = vmatprep.subr.mxu0 0.0
  %6689 = vmatpush1.msra.mxu0 0.0
  %6690 = vmatprep.mubr.f32.mxu0 0.0
  %6691 = vmatmul.mubr.f32.gmra.mrb[0].mxu0 %v6577
  %v6692 = vpop.f32.mrb[0].mxu0
  %v6693 = vadd.f32 0.0, %v6692
  %v6694 = vpop.f32.mrb[0].mxu0
  %6695 = vdwg.mxu0
  %6697 = vrot.lane.b32.xlu0 %v6157, 32
  %v6698 = vpop.permute.xlu0 %6697
  %6701 = vrot.lane.b32.xlu0 %v6425, 64
  %v6702 = vpop.permute.xlu0 %6701
  %6705 = vrot.lane.b32.xlu0 %v6693, 96
  %v6706 = vpop.permute.xlu0 %6705
  %v6708 = vsel %vm1672, %v5873, %v6698
  %v6709 = vsel %vm2614, %v6708, %v6702
  %vm6710 = vcmask 785408
  %v6711 = vsel %vm6710, %v6709, %v6706
  %v6712 = vld [vmem:[%s5 + $0x8] sm:$0x1]
  %v6714 = vlaneseq
  %v6715 = vshrl.u32 %v6714, 7
  %v6716 = vsub.s32 0, %v6715
  %v6717 = vrot.slane %v6712, %v6716
  %6719 = vmatprep.subr.mxu0 0.0
  %6720 = vmatpush1.msra.mxu0 %v5306
  %6721 = vmatprep.subr.mxu0 0.0
  %6722 = vmatpush1.msra.mxu0 %v5307
  %6723 = vmatprep.subr.mxu0 0.0
  %6724 = vmatpush1.msra.mxu0 %v5308
  %6725 = vmatprep.subr.mxu0 0.0
  %6726 = vmatpush1.msra.mxu0 %v5309
  %6727 = vmatprep.subr.mxu0 0.0
  %6728 = vmatpush1.msra.mxu0 %v5310
  %6729 = vmatprep.subr.mxu0 0.0
  %6730 = vmatpush1.msra.mxu0 %v5311
  %6731 = vmatprep.subr.mxu0 0.0
  %6732 = vmatpush1.msra.mxu0 %v5312
  %6733 = vmatprep.subr.mxu0 0.0
  %6734 = vmatpush1.msra.mxu0 %v5313
  %6735 = vmatprep.subr.mxu0 0.0
  %6736 = vmatpush1.msra.mxu0 %v5314
  %6737 = vmatprep.subr.mxu0 0.0
  %6738 = vmatpush1.msra.mxu0 %v5315
  %6739 = vmatprep.subr.mxu0 0.0
  %6740 = vmatpush1.msra.mxu0 %v5316
  %6741 = vmatprep.subr.mxu0 0.0
  %6742 = vmatpush1.msra.mxu0 %v5317
  %6743 = vmatprep.subr.mxu0 0.0
  %6744 = vmatpush1.msra.mxu0 %v5318
  %6745 = vmatprep.subr.mxu0 0.0
  %6746 = vmatpush1.msra.mxu0 %v5319
  %6747 = vmatprep.subr.mxu0 0.0
  %6748 = vmatpush1.msra.mxu0 %v5320
  %6749 = vmatprep.subr.mxu0 0.0
  %6750 = vmatpush1.msra.mxu0 %v5321
  %6751 = vmatprep.subr.mxu0 0.0
  %6752 = vmatpush1.msra.mxu0 0.0
  %6753 = vmatprep.subr.mxu0 0.0
  %6754 = vmatpush1.msra.mxu0 0.0
  %6755 = vmatprep.subr.mxu0 0.0
  %6756 = vmatpush1.msra.mxu0 0.0
  %6757 = vmatprep.subr.mxu0 0.0
  %6758 = vmatpush1.msra.mxu0 0.0
  %6759 = vmatprep.subr.mxu0 0.0
  %6760 = vmatpush1.msra.mxu0 0.0
  %6761 = vmatprep.subr.mxu0 0.0
  %6762 = vmatpush1.msra.mxu0 0.0
  %6763 = vmatprep.subr.mxu0 0.0
  %6764 = vmatpush1.msra.mxu0 0.0
  %6765 = vmatprep.subr.mxu0 0.0
  %6766 = vmatpush1.msra.mxu0 0.0
  %6767 = vmatprep.subr.mxu0 0.0
  %6768 = vmatpush1.msra.mxu0 0.0
  %6769 = vmatprep.subr.mxu0 0.0
  %6770 = vmatpush1.msra.mxu0 0.0
  %6771 = vmatprep.subr.mxu0 0.0
  %6772 = vmatpush1.msra.mxu0 0.0
  %6773 = vmatprep.subr.mxu0 0.0
  %6774 = vmatpush1.msra.mxu0 0.0
  %6775 = vmatprep.subr.mxu0 0.0
  %6776 = vmatpush1.msra.mxu0 0.0
  %6777 = vmatprep.subr.mxu0 0.0
  %6778 = vmatpush1.msra.mxu0 0.0
  %6779 = vmatprep.subr.mxu0 0.0
  %6780 = vmatpush1.msra.mxu0 0.0
  %6781 = vmatprep.subr.mxu0 0.0
  %6782 = vmatpush1.msra.mxu0 0.0
  %6783 = vmatprep.mubr.f32.mxu0 0.0
  %6784 = vmatmul.mubr.f32.gmra.mrb[0].mxu0 %v6711
  %v6785 = vpop.f32.mrb[0].mxu0
  %v6786 = vadd.f32 %v6717, %v6785
  %v6787 = vpop.f32.mrb[0].mxu0
  %6788 = vdwg.mxu0
  %v6789 = vadd.f32 %v5559, %v6786
  %v6790 = vld [vmem:[%s5 + $0x9] sm:$0x1]
  %v6791 = vld [vmem:[%s5 + $0xa] sm:$0x1]
  %6792 = vadd.xlane.f32.xlu0 %v6789
  %v6793 = vpop.xlane.xlu0 %6792
  %v6794 = vrcp.pop 128.0
  %v6795 = vmul.f32 %v6793, %v6794
  %v6796 = vsub.f32 %v6789, %v6795
  %v6797 = vmul.f32 %v6796, %v6796
  %6798 = vadd.xlane.f32.xlu0 %v6797
  %v6799 = vpop.xlane.xlu0 %6798
  %v6800 = vmul.f32 %v6799, %v6794
  %v6801 = vadd.f32 %v6800, 1e-05
  %v6802 = vrsqrt.pop %v6801
  %v6803 = vmul.f32 %v6796, %v6802
  %v6805 = vlaneseq
  %v6806 = vshrl.u32 %v6805, 7
  %v6807 = vsub.s32 0, %v6806
  %v6808 = vrot.slane %v6790, %v6807
  %v6810 = vmul.f32 %v6803, %v6808
  %v6812 = vlaneseq
  %v6813 = vshrl.u32 %v6812, 7
  %v6814 = vsub.s32 0, %v6813
  %v6815 = vrot.slane %v6791, %v6814
  %v6817 = vadd.f32 %v6810, %v6815
  %s6818 = smul.u32 4, 16
  %s6819 = smul.u32 %s6818, 16
  %s6820 = sshll.u32 %s6819, 4
  %6821 = dma.done [#allocation8], %s6820
  %s6822 = smul.u32 4, 256
  %s6823 = smul.u32 %s6822, 1
  %s6824 = sshll.u32 %s6823, 4
  %6825 = dma.done %s1098, %s6824
  %v6826 = vpack.c.bf16 %v6817, %v6817
  %v6827 = vld [vmem:[#allocation6] sm:$0xff]
  %v6828 = vld [vmem:[#allocation6 + $0x8] sm:$0xff]
  %v6829 = vld [vmem:[#allocation6 + $0x10] sm:$0xff]
  %v6830 = vld [vmem:[#allocation6 + $0x18] sm:$0xff]
  %v6831 = vld [vmem:[#allocation6 + $0x20] sm:$0xff]
  %v6832 = vld [vmem:[#allocation6 + $0x28] sm:$0xff]
  %v6833 = vld [vmem:[#allocation6 + $0x30] sm:$0xff]
  %v6834 = vld [vmem:[#allocation6 + $0x38] sm:$0xff]
  %v6835 = vld [vmem:[#allocation6 + $0x40] sm:$0xff]
  %v6836 = vld [vmem:[#allocation6 + $0x48] sm:$0xff]
  %v6837 = vld [vmem:[#allocation6 + $0x50] sm:$0xff]
  %v6838 = vld [vmem:[#allocation6 + $0x58] sm:$0xff]
  %v6839 = vld [vmem:[#allocation6 + $0x60] sm:$0xff]
  %v6840 = vld [vmem:[#allocation6 + $0x68] sm:$0xff]
  %v6841 = vld [vmem:[#allocation6 + $0x70] sm:$0xff]
  %v6842 = vld [vmem:[#allocation6 + $0x78] sm:$0xff]
  %v6843 = vld [vmem:[#allocation6 + $0x80] sm:$0xff]
  %v6844 = vld [vmem:[#allocation6 + $0x88] sm:$0xff]
  %v6845 = vld [vmem:[#allocation6 + $0x90] sm:$0xff]
  %v6846 = vld [vmem:[#allocation6 + $0x98] sm:$0xff]
  %v6847 = vld [vmem:[#allocation6 + $0xa0] sm:$0xff]
  %v6848 = vld [vmem:[#allocation6 + $0xa8] sm:$0xff]
  %v6849 = vld [vmem:[#allocation6 + $0xb0] sm:$0xff]
  %v6850 = vld [vmem:[#allocation6 + $0xb8] sm:$0xff]
  %v6851 = vld [vmem:[#allocation6 + $0xc0] sm:$0xff]
  %v6852 = vld [vmem:[#allocation6 + $0xc8] sm:$0xff]
  %v6853 = vld [vmem:[#allocation6 + $0xd0] sm:$0xff]
  %v6854 = vld [vmem:[#allocation6 + $0xd8] sm:$0xff]
  %v6855 = vld [vmem:[#allocation6 + $0xe0] sm:$0xff]
  %v6856 = vld [vmem:[#allocation6 + $0xe8] sm:$0xff]
  %v6857 = vld [vmem:[#allocation6 + $0xf0] sm:$0xff]
  %v6858 = vld [vmem:[#allocation6 + $0xf8] sm:$0xff]
  %v6859 = vld [vmem:[#allocation6 + $0x100] sm:$0xff]
  %v6860 = vld [vmem:[#allocation6 + $0x108] sm:$0xff]
  %v6861 = vld [vmem:[#allocation6 + $0x110] sm:$0xff]
  %v6862 = vld [vmem:[#allocation6 + $0x118] sm:$0xff]
  %v6863 = vld [vmem:[#allocation6 + $0x120] sm:$0xff]
  %v6864 = vld [vmem:[#allocation6 + $0x128] sm:$0xff]
  %v6865 = vld [vmem:[#allocation6 + $0x130] sm:$0xff]
  %v6866 = vld [vmem:[#allocation6 + $0x138] sm:$0xff]
  %v6867 = vld [vmem:[#allocation6 + $0x140] sm:$0xff]
  %v6868 = vld [vmem:[#allocation6 + $0x148] sm:$0xff]
  %v6869 = vld [vmem:[#allocation6 + $0x150] sm:$0xff]
  %v6870 = vld [vmem:[#allocation6 + $0x158] sm:$0xff]
  %v6871 = vld [vmem:[#allocation6 + $0x160] sm:$0xff]
  %v6872 = vld [vmem:[#allocation6 + $0x168] sm:$0xff]
  %v6873 = vld [vmem:[#allocation6 + $0x170] sm:$0xff]
  %v6874 = vld [vmem:[#allocation6 + $0x178] sm:$0xff]
  %v6875 = vld [vmem:[#allocation6 + $0x180] sm:$0xff]
  %v6876 = vld [vmem:[#allocation6 + $0x188] sm:$0xff]
  %v6877 = vld [vmem:[#allocation6 + $0x190] sm:$0xff]
  %v6878 = vld [vmem:[#allocation6 + $0x198] sm:$0xff]
  %v6879 = vld [vmem:[#allocation6 + $0x1a0] sm:$0xff]
  %v6880 = vld [vmem:[#allocation6 + $0x1a8] sm:$0xff]
  %v6881 = vld [vmem:[#allocation6 + $0x1b0] sm:$0xff]
  %v6882 = vld [vmem:[#allocation6 + $0x1b8] sm:$0xff]
  %v6883 = vld [vmem:[#allocation6 + $0x1c0] sm:$0xff]
  %v6884 = vld [vmem:[#allocation6 + $0x1c8] sm:$0xff]
  %v6885 = vld [vmem:[#allocation6 + $0x1d0] sm:$0xff]
  %v6886 = vld [vmem:[#allocation6 + $0x1d8] sm:$0xff]
  %v6887 = vld [vmem:[#allocation6 + $0x1e0] sm:$0xff]
  %v6888 = vld [vmem:[#allocation6 + $0x1e8] sm:$0xff]
  %v6889 = vld [vmem:[#allocation6 + $0x1f0] sm:$0xff]
  %v6890 = vld [vmem:[#allocation6 + $0x1f8] sm:$0xff]
  %v6891 = vld [vmem:[#allocation6 + $0x200] sm:$0xff]
  %v6892 = vld [vmem:[#allocation6 + $0x208] sm:$0xff]
  %v6893 = vld [vmem:[#allocation6 + $0x210] sm:$0xff]
  %v6894 = vld [vmem:[#allocation6 + $0x218] sm:$0xff]
  %v6895 = vld [vmem:[#allocation6 + $0x220] sm:$0xff]
  %v6896 = vld [vmem:[#allocation6 + $0x228] sm:$0xff]
  %v6897 = vld [vmem:[#allocation6 + $0x230] sm:$0xff]
  %v6898 = vld [vmem:[#allocation6 + $0x238] sm:$0xff]
  %v6899 = vld [vmem:[#allocation6 + $0x240] sm:$0xff]
  %v6900 = vld [vmem:[#allocation6 + $0x248] sm:$0xff]
  %v6901 = vld [vmem:[#allocation6 + $0x250] sm:$0xff]
  %v6902 = vld [vmem:[#allocation6 + $0x258] sm:$0xff]
  %v6903 = vld [vmem:[#allocation6 + $0x260] sm:$0xff]
  %v6904 = vld [vmem:[#allocation6 + $0x268] sm:$0xff]
  %v6905 = vld [vmem:[#allocation6 + $0x270] sm:$0xff]
  %v6906 = vld [vmem:[#allocation6 + $0x278] sm:$0xff]
  %v6907 = vld [vmem:[#allocation6 + $0x280] sm:$0xff]
  %v6908 = vld [vmem:[#allocation6 + $0x288] sm:$0xff]
  %v6909 = vld [vmem:[#allocation6 + $0x290] sm:$0xff]
  %v6910 = vld [vmem:[#allocation6 + $0x298] sm:$0xff]
  %v6911 = vld [vmem:[#allocation6 + $0x2a0] sm:$0xff]
  %v6912 = vld [vmem:[#allocation6 + $0x2a8] sm:$0xff]
  %v6913 = vld [vmem:[#allocation6 + $0x2b0] sm:$0xff]
  %v6914 = vld [vmem:[#allocation6 + $0x2b8] sm:$0xff]
  %v6915 = vld [vmem:[#allocation6 + $0x2c0] sm:$0xff]
  %v6916 = vld [vmem:[#allocation6 + $0x2c8] sm:$0xff]
  %v6917 = vld [vmem:[#allocation6 + $0x2d0] sm:$0xff]
  %v6918 = vld [vmem:[#allocation6 + $0x2d8] sm:$0xff]
  %v6919 = vld [vmem:[#allocation6 + $0x2e0] sm:$0xff]
  %v6920 = vld [vmem:[#allocation6 + $0x2e8] sm:$0xff]
  %v6921 = vld [vmem:[#allocation6 + $0x2f0] sm:$0xff]
  %v6922 = vld [vmem:[#allocation6 + $0x2f8] sm:$0xff]
  %v6923 = vld [vmem:[#allocation6 + $0x300] sm:$0xff]
  %v6924 = vld [vmem:[#allocation6 + $0x308] sm:$0xff]
  %v6925 = vld [vmem:[#allocation6 + $0x310] sm:$0xff]
  %v6926 = vld [vmem:[#allocation6 + $0x318] sm:$0xff]
  %v6927 = vld [vmem:[#allocation6 + $0x320] sm:$0xff]
  %v6928 = vld [vmem:[#allocation6 + $0x328] sm:$0xff]
  %v6929 = vld [vmem:[#allocation6 + $0x330] sm:$0xff]
  %v6930 = vld [vmem:[#allocation6 + $0x338] sm:$0xff]
  %v6931 = vld [vmem:[#allocation6 + $0x340] sm:$0xff]
  %v6932 = vld [vmem:[#allocation6 + $0x348] sm:$0xff]
  %v6933 = vld [vmem:[#allocation6 + $0x350] sm:$0xff]
  %v6934 = vld [vmem:[#allocation6 + $0x358] sm:$0xff]
  %v6935 = vld [vmem:[#allocation6 + $0x360] sm:$0xff]
  %v6936 = vld [vmem:[#allocation6 + $0x368] sm:$0xff]
  %v6937 = vld [vmem:[#allocation6 + $0x370] sm:$0xff]
  %v6938 = vld [vmem:[#allocation6 + $0x378] sm:$0xff]
  %v6939 = vld [vmem:[#allocation6 + $0x380] sm:$0xff]
  %v6940 = vld [vmem:[#allocation6 + $0x388] sm:$0xff]
  %v6941 = vld [vmem:[#allocation6 + $0x390] sm:$0xff]
  %v6942 = vld [vmem:[#allocation6 + $0x398] sm:$0xff]
  %v6943 = vld [vmem:[#allocation6 + $0x3a0] sm:$0xff]
  %v6944 = vld [vmem:[#allocation6 + $0x3a8] sm:$0xff]
  %v6945 = vld [vmem:[#allocation6 + $0x3b0] sm:$0xff]
  %v6946 = vld [vmem:[#allocation6 + $0x3b8] sm:$0xff]
  %v6947 = vld [vmem:[#allocation6 + $0x3c0] sm:$0xff]
  %v6948 = vld [vmem:[#allocation6 + $0x3c8] sm:$0xff]
  %v6949 = vld [vmem:[#allocation6 + $0x3d0] sm:$0xff]
  %v6950 = vld [vmem:[#allocation6 + $0x3d8] sm:$0xff]
  %v6951 = vld [vmem:[#allocation6 + $0x3e0] sm:$0xff]
  %v6952 = vld [vmem:[#allocation6 + $0x3e8] sm:$0xff]
  %v6953 = vld [vmem:[#allocation6 + $0x3f0] sm:$0xff]
  %v6954 = vld [vmem:[#allocation6 + $0x3f8] sm:$0xff]
  %v6955 = vld [vmem:[%s5 + $0xb] sm:$0xff]
  %v6956 = vld [vmem:[%s5 + $0x13] sm:$0xff]
  %v6959 = vlaneseq
  %v6960 = vshrl.u32 %v6959, 7
  %v6961 = vsub.s32 0, %v6960
  %v6962 = vrot.slane %v6955, %v6961
  %v6963 = vlaneseq
  %v6964 = vshrl.u32 %v6963, 7
  %v6965 = vsub.s32 1, %v6964
  %v6966 = vrot.slane %v6955, %v6965
  %v6967 = vlaneseq
  %v6968 = vshrl.u32 %v6967, 7
  %v6969 = vsub.s32 2, %v6968
  %v6970 = vrot.slane %v6955, %v6969
  %v6971 = vlaneseq
  %v6972 = vshrl.u32 %v6971, 7
  %v6973 = vsub.s32 3, %v6972
  %v6974 = vrot.slane %v6955, %v6973
  %v6975 = vlaneseq
  %v6976 = vshrl.u32 %v6975, 7
  %v6977 = vsub.s32 4, %v6976
  %v6978 = vrot.slane %v6955, %v6977
  %v6979 = vlaneseq
  %v6980 = vshrl.u32 %v6979, 7
  %v6981 = vsub.s32 5, %v6980
  %v6982 = vrot.slane %v6955, %v6981
  %v6983 = vlaneseq
  %v6984 = vshrl.u32 %v6983, 7
  %v6985 = vsub.s32 6, %v6984
  %v6986 = vrot.slane %v6955, %v6985
  %v6987 = vlaneseq
  %v6988 = vshrl.u32 %v6987, 7
  %v6989 = vsub.s32 7, %v6988
  %v6990 = vrot.slane %v6955, %v6989
  %v6991 = vlaneseq
  %v6992 = vshrl.u32 %v6991, 7
  %v6993 = vsub.s32 0, %v6992
  %v6994 = vrot.slane %v6956, %v6993
  %v6995 = vlaneseq
  %v6996 = vshrl.u32 %v6995, 7
  %v6997 = vsub.s32 1, %v6996
  %v6998 = vrot.slane %v6956, %v6997
  %v6999 = vlaneseq
  %v7000 = vshrl.u32 %v6999, 7
  %v7001 = vsub.s32 2, %v7000
  %v7002 = vrot.slane %v6956, %v7001
  %v7003 = vlaneseq
  %v7004 = vshrl.u32 %v7003, 7
  %v7005 = vsub.s32 3, %v7004
  %v7006 = vrot.slane %v6956, %v7005
  %v7007 = vlaneseq
  %v7008 = vshrl.u32 %v7007, 7
  %v7009 = vsub.s32 4, %v7008
  %v7010 = vrot.slane %v6956, %v7009
  %v7011 = vlaneseq
  %v7012 = vshrl.u32 %v7011, 7
  %v7013 = vsub.s32 5, %v7012
  %v7014 = vrot.slane %v6956, %v7013
  %v7015 = vlaneseq
  %v7016 = vshrl.u32 %v7015, 7
  %v7017 = vsub.s32 6, %v7016
  %v7018 = vrot.slane %v6956, %v7017
  %v7019 = vlaneseq
  %v7020 = vshrl.u32 %v7019, 7
  %v7021 = vsub.s32 7, %v7020
  %v7022 = vrot.slane %v6956, %v7021
  %7039 = vmatprep.subr.bf16.mxu0 %v6828
  %7040 = vmatpush1.bf16.msra.mxu0 %v6827
  %7041 = vmatprep.subr.bf16.mxu0 %v6844
  %7042 = vmatpush1.bf16.msra.mxu0 %v6843
  %7043 = vmatprep.subr.bf16.mxu0 %v6860
  %7044 = vmatpush1.bf16.msra.mxu0 %v6859
  %7045 = vmatprep.subr.bf16.mxu0 %v6876
  %7046 = vmatpush1.bf16.msra.mxu0 %v6875
  %7047 = vmatprep.subr.bf16.mxu0 %v6892
  %7048 = vmatpush1.bf16.msra.mxu0 %v6891
  %7049 = vmatprep.subr.bf16.mxu0 %v6908
  %7050 = vmatpush1.bf16.msra.mxu0 %v6907
  %7051 = vmatprep.subr.bf16.mxu0 %v6924
  %7052 = vmatpush1.bf16.msra.mxu0 %v6923
  %7053 = vmatprep.subr.bf16.mxu0 %v6940
  %7054 = vmatpush1.bf16.msra.mxu0 %v6939
  %7055 = vmatprep.subr.bf16.mxu0 0
  %7056 = vmatpush1.bf16.msra.mxu0 0
  %7057 = vmatprep.subr.bf16.mxu0 0
  %7058 = vmatpush1.bf16.msra.mxu0 0
  %7059 = vmatprep.subr.bf16.mxu0 0
  %7060 = vmatpush1.bf16.msra.mxu0 0
  %7061 = vmatprep.subr.bf16.mxu0 0
  %7062 = vmatpush1.bf16.msra.mxu0 0
  %7063 = vmatprep.subr.bf16.mxu0 0
  %7064 = vmatpush1.bf16.msra.mxu0 0
  %7065 = vmatprep.subr.bf16.mxu0 0
  %7066 = vmatpush1.bf16.msra.mxu0 0
  %7067 = vmatprep.subr.bf16.mxu0 0
  %7068 = vmatpush1.bf16.msra.mxu0 0
  %7069 = vmatprep.subr.bf16.mxu0 0
  %7070 = vmatpush1.bf16.msra.mxu0 0
  %7071 = vmatprep.mubr.bf16.mxu0 0
  %7072 = vmatmul.mubr.bf16.gmra.mrb[0].mxu0 %v6826
  %v7073 = vpop.f32.mrb[0].mxu0
  %v7074 = vadd.f32 %v6962, %v7073
  %v7075 = vpop.f32.mrb[0].mxu0
  %v7076 = vadd.f32 %v6966, %v7075
  %v7077 = vpop.f32.mrb[0].mxu0
  %v7078 = vpop.f32.mrb[0].mxu0
  %7079 = vdwg.mxu0
  %7080 = vmatprep.subr.bf16.mxu0 %v6830
  %7081 = vmatpush1.bf16.msra.mxu0 %v6829
  %7082 = vmatprep.subr.bf16.mxu0 %v6846
  %7083 = vmatpush1.bf16.msra.mxu0 %v6845
  %7084 = vmatprep.subr.bf16.mxu0 %v6862
  %7085 = vmatpush1.bf16.msra.mxu0 %v6861
  %7086 = vmatprep.subr.bf16.mxu0 %v6878
  %7087 = vmatpush1.bf16.msra.mxu0 %v6877
  %7088 = vmatprep.subr.bf16.mxu0 %v6894
  %7089 = vmatpush1.bf16.msra.mxu0 %v6893
  %7090 = vmatprep.subr.bf16.mxu0 %v6910
  %7091 = vmatpush1.bf16.msra.mxu0 %v6909
  %7092 = vmatprep.subr.bf16.mxu0 %v6926
  %7093 = vmatpush1.bf16.msra.mxu0 %v6925
  %7094 = vmatprep.subr.bf16.mxu0 %v6942
  %7095 = vmatpush1.bf16.msra.mxu0 %v6941
  %7096 = vmatprep.subr.bf16.mxu0 0
  %7097 = vmatpush1.bf16.msra.mxu0 0
  %7098 = vmatprep.subr.bf16.mxu0 0
  %7099 = vmatpush1.bf16.msra.mxu0 0
  %7100 = vmatprep.subr.bf16.mxu0 0
  %7101 = vmatpush1.bf16.msra.mxu0 0
  %7102 = vmatprep.subr.bf16.mxu0 0
  %7103 = vmatpush1.bf16.msra.mxu0 0
  %7104 = vmatprep.subr.bf16.mxu0 0
  %7105 = vmatpush1.bf16.msra.mxu0 0
  %7106 = vmatprep.subr.bf16.mxu0 0
  %7107 = vmatpush1.bf16.msra.mxu0 0
  %7108 = vmatprep.subr.bf16.mxu0 0
  %7109 = vmatpush1.bf16.msra.mxu0 0
  %7110 = vmatprep.subr.bf16.mxu0 0
  %7111 = vmatpush1.bf16.msra.mxu0 0
  %7112 = vmatprep.mubr.bf16.mxu0 0
  %7113 = vmatmul.mubr.bf16.gmra.mrb[0].mxu0 %v6826
  %v7114 = vpop.f32.mrb[0].mxu0
  %v7115 = vadd.f32 %v6970, %v7114
  %v7116 = vpop.f32.mrb[0].mxu0
  %v7117 = vadd.f32 %v6974, %v7116
  %v7118 = vpop.f32.mrb[0].mxu0
  %v7119 = vpop.f32.mrb[0].mxu0
  %7120 = vdwg.mxu0
  %7121 = vmatprep.subr.bf16.mxu0 %v6832
  %7122 = vmatpush1.bf16.msra.mxu0 %v6831
  %7123 = vmatprep.subr.bf16.mxu0 %v6848
  %7124 = vmatpush1.bf16.msra.mxu0 %v6847
  %7125 = vmatprep.subr.bf16.mxu0 %v6864
  %7126 = vmatpush1.bf16.msra.mxu0 %v6863
  %7127 = vmatprep.subr.bf16.mxu0 %v6880
  %7128 = vmatpush1.bf16.msra.mxu0 %v6879
  %7129 = vmatprep.subr.bf16.mxu0 %v6896
  %7130 = vmatpush1.bf16.msra.mxu0 %v6895
  %7131 = vmatprep.subr.bf16.mxu0 %v6912
  %7132 = vmatpush1.bf16.msra.mxu0 %v6911
  %7133 = vmatprep.subr.bf16.mxu0 %v6928
  %7134 = vmatpush1.bf16.msra.mxu0 %v6927
  %7135 = vmatprep.subr.bf16.mxu0 %v6944
  %7136 = vmatpush1.bf16.msra.mxu0 %v6943
  %7137 = vmatprep.subr.bf16.mxu0 0
  %7138 = vmatpush1.bf16.msra.mxu0 0
  %7139 = vmatprep.subr.bf16.mxu0 0
  %7140 = vmatpush1.bf16.msra.mxu0 0
  %7141 = vmatprep.subr.bf16.mxu0 0
  %7142 = vmatpush1.bf16.msra.mxu0 0
  %7143 = vmatprep.subr.bf16.mxu0 0
  %7144 = vmatpush1.bf16.msra.mxu0 0
  %7145 = vmatprep.subr.bf16.mxu0 0
  %7146 = vmatpush1.bf16.msra.mxu0 0
  %7147 = vmatprep.subr.bf16.mxu0 0
  %7148 = vmatpush1.bf16.msra.mxu0 0
  %7149 = vmatprep.subr.bf16.mxu0 0
  %7150 = vmatpush1.bf16.msra.mxu0 0
  %7151 = vmatprep.subr.bf16.mxu0 0
  %7152 = vmatpush1.bf16.msra.mxu0 0
  %7153 = vmatprep.mubr.bf16.mxu0 0
  %7154 = vmatmul.mubr.bf16.gmra.mrb[0].mxu0 %v6826
  %v7155 = vpop.f32.mrb[0].mxu0
  %v7156 = vadd.f32 %v6978, %v7155
  %v7157 = vpop.f32.mrb[0].mxu0
  %v7158 = vadd.f32 %v6982, %v7157
  %v7159 = vpop.f32.mrb[0].mxu0
  %v7160 = vpop.f32.mrb[0].mxu0
  %7161 = vdwg.mxu0
  %7162 = vmatprep.subr.bf16.mxu0 %v6834
  %7163 = vmatpush1.bf16.msra.mxu0 %v6833
  %7164 = vmatprep.subr.bf16.mxu0 %v6850
  %7165 = vmatpush1.bf16.msra.mxu0 %v6849
  %7166 = vmatprep.subr.bf16.mxu0 %v6866
  %7167 = vmatpush1.bf16.msra.mxu0 %v6865
  %7168 = vmatprep.subr.bf16.mxu0 %v6882
  %7169 = vmatpush1.bf16.msra.mxu0 %v6881
  %7170 = vmatprep.subr.bf16.mxu0 %v6898
  %7171 = vmatpush1.bf16.msra.mxu0 %v6897
  %7172 = vmatprep.subr.bf16.mxu0 %v6914
  %7173 = vmatpush1.bf16.msra.mxu0 %v6913
  %7174 = vmatprep.subr.bf16.mxu0 %v6930
  %7175 = vmatpush1.bf16.msra.mxu0 %v6929
  %7176 = vmatprep.subr.bf16.mxu0 %v6946
  %7177 = vmatpush1.bf16.msra.mxu0 %v6945
  %7178 = vmatprep.subr.bf16.mxu0 0
  %7179 = vmatpush1.bf16.msra.mxu0 0
  %7180 = vmatprep.subr.bf16.mxu0 0
  %7181 = vmatpush1.bf16.msra.mxu0 0
  %7182 = vmatprep.subr.bf16.mxu0 0
  %7183 = vmatpush1.bf16.msra.mxu0 0
  %7184 = vmatprep.subr.bf16.mxu0 0
  %7185 = vmatpush1.bf16.msra.mxu0 0
  %7186 = vmatprep.subr.bf16.mxu0 0
  %7187 = vmatpush1.bf16.msra.mxu0 0
  %7188 = vmatprep.subr.bf16.mxu0 0
  %7189 = vmatpush1.bf16.msra.mxu0 0
  %7190 = vmatprep.subr.bf16.mxu0 0
  %7191 = vmatpush1.bf16.msra.mxu0 0
  %7192 = vmatprep.subr.bf16.mxu0 0
  %7193 = vmatpush1.bf16.msra.mxu0 0
  %7194 = vmatprep.mubr.bf16.mxu0 0
  %7195 = vmatmul.mubr.bf16.gmra.mrb[0].mxu0 %v6826
  %v7196 = vpop.f32.mrb[0].mxu0
  %v7197 = vadd.f32 %v6986, %v7196
  %v7198 = vpop.f32.mrb[0].mxu0
  %v7199 = vadd.f32 %v6990, %v7198
  %v7200 = vpop.f32.mrb[0].mxu0
  %v7201 = vpop.f32.mrb[0].mxu0
  %7202 = vdwg.mxu0
  %7203 = vmatprep.subr.bf16.mxu0 %v6836
  %7204 = vmatpush1.bf16.msra.mxu0 %v6835
  %7205 = vmatprep.subr.bf16.mxu0 %v6852
  %7206 = vmatpush1.bf16.msra.mxu0 %v6851
  %7207 = vmatprep.subr.bf16.mxu0 %v6868
  %7208 = vmatpush1.bf16.msra.mxu0 %v6867
  %7209 = vmatprep.subr.bf16.mxu0 %v6884
  %7210 = vmatpush1.bf16.msra.mxu0 %v6883
  %7211 = vmatprep.subr.bf16.mxu0 %v6900
  %7212 = vmatpush1.bf16.msra.mxu0 %v6899
  %7213 = vmatprep.subr.bf16.mxu0 %v6916
  %7214 = vmatpush1.bf16.msra.mxu0 %v6915
  %7215 = vmatprep.subr.bf16.mxu0 %v6932
  %7216 = vmatpush1.bf16.msra.mxu0 %v6931
  %7217 = vmatprep.subr.bf16.mxu0 %v6948
  %7218 = vmatpush1.bf16.msra.mxu0 %v6947
  %7219 = vmatprep.subr.bf16.mxu0 0
  %7220 = vmatpush1.bf16.msra.mxu0 0
  %7221 = vmatprep.subr.bf16.mxu0 0
  %7222 = vmatpush1.bf16.msra.mxu0 0
  %7223 = vmatprep.subr.bf16.mxu0 0
  %7224 = vmatpush1.bf16.msra.mxu0 0
  %7225 = vmatprep.subr.bf16.mxu0 0
  %7226 = vmatpush1.bf16.msra.mxu0 0
  %7227 = vmatprep.subr.bf16.mxu0 0
  %7228 = vmatpush1.bf16.msra.mxu0 0
  %7229 = vmatprep.subr.bf16.mxu0 0
  %7230 = vmatpush1.bf16.msra.mxu0 0
  %7231 = vmatprep.subr.bf16.mxu0 0
  %7232 = vmatpush1.bf16.msra.mxu0 0
  %7233 = vmatprep.subr.bf16.mxu0 0
  %7234 = vmatpush1.bf16.msra.mxu0 0
  %7235 = vmatprep.mubr.bf16.mxu0 0
  %7236 = vmatmul.mubr.bf16.gmra.mrb[0].mxu0 %v6826
  %v7237 = vpop.f32.mrb[0].mxu0
  %v7238 = vadd.f32 %v6994, %v7237
  %v7239 = vpop.f32.mrb[0].mxu0
  %v7240 = vadd.f32 %v6998, %v7239
  %v7241 = vpop.f32.mrb[0].mxu0
  %v7242 = vpop.f32.mrb[0].mxu0
  %7243 = vdwg.mxu0
  %7244 = vmatprep.subr.bf16.mxu0 %v6838
  %7245 = vmatpush1.bf16.msra.mxu0 %v6837
  %7246 = vmatprep.subr.bf16.mxu0 %v6854
  %7247 = vmatpush1.bf16.msra.mxu0 %v6853
  %7248 = vmatprep.subr.bf16.mxu0 %v6870
  %7249 = vmatpush1.bf16.msra.mxu0 %v6869
  %7250 = vmatprep.subr.bf16.mxu0 %v6886
  %7251 = vmatpush1.bf16.msra.mxu0 %v6885
  %7252 = vmatprep.subr.bf16.mxu0 %v6902
  %7253 = vmatpush1.bf16.msra.mxu0 %v6901
  %7254 = vmatprep.subr.bf16.mxu0 %v6918
  %7255 = vmatpush1.bf16.msra.mxu0 %v6917
  %7256 = vmatprep.subr.bf16.mxu0 %v6934
  %7257 = vmatpush1.bf16.msra.mxu0 %v6933
  %7258 = vmatprep.subr.bf16.mxu0 %v6950
  %7259 = vmatpush1.bf16.msra.mxu0 %v6949
  %7260 = vmatprep.subr.bf16.mxu0 0
  %7261 = vmatpush1.bf16.msra.mxu0 0
  %7262 = vmatprep.subr.bf16.mxu0 0
  %7263 = vmatpush1.bf16.msra.mxu0 0
  %7264 = vmatprep.subr.bf16.mxu0 0
  %7265 = vmatpush1.bf16.msra.mxu0 0
  %7266 = vmatprep.subr.bf16.mxu0 0
  %7267 = vmatpush1.bf16.msra.mxu0 0
  %7268 = vmatprep.subr.bf16.mxu0 0
  %7269 = vmatpush1.bf16.msra.mxu0 0
  %7270 = vmatprep.subr.bf16.mxu0 0
  %7271 = vmatpush1.bf16.msra.mxu0 0
  %7272 = vmatprep.subr.bf16.mxu0 0
  %7273 = vmatpush1.bf16.msra.mxu0 0
  %7274 = vmatprep.subr.bf16.mxu0 0
  %7275 = vmatpush1.bf16.msra.mxu0 0
  %7276 = vmatprep.mubr.bf16.mxu0 0
  %7277 = vmatmul.mubr.bf16.gmra.mrb[0].mxu0 %v6826
  %v7278 = vpop.f32.mrb[0].mxu0
  %v7279 = vadd.f32 %v7002, %v7278
  %v7280 = vpop.f32.mrb[0].mxu0
  %v7281 = vadd.f32 %v7006, %v7280
  %v7282 = vpop.f32.mrb[0].mxu0
  %v7283 = vpop.f32.mrb[0].mxu0
  %7284 = vdwg.mxu0
  %7285 = vmatprep.subr.bf16.mxu0 %v6840
  %7286 = vmatpush1.bf16.msra.mxu0 %v6839
  %7287 = vmatprep.subr.bf16.mxu0 %v6856
  %7288 = vmatpush1.bf16.msra.mxu0 %v6855
  %7289 = vmatprep.subr.bf16.mxu0 %v6872
  %7290 = vmatpush1.bf16.msra.mxu0 %v6871
  %7291 = vmatprep.subr.bf16.mxu0 %v6888
  %7292 = vmatpush1.bf16.msra.mxu0 %v6887
  %7293 = vmatprep.subr.bf16.mxu0 %v6904
  %7294 = vmatpush1.bf16.msra.mxu0 %v6903
  %7295 = vmatprep.subr.bf16.mxu0 %v6920
  %7296 = vmatpush1.bf16.msra.mxu0 %v6919
  %7297 = vmatprep.subr.bf16.mxu0 %v6936
  %7298 = vmatpush1.bf16.msra.mxu0 %v6935
  %7299 = vmatprep.subr.bf16.mxu0 %v6952
  %7300 = vmatpush1.bf16.msra.mxu0 %v6951
  %7301 = vmatprep.subr.bf16.mxu0 0
  %7302 = vmatpush1.bf16.msra.mxu0 0
  %7303 = vmatprep.subr.bf16.mxu0 0
  %7304 = vmatpush1.bf16.msra.mxu0 0
  %7305 = vmatprep.subr.bf16.mxu0 0
  %7306 = vmatpush1.bf16.msra.mxu0 0
  %7307 = vmatprep.subr.bf16.mxu0 0
  %7308 = vmatpush1.bf16.msra.mxu0 0
  %7309 = vmatprep.subr.bf16.mxu0 0
  %7310 = vmatpush1.bf16.msra.mxu0 0
  %7311 = vmatprep.subr.bf16.mxu0 0
  %7312 = vmatpush1.bf16.msra.mxu0 0
  %7313 = vmatprep.subr.bf16.mxu0 0
  %7314 = vmatpush1.bf16.msra.mxu0 0
  %7315 = vmatprep.subr.bf16.mxu0 0
  %7316 = vmatpush1.bf16.msra.mxu0 0
  %7317 = vmatprep.mubr.bf16.mxu0 0
  %7318 = vmatmul.mubr.bf16.gmra.mrb[0].mxu0 %v6826
  %v7319 = vpop.f32.mrb[0].mxu0
  %v7320 = vadd.f32 %v7010, %v7319
  %v7321 = vpop.f32.mrb[0].mxu0
  %v7322 = vadd.f32 %v7014, %v7321
  %v7323 = vpop.f32.mrb[0].mxu0
  %v7324 = vpop.f32.mrb[0].mxu0
  %7325 = vdwg.mxu0
  %7326 = vmatprep.subr.bf16.mxu0 %v6842
  %7327 = vmatpush1.bf16.msra.mxu0 %v6841
  %7328 = vmatprep.subr.bf16.mxu0 %v6858
  %7329 = vmatpush1.bf16.msra.mxu0 %v6857
  %7330 = vmatprep.subr.bf16.mxu0 %v6874
  %7331 = vmatpush1.bf16.msra.mxu0 %v6873
  %7332 = vmatprep.subr.bf16.mxu0 %v6890
  %7333 = vmatpush1.bf16.msra.mxu0 %v6889
  %7334 = vmatprep.subr.bf16.mxu0 %v6906
  %7335 = vmatpush1.bf16.msra.mxu0 %v6905
  %7336 = vmatprep.subr.bf16.mxu0 %v6922
  %7337 = vmatpush1.bf16.msra.mxu0 %v6921
  %7338 = vmatprep.subr.bf16.mxu0 %v6938
  %7339 = vmatpush1.bf16.msra.mxu0 %v6937
  %7340 = vmatprep.subr.bf16.mxu0 %v6954
  %7341 = vmatpush1.bf16.msra.mxu0 %v6953
  %7342 = vmatprep.subr.bf16.mxu0 0
  %7343 = vmatpush1.bf16.msra.mxu0 0
  %7344 = vmatprep.subr.bf16.mxu0 0
  %7345 = vmatpush1.bf16.msra.mxu0 0
  %7346 = vmatprep.subr.bf16.mxu0 0
  %7347 = vmatpush1.bf16.msra.mxu0 0
  %7348 = vmatprep.subr.bf16.mxu0 0
  %7349 = vmatpush1.bf16.msra.mxu0 0
  %7350 = vmatprep.subr.bf16.mxu0 0
  %7351 = vmatpush1.bf16.msra.mxu0 0
  %7352 = vmatprep.subr.bf16.mxu0 0
  %7353 = vmatpush1.bf16.msra.mxu0 0
  %7354 = vmatprep.subr.bf16.mxu0 0
  %7355 = vmatpush1.bf16.msra.mxu0 0
  %7356 = vmatprep.subr.bf16.mxu0 0
  %7357 = vmatpush1.bf16.msra.mxu0 0
  %7358 = vmatprep.mubr.bf16.mxu0 0
  %7359 = vmatmul.mubr.bf16.gmra.mrb[0].mxu0 %v6826
  %v7360 = vpop.f32.mrb[0].mxu0
  %v7361 = vadd.f32 %v7018, %v7360
  %v7362 = vpop.f32.mrb[0].mxu0
  %v7363 = vadd.f32 %v7022, %v7362
  %v7364 = vpop.f32.mrb[0].mxu0
  %v7365 = vpop.f32.mrb[0].mxu0
  %7366 = vdwg.mxu0
  %v7367 = vmax.f32 %v7074, 0.0
  %v7368 = vmax.f32 %v7076, 0.0
  %v7369 = vmax.f32 %v7115, 0.0
  %v7370 = vmax.f32 %v7117, 0.0
  %v7371 = vmax.f32 %v7156, 0.0
  %v7372 = vmax.f32 %v7158, 0.0
  %v7373 = vmax.f32 %v7197, 0.0
  %v7374 = vmax.f32 %v7199, 0.0
  %v7375 = vmax.f32 %v7238, 0.0
  %v7376 = vmax.f32 %v7240, 0.0
  %v7377 = vmax.f32 %v7279, 0.0
  %v7378 = vmax.f32 %v7281, 0.0
  %v7379 = vmax.f32 %v7320, 0.0
  %v7380 = vmax.f32 %v7322, 0.0
  %v7381 = vmax.f32 %v7361, 0.0
  %v7382 = vmax.f32 %v7363, 0.0
  %v7383 = vpack.c.bf16 %v7367, %v7367
  %v7384 = vpack.c.bf16 %v7368, %v7368
  %v7385 = vpack.c.bf16 %v7369, %v7369
  %v7386 = vpack.c.bf16 %v7370, %v7370
  %v7387 = vpack.c.bf16 %v7371, %v7371
  %v7388 = vpack.c.bf16 %v7372, %v7372
  %v7389 = vpack.c.bf16 %v7373, %v7373
  %v7390 = vpack.c.bf16 %v7374, %v7374
  %v7391 = vpack.c.bf16 %v7375, %v7375
  %v7392 = vpack.c.bf16 %v7376, %v7376
  %v7393 = vpack.c.bf16 %v7377, %v7377
  %v7394 = vpack.c.bf16 %v7378, %v7378
  %v7395 = vpack.c.bf16 %v7379, %v7379
  %v7396 = vpack.c.bf16 %v7380, %v7380
  %v7397 = vpack.c.bf16 %v7381, %v7381
  %v7398 = vpack.c.bf16 %v7382, %v7382
  %v7399 = vld [vmem:[#allocation7] sm:$0xff]
  %v7400 = vld [vmem:[#allocation7 + $0x8] sm:$0xff]
  %v7401 = vld [vmem:[#allocation7 + $0x10] sm:$0xff]
  %v7402 = vld [vmem:[#allocation7 + $0x18] sm:$0xff]
  %v7403 = vld [vmem:[#allocation7 + $0x20] sm:$0xff]
  %v7404 = vld [vmem:[#allocation7 + $0x28] sm:$0xff]
  %v7405 = vld [vmem:[#allocation7 + $0x30] sm:$0xff]
  %v7406 = vld [vmem:[#allocation7 + $0x38] sm:$0xff]
  %v7407 = vld [vmem:[#allocation7 + $0x40] sm:$0xff]
  %v7408 = vld [vmem:[#allocation7 + $0x48] sm:$0xff]
  %v7409 = vld [vmem:[#allocation7 + $0x50] sm:$0xff]
  %v7410 = vld [vmem:[#allocation7 + $0x58] sm:$0xff]
  %v7411 = vld [vmem:[#allocation7 + $0x60] sm:$0xff]
  %v7412 = vld [vmem:[#allocation7 + $0x68] sm:$0xff]
  %v7413 = vld [vmem:[#allocation7 + $0x70] sm:$0xff]
  %v7414 = vld [vmem:[#allocation7 + $0x78] sm:$0xff]
  %v7415 = vld [vmem:[#allocation7 + $0x80] sm:$0xff]
  %v7416 = vld [vmem:[#allocation7 + $0x88] sm:$0xff]
  %v7417 = vld [vmem:[#allocation7 + $0x90] sm:$0xff]
  %v7418 = vld [vmem:[#allocation7 + $0x98] sm:$0xff]
  %v7419 = vld [vmem:[#allocation7 + $0xa0] sm:$0xff]
  %v7420 = vld [vmem:[#allocation7 + $0xa8] sm:$0xff]
  %v7421 = vld [vmem:[#allocation7 + $0xb0] sm:$0xff]
  %v7422 = vld [vmem:[#allocation7 + $0xb8] sm:$0xff]
  %v7423 = vld [vmem:[#allocation7 + $0xc0] sm:$0xff]
  %v7424 = vld [vmem:[#allocation7 + $0xc8] sm:$0xff]
  %v7425 = vld [vmem:[#allocation7 + $0xd0] sm:$0xff]
  %v7426 = vld [vmem:[#allocation7 + $0xd8] sm:$0xff]
  %v7427 = vld [vmem:[#allocation7 + $0xe0] sm:$0xff]
  %v7428 = vld [vmem:[#allocation7 + $0xe8] sm:$0xff]
  %v7429 = vld [vmem:[#allocation7 + $0xf0] sm:$0xff]
  %v7430 = vld [vmem:[#allocation7 + $0xf8] sm:$0xff]
  %v7431 = vld [vmem:[#allocation7 + $0x100] sm:$0xff]
  %v7432 = vld [vmem:[#allocation7 + $0x108] sm:$0xff]
  %v7433 = vld [vmem:[#allocation7 + $0x110] sm:$0xff]
  %v7434 = vld [vmem:[#allocation7 + $0x118] sm:$0xff]
  %v7435 = vld [vmem:[#allocation7 + $0x120] sm:$0xff]
  %v7436 = vld [vmem:[#allocation7 + $0x128] sm:$0xff]
  %v7437 = vld [vmem:[#allocation7 + $0x130] sm:$0xff]
  %v7438 = vld [vmem:[#allocation7 + $0x138] sm:$0xff]
  %v7439 = vld [vmem:[#allocation7 + $0x140] sm:$0xff]
  %v7440 = vld [vmem:[#allocation7 + $0x148] sm:$0xff]
  %v7441 = vld [vmem:[#allocation7 + $0x150] sm:$0xff]
  %v7442 = vld [vmem:[#allocation7 + $0x158] sm:$0xff]
  %v7443 = vld [vmem:[#allocation7 + $0x160] sm:$0xff]
  %v7444 = vld [vmem:[#allocation7 + $0x168] sm:$0xff]
  %v7445 = vld [vmem:[#allocation7 + $0x170] sm:$0xff]
  %v7446 = vld [vmem:[#allocation7 + $0x178] sm:$0xff]
  %v7447 = vld [vmem:[#allocation7 + $0x180] sm:$0xff]
  %v7448 = vld [vmem:[#allocation7 + $0x188] sm:$0xff]
  %v7449 = vld [vmem:[#allocation7 + $0x190] sm:$0xff]
  %v7450 = vld [vmem:[#allocation7 + $0x198] sm:$0xff]
  %v7451 = vld [vmem:[#allocation7 + $0x1a0] sm:$0xff]
  %v7452 = vld [vmem:[#allocation7 + $0x1a8] sm:$0xff]
  %v7453 = vld [vmem:[#allocation7 + $0x1b0] sm:$0xff]
  %v7454 = vld [vmem:[#allocation7 + $0x1b8] sm:$0xff]
  %v7455 = vld [vmem:[#allocation7 + $0x1c0] sm:$0xff]
  %v7456 = vld [vmem:[#allocation7 + $0x1c8] sm:$0xff]
  %v7457 = vld [vmem:[#allocation7 + $0x1d0] sm:$0xff]
  %v7458 = vld [vmem:[#allocation7 + $0x1d8] sm:$0xff]
  %v7459 = vld [vmem:[#allocation7 + $0x1e0] sm:$0xff]
  %v7460 = vld [vmem:[#allocation7 + $0x1e8] sm:$0xff]
  %v7461 = vld [vmem:[#allocation7 + $0x1f0] sm:$0xff]
  %v7462 = vld [vmem:[#allocation7 + $0x1f8] sm:$0xff]
  %v7463 = vld [vmem:[#allocation7 + $0x200] sm:$0xff]
  %v7464 = vld [vmem:[#allocation7 + $0x208] sm:$0xff]
  %v7465 = vld [vmem:[#allocation7 + $0x210] sm:$0xff]
  %v7466 = vld [vmem:[#allocation7 + $0x218] sm:$0xff]
  %v7467 = vld [vmem:[#allocation7 + $0x220] sm:$0xff]
  %v7468 = vld [vmem:[#allocation7 + $0x228] sm:$0xff]
  %v7469 = vld [vmem:[#allocation7 + $0x230] sm:$0xff]
  %v7470 = vld [vmem:[#allocation7 + $0x238] sm:$0xff]
  %v7471 = vld [vmem:[#allocation7 + $0x240] sm:$0xff]
  %v7472 = vld [vmem:[#allocation7 + $0x248] sm:$0xff]
  %v7473 = vld [vmem:[#allocation7 + $0x250] sm:$0xff]
  %v7474 = vld [vmem:[#allocation7 + $0x258] sm:$0xff]
  %v7475 = vld [vmem:[#allocation7 + $0x260] sm:$0xff]
  %v7476 = vld [vmem:[#allocation7 + $0x268] sm:$0xff]
  %v7477 = vld [vmem:[#allocation7 + $0x270] sm:$0xff]
  %v7478 = vld [vmem:[#allocation7 + $0x278] sm:$0xff]
  %v7479 = vld [vmem:[#allocation7 + $0x280] sm:$0xff]
  %v7480 = vld [vmem:[#allocation7 + $0x288] sm:$0xff]
  %v7481 = vld [vmem:[#allocation7 + $0x290] sm:$0xff]
  %v7482 = vld [vmem:[#allocation7 + $0x298] sm:$0xff]
  %v7483 = vld [vmem:[#allocation7 + $0x2a0] sm:$0xff]
  %v7484 = vld [vmem:[#allocation7 + $0x2a8] sm:$0xff]
  %v7485 = vld [vmem:[#allocation7 + $0x2b0] sm:$0xff]
  %v7486 = vld [vmem:[#allocation7 + $0x2b8] sm:$0xff]
  %v7487 = vld [vmem:[#allocation7 + $0x2c0] sm:$0xff]
  %v7488 = vld [vmem:[#allocation7 + $0x2c8] sm:$0xff]
  %v7489 = vld [vmem:[#allocation7 + $0x2d0] sm:$0xff]
  %v7490 = vld [vmem:[#allocation7 + $0x2d8] sm:$0xff]
  %v7491 = vld [vmem:[#allocation7 + $0x2e0] sm:$0xff]
  %v7492 = vld [vmem:[#allocation7 + $0x2e8] sm:$0xff]
  %v7493 = vld [vmem:[#allocation7 + $0x2f0] sm:$0xff]
  %v7494 = vld [vmem:[#allocation7 + $0x2f8] sm:$0xff]
  %v7495 = vld [vmem:[#allocation7 + $0x300] sm:$0xff]
  %v7496 = vld [vmem:[#allocation7 + $0x308] sm:$0xff]
  %v7497 = vld [vmem:[#allocation7 + $0x310] sm:$0xff]
  %v7498 = vld [vmem:[#allocation7 + $0x318] sm:$0xff]
  %v7499 = vld [vmem:[#allocation7 + $0x320] sm:$0xff]
  %v7500 = vld [vmem:[#allocation7 + $0x328] sm:$0xff]
  %v7501 = vld [vmem:[#allocation7 + $0x330] sm:$0xff]
  %v7502 = vld [vmem:[#allocation7 + $0x338] sm:$0xff]
  %v7503 = vld [vmem:[#allocation7 + $0x340] sm:$0xff]
  %v7504 = vld [vmem:[#allocation7 + $0x348] sm:$0xff]
  %v7505 = vld [vmem:[#allocation7 + $0x350] sm:$0xff]
  %v7506 = vld [vmem:[#allocation7 + $0x358] sm:$0xff]
  %v7507 = vld [vmem:[#allocation7 + $0x360] sm:$0xff]
  %v7508 = vld [vmem:[#allocation7 + $0x368] sm:$0xff]
  %v7509 = vld [vmem:[#allocation7 + $0x370] sm:$0xff]
  %v7510 = vld [vmem:[#allocation7 + $0x378] sm:$0xff]
  %v7511 = vld [vmem:[#allocation7 + $0x380] sm:$0xff]
  %v7512 = vld [vmem:[#allocation7 + $0x388] sm:$0xff]
  %v7513 = vld [vmem:[#allocation7 + $0x390] sm:$0xff]
  %v7514 = vld [vmem:[#allocation7 + $0x398] sm:$0xff]
  %v7515 = vld [vmem:[#allocation7 + $0x3a0] sm:$0xff]
  %v7516 = vld [vmem:[#allocation7 + $0x3a8] sm:$0xff]
  %v7517 = vld [vmem:[#allocation7 + $0x3b0] sm:$0xff]
  %v7518 = vld [vmem:[#allocation7 + $0x3b8] sm:$0xff]
  %v7519 = vld [vmem:[#allocation7 + $0x3c0] sm:$0xff]
  %v7520 = vld [vmem:[#allocation7 + $0x3c8] sm:$0xff]
  %v7521 = vld [vmem:[#allocation7 + $0x3d0] sm:$0xff]
  %v7522 = vld [vmem:[#allocation7 + $0x3d8] sm:$0xff]
  %v7523 = vld [vmem:[#allocation7 + $0x3e0] sm:$0xff]
  %v7524 = vld [vmem:[#allocation7 + $0x3e8] sm:$0xff]
  %v7525 = vld [vmem:[#allocation7 + $0x3f0] sm:$0xff]
  %v7526 = vld [vmem:[#allocation7 + $0x3f8] sm:$0xff]
  %v7527 = vld [vmem:[%s5 + $0x1b] sm:$0x1]
  %v7529 = vlaneseq
  %v7530 = vshrl.u32 %v7529, 7
  %v7531 = vsub.s32 0, %v7530
  %v7532 = vrot.slane %v7527, %v7531
  %7534 = vmatprep.subr.bf16.mxu0 0
  %7535 = vmatpush1.bf16.msra.mxu0 %v7399
  %7536 = vmatprep.subr.bf16.mxu0 0
  %7537 = vmatpush1.bf16.msra.mxu0 %v7400
  %7538 = vmatprep.subr.bf16.mxu0 0
  %7539 = vmatpush1.bf16.msra.mxu0 %v7401
  %7540 = vmatprep.subr.bf16.mxu0 0
  %7541 = vmatpush1.bf16.msra.mxu0 %v7402
  %7542 = vmatprep.subr.bf16.mxu0 0
  %7543 = vmatpush1.bf16.msra.mxu0 %v7403
  %7544 = vmatprep.subr.bf16.mxu0 0
  %7545 = vmatpush1.bf16.msra.mxu0 %v7404
  %7546 = vmatprep.subr.bf16.mxu0 0
  %7547 = vmatpush1.bf16.msra.mxu0 %v7405
  %7548 = vmatprep.subr.bf16.mxu0 0
  %7549 = vmatpush1.bf16.msra.mxu0 %v7406
  %7550 = vmatprep.subr.bf16.mxu0 0
  %7551 = vmatpush1.bf16.msra.mxu0 %v7407
  %7552 = vmatprep.subr.bf16.mxu0 0
  %7553 = vmatpush1.bf16.msra.mxu0 %v7408
  %7554 = vmatprep.subr.bf16.mxu0 0
  %7555 = vmatpush1.bf16.msra.mxu0 %v7409
  %7556 = vmatprep.subr.bf16.mxu0 0
  %7557 = vmatpush1.bf16.msra.mxu0 %v7410
  %7558 = vmatprep.subr.bf16.mxu0 0
  %7559 = vmatpush1.bf16.msra.mxu0 %v7411
  %7560 = vmatprep.subr.bf16.mxu0 0
  %7561 = vmatpush1.bf16.msra.mxu0 %v7412
  %7562 = vmatprep.subr.bf16.mxu0 0
  %7563 = vmatpush1.bf16.msra.mxu0 %v7413
  %7564 = vmatprep.subr.bf16.mxu0 0
  %7565 = vmatpush1.bf16.msra.mxu0 %v7414
  %7566 = vmatprep.mubr.bf16.mxu0 %v7384
  %7567 = vmatmul.mubr.bf16.gmra.mrb[0].mxu0 %v7383
  %v7568 = vpop.f32.mrb[0].mxu0
  %v7569 = vadd.f32 %v7532, %v7568
  %v7570 = vpop.f32.mrb[0].mxu0
  %v7571 = vpop.f32.mrb[0].mxu0
  %v7572 = vpop.f32.mrb[0].mxu0
  %7573 = vdwg.mxu0
  %7574 = vmatprep.subr.bf16.mxu0 0
  %7575 = vmatpush1.bf16.msra.mxu0 %v7415
  %7576 = vmatprep.subr.bf16.mxu0 0
  %7577 = vmatpush1.bf16.msra.mxu0 %v7416
  %7578 = vmatprep.subr.bf16.mxu0 0
  %7579 = vmatpush1.bf16.msra.mxu0 %v7417
  %7580 = vmatprep.subr.bf16.mxu0 0
  %7581 = vmatpush1.bf16.msra.mxu0 %v7418
  %7582 = vmatprep.subr.bf16.mxu0 0
  %7583 = vmatpush1.bf16.msra.mxu0 %v7419
  %7584 = vmatprep.subr.bf16.mxu0 0
  %7585 = vmatpush1.bf16.msra.mxu0 %v7420
  %7586 = vmatprep.subr.bf16.mxu0 0
  %7587 = vmatpush1.bf16.msra.mxu0 %v7421
  %7588 = vmatprep.subr.bf16.mxu0 0
  %7589 = vmatpush1.bf16.msra.mxu0 %v7422
  %7590 = vmatprep.subr.bf16.mxu0 0
  %7591 = vmatpush1.bf16.msra.mxu0 %v7423
  %7592 = vmatprep.subr.bf16.mxu0 0
  %7593 = vmatpush1.bf16.msra.mxu0 %v7424
  %7594 = vmatprep.subr.bf16.mxu0 0
  %7595 = vmatpush1.bf16.msra.mxu0 %v7425
  %7596 = vmatprep.subr.bf16.mxu0 0
  %7597 = vmatpush1.bf16.msra.mxu0 %v7426
  %7598 = vmatprep.subr.bf16.mxu0 0
  %7599 = vmatpush1.bf16.msra.mxu0 %v7427
  %7600 = vmatprep.subr.bf16.mxu0 0
  %7601 = vmatpush1.bf16.msra.mxu0 %v7428
  %7602 = vmatprep.subr.bf16.mxu0 0
  %7603 = vmatpush1.bf16.msra.mxu0 %v7429
  %7604 = vmatprep.subr.bf16.mxu0 0
  %7605 = vmatpush1.bf16.msra.mxu0 %v7430
  %7606 = vmatprep.mubr.bf16.mxu0 %v7386
  %7607 = vmatmul.mubr.bf16.gmra.mrb[0].mxu0 %v7385
  %v7608 = vpop.f32.mrb[0].mxu0
  %v7609 = vadd.f32 %v7569, %v7608
  %v7610 = vpop.f32.mrb[0].mxu0
  %v7611 = vpop.f32.mrb[0].mxu0
  %v7612 = vpop.f32.mrb[0].mxu0
  %7613 = vdwg.mxu0
  %7614 = vmatprep.subr.bf16.mxu0 0
  %7615 = vmatpush1.bf16.msra.mxu0 %v7431
  %7616 = vmatprep.subr.bf16.mxu0 0
  %7617 = vmatpush1.bf16.msra.mxu0 %v7432
  %7618 = vmatprep.subr.bf16.mxu0 0
  %7619 = vmatpush1.bf16.msra.mxu0 %v7433
  %7620 = vmatprep.subr.bf16.mxu0 0
  %7621 = vmatpush1.bf16.msra.mxu0 %v7434
  %7622 = vmatprep.subr.bf16.mxu0 0
  %7623 = vmatpush1.bf16.msra.mxu0 %v7435
  %7624 = vmatprep.subr.bf16.mxu0 0
  %7625 = vmatpush1.bf16.msra.mxu0 %v7436
  %7626 = vmatprep.subr.bf16.mxu0 0
  %7627 = vmatpush1.bf16.msra.mxu0 %v7437
  %7628 = vmatprep.subr.bf16.mxu0 0
  %7629 = vmatpush1.bf16.msra.mxu0 %v7438
  %7630 = vmatprep.subr.bf16.mxu0 0
  %7631 = vmatpush1.bf16.msra.mxu0 %v7439
  %7632 = vmatprep.subr.bf16.mxu0 0
  %7633 = vmatpush1.bf16.msra.mxu0 %v7440
  %7634 = vmatprep.subr.bf16.mxu0 0
  %7635 = vmatpush1.bf16.msra.mxu0 %v7441
  %7636 = vmatprep.subr.bf16.mxu0 0
  %7637 = vmatpush1.bf16.msra.mxu0 %v7442
  %7638 = vmatprep.subr.bf16.mxu0 0
  %7639 = vmatpush1.bf16.msra.mxu0 %v7443
  %7640 = vmatprep.subr.bf16.mxu0 0
  %7641 = vmatpush1.bf16.msra.mxu0 %v7444
  %7642 = vmatprep.subr.bf16.mxu0 0
  %7643 = vmatpush1.bf16.msra.mxu0 %v7445
  %7644 = vmatprep.subr.bf16.mxu0 0
  %7645 = vmatpush1.bf16.msra.mxu0 %v7446
  %7646 = vmatprep.mubr.bf16.mxu0 %v7388
  %7647 = vmatmul.mubr.bf16.gmra.mrb[0].mxu0 %v7387
  %v7648 = vpop.f32.mrb[0].mxu0
  %v7649 = vadd.f32 %v7609, %v7648
  %v7650 = vpop.f32.mrb[0].mxu0
  %v7651 = vpop.f32.mrb[0].mxu0
  %v7652 = vpop.f32.mrb[0].mxu0
  %7653 = vdwg.mxu0
  %7654 = vmatprep.subr.bf16.mxu0 0
  %7655 = vmatpush1.bf16.msra.mxu0 %v7447
  %7656 = vmatprep.subr.bf16.mxu0 0
  %7657 = vmatpush1.bf16.msra.mxu0 %v7448
  %7658 = vmatprep.subr.bf16.mxu0 0
  %7659 = vmatpush1.bf16.msra.mxu0 %v7449
  %7660 = vmatprep.subr.bf16.mxu0 0
  %7661 = vmatpush1.bf16.msra.mxu0 %v7450
  %7662 = vmatprep.subr.bf16.mxu0 0
  %7663 = vmatpush1.bf16.msra.mxu0 %v7451
  %7664 = vmatprep.subr.bf16.mxu0 0
  %7665 = vmatpush1.bf16.msra.mxu0 %v7452
  %7666 = vmatprep.subr.bf16.mxu0 0
  %7667 = vmatpush1.bf16.msra.mxu0 %v7453
  %7668 = vmatprep.subr.bf16.mxu0 0
  %7669 = vmatpush1.bf16.msra.mxu0 %v7454
  %7670 = vmatprep.subr.bf16.mxu0 0
  %7671 = vmatpush1.bf16.msra.mxu0 %v7455
  %7672 = vmatprep.subr.bf16.mxu0 0
  %7673 = vmatpush1.bf16.msra.mxu0 %v7456
  %7674 = vmatprep.subr.bf16.mxu0 0
  %7675 = vmatpush1.bf16.msra.mxu0 %v7457
  %7676 = vmatprep.subr.bf16.mxu0 0
  %7677 = vmatpush1.bf16.msra.mxu0 %v7458
  %7678 = vmatprep.subr.bf16.mxu0 0
  %7679 = vmatpush1.bf16.msra.mxu0 %v7459
  %7680 = vmatprep.subr.bf16.mxu0 0
  %7681 = vmatpush1.bf16.msra.mxu0 %v7460
  %7682 = vmatprep.subr.bf16.mxu0 0
  %7683 = vmatpush1.bf16.msra.mxu0 %v7461
  %7684 = vmatprep.subr.bf16.mxu0 0
  %7685 = vmatpush1.bf16.msra.mxu0 %v7462
  %7686 = vmatprep.mubr.bf16.mxu0 %v7390
  %7687 = vmatmul.mubr.bf16.gmra.mrb[0].mxu0 %v7389
  %v7688 = vpop.f32.mrb[0].mxu0
  %v7689 = vadd.f32 %v7649, %v7688
  %v7690 = vpop.f32.mrb[0].mxu0
  %v7691 = vpop.f32.mrb[0].mxu0
  %v7692 = vpop.f32.mrb[0].mxu0
  %7693 = vdwg.mxu0
  %7694 = vmatprep.subr.bf16.mxu0 0
  %7695 = vmatpush1.bf16.msra.mxu0 %v7463
  %7696 = vmatprep.subr.bf16.mxu0 0
  %7697 = vmatpush1.bf16.msra.mxu0 %v7464
  %7698 = vmatprep.subr.bf16.mxu0 0
  %7699 = vmatpush1.bf16.msra.mxu0 %v7465
  %7700 = vmatprep.subr.bf16.mxu0 0
  %7701 = vmatpush1.bf16.msra.mxu0 %v7466
  %7702 = vmatprep.subr.bf16.mxu0 0
  %7703 = vmatpush1.bf16.msra.mxu0 %v7467
  %7704 = vmatprep.subr.bf16.mxu0 0
  %7705 = vmatpush1.bf16.msra.mxu0 %v7468
  %7706 = vmatprep.subr.bf16.mxu0 0
  %7707 = vmatpush1.bf16.msra.mxu0 %v7469
  %7708 = vmatprep.subr.bf16.mxu0 0
  %7709 = vmatpush1.bf16.msra.mxu0 %v7470
  %7710 = vmatprep.subr.bf16.mxu0 0
  %7711 = vmatpush1.bf16.msra.mxu0 %v7471
  %7712 = vmatprep.subr.bf16.mxu0 0
  %7713 = vmatpush1.bf16.msra.mxu0 %v7472
  %7714 = vmatprep.subr.bf16.mxu0 0
  %7715 = vmatpush1.bf16.msra.mxu0 %v7473
  %7716 = vmatprep.subr.bf16.mxu0 0
  %7717 = vmatpush1.bf16.msra.mxu0 %v7474
  %7718 = vmatprep.subr.bf16.mxu0 0
  %7719 = vmatpush1.bf16.msra.mxu0 %v7475
  %7720 = vmatprep.subr.bf16.mxu0 0
  %7721 = vmatpush1.bf16.msra.mxu0 %v7476
  %7722 = vmatprep.subr.bf16.mxu0 0
  %7723 = vmatpush1.bf16.msra.mxu0 %v7477
  %7724 = vmatprep.subr.bf16.mxu0 0
  %7725 = vmatpush1.bf16.msra.mxu0 %v7478
  %7726 = vmatprep.mubr.bf16.mxu0 %v7392
  %7727 = vmatmul.mubr.bf16.gmra.mrb[0].mxu0 %v7391
  %v7728 = vpop.f32.mrb[0].mxu0
  %v7729 = vadd.f32 %v7689, %v7728
  %v7730 = vpop.f32.mrb[0].mxu0
  %v7731 = vpop.f32.mrb[0].mxu0
  %v7732 = vpop.f32.mrb[0].mxu0
  %7733 = vdwg.mxu0
  %7734 = vmatprep.subr.bf16.mxu0 0
  %7735 = vmatpush1.bf16.msra.mxu0 %v7479
  %7736 = vmatprep.subr.bf16.mxu0 0
  %7737 = vmatpush1.bf16.msra.mxu0 %v7480
  %7738 = vmatprep.subr.bf16.mxu0 0
  %7739 = vmatpush1.bf16.msra.mxu0 %v7481
  %7740 = vmatprep.subr.bf16.mxu0 0
  %7741 = vmatpush1.bf16.msra.mxu0 %v7482
  %7742 = vmatprep.subr.bf16.mxu0 0
  %7743 = vmatpush1.bf16.msra.mxu0 %v7483
  %7744 = vmatprep.subr.bf16.mxu0 0
  %7745 = vmatpush1.bf16.msra.mxu0 %v7484
  %7746 = vmatprep.subr.bf16.mxu0 0
  %7747 = vmatpush1.bf16.msra.mxu0 %v7485
  %7748 = vmatprep.subr.bf16.mxu0 0
  %7749 = vmatpush1.bf16.msra.mxu0 %v7486
  %7750 = vmatprep.subr.bf16.mxu0 0
  %7751 = vmatpush1.bf16.msra.mxu0 %v7487
  %7752 = vmatprep.subr.bf16.mxu0 0
  %7753 = vmatpush1.bf16.msra.mxu0 %v7488
  %7754 = vmatprep.subr.bf16.mxu0 0
  %7755 = vmatpush1.bf16.msra.mxu0 %v7489
  %7756 = vmatprep.subr.bf16.mxu0 0
  %7757 = vmatpush1.bf16.msra.mxu0 %v7490
  %7758 = vmatprep.subr.bf16.mxu0 0
  %7759 = vmatpush1.bf16.msra.mxu0 %v7491
  %7760 = vmatprep.subr.bf16.mxu0 0
  %7761 = vmatpush1.bf16.msra.mxu0 %v7492
  %7762 = vmatprep.subr.bf16.mxu0 0
  %7763 = vmatpush1.bf16.msra.mxu0 %v7493
  %7764 = vmatprep.subr.bf16.mxu0 0
  %7765 = vmatpush1.bf16.msra.mxu0 %v7494
  %7766 = vmatprep.mubr.bf16.mxu0 %v7394
  %7767 = vmatmul.mubr.bf16.gmra.mrb[0].mxu0 %v7393
  %v7768 = vpop.f32.mrb[0].mxu0
  %v7769 = vadd.f32 %v7729, %v7768
  %v7770 = vpop.f32.mrb[0].mxu0
  %v7771 = vpop.f32.mrb[0].mxu0
  %v7772 = vpop.f32.mrb[0].mxu0
  %7773 = vdwg.mxu0
  %7774 = vmatprep.subr.bf16.mxu0 0
  %7775 = vmatpush1.bf16.msra.mxu0 %v7495
  %7776 = vmatprep.subr.bf16.mxu0 0
  %7777 = vmatpush1.bf16.msra.mxu0 %v7496
  %7778 = vmatprep.subr.bf16.mxu0 0
  %7779 = vmatpush1.bf16.msra.mxu0 %v7497
  %7780 = vmatprep.subr.bf16.mxu0 0
  %7781 = vmatpush1.bf16.msra.mxu0 %v7498
  %7782 = vmatprep.subr.bf16.mxu0 0
  %7783 = vmatpush1.bf16.msra.mxu0 %v7499
  %7784 = vmatprep.subr.bf16.mxu0 0
  %7785 = vmatpush1.bf16.msra.mxu0 %v7500
  %7786 = vmatprep.subr.bf16.mxu0 0
  %7787 = vmatpush1.bf16.msra.mxu0 %v7501
  %7788 = vmatprep.subr.bf16.mxu0 0
  %7789 = vmatpush1.bf16.msra.mxu0 %v7502
  %7790 = vmatprep.subr.bf16.mxu0 0
  %7791 = vmatpush1.bf16.msra.mxu0 %v7503
  %7792 = vmatprep.subr.bf16.mxu0 0
  %7793 = vmatpush1.bf16.msra.mxu0 %v7504
  %7794 = vmatprep.subr.bf16.mxu0 0
  %7795 = vmatpush1.bf16.msra.mxu0 %v7505
  %7796 = vmatprep.subr.bf16.mxu0 0
  %7797 = vmatpush1.bf16.msra.mxu0 %v7506
  %7798 = vmatprep.subr.bf16.mxu0 0
  %7799 = vmatpush1.bf16.msra.mxu0 %v7507
  %7800 = vmatprep.subr.bf16.mxu0 0
  %7801 = vmatpush1.bf16.msra.mxu0 %v7508
  %7802 = vmatprep.subr.bf16.mxu0 0
  %7803 = vmatpush1.bf16.msra.mxu0 %v7509
  %7804 = vmatprep.subr.bf16.mxu0 0
  %7805 = vmatpush1.bf16.msra.mxu0 %v7510
  %7806 = vmatprep.mubr.bf16.mxu0 %v7396
  %7807 = vmatmul.mubr.bf16.gmra.mrb[0].mxu0 %v7395
  %v7808 = vpop.f32.mrb[0].mxu0
  %v7809 = vadd.f32 %v7769, %v7808
  %v7810 = vpop.f32.mrb[0].mxu0
  %v7811 = vpop.f32.mrb[0].mxu0
  %v7812 = vpop.f32.mrb[0].mxu0
  %7813 = vdwg.mxu0
  %7814 = vmatprep.subr.bf16.mxu0 0
  %7815 = vmatpush1.bf16.msra.mxu0 %v7511
  %7816 = vmatprep.subr.bf16.mxu0 0
  %7817 = vmatpush1.bf16.msra.mxu0 %v7512
  %7818 = vmatprep.subr.bf16.mxu0 0
  %7819 = vmatpush1.bf16.msra.mxu0 %v7513
  %7820 = vmatprep.subr.bf16.mxu0 0
  %7821 = vmatpush1.bf16.msra.mxu0 %v7514
  %7822 = vmatprep.subr.bf16.mxu0 0
  %7823 = vmatpush1.bf16.msra.mxu0 %v7515
  %7824 = vmatprep.subr.bf16.mxu0 0
  %7825 = vmatpush1.bf16.msra.mxu0 %v7516
  %7826 = vmatprep.subr.bf16.mxu0 0
  %7827 = vmatpush1.bf16.msra.mxu0 %v7517
  %7828 = vmatprep.subr.bf16.mxu0 0
  %7829 = vmatpush1.bf16.msra.mxu0 %v7518
  %7830 = vmatprep.subr.bf16.mxu0 0
  %7831 = vmatpush1.bf16.msra.mxu0 %v7519
  %7832 = vmatprep.subr.bf16.mxu0 0
  %7833 = vmatpush1.bf16.msra.mxu0 %v7520
  %7834 = vmatprep.subr.bf16.mxu0 0
  %7835 = vmatpush1.bf16.msra.mxu0 %v7521
  %7836 = vmatprep.subr.bf16.mxu0 0
  %7837 = vmatpush1.bf16.msra.mxu0 %v7522
  %7838 = vmatprep.subr.bf16.mxu0 0
  %7839 = vmatpush1.bf16.msra.mxu0 %v7523
  %7840 = vmatprep.subr.bf16.mxu0 0
  %7841 = vmatpush1.bf16.msra.mxu0 %v7524
  %7842 = vmatprep.subr.bf16.mxu0 0
  %7843 = vmatpush1.bf16.msra.mxu0 %v7525
  %7844 = vmatprep.subr.bf16.mxu0 0
  %7845 = vmatpush1.bf16.msra.mxu0 %v7526
  %7846 = vmatprep.mubr.bf16.mxu0 %v7398
  %7847 = vmatmul.mubr.bf16.gmra.mrb[0].mxu0 %v7397
  %v7848 = vpop.f32.mrb[0].mxu0
  %v7849 = vadd.f32 %v7809, %v7848
  %v7850 = vpop.f32.mrb[0].mxu0
  %v7851 = vpop.f32.mrb[0].mxu0
  %v7852 = vpop.f32.mrb[0].mxu0
  %7853 = vdwg.mxu0
  %v7854 = vadd.f32 %v6817, %v7849
  %v7855 = vld [vmem:[%s5 + $0x1c] sm:$0x1]
  %v7856 = vld [vmem:[%s5 + $0x1d] sm:$0x1]
  %7857 = vadd.xlane.f32.xlu0 %v7854
  %v7858 = vpop.xlane.xlu0 %7857
  %v7859 = vmul.f32 %v7858, %v6794
  %v7860 = vsub.f32 %v7854, %v7859
  %v7861 = vmul.f32 %v7860, %v7860
  %7862 = vadd.xlane.f32.xlu0 %v7861
  %v7863 = vpop.xlane.xlu0 %7862
  %v7864 = vmul.f32 %v7863, %v6794
  %v7865 = vadd.f32 %v7864, 1e-05
  %v7866 = vrsqrt.pop %v7865
  %v7867 = vmul.f32 %v7860, %v7866
  %v7869 = vlaneseq
  %v7870 = vshrl.u32 %v7869, 7
  %v7871 = vsub.s32 0, %v7870
  %v7872 = vrot.slane %v7855, %v7871
  %v7874 = vmul.f32 %v7867, %v7872
  %v7876 = vlaneseq
  %v7877 = vshrl.u32 %v7876, 7
  %v7878 = vsub.s32 0, %v7877
  %v7879 = vrot.slane %v7856, %v7878
  %v7881 = vadd.f32 %v7874, %v7879
  %v7882 = vld [vmem:[%s5 + $0x1e] sm:$0x1]
  %v7883 = vld [vmem:[%s5 + $0x1f] sm:$0x1]
  %7884 = vadd.xlane.f32.xlu0 %v7881
  %v7885 = vpop.xlane.xlu0 %7884
  %v7886 = vmul.f32 %v7885, %v6794
  %v7887 = vsub.f32 %v7881, %v7886
  %v7888 = vmul.f32 %v7887, %v7887
  %7889 = vadd.xlane.f32.xlu0 %v7888
  %v7890 = vpop.xlane.xlu0 %7889
  %v7891 = vmul.f32 %v7890, %v6794
  %v7892 = vadd.f32 %v7891, 1e-05
  %v7893 = vrsqrt.pop %v7892
  %v7894 = vmul.f32 %v7887, %v7893
  %v7896 = vlaneseq
  %v7897 = vshrl.u32 %v7896, 7
  %v7898 = vsub.s32 0, %v7897
  %v7899 = vrot.slane %v7882, %v7898
  %v7901 = vmul.f32 %v7894, %v7899
  %v7903 = vlaneseq
  %v7904 = vshrl.u32 %v7903, 7
  %v7905 = vsub.s32 0, %v7904
  %v7906 = vrot.slane %v7883, %v7905
  %v7908 = vadd.f32 %v7901, %v7906
  %v7909 = vld [vmem:[%s5 + $0x20] sm:$0x1]
  %v7911 = vlaneseq
  %v7912 = vshrl.u32 %v7911, 7
  %v7913 = vsub.s32 0, %v7912
  %v7914 = vrot.slane %v7909, %v7913
  %7916 = vmatprep.subr.mxu0 0.0
  %7917 = vmatpush1.msra.mxu0 %v5322
  %7918 = vmatprep.subr.mxu0 0.0
  %7919 = vmatpush1.msra.mxu0 %v5323
  %7920 = vmatprep.subr.mxu0 0.0
  %7921 = vmatpush1.msra.mxu0 %v5324
  %7922 = vmatprep.subr.mxu0 0.0
  %7923 = vmatpush1.msra.mxu0 %v5325
  %7924 = vmatprep.subr.mxu0 0.0
  %7925 = vmatpush1.msra.mxu0 %v5326
  %7926 = vmatprep.subr.mxu0 0.0
  %7927 = vmatpush1.msra.mxu0 %v5327
  %7928 = vmatprep.subr.mxu0 0.0
  %7929 = vmatpush1.msra.mxu0 %v5328
  %7930 = vmatprep.subr.mxu0 0.0
  %7931 = vmatpush1.msra.mxu0 %v5329
  %7932 = vmatprep.subr.mxu0 0.0
  %7933 = vmatpush1.msra.mxu0 %v5330
  %7934 = vmatprep.subr.mxu0 0.0
  %7935 = vmatpush1.msra.mxu0 %v5331
  %7936 = vmatprep.subr.mxu0 0.0
  %7937 = vmatpush1.msra.mxu0 %v5332
  %7938 = vmatprep.subr.mxu0 0.0
  %7939 = vmatpush1.msra.mxu0 %v5333
  %7940 = vmatprep.subr.mxu0 0.0
  %7941 = vmatpush1.msra.mxu0 %v5334
  %7942 = vmatprep.subr.mxu0 0.0
  %7943 = vmatpush1.msra.mxu0 %v5335
  %7944 = vmatprep.subr.mxu0 0.0
  %7945 = vmatpush1.msra.mxu0 %v5336
  %7946 = vmatprep.subr.mxu0 0.0
  %7947 = vmatpush1.msra.mxu0 %v5337
  %7948 = vmatprep.subr.mxu0 0.0
  %7949 = vmatpush1.msra.mxu0 0.0
  %7950 = vmatprep.subr.mxu0 0.0
  %7951 = vmatpush1.msra.mxu0 0.0
  %7952 = vmatprep.subr.mxu0 0.0
  %7953 = vmatpush1.msra.mxu0 0.0
  %7954 = vmatprep.subr.mxu0 0.0
  %7955 = vmatpush1.msra.mxu0 0.0
  %7956 = vmatprep.subr.mxu0 0.0
  %7957 = vmatpush1.msra.mxu0 0.0
  %7958 = vmatprep.subr.mxu0 0.0
  %7959 = vmatpush1.msra.mxu0 0.0
  %7960 = vmatprep.subr.mxu0 0.0
  %7961 = vmatpush1.msra.mxu0 0.0
  %7962 = vmatprep.subr.mxu0 0.0
  %7963 = vmatpush1.msra.mxu0 0.0
  %7964 = vmatprep.subr.mxu0 0.0
  %7965 = vmatpush1.msra.mxu0 0.0
  %7966 = vmatprep.subr.mxu0 0.0
  %7967 = vmatpush1.msra.mxu0 0.0
  %7968 = vmatprep.subr.mxu0 0.0
  %7969 = vmatpush1.msra.mxu0 0.0
  %7970 = vmatprep.subr.mxu0 0.0
  %7971 = vmatpush1.msra.mxu0 0.0
  %7972 = vmatprep.subr.mxu0 0.0
  %7973 = vmatpush1.msra.mxu0 0.0
  %7974 = vmatprep.subr.mxu0 0.0
  %7975 = vmatpush1.msra.mxu0 0.0
  %7976 = vmatprep.subr.mxu0 0.0
  %7977 = vmatpush1.msra.mxu0 0.0
  %7978 = vmatprep.subr.mxu0 0.0
  %7979 = vmatpush1.msra.mxu0 0.0
  %7980 = vmatprep.mubr.f32.mxu0 0.0
  %7981 = vmatmul.mubr.f32.gmra.mrb[0].mxu0 %v7908
  %v7982 = vpop.f32.mrb[0].mxu0
  %v7983 = vadd.f32 %v7914, %v7982
  %v7984 = vpop.f32.mrb[0].mxu0
  %7985 = vdwg.mxu0
  %vm7986 = vcmask 7168
  %7987 = vst.msk [vmem:[%s8] sm:$0xff] %vm7986, %v7983
  // Predicated region
  $region97: #{forward.1} parent=0 // pred_check
    _
  $region98: #{forward.1} parent=0 // pred_check_branch
    %7989 = sbr.rel (0) target = $region100
  $region99: #{forward.1} parent=0 // pred_region
    _
  $region100: #{forward.1} parent=0 // pred_fallthru
    _
  // Predicated region
  $region101: #{forward.1} parent=0 // pred_check
    _
  $region102: #{forward.1} parent=0 // pred_check_branch
    %7991 = sbr.rel (0) target = $region104
  $region103: #{forward.1} parent=0 // pred_region
    _
  $region104: #{forward.1} parent=0 // pred_fallthru
    _
  %7992 = vsyncmov [#allocation8]
  %s7993 = vpop.sfrf %7992
  %p7994 = scmp.eq.s32.totalorder %s7993, 0
  %p7995 = pneg %p7994
  %7997 = shalt.err (%p7995)
  %s7998 = scalar_lea.sflag [#allocation8], 1
  %7999 = vsyncmov %s7998
  %s8000 = vpop.sfrf %7999
  %p8001 = scmp.eq.s32.totalorder %s8000, 0
  %p8002 = pneg %p8001
  %8004 = shalt.err (%p8002)

</llo_original>
